<compile_context>
chip_gen: v7x
topology: tpu7x:2x2x1
jax: 0.10.0
libtpu: 0.0.40
codegen_flags: <defaults>
</compile_context>

<pallas_src>
import numpy as np

import jax
import jax.numpy as jnp
from jax.experimental import pallas as pl
from jax.experimental.pallas import tpu as pltpu

EMBED_DIMS = (8, 16, 32, 64, 128)   # scaled-down [64, 256, 512, 1024, 2048]
MIN_IMG = 4                         # scaled-down 8
HIDDEN = 128                        # scaled-down 1024
OUT_CHANNELS = 10
IMG = 32                            # input spatial size (this config)
STAGE_POOL = (2, 1, 2, 1, 2)        # per-stage downsample (ResNet-like pyramid)
N_POS = MIN_IMG * MIN_IMG           # 16 pooled spatial positions
FEAT_LANES = 256                    # sum(EMBED_DIMS)=248 padded to a lane-dense 256
PROJ_K = N_POS * FEAT_LANES         # 4096
TK = 512                            # proj matmul K tile (pipelined weight DMA)

# channels-last lane packing of the concatenated pooled feature (per spatial row):
#   [0:128)=stage4  [128:192)=stage3  [192:224)=stage2  [224:240)=stage1
#   [240:248)=stage0  [248:256)=zero pad
_LANE_OFF = {4: 0, 3: 128, 2: 192, 1: 224, 0: 240}

_INV_SQRT2 = 0.7071067811865476


# ----------------------------- Pallas kernels -----------------------------

def _erf(x):
    # Abramowitz & Stegun 7.1.26 rational approximation (max abs err 1.5e-7, below f32
    # resolution) -- keeps nn.GELU() (erf form) semantics without relying on an erf
    # lowering in Mosaic.
    sgn = jnp.where(x >= 0.0, 1.0, -1.0)
    a = jnp.abs(x)
    t = 1.0 / (1.0 + 0.3275911 * a)
    poly = t * (0.254829592
                + t * (-0.284496736
                       + t * (1.421413741
                              + t * (-1.453152027 + t * 1.061405429))))
    return sgn * (1.0 - poly * jnp.exp(-a * a))


def _encoder_kernel(x_ref,
                    w0_ref, b0_ref, w1_ref, b1_ref, w2_ref, b2_ref,
                    w3_ref, b3_ref, w4_ref, b4_ref,
                    p32_ref, p16q_ref, p16h_ref, p8_ref, placer_ref,
                    feat_ref):
    """One batch image per grid step; all intermediates stay in VMEM/vregs."""
    x = x_ref[0]                                                   # (1024, 3)

    # ---- stage 0: 1x1 conv (Cin=3) as a VPU broadcast-MAC (MXU would be >95% padding)
    w0 = w0_ref[...]
    s0 = (x[:, 0:1] * w0[0:1, :]
          + x[:, 1:2] * w0[1:2, :]
          + x[:, 2:3] * w0[2:3, :]
          + b0_ref[...])
    s0 = jnp.maximum(s0, 0.0)                                      # (1024, 8)
    f0 = jnp.dot(p32_ref[...], s0, preferred_element_type=jnp.float32)    # 32x32->16x16

    # ---- stage 1 (no spatial downsample)
    s1 = jnp.maximum(
        jnp.dot(f0, w1_ref[...], preferred_element_type=jnp.float32) + b1_ref[...], 0.0)
    f1 = s1                                                        # (256, 16)

    # ---- stage 2
    s2 = jnp.maximum(
        jnp.dot(f1, w2_ref[...], preferred_element_type=jnp.float32) + b2_ref[...], 0.0)
    f2 = jnp.dot(p16h_ref[...], s2, preferred_element_type=jnp.float32)   # 16x16->8x8

    # ---- stage 3 (no spatial downsample)
    s3 = jnp.maximum(
        jnp.dot(f2, w3_ref[...], preferred_element_type=jnp.float32) + b3_ref[...], 0.0)
    f3 = s3                                                        # (64, 64)

    # ---- stage 4
    s4 = jnp.maximum(
        jnp.dot(f3, w4_ref[...], preferred_element_type=jnp.float32) + b4_ref[...], 0.0)
    f4 = jnp.dot(p8_ref[...], s4, preferred_element_type=jnp.float32)     # 8x8->4x4

    # ---- adaptive avg-pool of every pyramid level to 4x4 (matmul with pooling operator)
    g0 = jnp.dot(p16q_ref[...], f0, preferred_element_type=jnp.float32)   # (16, 8)
    g1 = jnp.dot(p16q_ref[...], f1, preferred_element_type=jnp.float32)   # (16, 16)
    g2 = jnp.dot(p8_ref[...], f2, preferred_element_type=jnp.float32)     # (16, 32)
    g3 = jnp.dot(p8_ref[...], f3, preferred_element_type=jnp.float32)     # (16, 64)
    g4 = f4                                                               # (16, 128)

    # ---- channels-last packing of the concatenated feature into two lane-dense
    #      128-wide aligned stores. Sub-128 pieces are placed via identity-slice
    #      matmuls on the MXU (avoids unaligned masked stores / lane concatenation).
    eye = placer_ref[...]
    tail = (jnp.dot(g3, eye[0:64, :], preferred_element_type=jnp.float32)
            + jnp.dot(g2, eye[64:96, :], preferred_element_type=jnp.float32)
            + jnp.dot(g1, eye[96:112, :], preferred_element_type=jnp.float32)
            + jnp.dot(g0, eye[112:120, :], preferred_element_type=jnp.float32))
    feat_ref[0, :, 0:128] = g4
    feat_ref[0, :, 128:256] = tail


def _proj_kernel(x_ref, w1_ref, b1_ref, w2_ref, b2_ref, o_ref, acc_ref, ss_ref):
    """K-tiled proj head: accumulate x@W1 and ||x||^2 across K tiles, finalize at end."""
    k = pl.program_id(0)

    @pl.when(k == 0)
    def _init():
        acc_ref[...] = jnp.zeros_like(acc_ref)
        ss_ref[...] = jnp.zeros_like(ss_ref)

    x = x_ref[...]                                                 # (B, TK)
    ss_ref[...] += jnp.sum(x * x, axis=-1, keepdims=True)
    acc_ref[...] += jnp.dot(x, w1_ref[...], preferred_element_type=jnp.float32)

    @pl.when(k == pl.num_programs(0) - 1)
    def _finish():
        # F.normalize(dim=-1) folded into the accumulated matmul:
        #   (x / max(||x||, 1e-12)) @ W1 == (x @ W1) / max(||x||, 1e-12)
        denom = jnp.maximum(jnp.sqrt(ss_ref[...]), 1e-12)
        h = acc_ref[...] / denom + b1_ref[...]
        # exact (erf-form) GELU as nn.GELU() default; Dropout(0.1) is identity in eval
        h = 0.5 * h * (1.0 + _erf(h * _INV_SQRT2))
        o_ref[...] = (jnp.dot(h, w2_ref[...], preferred_element_type=jnp.float32)
                      + b2_ref[...])


# ----------------------------- wrappers -----------------------------

def encoder_forward(x_flat, params):
    """x_flat: (B, IMG*IMG, 3) channels-last -> (B, 16, 256) pooled packed feature."""
    B = x_flat.shape[0]
    R = IMG * IMG
    in_specs = [pl.BlockSpec((1, R, 3), lambda b: (b, 0, 0))]
    args = [x_flat]
    for w, bias in zip(params["stage_w"], params["stage_b"]):
        in_specs.append(pl.BlockSpec(w.shape, lambda b: (0, 0)))
        in_specs.append(pl.BlockSpec(bias.shape, lambda b: (0, 0)))
        args += [w, bias]
    for name in ("p32", "p16q", "p16h", "p8", "placer"):
        m = params["pool_ops"][name]
        in_specs.append(pl.BlockSpec(m.shape, lambda b: (0, 0)))
        args.append(m)
    return pl.pallas_call(
        _encoder_kernel,
        grid=(B,),
        in_specs=in_specs,
        out_specs=pl.BlockSpec((1, N_POS, FEAT_LANES), lambda b: (b, 0, 0)),
        out_shape=jax.ShapeDtypeStruct((B, N_POS, FEAT_LANES), jnp.float32),
        compiler_params=pltpu.CompilerParams(dimension_semantics=("parallel",)),
    )(*args)


def proj_forward(flat, w1p, b1, w2p, b2p):
    """flat: (B, 4096) -> (B, 128) (lanes [10:128) are zero-weight padding)."""
    B, K = flat.shape
    nk = K // TK
    return pl.pallas_call(
        _proj_kernel,
        grid=(nk,),
        in_specs=[
            pl.BlockSpec((B, TK), lambda k: (0, k)),
            pl.BlockSpec((TK, HIDDEN), lambda k: (k, 0)),
            pl.BlockSpec((1, HIDDEN), lambda k: (0, 0)),
            pl.BlockSpec((HIDDEN, HIDDEN), lambda k: (0, 0)),
            pl.BlockSpec((1, HIDDEN), lambda k: (0, 0)),
        ],
        out_specs=pl.BlockSpec((B, HIDDEN), lambda k: (0, 0)),
        out_shape=jax.ShapeDtypeStruct((B, HIDDEN), jnp.float32),
        scratch_shapes=[pltpu.VMEM((B, HIDDEN), jnp.float32),
                        pltpu.VMEM((B, 1), jnp.float32)],
        compiler_params=pltpu.CompilerParams(dimension_semantics=("arbitrary",)),
    )(flat, w1p, b1, w2p, b2p)


# ----------------------------- parameter / operator construction -----------------------------

def _pool_matrix(hw_in, k):
    """(hw_out^2, hw_in^2) averaging operator: pooled = P @ feature(rows=h*W+w, C)."""
    hw_out = hw_in // k
    m = np.zeros((hw_out * hw_out, hw_in * hw_in), np.float32)
    inv = 1.0 / float(k * k)
    for ho in range(hw_out):
        for wo in range(hw_out):
            for dh in range(k):
                for dw in range(k):
                    m[ho * hw_out + wo, (ho * k + dh) * hw_in + (wo * k + dw)] = inv
    return jnp.asarray(m)


def _pack_w1(w1_torch):
    """Permute w1 rows (torch flatten order c*16+h*4+w) to our padded channels-last
    layout (row r = h*4+w, lane = stage slot offset + channel); pad lanes hit a zero row."""
    sum_c = sum(EMBED_DIMS)
    torch_off = np.cumsum([0] + list(EMBED_DIMS))[:-1]        # [0, 8, 24, 56, 120]
    src = np.full((N_POS * FEAT_LANES,), sum_c * N_POS, dtype=np.int32)  # -> zero row
    for s, loff in _LANE_OFF.items():
        for c in range(EMBED_DIMS[s]):
            for r in range(N_POS):
                src[r * FEAT_LANES + loff + c] = (torch_off[s] + c) * N_POS + r
    w1_ext = jnp.concatenate(
        [w1_torch, jnp.zeros((1, w1_torch.shape[1]), jnp.float32)], axis=0)
    return jnp.take(w1_ext, jnp.asarray(src), axis=0)          # (4096, HIDDEN)


def init_params(key):
    # TODO(synk): the CLIP ModifiedResNet visual encoder is loaded from a checkpoint in
    # the reference; here it is replaced by a deterministic surrogate pyramid of
    # 1x1-conv(+ReLU)+avgpool stages producing the same 5-level feature-channel structure.
    params = {"stage_w": [], "stage_b": []}
    cin = 3
    for cout in EMBED_DIMS:
        key, kw, kb = jax.random.split(key, 3)
        w = jax.random.normal(kw, (cin, cout), jnp.float32) / jnp.sqrt(float(cin))
        b = jax.random.normal(kb, (cout,), jnp.float32) * 0.01
        params["stage_w"].append(w)
        params["stage_b"].append(b.reshape(1, cout))
        cin = cout

    proj_in = sum(EMBED_DIMS) * N_POS
    key, k1, k2, k3, k4 = jax.random.split(key, 5)
    w1 = jax.random.normal(k1, (proj_in, HIDDEN), jnp.float32) / jnp.sqrt(float(proj_in))
    b1 = jax.random.normal(k2, (HIDDEN,), jnp.float32) * 0.01
    w2 = jax.random.normal(k3, (HIDDEN, OUT_CHANNELS), jnp.float32) / jnp.sqrt(float(HIDDEN))
    b2 = jax.random.normal(k4, (OUT_CHANNELS,), jnp.float32) * 0.01

    # Fold the torch flatten order into w1 once at init; pad the tiny output to 128 lanes
    # so every kernel store is lane-dense.
    params["w1_packed"] = _pack_w1(w1)
    params["b1"] = b1.reshape(1, HIDDEN)
    params["w2_padded"] = jnp.zeros((HIDDEN, HIDDEN), jnp.float32).at[:, :OUT_CHANNELS].set(w2)
    params["b2_padded"] = jnp.zeros((1, HIDDEN), jnp.float32).at[0, :OUT_CHANNELS].set(b2)

    # Pooling/placement operators (built once; specialized to the 32x32 input pyramid).
    # NOTE: at real (unscaled) CLIP dims the conv rows and proj K dim must additionally
    # be grid-tiled with vmem_limit_bytes headroom (v7x: 64 MiB VMEM).
    params["pool_ops"] = {
        "p32": _pool_matrix(IMG, 2),        # 32x32 -> 16x16 (stage-0 downsample)
        "p16q": _pool_matrix(IMG // 2, 4),  # 16x16 -> 4x4   (adaptive pool, stages 0/1)
        "p16h": _pool_matrix(IMG // 2, 2),  # 16x16 -> 8x8   (stage-2 downsample)
        "p8": _pool_matrix(IMG // 4, 2),    # 8x8   -> 4x4   (stage-4 down + adaptive 2/3)
        "placer": jnp.eye(128, dtype=jnp.float32),  # lane-placement operator
    }
    return params


# ----------------------------- model -----------------------------

def cqa_clip_forward(params, x_nchw):
    """CQACLIP.forward: x (B, in_channels, H, W) NCHW float32 -> (B, out_channels)."""
    B, C, H, W = x_nchw.shape
    if C == 1:
        x_nchw = jnp.concatenate([x_nchw, x_nchw, x_nchw], axis=1)   # x.repeat(1,3,1,1)
    # NCHW -> NHWC, flatten spatial so channels sit on the 128-lane axis
    x = jnp.transpose(x_nchw, (0, 2, 3, 1)).reshape(B, H * W, 3)

    feat = encoder_forward(x, params)                  # (B, 16, 256) packed channels-last
    flat = feat.reshape(B, N_POS * FEAT_LANES)         # contiguous, no data movement
    y = proj_forward(flat, params["w1_packed"], params["b1"],
                     params["w2_padded"], params["b2_padded"])        # (B, 128)
    return y[:, :OUT_CHANNELS]

    # TODO(synk): memory bank / multiclass contrastive loss are training-time state and
    # are not part of forward(); they are not implemented here.


if __name__ == "__main__":
    key = jax.random.PRNGKey(0)
    pkey, xkey = jax.random.split(key)
    params = init_params(pkey)
    x = jax.random.normal(xkey, (2, 1, IMG, IMG), jnp.float32)   # (B, in_channels=1, H, W)

    fwd = jax.jit(cqa_clip_forward)
    y = jax.block_until_ready(fwd(params, x))
    assert y.shape == (2, OUT_CHANNELS)
    assert bool(jnp.all(jnp.isfinite(y)))
    print("KERNEL_OK")
</pallas_src>

<mosaic_0001>
module attributes {stable_mosaic.version = 11 : i64} {
  func.func @_encoder_kernel(%arg0: i32, %arg1: memref<1x1024x3xf32, #tpu.memory_space<vmem>>, %arg2: memref<3x8xf32, #tpu.memory_space<vmem>>, %arg3: memref<1x8xf32, #tpu.memory_space<vmem>>, %arg4: memref<8x16xf32, #tpu.memory_space<vmem>>, %arg5: memref<1x16xf32, #tpu.memory_space<vmem>>, %arg6: memref<16x32xf32, #tpu.memory_space<vmem>>, %arg7: memref<1x32xf32, #tpu.memory_space<vmem>>, %arg8: memref<32x64xf32, #tpu.memory_space<vmem>>, %arg9: memref<1x64xf32, #tpu.memory_space<vmem>>, %arg10: memref<64x128xf32, #tpu.memory_space<vmem>>, %arg11: memref<1x128xf32, #tpu.memory_space<vmem>>, %arg12: memref<256x1024xf32, #tpu.memory_space<vmem>>, %arg13: memref<16x256xf32, #tpu.memory_space<vmem>>, %arg14: memref<64x256xf32, #tpu.memory_space<vmem>>, %arg15: memref<16x64xf32, #tpu.memory_space<vmem>>, %arg16: memref<128x128xf32, #tpu.memory_space<vmem>>, %arg17: memref<1x16x256xf32, #tpu.memory_space<vmem>>) attributes {dimension_semantics = [#tpu.dimension_semantics<parallel>], iteration_bounds = array<i64: 2>, scalar_prefetch = 0 : i64, scratch_operands = 0 : i64, tpu.core_type = #tpu.core_type<tc>, window_params = [{transform_indices = @transform_0, window_bounds = array<i64: 1, 1024, 3>}, {pipeline_mode = #tpu.pipeline_mode<synchronous>, transform_indices = @transform_1, window_bounds = array<i64: 3, 8>}, {pipeline_mode = #tpu.pipeline_mode<synchronous>, transform_indices = @transform_2, window_bounds = array<i64: 1, 8>}, {pipeline_mode = #tpu.pipeline_mode<synchronous>, transform_indices = @transform_3, window_bounds = array<i64: 8, 16>}, {pipeline_mode = #tpu.pipeline_mode<synchronous>, transform_indices = @transform_4, window_bounds = array<i64: 1, 16>}, {pipeline_mode = #tpu.pipeline_mode<synchronous>, transform_indices = @transform_5, window_bounds = array<i64: 16, 32>}, {pipeline_mode = #tpu.pipeline_mode<synchronous>, transform_indices = @transform_6, window_bounds = array<i64: 1, 32>}, {pipeline_mode = #tpu.pipeline_mode<synchronous>, transform_indices = @transform_7, window_bounds = array<i64: 32, 64>}, {pipeline_mode = #tpu.pipeline_mode<synchronous>, transform_indices = @transform_8, window_bounds = array<i64: 1, 64>}, {pipeline_mode = #tpu.pipeline_mode<synchronous>, transform_indices = @transform_9, window_bounds = array<i64: 64, 128>}, {pipeline_mode = #tpu.pipeline_mode<synchronous>, transform_indices = @transform_10, window_bounds = array<i64: 1, 128>}, {pipeline_mode = #tpu.pipeline_mode<synchronous>, transform_indices = @transform_11, window_bounds = array<i64: 256, 1024>}, {pipeline_mode = #tpu.pipeline_mode<synchronous>, transform_indices = @transform_12, window_bounds = array<i64: 16, 256>}, {pipeline_mode = #tpu.pipeline_mode<synchronous>, transform_indices = @transform_13, window_bounds = array<i64: 64, 256>}, {pipeline_mode = #tpu.pipeline_mode<synchronous>, transform_indices = @transform_14, window_bounds = array<i64: 16, 64>}, {pipeline_mode = #tpu.pipeline_mode<synchronous>, transform_indices = @transform_15, window_bounds = array<i64: 128, 128>}, {transform_indices = @transform_16, window_bounds = array<i64: 1, 16, 256>}]} {
    %c0 = arith.constant 0 : index
    %c0_0 = arith.constant 0 : index
    %c0_1 = arith.constant 0 : index
    %0 = vector.load %arg1[%c0, %c0_0, %c0_1] : memref<1x1024x3xf32, #tpu.memory_space<vmem>>, vector<1x1024x3xf32>
    %1 = vector.shape_cast %0 : vector<1x1024x3xf32> to vector<1024x3xf32>
    %c0_2 = arith.constant 0 : index
    %c0_3 = arith.constant 0 : index
    %2 = vector.load %arg2[%c0_2, %c0_3] : memref<3x8xf32, #tpu.memory_space<vmem>>, vector<3x8xf32>
    %3 = vector.extract_strided_slice %1 {offsets = [0, 0], sizes = [1024, 1], strides = [1, 1]} : vector<1024x3xf32> to vector<1024x1xf32>
    %4 = vector.extract_strided_slice %2 {offsets = [0, 0], sizes = [1, 8], strides = [1, 1]} : vector<3x8xf32> to vector<1x8xf32>
    %5 = vector.broadcast %3 : vector<1024x1xf32> to vector<1024x8xf32>
    %6 = vector.broadcast %4 : vector<1x8xf32> to vector<1024x8xf32>
    %7 = arith.mulf %5, %6 : vector<1024x8xf32>
    %8 = vector.extract_strided_slice %1 {offsets = [0, 1], sizes = [1024, 1], strides = [1, 1]} : vector<1024x3xf32> to vector<1024x1xf32>
    %9 = vector.extract_strided_slice %2 {offsets = [1, 0], sizes = [1, 8], strides = [1, 1]} : vector<3x8xf32> to vector<1x8xf32>
    %10 = vector.broadcast %8 : vector<1024x1xf32> to vector<1024x8xf32>
    %11 = vector.broadcast %9 : vector<1x8xf32> to vector<1024x8xf32>
    %12 = arith.mulf %10, %11 : vector<1024x8xf32>
    %13 = arith.addf %7, %12 : vector<1024x8xf32>
    %14 = vector.extract_strided_slice %1 {offsets = [0, 2], sizes = [1024, 1], strides = [1, 1]} : vector<1024x3xf32> to vector<1024x1xf32>
    %15 = vector.extract_strided_slice %2 {offsets = [2, 0], sizes = [1, 8], strides = [1, 1]} : vector<3x8xf32> to vector<1x8xf32>
    %16 = vector.broadcast %14 : vector<1024x1xf32> to vector<1024x8xf32>
    %17 = vector.broadcast %15 : vector<1x8xf32> to vector<1024x8xf32>
    %18 = arith.mulf %16, %17 : vector<1024x8xf32>
    %19 = arith.addf %13, %18 : vector<1024x8xf32>
    %c0_4 = arith.constant 0 : index
    %c0_5 = arith.constant 0 : index
    %20 = vector.load %arg3[%c0_4, %c0_5] : memref<1x8xf32, #tpu.memory_space<vmem>>, vector<1x8xf32>
    %21 = vector.broadcast %20 : vector<1x8xf32> to vector<1024x8xf32>
    %22 = arith.addf %19, %21 : vector<1024x8xf32>
    %cst = arith.constant 0.000000e+00 : f32
    %23 = vector.broadcast %cst : f32 to vector<1024x8xf32>
    %24 = arith.maximumf %22, %23 : vector<1024x8xf32>
    %c0_6 = arith.constant 0 : index
    %c0_7 = arith.constant 0 : index
    %25 = vector.load %arg12[%c0_6, %c0_7] : memref<256x1024xf32, #tpu.memory_space<vmem>>, vector<256x1024xf32>
    %cst_8 = arith.constant dense<0.000000e+00> : vector<256x8xf32>
    %26 = tpu.matmul %25, %24, %cst_8 {dimension_numbers = #tpu.dot_dimension_numbers<[1], [0], [0], [1], [0, 0, 1, 1], [], []>} : vector<256x1024xf32>, vector<1024x8xf32>, vector<256x8xf32> -> vector<256x8xf32>
    %c0_9 = arith.constant 0 : index
    %c0_10 = arith.constant 0 : index
    %27 = vector.load %arg4[%c0_9, %c0_10] : memref<8x16xf32, #tpu.memory_space<vmem>>, vector<8x16xf32>
    %cst_11 = arith.constant dense<0.000000e+00> : vector<256x16xf32>
    %28 = tpu.matmul %26, %27, %cst_11 {dimension_numbers = #tpu.dot_dimension_numbers<[1], [0], [0], [1], [0, 0, 1, 1], [], []>} : vector<256x8xf32>, vector<8x16xf32>, vector<256x16xf32> -> vector<256x16xf32>
    %c0_12 = arith.constant 0 : index
    %c0_13 = arith.constant 0 : index
    %29 = vector.load %arg5[%c0_12, %c0_13] : memref<1x16xf32, #tpu.memory_space<vmem>>, vector<1x16xf32>
    %30 = vector.broadcast %29 : vector<1x16xf32> to vector<256x16xf32>
    %31 = arith.addf %28, %30 : vector<256x16xf32>
    %cst_14 = arith.constant 0.000000e+00 : f32
    %32 = vector.broadcast %cst_14 : f32 to vector<256x16xf32>
    %33 = arith.maximumf %31, %32 : vector<256x16xf32>
    %c0_15 = arith.constant 0 : index
    %c0_16 = arith.constant 0 : index
    %34 = vector.load %arg6[%c0_15, %c0_16] : memref<16x32xf32, #tpu.memory_space<vmem>>, vector<16x32xf32>
    %cst_17 = arith.constant dense<0.000000e+00> : vector<256x32xf32>
    %35 = tpu.matmul %33, %34, %cst_17 {dimension_numbers = #tpu.dot_dimension_numbers<[1], [0], [0], [1], [0, 0, 1, 1], [], []>} : vector<256x16xf32>, vector<16x32xf32>, vector<256x32xf32> -> vector<256x32xf32>
    %c0_18 = arith.constant 0 : index
    %c0_19 = arith.constant 0 : index
    %36 = vector.load %arg7[%c0_18, %c0_19] : memref<1x32xf32, #tpu.memory_space<vmem>>, vector<1x32xf32>
    %37 = vector.broadcast %36 : vector<1x32xf32> to vector<256x32xf32>
    %38 = arith.addf %35, %37 : vector<256x32xf32>
    %cst_20 = arith.constant 0.000000e+00 : f32
    %39 = vector.broadcast %cst_20 : f32 to vector<256x32xf32>
    %40 = arith.maximumf %38, %39 : vector<256x32xf32>
    %c0_21 = arith.constant 0 : index
    %c0_22 = arith.constant 0 : index
    %41 = vector.load %arg14[%c0_21, %c0_22] : memref<64x256xf32, #tpu.memory_space<vmem>>, vector<64x256xf32>
    %cst_23 = arith.constant dense<0.000000e+00> : vector<64x32xf32>
    %42 = tpu.matmul %41, %40, %cst_23 {dimension_numbers = #tpu.dot_dimension_numbers<[1], [0], [0], [1], [0, 0, 1, 1], [], []>} : vector<64x256xf32>, vector<256x32xf32>, vector<64x32xf32> -> vector<64x32xf32>
    %c0_24 = arith.constant 0 : index
    %c0_25 = arith.constant 0 : index
    %43 = vector.load %arg8[%c0_24, %c0_25] : memref<32x64xf32, #tpu.memory_space<vmem>>, vector<32x64xf32>
    %cst_26 = arith.constant dense<0.000000e+00> : vector<64x64xf32>
    %44 = tpu.matmul %42, %43, %cst_26 {dimension_numbers = #tpu.dot_dimension_numbers<[1], [0], [0], [1], [0, 0, 1, 1], [], []>} : vector<64x32xf32>, vector<32x64xf32>, vector<64x64xf32> -> vector<64x64xf32>
    %c0_27 = arith.constant 0 : index
    %c0_28 = arith.constant 0 : index
    %45 = vector.load %arg9[%c0_27, %c0_28] : memref<1x64xf32, #tpu.memory_space<vmem>>, vector<1x64xf32>
    %46 = vector.broadcast %45 : vector<1x64xf32> to vector<64x64xf32>
    %47 = arith.addf %44, %46 : vector<64x64xf32>
    %cst_29 = arith.constant 0.000000e+00 : f32
    %48 = vector.broadcast %cst_29 : f32 to vector<64x64xf32>
    %49 = arith.maximumf %47, %48 : vector<64x64xf32>
    %c0_30 = arith.constant 0 : index
    %c0_31 = arith.constant 0 : index
    %50 = vector.load %arg10[%c0_30, %c0_31] : memref<64x128xf32, #tpu.memory_space<vmem>>, vector<64x128xf32>
    %cst_32 = arith.constant dense<0.000000e+00> : vector<64x128xf32>
    %51 = tpu.matmul %49, %50, %cst_32 {dimension_numbers = #tpu.dot_dimension_numbers<[1], [0], [0], [1], [0, 0, 1, 1], [], []>} : vector<64x64xf32>, vector<64x128xf32>, vector<64x128xf32> -> vector<64x128xf32>
    %c0_33 = arith.constant 0 : index
    %c0_34 = arith.constant 0 : index
    %52 = vector.load %arg11[%c0_33, %c0_34] : memref<1x128xf32, #tpu.memory_space<vmem>>, vector<1x128xf32>
    %53 = vector.broadcast %52 : vector<1x128xf32> to vector<64x128xf32>
    %54 = arith.addf %51, %53 : vector<64x128xf32>
    %cst_35 = arith.constant 0.000000e+00 : f32
    %55 = vector.broadcast %cst_35 : f32 to vector<64x128xf32>
    %56 = arith.maximumf %54, %55 : vector<64x128xf32>
    %c0_36 = arith.constant 0 : index
    %c0_37 = arith.constant 0 : index
    %57 = vector.load %arg15[%c0_36, %c0_37] : memref<16x64xf32, #tpu.memory_space<vmem>>, vector<16x64xf32>
    %cst_38 = arith.constant dense<0.000000e+00> : vector<16x128xf32>
    %58 = tpu.matmul %57, %56, %cst_38 {dimension_numbers = #tpu.dot_dimension_numbers<[1], [0], [0], [1], [0, 0, 1, 1], [], []>} : vector<16x64xf32>, vector<64x128xf32>, vector<16x128xf32> -> vector<16x128xf32>
    %c0_39 = arith.constant 0 : index
    %c0_40 = arith.constant 0 : index
    %59 = vector.load %arg13[%c0_39, %c0_40] : memref<16x256xf32, #tpu.memory_space<vmem>>, vector<16x256xf32>
    %cst_41 = arith.constant dense<0.000000e+00> : vector<16x8xf32>
    %60 = tpu.matmul %59, %26, %cst_41 {dimension_numbers = #tpu.dot_dimension_numbers<[1], [0], [0], [1], [0, 0, 1, 1], [], []>} : vector<16x256xf32>, vector<256x8xf32>, vector<16x8xf32> -> vector<16x8xf32>
    %c0_42 = arith.constant 0 : index
    %c0_43 = arith.constant 0 : index
    %61 = vector.load %arg13[%c0_42, %c0_43] : memref<16x256xf32, #tpu.memory_space<vmem>>, vector<16x256xf32>
    %cst_44 = arith.constant dense<0.000000e+00> : vector<16x16xf32>
    %62 = tpu.matmul %61, %33, %cst_44 {dimension_numbers = #tpu.dot_dimension_numbers<[1], [0], [0], [1], [0, 0, 1, 1], [], []>} : vector<16x256xf32>, vector<256x16xf32>, vector<16x16xf32> -> vector<16x16xf32>
    %c0_45 = arith.constant 0 : index
    %c0_46 = arith.constant 0 : index
    %63 = vector.load %arg15[%c0_45, %c0_46] : memref<16x64xf32, #tpu.memory_space<vmem>>, vector<16x64xf32>
    %cst_47 = arith.constant dense<0.000000e+00> : vector<16x32xf32>
    %64 = tpu.matmul %63, %42, %cst_47 {dimension_numbers = #tpu.dot_dimension_numbers<[1], [0], [0], [1], [0, 0, 1, 1], [], []>} : vector<16x64xf32>, vector<64x32xf32>, vector<16x32xf32> -> vector<16x32xf32>
    %c0_48 = arith.constant 0 : index
    %c0_49 = arith.constant 0 : index
    %65 = vector.load %arg15[%c0_48, %c0_49] : memref<16x64xf32, #tpu.memory_space<vmem>>, vector<16x64xf32>
    %cst_50 = arith.constant dense<0.000000e+00> : vector<16x64xf32>
    %66 = tpu.matmul %65, %49, %cst_50 {dimension_numbers = #tpu.dot_dimension_numbers<[1], [0], [0], [1], [0, 0, 1, 1], [], []>} : vector<16x64xf32>, vector<64x64xf32>, vector<16x64xf32> -> vector<16x64xf32>
    %c0_51 = arith.constant 0 : index
    %c0_52 = arith.constant 0 : index
    %67 = vector.load %arg16[%c0_51, %c0_52] : memref<128x128xf32, #tpu.memory_space<vmem>>, vector<128x128xf32>
    %68 = vector.extract_strided_slice %67 {offsets = [0, 0], sizes = [64, 128], strides = [1, 1]} : vector<128x128xf32> to vector<64x128xf32>
    %cst_53 = arith.constant dense<0.000000e+00> : vector<16x128xf32>
    %69 = tpu.matmul %66, %68, %cst_53 {dimension_numbers = #tpu.dot_dimension_numbers<[1], [0], [0], [1], [0, 0, 1, 1], [], []>} : vector<16x64xf32>, vector<64x128xf32>, vector<16x128xf32> -> vector<16x128xf32>
    %70 = vector.extract_strided_slice %67 {offsets = [64, 0], sizes = [32, 128], strides = [1, 1]} : vector<128x128xf32> to vector<32x128xf32>
    %cst_54 = arith.constant dense<0.000000e+00> : vector<16x128xf32>
    %71 = tpu.matmul %64, %70, %cst_54 {dimension_numbers = #tpu.dot_dimension_numbers<[1], [0], [0], [1], [0, 0, 1, 1], [], []>} : vector<16x32xf32>, vector<32x128xf32>, vector<16x128xf32> -> vector<16x128xf32>
    %72 = arith.addf %69, %71 : vector<16x128xf32>
    %73 = vector.extract_strided_slice %67 {offsets = [96, 0], sizes = [16, 128], strides = [1, 1]} : vector<128x128xf32> to vector<16x128xf32>
    %cst_55 = arith.constant dense<0.000000e+00> : vector<16x128xf32>
    %74 = tpu.matmul %62, %73, %cst_55 {dimension_numbers = #tpu.dot_dimension_numbers<[1], [0], [0], [1], [0, 0, 1, 1], [], []>} : vector<16x16xf32>, vector<16x128xf32>, vector<16x128xf32> -> vector<16x128xf32>
    %75 = arith.addf %72, %74 : vector<16x128xf32>
    %76 = vector.extract_strided_slice %67 {offsets = [112, 0], sizes = [8, 128], strides = [1, 1]} : vector<128x128xf32> to vector<8x128xf32>
    %cst_56 = arith.constant dense<0.000000e+00> : vector<16x128xf32>
    %77 = tpu.matmul %60, %76, %cst_56 {dimension_numbers = #tpu.dot_dimension_numbers<[1], [0], [0], [1], [0, 0, 1, 1], [], []>} : vector<16x8xf32>, vector<8x128xf32>, vector<16x128xf32> -> vector<16x128xf32>
    %78 = arith.addf %75, %77 : vector<16x128xf32>
    %c0_57 = arith.constant 0 : index
    %c0_58 = arith.constant 0 : index
    %c0_59 = arith.constant 0 : index
    %79 = vector.load %arg17[%c0_57, %c0_58, %c0_59] : memref<1x16x256xf32, #tpu.memory_space<vmem>>, vector<1x16x128xf32>
    %80 = vector.shape_cast %79 : vector<1x16x128xf32> to vector<16x128xf32>
    %81 = vector.shape_cast %58 : vector<16x128xf32> to vector<1x16x128xf32>
    tpu.vector_store %arg17[%c0_57, %c0_58, %c0_59], %81 {strides = array<i32>} : memref<1x16x256xf32, #tpu.memory_space<vmem>>, vector<1x16x128xf32>,
    %c0_60 = arith.constant 0 : index
    %c0_61 = arith.constant 0 : index
    %c128 = arith.constant 128 : index
    %82 = vector.load %arg17[%c0_60, %c0_61, %c128] : memref<1x16x256xf32, #tpu.memory_space<vmem>>, vector<1x16x128xf32>
    %83 = vector.shape_cast %82 : vector<1x16x128xf32> to vector<16x128xf32>
    %84 = vector.shape_cast %78 : vector<16x128xf32> to vector<1x16x128xf32>
    tpu.vector_store %arg17[%c0_60, %c0_61, %c128], %84 {strides = array<i32>} : memref<1x16x256xf32, #tpu.memory_space<vmem>>, vector<1x16x128xf32>,
    return
  }
  func.func @transform_0(%arg0: i32) -> (i32, i32, i32) {
    %c0_i32 = arith.constant 0 : i32
    %c0_i32_0 = arith.constant 0 : i32
    %c0_i32_1 = arith.constant 0 : i32
    return %arg0, %c0_i32, %c0_i32_0 : i32, i32, i32
  }
  func.func @transform_1(%arg0: i32) -> (i32, i32) {
    %c0_i32 = arith.constant 0 : i32
    %c0_i32_0 = arith.constant 0 : i32
    %c0_i32_1 = arith.constant 0 : i32
    return %c0_i32, %c0_i32_0 : i32, i32
  }
  func.func @transform_2(%arg0: i32) -> (i32, i32) {
    %c0_i32 = arith.constant 0 : i32
    %c0_i32_0 = arith.constant 0 : i32
    %c0_i32_1 = arith.constant 0 : i32
    return %c0_i32, %c0_i32_0 : i32, i32
  }
  func.func @transform_3(%arg0: i32) -> (i32, i32) {
    %c0_i32 = arith.constant 0 : i32
    %c0_i32_0 = arith.constant 0 : i32
    %c0_i32_1 = arith.constant 0 : i32
    return %c0_i32, %c0_i32_0 : i32, i32
  }
  func.func @transform_4(%arg0: i32) -> (i32, i32) {
    %c0_i32 = arith.constant 0 : i32
    %c0_i32_0 = arith.constant 0 : i32
    %c0_i32_1 = arith.constant 0 : i32
    return %c0_i32, %c0_i32_0 : i32, i32
  }
  func.func @transform_5(%arg0: i32) -> (i32, i32) {
    %c0_i32 = arith.constant 0 : i32
    %c0_i32_0 = arith.constant 0 : i32
    %c0_i32_1 = arith.constant 0 : i32
    return %c0_i32, %c0_i32_0 : i32, i32
  }
  func.func @transform_6(%arg0: i32) -> (i32, i32) {
    %c0_i32 = arith.constant 0 : i32
    %c0_i32_0 = arith.constant 0 : i32
    %c0_i32_1 = arith.constant 0 : i32
    return %c0_i32, %c0_i32_0 : i32, i32
  }
  func.func @transform_7(%arg0: i32) -> (i32, i32) {
    %c0_i32 = arith.constant 0 : i32
    %c0_i32_0 = arith.constant 0 : i32
    %c0_i32_1 = arith.constant 0 : i32
    return %c0_i32, %c0_i32_0 : i32, i32
  }
  func.func @transform_8(%arg0: i32) -> (i32, i32) {
    %c0_i32 = arith.constant 0 : i32
    %c0_i32_0 = arith.constant 0 : i32
    %c0_i32_1 = arith.constant 0 : i32
    return %c0_i32, %c0_i32_0 : i32, i32
  }
  func.func @transform_9(%arg0: i32) -> (i32, i32) {
    %c0_i32 = arith.constant 0 : i32
    %c0_i32_0 = arith.constant 0 : i32
    %c0_i32_1 = arith.constant 0 : i32
    return %c0_i32, %c0_i32_0 : i32, i32
  }
  func.func @transform_10(%arg0: i32) -> (i32, i32) {
    %c0_i32 = arith.constant 0 : i32
    %c0_i32_0 = arith.constant 0 : i32
    %c0_i32_1 = arith.constant 0 : i32
    return %c0_i32, %c0_i32_0 : i32, i32
  }
  func.func @transform_11(%arg0: i32) -> (i32, i32) {
    %c0_i32 = arith.constant 0 : i32
    %c0_i32_0 = arith.constant 0 : i32
    %c0_i32_1 = arith.constant 0 : i32
    return %c0_i32, %c0_i32_0 : i32, i32
  }
  func.func @transform_12(%arg0: i32) -> (i32, i32) {
    %c0_i32 = arith.constant 0 : i32
    %c0_i32_0 = arith.constant 0 : i32
    %c0_i32_1 = arith.constant 0 : i32
    return %c0_i32, %c0_i32_0 : i32, i32
  }
  func.func @transform_13(%arg0: i32) -> (i32, i32) {
    %c0_i32 = arith.constant 0 : i32
    %c0_i32_0 = arith.constant 0 : i32
    %c0_i32_1 = arith.constant 0 : i32
    return %c0_i32, %c0_i32_0 : i32, i32
  }
  func.func @transform_14(%arg0: i32) -> (i32, i32) {
    %c0_i32 = arith.constant 0 : i32
    %c0_i32_0 = arith.constant 0 : i32
    %c0_i32_1 = arith.constant 0 : i32
    return %c0_i32, %c0_i32_0 : i32, i32
  }
  func.func @transform_15(%arg0: i32) -> (i32, i32) {
    %c0_i32 = arith.constant 0 : i32
    %c0_i32_0 = arith.constant 0 : i32
    %c0_i32_1 = arith.constant 0 : i32
    return %c0_i32, %c0_i32_0 : i32, i32
  }
  func.func @transform_16(%arg0: i32) -> (i32, i32, i32) {
    %c0_i32 = arith.constant 0 : i32
    %c0_i32_0 = arith.constant 0 : i32
    %c0_i32_1 = arith.constant 0 : i32
    return %arg0, %c0_i32, %c0_i32_0 : i32, i32, i32
  }
}

module attributes {stable_mosaic.version = 11 : i64} {
  func.func @_proj_kernel(%arg0: i32, %arg1: memref<2x512xf32, #tpu.memory_space<vmem>>, %arg2: memref<512x128xf32, #tpu.memory_space<vmem>>, %arg3: memref<1x128xf32, #tpu.memory_space<vmem>>, %arg4: memref<128x128xf32, #tpu.memory_space<vmem>>, %arg5: memref<1x128xf32, #tpu.memory_space<vmem>>, %arg6: memref<2x128xf32, #tpu.memory_space<vmem>>, %arg7: memref<2x128xf32, #tpu.memory_space<vmem>>, %arg8: memref<2x1xf32, #tpu.memory_space<vmem>>) attributes {dimension_semantics = [#tpu.dimension_semantics<arbitrary>], iteration_bounds = array<i64: 8>, scalar_prefetch = 0 : i64, scratch_operands = 2 : i64, tpu.core_type = #tpu.core_type<tc>, window_params = [{transform_indices = @transform_0, window_bounds = array<i64: 2, 512>}, {transform_indices = @transform_1, window_bounds = array<i64: 512, 128>}, {pipeline_mode = #tpu.pipeline_mode<synchronous>, transform_indices = @transform_2, window_bounds = array<i64: 1, 128>}, {pipeline_mode = #tpu.pipeline_mode<synchronous>, transform_indices = @transform_3, window_bounds = array<i64: 128, 128>}, {pipeline_mode = #tpu.pipeline_mode<synchronous>, transform_indices = @transform_4, window_bounds = array<i64: 1, 128>}, {pipeline_mode = #tpu.pipeline_mode<synchronous>, transform_indices = @transform_5, window_bounds = array<i64: 2, 128>}]} {
    %c0_i32 = arith.constant 0 : i32
    %0 = arith.cmpi eq, %arg0, %c0_i32 : i32
    %1 = arith.extui %0 : i1 to i32
    %c0_i32_0 = arith.constant 0 : i32
    %2 = arith.cmpi ne, %1, %c0_i32_0 : i32
    scf.if %2 {
      %cst_14 = arith.constant 0.000000e+00 : f32
      %18 = vector.broadcast %cst_14 : f32 to vector<2x128xf32>
      %c0_15 = arith.constant 0 : index
      %c0_16 = arith.constant 0 : index
      %19 = vector.load %arg7[%c0_15, %c0_16] : memref<2x128xf32, #tpu.memory_space<vmem>>, vector<2x128xf32>
      tpu.vector_store %arg7[%c0_15, %c0_16], %18 {strides = array<i32>} : memref<2x128xf32, #tpu.memory_space<vmem>>, vector<2x128xf32>,
      %cst_17 = arith.constant 0.000000e+00 : f32
      %20 = vector.broadcast %cst_17 : f32 to vector<2x1xf32>
      %c0_18 = arith.constant 0 : index
      %c0_19 = arith.constant 0 : index
      %21 = vector.load %arg8[%c0_18, %c0_19] : memref<2x1xf32, #tpu.memory_space<vmem>>, vector<2x1xf32>
      tpu.vector_store %arg8[%c0_18, %c0_19], %20 {strides = array<i32>} : memref<2x1xf32, #tpu.memory_space<vmem>>, vector<2x1xf32>,
    } else {
    }
    %c0 = arith.constant 0 : index
    %c0_1 = arith.constant 0 : index
    %3 = vector.load %arg1[%c0, %c0_1] : memref<2x512xf32, #tpu.memory_space<vmem>>, vector<2x512xf32>
    %c0_2 = arith.constant 0 : index
    %c0_3 = arith.constant 0 : index
    %4 = vector.load %arg8[%c0_2, %c0_3] : memref<2x1xf32, #tpu.memory_space<vmem>>, vector<2x1xf32>
    %5 = arith.mulf %3, %3 : vector<2x512xf32>
    %cst = arith.constant dense<0.000000e+00> : vector<2xf32>
    %6 = vector.multi_reduction <add>, %5, %cst [1] : vector<2x512xf32> to vector<2xf32>
    %7 = vector.shape_cast %6 : vector<2xf32> to vector<2x1xf32>
    %8 = arith.addf %4, %7 : vector<2x1xf32>
    %c0_4 = arith.constant 0 : index
    %c0_5 = arith.constant 0 : index
    %9 = vector.load %arg8[%c0_4, %c0_5] : memref<2x1xf32, #tpu.memory_space<vmem>>, vector<2x1xf32>
    tpu.vector_store %arg8[%c0_4, %c0_5], %8 {strides = array<i32>} : memref<2x1xf32, #tpu.memory_space<vmem>>, vector<2x1xf32>,
    %c0_6 = arith.constant 0 : index
    %c0_7 = arith.constant 0 : index
    %10 = vector.load %arg7[%c0_6, %c0_7] : memref<2x128xf32, #tpu.memory_space<vmem>>, vector<2x128xf32>
    %c0_8 = arith.constant 0 : index
    %c0_9 = arith.constant 0 : index
    %11 = vector.load %arg2[%c0_8, %c0_9] : memref<512x128xf32, #tpu.memory_space<vmem>>, vector<512x128xf32>
    %cst_10 = arith.constant dense<0.000000e+00> : vector<2x128xf32>
    %12 = tpu.matmul %3, %11, %cst_10 {dimension_numbers = #tpu.dot_dimension_numbers<[1], [0], [0], [1], [0, 0, 1, 1], [], []>} : vector<2x512xf32>, vector<512x128xf32>, vector<2x128xf32> -> vector<2x128xf32>
    %13 = arith.addf %10, %12 : vector<2x128xf32>
    %c0_11 = arith.constant 0 : index
    %c0_12 = arith.constant 0 : index
    %14 = vector.load %arg7[%c0_11, %c0_12] : memref<2x128xf32, #tpu.memory_space<vmem>>, vector<2x128xf32>
    tpu.vector_store %arg7[%c0_11, %c0_12], %13 {strides = array<i32>} : memref<2x128xf32, #tpu.memory_space<vmem>>, vector<2x128xf32>,
    %c7_i32 = arith.constant 7 : i32
    %15 = arith.cmpi eq, %arg0, %c7_i32 : i32
    %16 = arith.extui %15 : i1 to i32
    %c0_i32_13 = arith.constant 0 : i32
    %17 = arith.cmpi ne, %16, %c0_i32_13 : i32
    scf.if %17 {
      %c0_14 = arith.constant 0 : index
      %c0_15 = arith.constant 0 : index
      %18 = vector.load %arg8[%c0_14, %c0_15] : memref<2x1xf32, #tpu.memory_space<vmem>>, vector<2x1xf32>
      %19 = math.sqrt %18 : vector<2x1xf32>
      %cst_16 = arith.constant 9.99999996E-13 : f32
      %20 = vector.broadcast %cst_16 : f32 to vector<2x1xf32>
      %21 = arith.maximumf %19, %20 : vector<2x1xf32>
      %c0_17 = arith.constant 0 : index
      %c0_18 = arith.constant 0 : index
      %22 = vector.load %arg7[%c0_17, %c0_18] : memref<2x128xf32, #tpu.memory_space<vmem>>, vector<2x128xf32>
      %23 = vector.broadcast %21 : vector<2x1xf32> to vector<2x128xf32>
      %24 = arith.divf %22, %23 : vector<2x128xf32>
      %c0_19 = arith.constant 0 : index
      %c0_20 = arith.constant 0 : index
      %25 = vector.load %arg3[%c0_19, %c0_20] : memref<1x128xf32, #tpu.memory_space<vmem>>, vector<1x128xf32>
      %26 = vector.broadcast %25 : vector<1x128xf32> to vector<2x128xf32>
      %27 = arith.addf %24, %26 : vector<2x128xf32>
      %cst_21 = arith.constant 5.000000e-01 : f32
      %28 = vector.broadcast %cst_21 : f32 to vector<2x128xf32>
      %29 = arith.mulf %28, %27 : vector<2x128xf32>
      %cst_22 = arith.constant 0.707106769 : f32
      %30 = vector.broadcast %cst_22 : f32 to vector<2x128xf32>
      %31 = arith.mulf %27, %30 : vector<2x128xf32>
      %cst_23 = arith.constant 0.000000e+00 : f32
      %32 = vector.broadcast %cst_23 : f32 to vector<2x128xf32>
      %33 = arith.cmpf oge, %31, %32 : vector<2x128xf32>
      %cst_24 = arith.constant 1.000000e+00 : f32
      %cst_25 = arith.constant -1.000000e+00 : f32
      %34 = vector.broadcast %cst_24 : f32 to vector<2x128xf32>
      %35 = vector.broadcast %cst_25 : f32 to vector<2x128xf32>
      %36 = arith.select %33, %34, %35 : vector<2x128xi1>, vector<2x128xf32>
      %37 = math.absf %31 : vector<2x128xf32>
      %cst_26 = arith.constant 0.327591091 : f32
      %38 = vector.broadcast %cst_26 : f32 to vector<2x128xf32>
      %39 = arith.mulf %38, %37 : vector<2x128xf32>
      %cst_27 = arith.constant 1.000000e+00 : f32
      %40 = vector.broadcast %cst_27 : f32 to vector<2x128xf32>
      %41 = arith.addf %40, %39 : vector<2x128xf32>
      %cst_28 = arith.constant 1.000000e+00 : f32
      %42 = vector.broadcast %cst_28 : f32 to vector<2x128xf32>
      %43 = arith.divf %42, %41 : vector<2x128xf32>
      %cst_29 = arith.constant 1.06140542 : f32
      %44 = vector.broadcast %cst_29 : f32 to vector<2x128xf32>
      %45 = arith.mulf %43, %44 : vector<2x128xf32>
      %cst_30 = arith.constant -1.45315206 : f32
      %46 = vector.broadcast %cst_30 : f32 to vector<2x128xf32>
      %47 = arith.addf %46, %45 : vector<2x128xf32>
      %48 = arith.mulf %43, %47 : vector<2x128xf32>
      %cst_31 = arith.constant 1.42141378 : f32
      %49 = vector.broadcast %cst_31 : f32 to vector<2x128xf32>
      %50 = arith.addf %49, %48 : vector<2x128xf32>
      %51 = arith.mulf %43, %50 : vector<2x128xf32>
      %cst_32 = arith.constant -0.284496725 : f32
      %52 = vector.broadcast %cst_32 : f32 to vector<2x128xf32>
      %53 = arith.addf %52, %51 : vector<2x128xf32>
      %54 = arith.mulf %43, %53 : vector<2x128xf32>
      %cst_33 = arith.constant 0.254829586 : f32
      %55 = vector.broadcast %cst_33 : f32 to vector<2x128xf32>
      %56 = arith.addf %55, %54 : vector<2x128xf32>
      %57 = arith.mulf %43, %56 : vector<2x128xf32>
      %cst_34 = arith.constant 0.000000e+00 : f32
      %58 = vector.broadcast %cst_34 : f32 to vector<2x128xf32>
      %59 = arith.subf %58, %37 : vector<2x128xf32>
      %60 = arith.mulf %59, %37 : vector<2x128xf32>
      %61 = math.exp %60 : vector<2x128xf32>
      %62 = arith.mulf %57, %61 : vector<2x128xf32>
      %cst_35 = arith.constant 1.000000e+00 : f32
      %63 = vector.broadcast %cst_35 : f32 to vector<2x128xf32>
      %64 = arith.subf %63, %62 : vector<2x128xf32>
      %65 = arith.mulf %36, %64 : vector<2x128xf32>
      %cst_36 = arith.constant 1.000000e+00 : f32
      %66 = vector.broadcast %cst_36 : f32 to vector<2x128xf32>
      %67 = arith.addf %66, %65 : vector<2x128xf32>
      %68 = arith.mulf %29, %67 : vector<2x128xf32>
      %c0_37 = arith.constant 0 : index
      %c0_38 = arith.constant 0 : index
      %69 = vector.load %arg4[%c0_37, %c0_38] : memref<128x128xf32, #tpu.memory_space<vmem>>, vector<128x128xf32>
      %cst_39 = arith.constant dense<0.000000e+00> : vector<2x128xf32>
      %70 = tpu.matmul %68, %69, %cst_39 {dimension_numbers = #tpu.dot_dimension_numbers<[1], [0], [0], [1], [0, 0, 1, 1], [], []>} : vector<2x128xf32>, vector<128x128xf32>, vector<2x128xf32> -> vector<2x128xf32>
      %c0_40 = arith.constant 0 : index
      %c0_41 = arith.constant 0 : index
      %71 = vector.load %arg5[%c0_40, %c0_41] : memref<1x128xf32, #tpu.memory_space<vmem>>, vector<1x128xf32>
      %72 = vector.broadcast %71 : vector<1x128xf32> to vector<2x128xf32>
      %73 = arith.addf %70, %72 : vector<2x128xf32>
      %c0_42 = arith.constant 0 : index
      %c0_43 = arith.constant 0 : index
      %74 = vector.load %arg6[%c0_42, %c0_43] : memref<2x128xf32, #tpu.memory_space<vmem>>, vector<2x128xf32>
      tpu.vector_store %arg6[%c0_42, %c0_43], %73 {strides = array<i32>} : memref<2x128xf32, #tpu.memory_space<vmem>>, vector<2x128xf32>,
    } else {
    }
    return
  }
  func.func @transform_0(%arg0: i32) -> (i32, i32) {
    %c0_i32 = arith.constant 0 : i32
    %c0_i32_0 = arith.constant 0 : i32
    return %c0_i32, %arg0 : i32, i32
  }
  func.func @transform_1(%arg0: i32) -> (i32, i32) {
    %c0_i32 = arith.constant 0 : i32
    %c0_i32_0 = arith.constant 0 : i32
    return %arg0, %c0_i32 : i32, i32
  }
  func.func @transform_2(%arg0: i32) -> (i32, i32) {
    %c0_i32 = arith.constant 0 : i32
    %c0_i32_0 = arith.constant 0 : i32
    %c0_i32_1 = arith.constant 0 : i32
    return %c0_i32, %c0_i32_0 : i32, i32
  }
  func.func @transform_3(%arg0: i32) -> (i32, i32) {
    %c0_i32 = arith.constant 0 : i32
    %c0_i32_0 = arith.constant 0 : i32
    %c0_i32_1 = arith.constant 0 : i32
    return %c0_i32, %c0_i32_0 : i32, i32
  }
  func.func @transform_4(%arg0: i32) -> (i32, i32) {
    %c0_i32 = arith.constant 0 : i32
    %c0_i32_0 = arith.constant 0 : i32
    %c0_i32_1 = arith.constant 0 : i32
    return %c0_i32, %c0_i32_0 : i32, i32
  }
  func.func @transform_5(%arg0: i32) -> (i32, i32) {
    %c0_i32 = arith.constant 0 : i32
    %c0_i32_0 = arith.constant 0 : i32
    %c0_i32_1 = arith.constant 0 : i32
    return %c0_i32, %c0_i32_0 : i32, i32
  }
}

</mosaic_0001>

<llo_original>
// kernel: cqa_clip_forward.3
$region0: #{cqa_clip_forward.3}
  #allocation0 [shape = 'u32[]', space=smem, size = 0x4, offset = 0x4, fixed_abs, tag = 'smem constant byte address 0x4 - core index']
  #allocation1 [shape = 'u32[144,128]{1,0:T(1,128)}', space=vmem, size = 0x12000, scoped, tag = 'internal scratch']
  #allocation2 [shape = 'f32[2,128]{1,0:T(2,128)}', space=vmem, size = 0x400, scoped, tag = 'scratch operand']
  #allocation3 [shape = 'f32[2,1]{1,0:T(2,128)}', space=vmem, size = 0x400, scoped, tag = 'scratch operand']
  %s0 = inlined_call_operand.vmem [shape: f32[2,4096], index: 0, kind: input, shape index: {}]
  %s1 = inlined_call_operand.vmem [shape: f32[4096,128], index: 1, kind: input, shape index: {}]
  %s2 = inlined_call_operand.vmem [shape: f32[1,128], index: 2, kind: input, shape index: {}]
  %s3 = inlined_call_operand.vmem [shape: f32[128,128], index: 3, kind: input, shape index: {}]
  %s4 = inlined_call_operand.vmem [shape: f32[1,128], index: 4, kind: input, shape index: {}]
  %s5 = inlined_call_operand.hbm [shape: f32[2,128], index: 5, kind: output, shape index: {}]
  %s6 = sld [smem:[#allocation0]]
  $region61: #{cqa_clip_forward.3} parent=0
    _
  %s8 = ssub.s32 1, %s6
  %s9 = scalar_select 0, %s8, %s6
  $region1: #{cqa_clip_forward.3} parent=0
    #allocation4 [shape = 'u8[1024]{0}', space=vmem, size = 0x400, scoped, tag = 'output window, operand 0, single buffered']
    #allocation5 [shape = 's32[2]{0}', space=sflag, size = 0x8, scoped, tag = 'scoped memory for cqa_clip_forward.3']
    %10 = vsyncpa [#allocation5], 0
    loop: start=0, step=1, limit=10
    $region2: #{cqa_clip_forward.3} parent=1 // loop_pre_header
      _
    $region3: #{cqa_clip_forward.3} parent=1 // loop_header
      %s12 = sphi 0, %s16
      %p13 = scmp.ge.s32.totalorder %s12, 10
      %s22 = sphi 0, %s24
      %s25 = sphi 0, %s22
      %s26 = sphi 0, %s25
      %s42 = sphi 0, %s26
      %s48 = sphi 0, %s50
      %s51 = sphi 0, %s48
      %s52 = sphi 0, %s51
      %s68 = sphi 0, %s52
      %s72 = sphi 0, %s72
      %s74 = sphi 0, %s72
      %s75 = sphi 0, %s74
      %s89 = sphi 0, %s75
      %s93 = sphi 0, %s93
      %s95 = sphi 0, %s93
      %s96 = sphi 0, %s95
      %s110 = sphi 0, %s96
      %s114 = sphi 0, %s114
      %s116 = sphi 0, %s114
      %s117 = sphi 0, %s116
      %s131 = sphi 0, %s117
      %s135 = sphi 0, %s135
      %s137 = sphi 0, %s135
      %s138 = sphi 0, %s137
      %s152 = sphi 0, %s138
    $region4: #{cqa_clip_forward.3} parent=1 // loop_header_branch
      %15 = sbr.rel (%p13) target = $region8
    $region5: #{cqa_clip_forward.3} parent=1 // loop_body
      %s17 = ssub.s32 %s12, 1
      %s18 = ssub.s32 %s12, 2
      %s19 = sadd.s32 %s12, 1
      %s20 = ssub.s32 %s12, %s19
      %p21 = scmp.eq.s32.totalorder %s20, 0
      %s23 = sadd.s32 %s22, 1
      %s24 = scalar_select %p21, %s22, %s23
      %p27 = pneg %p21
      %p28 = scmp.eq.s32.totalorder %s12, 7
      %p29 = por %p27, %p28
      %p30 = scmp.ne.s32.totalorder %s22, %s25
      %p31 = scmp.eq.s32.totalorder %s12, 0
      %p32 = por %p30, %p31
      %p33 = scmp.ne.s32.totalorder %s22, %s25
      %p34 = scmp.eq.s32.totalorder %s17, 7
      %p35 = por %p33, %p34
      %p36 = scmp.ne.s32.totalorder %s25, %s26
      %p37 = scmp.eq.s32.totalorder %s17, 0
      %p38 = por %p36, %p37
      %p39 = scmp.ne.s32.totalorder %s25, %s26
      %p40 = scmp.eq.s32.totalorder %s18, 7
      %p41 = por %p39, %p40
      %p43 = scmp.ne.s32.totalorder %s26, %s42
      %p44 = scmp.eq.s32.totalorder %s18, 0
      %p45 = por %p43, %p44
      %s46 = ssub.s32 %s12, %s19
      %p47 = scmp.eq.s32.totalorder %s46, 0
      %s49 = sadd.s32 %s48, 1
      %s50 = scalar_select %p47, %s48, %s49
      %p53 = pneg %p47
      %p54 = scmp.eq.s32.totalorder %s12, 7
      %p55 = por %p53, %p54
      %p56 = scmp.ne.s32.totalorder %s48, %s51
      %p57 = scmp.eq.s32.totalorder %s12, 0
      %p58 = por %p56, %p57
      %p59 = scmp.ne.s32.totalorder %s48, %s51
      %p60 = scmp.eq.s32.totalorder %s17, 7
      %p61 = por %p59, %p60
      %p62 = scmp.ne.s32.totalorder %s51, %s52
      %p63 = scmp.eq.s32.totalorder %s17, 0
      %p64 = por %p62, %p63
      %p65 = scmp.ne.s32.totalorder %s51, %s52
      %p66 = scmp.eq.s32.totalorder %s18, 7
      %p67 = por %p65, %p66
      %p69 = scmp.ne.s32.totalorder %s52, %s68
      %p70 = scmp.eq.s32.totalorder %s18, 0
      %p71 = por %p69, %p70
      %s73 = sadd.s32 %s72, 1
      %p76 = scmp.eq.s32.totalorder %s12, 7
      %p77 = scmp.ne.s32.totalorder %s72, %s74
      %p78 = scmp.eq.s32.totalorder %s12, 0
      %p79 = por %p77, %p78
      %p80 = scmp.ne.s32.totalorder %s72, %s74
      %p81 = scmp.eq.s32.totalorder %s17, 7
      %p82 = por %p80, %p81
      %p83 = scmp.ne.s32.totalorder %s74, %s75
      %p84 = scmp.eq.s32.totalorder %s17, 0
      %p85 = por %p83, %p84
      %p86 = scmp.ne.s32.totalorder %s74, %s75
      %p87 = scmp.eq.s32.totalorder %s18, 7
      %p88 = por %p86, %p87
      %p90 = scmp.ne.s32.totalorder %s75, %s89
      %p91 = scmp.eq.s32.totalorder %s18, 0
      %p92 = por %p90, %p91
      %s94 = sadd.s32 %s93, 1
      %p97 = scmp.eq.s32.totalorder %s12, 7
      %p98 = scmp.ne.s32.totalorder %s93, %s95
      %p99 = scmp.eq.s32.totalorder %s12, 0
      %p100 = por %p98, %p99
      %p101 = scmp.ne.s32.totalorder %s93, %s95
      %p102 = scmp.eq.s32.totalorder %s17, 7
      %p103 = por %p101, %p102
      %p104 = scmp.ne.s32.totalorder %s95, %s96
      %p105 = scmp.eq.s32.totalorder %s17, 0
      %p106 = por %p104, %p105
      %p107 = scmp.ne.s32.totalorder %s95, %s96
      %p108 = scmp.eq.s32.totalorder %s18, 7
      %p109 = por %p107, %p108
      %p111 = scmp.ne.s32.totalorder %s96, %s110
      %p112 = scmp.eq.s32.totalorder %s18, 0
      %p113 = por %p111, %p112
      %s115 = sadd.s32 %s114, 1
      %p118 = scmp.eq.s32.totalorder %s12, 7
      %p119 = scmp.ne.s32.totalorder %s114, %s116
      %p120 = scmp.eq.s32.totalorder %s12, 0
      %p121 = por %p119, %p120
      %p122 = scmp.ne.s32.totalorder %s114, %s116
      %p123 = scmp.eq.s32.totalorder %s17, 7
      %p124 = por %p122, %p123
      %p125 = scmp.ne.s32.totalorder %s116, %s117
      %p126 = scmp.eq.s32.totalorder %s17, 0
      %p127 = por %p125, %p126
      %p128 = scmp.ne.s32.totalorder %s116, %s117
      %p129 = scmp.eq.s32.totalorder %s18, 7
      %p130 = por %p128, %p129
      %p132 = scmp.ne.s32.totalorder %s117, %s131
      %p133 = scmp.eq.s32.totalorder %s18, 0
      %p134 = por %p132, %p133
      %s136 = sadd.s32 %s135, 1
      %p139 = scmp.eq.s32.totalorder %s12, 7
      %p140 = scmp.ne.s32.totalorder %s135, %s137
      %p141 = scmp.eq.s32.totalorder %s12, 0
      %p142 = por %p140, %p141
      %p143 = scmp.ne.s32.totalorder %s135, %s137
      %p144 = scmp.eq.s32.totalorder %s17, 7
      %p145 = por %p143, %p144
      %p146 = scmp.ne.s32.totalorder %s137, %s138
      %p147 = scmp.eq.s32.totalorder %s17, 0
      %p148 = por %p146, %p147
      %p149 = scmp.ne.s32.totalorder %s137, %s138
      %p150 = scmp.eq.s32.totalorder %s18, 7
      %p151 = por %p149, %p150
      %p153 = scmp.ne.s32.totalorder %s138, %s152
      %p154 = scmp.eq.s32.totalorder %s18, 0
      %p155 = por %p153, %p154
      %p156 = scmp.le.s32.totalorder 1, %s12
      %p157 = scmp.lt.s32.totalorder %s12, 9
      %p158 = pnand %p156, %p157
      %p159 = pneg %p158
      // Predicated region
      $region9: #{cqa_clip_forward.3} parent=5 // pred_check
        _
      $region10: #{cqa_clip_forward.3} parent=5 // pred_check_branch
        %161 = sbr.rel (%p158) target = $region12
      $region11: #{cqa_clip_forward.3} parent=5 // pred_region
        %s162 = ssub.s32 %s12, 1
        // Predicated region
        $region13: #{cqa_clip_forward.3} parent=11 // pred_check
          %p163 = pneg %p85
        $region14: #{cqa_clip_forward.3} parent=11 // pred_check_branch
          %165 = sbr.rel (%p163) target = $region16
        $region15: #{cqa_clip_forward.3} parent=11 // pred_region
          _
        $region16: #{cqa_clip_forward.3} parent=11 // pred_fallthru
          _
        // Predicated region
        $region17: #{cqa_clip_forward.3} parent=11 // pred_check
          %p166 = pneg %p106
        $region18: #{cqa_clip_forward.3} parent=11 // pred_check_branch
          %168 = sbr.rel (%p166) target = $region20
        $region19: #{cqa_clip_forward.3} parent=11 // pred_region
          _
        $region20: #{cqa_clip_forward.3} parent=11 // pred_fallthru
          _
        // Predicated region
        $region21: #{cqa_clip_forward.3} parent=11 // pred_check
          %p169 = pneg %p127
        $region22: #{cqa_clip_forward.3} parent=11 // pred_check_branch
          %171 = sbr.rel (%p169) target = $region24
        $region23: #{cqa_clip_forward.3} parent=11 // pred_region
          _
        $region24: #{cqa_clip_forward.3} parent=11 // pred_fallthru
          _
      $region12: #{cqa_clip_forward.3} parent=5 // pred_fallthru
        _
      %p172 = scmp.lt.s32.totalorder %s12, 8
      // Predicated region
      $region25: #{cqa_clip_forward.3} parent=5 // pred_check
        %p173 = pneg %p172
      $region26: #{cqa_clip_forward.3} parent=5 // pred_check_branch
        %175 = sbr.rel (%p173) target = $region28
      $region27: #{cqa_clip_forward.3} parent=5 // pred_region
        // Predicated region
        $region29: #{cqa_clip_forward.3} parent=27 // pred_check
          %p176 = pneg %p32
        $region30: #{cqa_clip_forward.3} parent=27 // pred_check_branch
          %178 = sbr.rel (%p176) target = $region32
        $region31: #{cqa_clip_forward.3} parent=27 // pred_region
          %s179 = smul.u32 4, %s12
          %p180 = scmp.lt.s32.totalorder %s179, 31
          %s181 = scalar_select %p180, %s179, 31
          %s182 = smul.addr %s181, 2
          %s183 = scalar_lea.vmem %s0, %s182
          %s184 = smul.u32 4, %s12
        $region32: #{cqa_clip_forward.3} parent=27 // pred_fallthru
          _
        // Predicated region
        $region33: #{cqa_clip_forward.3} parent=27 // pred_check
          %p185 = pneg %p58
        $region34: #{cqa_clip_forward.3} parent=27 // pred_check_branch
          %187 = sbr.rel (%p185) target = $region36
        $region35: #{cqa_clip_forward.3} parent=27 // pred_region
          %s188 = smul.u32 64, %s12
          %p189 = scmp.lt.s32.totalorder %s188, 511
          %s190 = scalar_select %p189, %s188, 511
          %s191 = smul.addr %s190, 8
          %s192 = scalar_lea.vmem %s1, %s191
          %s193 = smul.u32 64, %s12
        $region36: #{cqa_clip_forward.3} parent=27 // pred_fallthru
          _
      $region28: #{cqa_clip_forward.3} parent=5 // pred_fallthru
        _
      %p194 = scmp.le.s32.totalorder 1, %s12
      %p195 = scmp.lt.s32.totalorder %s12, 9
      %p196 = pnand %p194, %p195
      %p197 = pneg %p196
      // Predicated region
      $region37: #{cqa_clip_forward.3} parent=5 // pred_check
        _
      $region38: #{cqa_clip_forward.3} parent=5 // pred_check_branch
        %199 = sbr.rel (%p196) target = $region40
      $region39: #{cqa_clip_forward.3} parent=5 // pred_region
        %s200 = ssub.s32 %s12, 1
        %s201 = smul.u32 4, %s17
        %p202 = scmp.lt.s32.totalorder %s201, 31
        %s203 = scalar_select %p202, %s201, 31
        %s204 = smul.addr %s203, 2
        %s205 = scalar_lea.vmem %s0, %s204
        %p206 = pneg %p38
        %p207 = pneg %p35
        %s208 = smul.u32 64, %s17
        %p209 = scmp.lt.s32.totalorder %s208, 511
        %s210 = scalar_select %p209, %s208, 511
        %s211 = smul.addr %s210, 8
        %s212 = scalar_lea.vmem %s1, %s211
        %p213 = pneg %p64
        %p214 = pneg %p61
        %p215 = pneg %p85
        %p216 = pneg %p82
        %p217 = pneg %p106
        %p218 = pneg %p103
        %p219 = pneg %p127
        %p220 = pneg %p124
        %p221 = pneg %p148
        %p222 = pneg %p145
        %s223 = smul.u32 4, %s17
        %p224 = scmp.lt.s32.totalorder %s223, 31
        %s225 = scalar_select %p224, %s223, 31
        %s226 = smul.addr %s225, 2
        %s227 = scalar_lea.vmem %s0, %s226
        %s228 = smul.u32 4, %s17
        %s229 = smul.u32 64, %s17
        %p230 = scmp.lt.s32.totalorder %s229, 511
        %s231 = scalar_select %p230, %s229, 511
        %s232 = smul.addr %s231, 8
        %s233 = scalar_lea.vmem %s1, %s232
        %s234 = smul.u32 64, %s17
        %p235 = scmp.eq.s32.totalorder %s17, 0
        // Predicated region
        $region41: #{cqa_clip_forward.3} parent=39 // pred_check
          %p236 = pneg %p235
        $region42: #{cqa_clip_forward.3} parent=39 // pred_check_branch
          %238 = sbr.rel (%p236) target = $region44
        $region43: #{cqa_clip_forward.3} parent=39 // pred_region
          %239 = vst [vmem:[#allocation2] sm:$0x3] 0.0
          %vm240 = vcmask 1024
          %241 = vst.msk [vmem:[#allocation3] sm:$0x3] %vm240, 0.0
        $region44: #{cqa_clip_forward.3} parent=39 // pred_fallthru
          _
        %v242 = vld [vmem:[%s227] sm:$0xff]
        %v243 = vld [vmem:[#allocation3] sm:$0x3]
        %v244 = vmul.f32 %v242, %v242
        %v246 = vcombine.high %v244, %v244
        %v248 = vunpack.c.l.s4 1983009808
        %v249 = vunpack.c.0.s8 %v248
        %v250 = vlaneseq
        %v251 = vshrl.u32 %v250, 7
        %v252 = vsub.s32 %v249, %v251
        %v253 = vrot.slane %v244, %v252
        %v255 = vunpack.c.l.s4 1983009808
        %v256 = vunpack.c.0.s8 %v255
        %v257 = vlaneseq
        %v258 = vshrl.u32 %v257, 7
        %v259 = vsub.s32 %v256, %v258
        %v260 = vrot.slane %v246, %v259
        %v261 = vcombine.high %v253, %v253
        %v262 = vcombine.high %v260, %v260
        %vm267 = vcmask 1041408
        %v268 = vsel %vm267, %v253, 0.0
        %v269 = vsel %vm267, %v261, 0.0
        %v270 = vadd.f32 %v268, %v269
        %v271 = vsel %vm267, %v260, 0.0
        %v272 = vadd.f32 %v270, %v271
        %v273 = vsel %vm267, %v262, 0.0
        %v274 = vadd.f32 %v272, %v273
        %275 = vadd.xlane.f32.xlu0 %v274
        %v276 = vpop.xlane.xlu0 %275
        %v277 = vadd.f32 %v243, %v276
        %vm278 = vcmask 1024
        %279 = vst.msk [vmem:[#allocation3] sm:$0x3] %vm278, %v277
        %v280 = vld [vmem:[#allocation2] sm:$0x3]
        %v281 = vld [vmem:[%s233] sm:$0xff]
        %v282 = vld [vmem:[%s233 + $0x8] sm:$0xff]
        %v283 = vld [vmem:[%s233 + $0x10] sm:$0xff]
        %v284 = vld [vmem:[%s233 + $0x18] sm:$0xff]
        %v285 = vld [vmem:[%s233 + $0x20] sm:$0xff]
        %v286 = vld [vmem:[%s233 + $0x28] sm:$0xff]
        %v287 = vld [vmem:[%s233 + $0x30] sm:$0xff]
        %v288 = vld [vmem:[%s233 + $0x38] sm:$0xff]
        %v289 = vld [vmem:[%s233 + $0x40] sm:$0xff]
        %v290 = vld [vmem:[%s233 + $0x48] sm:$0xff]
        %v291 = vld [vmem:[%s233 + $0x50] sm:$0xff]
        %v292 = vld [vmem:[%s233 + $0x58] sm:$0xff]
        %v293 = vld [vmem:[%s233 + $0x60] sm:$0xff]
        %v294 = vld [vmem:[%s233 + $0x68] sm:$0xff]
        %v295 = vld [vmem:[%s233 + $0x70] sm:$0xff]
        %v296 = vld [vmem:[%s233 + $0x78] sm:$0xff]
        %v297 = vld [vmem:[%s233 + $0x80] sm:$0xff]
        %v298 = vld [vmem:[%s233 + $0x88] sm:$0xff]
        %v299 = vld [vmem:[%s233 + $0x90] sm:$0xff]
        %v300 = vld [vmem:[%s233 + $0x98] sm:$0xff]
        %v301 = vld [vmem:[%s233 + $0xa0] sm:$0xff]
        %v302 = vld [vmem:[%s233 + $0xa8] sm:$0xff]
        %v303 = vld [vmem:[%s233 + $0xb0] sm:$0xff]
        %v304 = vld [vmem:[%s233 + $0xb8] sm:$0xff]
        %v305 = vld [vmem:[%s233 + $0xc0] sm:$0xff]
        %v306 = vld [vmem:[%s233 + $0xc8] sm:$0xff]
        %v307 = vld [vmem:[%s233 + $0xd0] sm:$0xff]
        %v308 = vld [vmem:[%s233 + $0xd8] sm:$0xff]
        %v309 = vld [vmem:[%s233 + $0xe0] sm:$0xff]
        %v310 = vld [vmem:[%s233 + $0xe8] sm:$0xff]
        %v311 = vld [vmem:[%s233 + $0xf0] sm:$0xff]
        %v312 = vld [vmem:[%s233 + $0xf8] sm:$0xff]
        %v313 = vld [vmem:[%s233 + $0x100] sm:$0xff]
        %v314 = vld [vmem:[%s233 + $0x108] sm:$0xff]
        %v315 = vld [vmem:[%s233 + $0x110] sm:$0xff]
        %v316 = vld [vmem:[%s233 + $0x118] sm:$0xff]
        %v317 = vld [vmem:[%s233 + $0x120] sm:$0xff]
        %v318 = vld [vmem:[%s233 + $0x128] sm:$0xff]
        %v319 = vld [vmem:[%s233 + $0x130] sm:$0xff]
        %v320 = vld [vmem:[%s233 + $0x138] sm:$0xff]
        %v321 = vld [vmem:[%s233 + $0x140] sm:$0xff]
        %v322 = vld [vmem:[%s233 + $0x148] sm:$0xff]
        %v323 = vld [vmem:[%s233 + $0x150] sm:$0xff]
        %v324 = vld [vmem:[%s233 + $0x158] sm:$0xff]
        %v325 = vld [vmem:[%s233 + $0x160] sm:$0xff]
        %v326 = vld [vmem:[%s233 + $0x168] sm:$0xff]
        %v327 = vld [vmem:[%s233 + $0x170] sm:$0xff]
        %v328 = vld [vmem:[%s233 + $0x178] sm:$0xff]
        %v329 = vld [vmem:[%s233 + $0x180] sm:$0xff]
        %v330 = vld [vmem:[%s233 + $0x188] sm:$0xff]
        %v331 = vld [vmem:[%s233 + $0x190] sm:$0xff]
        %v332 = vld [vmem:[%s233 + $0x198] sm:$0xff]
        %v333 = vld [vmem:[%s233 + $0x1a0] sm:$0xff]
        %v334 = vld [vmem:[%s233 + $0x1a8] sm:$0xff]
        %v335 = vld [vmem:[%s233 + $0x1b0] sm:$0xff]
        %v336 = vld [vmem:[%s233 + $0x1b8] sm:$0xff]
        %v337 = vld [vmem:[%s233 + $0x1c0] sm:$0xff]
        %v338 = vld [vmem:[%s233 + $0x1c8] sm:$0xff]
        %v339 = vld [vmem:[%s233 + $0x1d0] sm:$0xff]
        %v340 = vld [vmem:[%s233 + $0x1d8] sm:$0xff]
        %v341 = vld [vmem:[%s233 + $0x1e0] sm:$0xff]
        %v342 = vld [vmem:[%s233 + $0x1e8] sm:$0xff]
        %v343 = vld [vmem:[%s233 + $0x1f0] sm:$0xff]
        %v344 = vld [vmem:[%s233 + $0x1f8] sm:$0xff]
        %v346 = vcombine.high %v242, %v242
        %v348 = vunpack.c.l.s4 1983009808
        %v349 = vunpack.c.0.s8 %v348
        %v350 = vlaneseq
        %v351 = vshrl.u32 %v350, 7
        %v352 = vsub.s32 %v349, %v351
        %v353 = vrot.slane %v242, %v352
        %v355 = vunpack.c.l.s4 1983009808
        %v356 = vunpack.c.0.s8 %v355
        %v357 = vlaneseq
        %v358 = vshrl.u32 %v357, 7
        %v359 = vsub.s32 %v356, %v358
        %v360 = vrot.slane %v346, %v359
        %v361 = vcombine.high %v353, %v353
        %v362 = vcombine.high %v360, %v360
        %367 = vmatprep.subr.mxu0 0.0
        %368 = vmatpush1.msra.mxu0 %v281
        %369 = vmatprep.subr.mxu0 0.0
        %370 = vmatpush1.msra.mxu0 %v282
        %371 = vmatprep.subr.mxu0 0.0
        %372 = vmatpush1.msra.mxu0 %v283
        %373 = vmatprep.subr.mxu0 0.0
        %374 = vmatpush1.msra.mxu0 %v284
        %375 = vmatprep.subr.mxu0 0.0
        %376 = vmatpush1.msra.mxu0 %v285
        %377 = vmatprep.subr.mxu0 0.0
        %378 = vmatpush1.msra.mxu0 %v286
        %379 = vmatprep.subr.mxu0 0.0
        %380 = vmatpush1.msra.mxu0 %v287
        %381 = vmatprep.subr.mxu0 0.0
        %382 = vmatpush1.msra.mxu0 %v288
        %383 = vmatprep.subr.mxu0 0.0
        %384 = vmatpush1.msra.mxu0 %v289
        %385 = vmatprep.subr.mxu0 0.0
        %386 = vmatpush1.msra.mxu0 %v290
        %387 = vmatprep.subr.mxu0 0.0
        %388 = vmatpush1.msra.mxu0 %v291
        %389 = vmatprep.subr.mxu0 0.0
        %390 = vmatpush1.msra.mxu0 %v292
        %391 = vmatprep.subr.mxu0 0.0
        %392 = vmatpush1.msra.mxu0 %v293
        %393 = vmatprep.subr.mxu0 0.0
        %394 = vmatpush1.msra.mxu0 %v294
        %395 = vmatprep.subr.mxu0 0.0
        %396 = vmatpush1.msra.mxu0 %v295
        %397 = vmatprep.subr.mxu0 0.0
        %398 = vmatpush1.msra.mxu0 %v296
        %399 = vmatprep.subr.mxu0 0.0
        %400 = vmatpush1.msra.mxu0 %v297
        %401 = vmatprep.subr.mxu0 0.0
        %402 = vmatpush1.msra.mxu0 %v298
        %403 = vmatprep.subr.mxu0 0.0
        %404 = vmatpush1.msra.mxu0 %v299
        %405 = vmatprep.subr.mxu0 0.0
        %406 = vmatpush1.msra.mxu0 %v300
        %407 = vmatprep.subr.mxu0 0.0
        %408 = vmatpush1.msra.mxu0 %v301
        %409 = vmatprep.subr.mxu0 0.0
        %410 = vmatpush1.msra.mxu0 %v302
        %411 = vmatprep.subr.mxu0 0.0
        %412 = vmatpush1.msra.mxu0 %v303
        %413 = vmatprep.subr.mxu0 0.0
        %414 = vmatpush1.msra.mxu0 %v304
        %415 = vmatprep.subr.mxu0 0.0
        %416 = vmatpush1.msra.mxu0 %v305
        %417 = vmatprep.subr.mxu0 0.0
        %418 = vmatpush1.msra.mxu0 %v306
        %419 = vmatprep.subr.mxu0 0.0
        %420 = vmatpush1.msra.mxu0 %v307
        %421 = vmatprep.subr.mxu0 0.0
        %422 = vmatpush1.msra.mxu0 %v308
        %423 = vmatprep.subr.mxu0 0.0
        %424 = vmatpush1.msra.mxu0 %v309
        %425 = vmatprep.subr.mxu0 0.0
        %426 = vmatpush1.msra.mxu0 %v310
        %427 = vmatprep.subr.mxu0 0.0
        %428 = vmatpush1.msra.mxu0 %v311
        %429 = vmatprep.subr.mxu0 0.0
        %430 = vmatpush1.msra.mxu0 %v312
        %431 = vmatprep.mubr.f32.mxu0 %v361
        %432 = vmatmul.mubr.f32.gmra.mrb[0].mxu0 %v353
        %v433 = vpop.f32.mrb[0].mxu0
        %v434 = vadd.f32 0.0, %v433
        %v435 = vpop.f32.mrb[0].mxu0
        %436 = vdwg.mxu0
        %437 = vmatprep.subr.mxu0 0.0
        %438 = vmatpush1.msra.mxu0 %v313
        %439 = vmatprep.subr.mxu0 0.0
        %440 = vmatpush1.msra.mxu0 %v314
        %441 = vmatprep.subr.mxu0 0.0
        %442 = vmatpush1.msra.mxu0 %v315
        %443 = vmatprep.subr.mxu0 0.0
        %444 = vmatpush1.msra.mxu0 %v316
        %445 = vmatprep.subr.mxu0 0.0
        %446 = vmatpush1.msra.mxu0 %v317
        %447 = vmatprep.subr.mxu0 0.0
        %448 = vmatpush1.msra.mxu0 %v318
        %449 = vmatprep.subr.mxu0 0.0
        %450 = vmatpush1.msra.mxu0 %v319
        %451 = vmatprep.subr.mxu0 0.0
        %452 = vmatpush1.msra.mxu0 %v320
        %453 = vmatprep.subr.mxu0 0.0
        %454 = vmatpush1.msra.mxu0 %v321
        %455 = vmatprep.subr.mxu0 0.0
        %456 = vmatpush1.msra.mxu0 %v322
        %457 = vmatprep.subr.mxu0 0.0
        %458 = vmatpush1.msra.mxu0 %v323
        %459 = vmatprep.subr.mxu0 0.0
        %460 = vmatpush1.msra.mxu0 %v324
        %461 = vmatprep.subr.mxu0 0.0
        %462 = vmatpush1.msra.mxu0 %v325
        %463 = vmatprep.subr.mxu0 0.0
        %464 = vmatpush1.msra.mxu0 %v326
        %465 = vmatprep.subr.mxu0 0.0
        %466 = vmatpush1.msra.mxu0 %v327
        %467 = vmatprep.subr.mxu0 0.0
        %468 = vmatpush1.msra.mxu0 %v328
        %469 = vmatprep.subr.mxu0 0.0
        %470 = vmatpush1.msra.mxu0 %v329
        %471 = vmatprep.subr.mxu0 0.0
        %472 = vmatpush1.msra.mxu0 %v330
        %473 = vmatprep.subr.mxu0 0.0
        %474 = vmatpush1.msra.mxu0 %v331
        %475 = vmatprep.subr.mxu0 0.0
        %476 = vmatpush1.msra.mxu0 %v332
        %477 = vmatprep.subr.mxu0 0.0
        %478 = vmatpush1.msra.mxu0 %v333
        %479 = vmatprep.subr.mxu0 0.0
        %480 = vmatpush1.msra.mxu0 %v334
        %481 = vmatprep.subr.mxu0 0.0
        %482 = vmatpush1.msra.mxu0 %v335
        %483 = vmatprep.subr.mxu0 0.0
        %484 = vmatpush1.msra.mxu0 %v336
        %485 = vmatprep.subr.mxu0 0.0
        %486 = vmatpush1.msra.mxu0 %v337
        %487 = vmatprep.subr.mxu0 0.0
        %488 = vmatpush1.msra.mxu0 %v338
        %489 = vmatprep.subr.mxu0 0.0
        %490 = vmatpush1.msra.mxu0 %v339
        %491 = vmatprep.subr.mxu0 0.0
        %492 = vmatpush1.msra.mxu0 %v340
        %493 = vmatprep.subr.mxu0 0.0
        %494 = vmatpush1.msra.mxu0 %v341
        %495 = vmatprep.subr.mxu0 0.0
        %496 = vmatpush1.msra.mxu0 %v342
        %497 = vmatprep.subr.mxu0 0.0
        %498 = vmatpush1.msra.mxu0 %v343
        %499 = vmatprep.subr.mxu0 0.0
        %500 = vmatpush1.msra.mxu0 %v344
        %501 = vmatprep.mubr.f32.mxu0 %v362
        %502 = vmatmul.mubr.f32.gmra.mrb[0].mxu0 %v360
        %v503 = vpop.f32.mrb[0].mxu0
        %v504 = vadd.f32 %v434, %v503
        %v505 = vpop.f32.mrb[0].mxu0
        %506 = vdwg.mxu0
        %v507 = vadd.f32 %v280, %v504
        %508 = vst [vmem:[#allocation2] sm:$0x3] %v507
        %p509 = scmp.eq.s32.totalorder %s17, 7
        // Predicated region
        $region45: #{cqa_clip_forward.3} parent=39 // pred_check
          %p510 = pneg %p509
        $region46: #{cqa_clip_forward.3} parent=39 // pred_check_branch
          %512 = sbr.rel (%p510) target = $region48
        $region47: #{cqa_clip_forward.3} parent=39 // pred_region
          %v513 = vld [vmem:[#allocation3] sm:$0x3]
          %v514 = vrsqrt.pop %v513
          %v515 = vmul.f32 %v513, %v514
          %vm516 = vcmp.eq.f32.partialorder %v513, inf
          %v517 = vsel %vm516, %v513, %v515
          %vm518 = vcmp.eq.f32.partialorder %v513, 0.0
          %v519 = vand.u32 %v513, 2147483648
          %v520 = vsel %vm518, %v519, %v517
          %v521 = vmax.f32 %v520, 1e-12
          %v522 = vld [vmem:[#allocation2] sm:$0x3]
          %524 = vset.pattern.permute.xlu0 0
          %525 = vperm.xlu0 %524, %v521
          %v526 = vpop.permute.xlu0 %525
          %v528 = vrcp.pop %v526
          %v529 = vmul.f32 %v522, %v528
          %v530 = vld [vmem:[%s2] sm:$0x1]
          %v532 = vlaneseq
          %v533 = vshrl.u32 %v532, 7
          %v534 = vsub.s32 0, %v533
          %v535 = vrot.slane %v530, %v534
          %v537 = vadd.f32 %v529, %v535
          %v538 = vmul.f32 %v537, 0.5
          %v539 = vmul.f32 %v537, 0.70710677
          %vm540 = vcmp.ge.f32.partialorder %v539, 0.0
          %v541 = vsel %vm540, 1.0, -1.0
          %v542 = vand.u32 2147483647, %v539
          %v543 = vmul.f32 %v542, 0.3275911
          %v544 = vadd.f32 %v543, 1.0
          %v545 = vrcp.pop %v544
          %v546 = vmul.f32 1.0, %v545
          %v547 = vmul.f32 %v546, 1.0614054
          %v548 = vadd.f32 %v547, -1.4531521
          %v549 = vmul.f32 %v546, %v548
          %v550 = vadd.f32 %v549, 1.4214138
          %v551 = vmul.f32 %v546, %v550
          %v552 = vadd.f32 %v551, -0.28449672
          %v553 = vmul.f32 %v546, %v552
          %v554 = vadd.f32 %v553, 0.2548296
          %v555 = vmul.f32 %v546, %v554
          %v556 = vsub.f32 0.0, %v542
          %v557 = vmul.f32 %v556, %v542
          %v558 = vmul.f32 %v557, 1.442695
          %v559 = vpow.pop %v558
          %v560 = vmul.f32 %v555, %v559
          %v561 = vsub.f32 1.0, %v560
          %v562 = vmul.f32 %v541, %v561
          %v563 = vadd.f32 %v562, 1.0
          %v564 = vmul.f32 %v538, %v563
          %v565 = vld [vmem:[%s3] sm:$0xff]
          %v566 = vld [vmem:[%s3 + $0x8] sm:$0xff]
          %v567 = vld [vmem:[%s3 + $0x10] sm:$0xff]
          %v568 = vld [vmem:[%s3 + $0x18] sm:$0xff]
          %v569 = vld [vmem:[%s3 + $0x20] sm:$0xff]
          %v570 = vld [vmem:[%s3 + $0x28] sm:$0xff]
          %v571 = vld [vmem:[%s3 + $0x30] sm:$0xff]
          %v572 = vld [vmem:[%s3 + $0x38] sm:$0xff]
          %v573 = vld [vmem:[%s3 + $0x40] sm:$0xff]
          %v574 = vld [vmem:[%s3 + $0x48] sm:$0xff]
          %v575 = vld [vmem:[%s3 + $0x50] sm:$0xff]
          %v576 = vld [vmem:[%s3 + $0x58] sm:$0xff]
          %v577 = vld [vmem:[%s3 + $0x60] sm:$0xff]
          %v578 = vld [vmem:[%s3 + $0x68] sm:$0xff]
          %v579 = vld [vmem:[%s3 + $0x70] sm:$0xff]
          %v580 = vld [vmem:[%s3 + $0x78] sm:$0xff]
          %v581 = vld [vmem:[%s4] sm:$0x1]
          %v583 = vlaneseq
          %v584 = vshrl.u32 %v583, 7
          %v585 = vsub.s32 0, %v584
          %v586 = vrot.slane %v581, %v585
          %588 = vmatprep.subr.mxu0 0.0
          %589 = vmatpush1.msra.mxu0 %v565
          %590 = vmatprep.subr.mxu0 0.0
          %591 = vmatpush1.msra.mxu0 %v566
          %592 = vmatprep.subr.mxu0 0.0
          %593 = vmatpush1.msra.mxu0 %v567
          %594 = vmatprep.subr.mxu0 0.0
          %595 = vmatpush1.msra.mxu0 %v568
          %596 = vmatprep.subr.mxu0 0.0
          %597 = vmatpush1.msra.mxu0 %v569
          %598 = vmatprep.subr.mxu0 0.0
          %599 = vmatpush1.msra.mxu0 %v570
          %600 = vmatprep.subr.mxu0 0.0
          %601 = vmatpush1.msra.mxu0 %v571
          %602 = vmatprep.subr.mxu0 0.0
          %603 = vmatpush1.msra.mxu0 %v572
          %604 = vmatprep.subr.mxu0 0.0
          %605 = vmatpush1.msra.mxu0 %v573
          %606 = vmatprep.subr.mxu0 0.0
          %607 = vmatpush1.msra.mxu0 %v574
          %608 = vmatprep.subr.mxu0 0.0
          %609 = vmatpush1.msra.mxu0 %v575
          %610 = vmatprep.subr.mxu0 0.0
          %611 = vmatpush1.msra.mxu0 %v576
          %612 = vmatprep.subr.mxu0 0.0
          %613 = vmatpush1.msra.mxu0 %v577
          %614 = vmatprep.subr.mxu0 0.0
          %615 = vmatpush1.msra.mxu0 %v578
          %616 = vmatprep.subr.mxu0 0.0
          %617 = vmatpush1.msra.mxu0 %v579
          %618 = vmatprep.subr.mxu0 0.0
          %619 = vmatpush1.msra.mxu0 %v580
          %620 = vmatprep.subr.mxu0 0.0
          %621 = vmatpush1.msra.mxu0 0.0
          %622 = vmatprep.subr.mxu0 0.0
          %623 = vmatpush1.msra.mxu0 0.0
          %624 = vmatprep.subr.mxu0 0.0
          %625 = vmatpush1.msra.mxu0 0.0
          %626 = vmatprep.subr.mxu0 0.0
          %627 = vmatpush1.msra.mxu0 0.0
          %628 = vmatprep.subr.mxu0 0.0
          %629 = vmatpush1.msra.mxu0 0.0
          %630 = vmatprep.subr.mxu0 0.0
          %631 = vmatpush1.msra.mxu0 0.0
          %632 = vmatprep.subr.mxu0 0.0
          %633 = vmatpush1.msra.mxu0 0.0
          %634 = vmatprep.subr.mxu0 0.0
          %635 = vmatpush1.msra.mxu0 0.0
          %636 = vmatprep.subr.mxu0 0.0
          %637 = vmatpush1.msra.mxu0 0.0
          %638 = vmatprep.subr.mxu0 0.0
          %639 = vmatpush1.msra.mxu0 0.0
          %640 = vmatprep.subr.mxu0 0.0
          %641 = vmatpush1.msra.mxu0 0.0
          %642 = vmatprep.subr.mxu0 0.0
          %643 = vmatpush1.msra.mxu0 0.0
          %644 = vmatprep.subr.mxu0 0.0
          %645 = vmatpush1.msra.mxu0 0.0
          %646 = vmatprep.subr.mxu0 0.0
          %647 = vmatpush1.msra.mxu0 0.0
          %648 = vmatprep.subr.mxu0 0.0
          %649 = vmatpush1.msra.mxu0 0.0
          %650 = vmatprep.subr.mxu0 0.0
          %651 = vmatpush1.msra.mxu0 0.0
          %652 = vmatprep.mubr.f32.mxu0 0.0
          %653 = vmatmul.mubr.f32.gmra.mrb[0].mxu0 %v564
          %v654 = vpop.f32.mrb[0].mxu0
          %v655 = vadd.f32 %v586, %v654
          %v656 = vpop.f32.mrb[0].mxu0
          %657 = vdwg.mxu0
          %658 = vst [vmem:[#allocation4] sm:$0x3] %v655
        $region48: #{cqa_clip_forward.3} parent=39 // pred_fallthru
          _
        // Predicated region
        $region49: #{cqa_clip_forward.3} parent=39 // pred_check
          %p659 = pneg %p145
        $region50: #{cqa_clip_forward.3} parent=39 // pred_check_branch
          %661 = sbr.rel (%p659) target = $region52
        $region51: #{cqa_clip_forward.3} parent=39 // pred_region
          %s663 = ssub.s32 32, 32
          %664 = vsyncadd [#allocation5], %s663
          %s666 = sshll.u32 [#allocation4], 4
          %s667 = int_to_ptr.vmem [resolvable:$true] %s666
          %669 = dma.vmem_to_hbm [thread:$0]  %s667, 32, %s5, [#allocation5]
        $region52: #{cqa_clip_forward.3} parent=39 // pred_fallthru
          _
        // Predicated region
        $region53: #{cqa_clip_forward.3} parent=39 // pred_check
          %p670 = pneg %p145
        $region54: #{cqa_clip_forward.3} parent=39 // pred_check_branch
          %672 = sbr.rel (%p670) target = $region56
        $region55: #{cqa_clip_forward.3} parent=39 // pred_region
          %673 = dma.done [#allocation5], 32
        $region56: #{cqa_clip_forward.3} parent=39 // pred_fallthru
          _
      $region40: #{cqa_clip_forward.3} parent=5 // pred_fallthru
        _
      %p674 = scmp.le.s32.totalorder 2, %s12
      // Predicated region
      $region57: #{cqa_clip_forward.3} parent=5 // pred_check
        %p675 = pneg %p674
      $region58: #{cqa_clip_forward.3} parent=5 // pred_check_branch
        %677 = sbr.rel (%p675) target = $region60
      $region59: #{cqa_clip_forward.3} parent=5 // pred_region
        %s678 = ssub.s32 %s12, 2
      $region60: #{cqa_clip_forward.3} parent=5 // pred_fallthru
        _
    $region6: #{cqa_clip_forward.3} parent=1 // loop_footer
      %s16 = sadd.s32 1, %s12
    $region7: #{cqa_clip_forward.3} parent=1 // loop_footer_branch
      %11 = sbr.rel target = $region3
    $region8: #{cqa_clip_forward.3} parent=1 // loop_exit
      _
    %679 = vsyncpa [#allocation5], 1
    %s680 = scalar_lea.sflag [#allocation5], 1
    %681 = vsyncpa %s680, 1

// kernel: cqa_clip_forward.2
$region0: #{cqa_clip_forward.2}
  #allocation0 [shape = 'u32[]', space=smem, size = 0x4, offset = 0x4, fixed_abs, tag = 'smem constant byte address 0x4 - core index']
  #allocation1 [shape = 'u32[144,128]{1,0:T(1,128)}', space=vmem, size = 0x12000, scoped, tag = 'internal scratch']
  %s0 = inlined_call_operand.vmem [shape: f32[2,1024,3], index: 0, kind: input, shape index: {}]
  %s1 = inlined_call_operand.hbm [shape: f32[3,8], index: 1, kind: input, shape index: {}]
  %s2 = inlined_call_operand.hbm [shape: f32[1,8], index: 2, kind: input, shape index: {}]
  %s3 = inlined_call_operand.hbm [shape: f32[8,16], index: 3, kind: input, shape index: {}]
  %s4 = inlined_call_operand.hbm [shape: f32[1,16], index: 4, kind: input, shape index: {}]
  %s5 = inlined_call_operand.hbm [shape: f32[16,32], index: 5, kind: input, shape index: {}]
  %s6 = inlined_call_operand.hbm [shape: f32[1,32], index: 6, kind: input, shape index: {}]
  %s7 = inlined_call_operand.hbm [shape: f32[32,64], index: 7, kind: input, shape index: {}]
  %s8 = inlined_call_operand.hbm [shape: f32[1,64], index: 8, kind: input, shape index: {}]
  %s9 = inlined_call_operand.hbm [shape: f32[64,128], index: 9, kind: input, shape index: {}]
  %s10 = inlined_call_operand.hbm [shape: f32[1,128], index: 10, kind: input, shape index: {}]
  %s11 = inlined_call_operand.hbm [shape: f32[256,1024], index: 11, kind: input, shape index: {}]
  %s12 = inlined_call_operand.hbm [shape: f32[16,256], index: 12, kind: input, shape index: {}]
  %s13 = inlined_call_operand.hbm [shape: f32[64,256], index: 13, kind: input, shape index: {}]
  %s14 = inlined_call_operand.hbm [shape: f32[16,64], index: 14, kind: input, shape index: {}]
  %s15 = inlined_call_operand.hbm [shape: f32[128,128], index: 15, kind: input, shape index: {}]
  %s16 = inlined_call_operand.vmem [shape: f32[2,16,256], index: 16, kind: output, shape index: {}]
  %s17 = sld [smem:[#allocation0]]
  $region157: #{cqa_clip_forward.2} parent=0
    _
  %s19 = ssub.s32 1, %s17
  %s20 = scalar_select 0, %s19, %s17
  $region1: #{cqa_clip_forward.2} parent=0
    #allocation2 [shape = 'u8[2048]{0}', space=vmem, size = 0x800, scoped, tag = 'input window, operand 1, single buffered']
    #allocation3 [shape = 's32[2]{0}', space=sflag, size = 0x8, scoped, tag = 'scoped memory for cqa_clip_forward.2']
    #allocation4 [shape = 'u8[512]{0}', space=vmem, size = 0x400, scoped, tag = 'input window, operand 2, single buffered']
    #allocation5 [shape = 's32[1]{0}', space=sflag, size = 0x4, scoped, tag = 'scoped memory for cqa_clip_forward.2']
    #allocation6 [shape = 'u8[4096]{0}', space=vmem, size = 0x1000, scoped, tag = 'input window, operand 3, single buffered']
    #allocation7 [shape = 'u8[512]{0}', space=vmem, size = 0x400, scoped, tag = 'input window, operand 4, single buffered']
    #allocation8 [shape = 's32[1]{0}', space=sflag, size = 0x4, scoped, tag = 'scoped memory for cqa_clip_forward.2']
    #allocation9 [shape = 'u8[8192]{0}', space=vmem, size = 0x2000, scoped, tag = 'input window, operand 5, single buffered']
    #allocation10 [shape = 'u8[512]{0}', space=vmem, size = 0x400, scoped, tag = 'input window, operand 6, single buffered']
    #allocation11 [shape = 's32[1]{0}', space=sflag, size = 0x4, scoped, tag = 'scoped memory for cqa_clip_forward.2']
    #allocation12 [shape = 'u8[16384]{0}', space=vmem, size = 0x4000, scoped, tag = 'input window, operand 7, single buffered']
    #allocation13 [shape = 'u8[512]{0}', space=vmem, size = 0x400, scoped, tag = 'input window, operand 8, single buffered']
    #allocation14 [shape = 's32[1]{0}', space=sflag, size = 0x4, scoped, tag = 'scoped memory for cqa_clip_forward.2']
    #allocation15 [shape = 'u8[32768]{0}', space=vmem, size = 0x8000, scoped, tag = 'input window, operand 9, single buffered']
    #allocation16 [shape = 'u8[512]{0}', space=vmem, size = 0x400, scoped, tag = 'input window, operand 10, single buffered']
    #allocation17 [shape = 's32[1]{0}', space=sflag, size = 0x4, scoped, tag = 'scoped memory for cqa_clip_forward.2']
    #allocation18 [shape = 'u8[1048576]{0}', space=vmem, size = 0x100000, scoped, tag = 'input window, operand 11, single buffered']
    #allocation19 [shape = 'u8[16384]{0}', space=vmem, size = 0x4000, scoped, tag = 'input window, operand 12, single buffered']
    #allocation20 [shape = 's32[1]{0}', space=sflag, size = 0x4, scoped, tag = 'scoped memory for cqa_clip_forward.2']
    #allocation21 [shape = 'u8[65536]{0}', space=vmem, size = 0x10000, scoped, tag = 'input window, operand 13, single buffered']
    #allocation22 [shape = 'u8[8192]{0}', space=vmem, size = 0x2000, scoped, tag = 'input window, operand 14, single buffered']
    #allocation23 [shape = 's32[1]{0}', space=sflag, size = 0x4, scoped, tag = 'scoped memory for cqa_clip_forward.2']
    #allocation24 [shape = 'u8[65536]{0}', space=vmem, size = 0x10000, scoped, tag = 'input window, operand 15, single buffered']
    %21 = vsyncpa [#allocation3], 0
    %22 = vsyncpa [#allocation5], 0
    %23 = vsyncpa [#allocation8], 0
    %24 = vsyncpa [#allocation11], 0
    %25 = vsyncpa [#allocation14], 0
    %26 = vsyncpa [#allocation17], 0
    %27 = vsyncpa [#allocation20], 0
    %28 = vsyncpa [#allocation23], 0
    loop: start=0, step=1, limit=4
    $region2: #{cqa_clip_forward.2} parent=1 // loop_pre_header
      _
    $region3: #{cqa_clip_forward.2} parent=1 // loop_header
      %s30 = sphi 0, %s34
      %p31 = scmp.ge.s32.totalorder %s30, 4
      %s40 = sphi 0, %s42
      %s43 = sphi 0, %s40
      %s44 = sphi 0, %s43
      %s60 = sphi 0, %s44
      %s64 = sphi 0, %s64
      %s66 = sphi 0, %s64
      %s67 = sphi 0, %s66
      %s81 = sphi 0, %s67
      %s85 = sphi 0, %s85
      %s87 = sphi 0, %s85
      %s88 = sphi 0, %s87
      %s102 = sphi 0, %s88
      %s106 = sphi 0, %s106
      %s108 = sphi 0, %s106
      %s109 = sphi 0, %s108
      %s123 = sphi 0, %s109
      %s127 = sphi 0, %s127
      %s129 = sphi 0, %s127
      %s130 = sphi 0, %s129
      %s144 = sphi 0, %s130
      %s148 = sphi 0, %s148
      %s150 = sphi 0, %s148
      %s151 = sphi 0, %s150
      %s165 = sphi 0, %s151
      %s169 = sphi 0, %s169
      %s171 = sphi 0, %s169
      %s172 = sphi 0, %s171
      %s186 = sphi 0, %s172
      %s190 = sphi 0, %s190
      %s192 = sphi 0, %s190
      %s193 = sphi 0, %s192
      %s207 = sphi 0, %s193
      %s211 = sphi 0, %s211
      %s213 = sphi 0, %s211
      %s214 = sphi 0, %s213
      %s228 = sphi 0, %s214
      %s232 = sphi 0, %s232
      %s234 = sphi 0, %s232
      %s235 = sphi 0, %s234
      %s249 = sphi 0, %s235
      %s253 = sphi 0, %s253
      %s255 = sphi 0, %s253
      %s256 = sphi 0, %s255
      %s270 = sphi 0, %s256
      %s274 = sphi 0, %s274
      %s276 = sphi 0, %s274
      %s277 = sphi 0, %s276
      %s291 = sphi 0, %s277
      %s295 = sphi 0, %s295
      %s297 = sphi 0, %s295
      %s298 = sphi 0, %s297
      %s312 = sphi 0, %s298
      %s316 = sphi 0, %s316
      %s318 = sphi 0, %s316
      %s319 = sphi 0, %s318
      %s333 = sphi 0, %s319
      %s337 = sphi 0, %s337
      %s339 = sphi 0, %s337
      %s340 = sphi 0, %s339
      %s354 = sphi 0, %s340
      %s358 = sphi 0, %s358
      %s360 = sphi 0, %s358
      %s361 = sphi 0, %s360
      %s375 = sphi 0, %s361
      %s381 = sphi 0, %s383
      %s384 = sphi 0, %s381
      %s385 = sphi 0, %s384
      %s401 = sphi 0, %s385
    $region4: #{cqa_clip_forward.2} parent=1 // loop_header_branch
      %33 = sbr.rel (%p31) target = $region8
    $region5: #{cqa_clip_forward.2} parent=1 // loop_body
      %s35 = ssub.s32 %s30, 1
      %s36 = ssub.s32 %s30, 2
      %s37 = sadd.s32 %s30, 1
      %s38 = ssub.s32 %s30, %s37
      %p39 = scmp.eq.s32.totalorder %s38, 0
      %s41 = sadd.s32 %s40, 1
      %s42 = scalar_select %p39, %s40, %s41
      %p45 = pneg %p39
      %p46 = scmp.eq.s32.totalorder %s30, 1
      %p47 = por %p45, %p46
      %p48 = scmp.ne.s32.totalorder %s40, %s43
      %p49 = scmp.eq.s32.totalorder %s30, 0
      %p50 = por %p48, %p49
      %p51 = scmp.ne.s32.totalorder %s40, %s43
      %p52 = scmp.eq.s32.totalorder %s35, 1
      %p53 = por %p51, %p52
      %p54 = scmp.ne.s32.totalorder %s43, %s44
      %p55 = scmp.eq.s32.totalorder %s35, 0
      %p56 = por %p54, %p55
      %p57 = scmp.ne.s32.totalorder %s43, %s44
      %p58 = scmp.eq.s32.totalorder %s36, 1
      %p59 = por %p57, %p58
      %p61 = scmp.ne.s32.totalorder %s44, %s60
      %p62 = scmp.eq.s32.totalorder %s36, 0
      %p63 = por %p61, %p62
      %s65 = sadd.s32 %s64, 1
      %p68 = scmp.eq.s32.totalorder %s30, 1
      %p69 = scmp.ne.s32.totalorder %s64, %s66
      %p70 = scmp.eq.s32.totalorder %s30, 0
      %p71 = por %p69, %p70
      %p72 = scmp.ne.s32.totalorder %s64, %s66
      %p73 = scmp.eq.s32.totalorder %s35, 1
      %p74 = por %p72, %p73
      %p75 = scmp.ne.s32.totalorder %s66, %s67
      %p76 = scmp.eq.s32.totalorder %s35, 0
      %p77 = por %p75, %p76
      %p78 = scmp.ne.s32.totalorder %s66, %s67
      %p79 = scmp.eq.s32.totalorder %s36, 1
      %p80 = por %p78, %p79
      %p82 = scmp.ne.s32.totalorder %s67, %s81
      %p83 = scmp.eq.s32.totalorder %s36, 0
      %p84 = por %p82, %p83
      %s86 = sadd.s32 %s85, 1
      %p89 = scmp.eq.s32.totalorder %s30, 1
      %p90 = scmp.ne.s32.totalorder %s85, %s87
      %p91 = scmp.eq.s32.totalorder %s30, 0
      %p92 = por %p90, %p91
      %p93 = scmp.ne.s32.totalorder %s85, %s87
      %p94 = scmp.eq.s32.totalorder %s35, 1
      %p95 = por %p93, %p94
      %p96 = scmp.ne.s32.totalorder %s87, %s88
      %p97 = scmp.eq.s32.totalorder %s35, 0
      %p98 = por %p96, %p97
      %p99 = scmp.ne.s32.totalorder %s87, %s88
      %p100 = scmp.eq.s32.totalorder %s36, 1
      %p101 = por %p99, %p100
      %p103 = scmp.ne.s32.totalorder %s88, %s102
      %p104 = scmp.eq.s32.totalorder %s36, 0
      %p105 = por %p103, %p104
      %s107 = sadd.s32 %s106, 1
      %p110 = scmp.eq.s32.totalorder %s30, 1
      %p111 = scmp.ne.s32.totalorder %s106, %s108
      %p112 = scmp.eq.s32.totalorder %s30, 0
      %p113 = por %p111, %p112
      %p114 = scmp.ne.s32.totalorder %s106, %s108
      %p115 = scmp.eq.s32.totalorder %s35, 1
      %p116 = por %p114, %p115
      %p117 = scmp.ne.s32.totalorder %s108, %s109
      %p118 = scmp.eq.s32.totalorder %s35, 0
      %p119 = por %p117, %p118
      %p120 = scmp.ne.s32.totalorder %s108, %s109
      %p121 = scmp.eq.s32.totalorder %s36, 1
      %p122 = por %p120, %p121
      %p124 = scmp.ne.s32.totalorder %s109, %s123
      %p125 = scmp.eq.s32.totalorder %s36, 0
      %p126 = por %p124, %p125
      %s128 = sadd.s32 %s127, 1
      %p131 = scmp.eq.s32.totalorder %s30, 1
      %p132 = scmp.ne.s32.totalorder %s127, %s129
      %p133 = scmp.eq.s32.totalorder %s30, 0
      %p134 = por %p132, %p133
      %p135 = scmp.ne.s32.totalorder %s127, %s129
      %p136 = scmp.eq.s32.totalorder %s35, 1
      %p137 = por %p135, %p136
      %p138 = scmp.ne.s32.totalorder %s129, %s130
      %p139 = scmp.eq.s32.totalorder %s35, 0
      %p140 = por %p138, %p139
      %p141 = scmp.ne.s32.totalorder %s129, %s130
      %p142 = scmp.eq.s32.totalorder %s36, 1
      %p143 = por %p141, %p142
      %p145 = scmp.ne.s32.totalorder %s130, %s144
      %p146 = scmp.eq.s32.totalorder %s36, 0
      %p147 = por %p145, %p146
      %s149 = sadd.s32 %s148, 1
      %p152 = scmp.eq.s32.totalorder %s30, 1
      %p153 = scmp.ne.s32.totalorder %s148, %s150
      %p154 = scmp.eq.s32.totalorder %s30, 0
      %p155 = por %p153, %p154
      %p156 = scmp.ne.s32.totalorder %s148, %s150
      %p157 = scmp.eq.s32.totalorder %s35, 1
      %p158 = por %p156, %p157
      %p159 = scmp.ne.s32.totalorder %s150, %s151
      %p160 = scmp.eq.s32.totalorder %s35, 0
      %p161 = por %p159, %p160
      %p162 = scmp.ne.s32.totalorder %s150, %s151
      %p163 = scmp.eq.s32.totalorder %s36, 1
      %p164 = por %p162, %p163
      %p166 = scmp.ne.s32.totalorder %s151, %s165
      %p167 = scmp.eq.s32.totalorder %s36, 0
      %p168 = por %p166, %p167
      %s170 = sadd.s32 %s169, 1
      %p173 = scmp.eq.s32.totalorder %s30, 1
      %p174 = scmp.ne.s32.totalorder %s169, %s171
      %p175 = scmp.eq.s32.totalorder %s30, 0
      %p176 = por %p174, %p175
      %p177 = scmp.ne.s32.totalorder %s169, %s171
      %p178 = scmp.eq.s32.totalorder %s35, 1
      %p179 = por %p177, %p178
      %p180 = scmp.ne.s32.totalorder %s171, %s172
      %p181 = scmp.eq.s32.totalorder %s35, 0
      %p182 = por %p180, %p181
      %p183 = scmp.ne.s32.totalorder %s171, %s172
      %p184 = scmp.eq.s32.totalorder %s36, 1
      %p185 = por %p183, %p184
      %p187 = scmp.ne.s32.totalorder %s172, %s186
      %p188 = scmp.eq.s32.totalorder %s36, 0
      %p189 = por %p187, %p188
      %s191 = sadd.s32 %s190, 1
      %p194 = scmp.eq.s32.totalorder %s30, 1
      %p195 = scmp.ne.s32.totalorder %s190, %s192
      %p196 = scmp.eq.s32.totalorder %s30, 0
      %p197 = por %p195, %p196
      %p198 = scmp.ne.s32.totalorder %s190, %s192
      %p199 = scmp.eq.s32.totalorder %s35, 1
      %p200 = por %p198, %p199
      %p201 = scmp.ne.s32.totalorder %s192, %s193
      %p202 = scmp.eq.s32.totalorder %s35, 0
      %p203 = por %p201, %p202
      %p204 = scmp.ne.s32.totalorder %s192, %s193
      %p205 = scmp.eq.s32.totalorder %s36, 1
      %p206 = por %p204, %p205
      %p208 = scmp.ne.s32.totalorder %s193, %s207
      %p209 = scmp.eq.s32.totalorder %s36, 0
      %p210 = por %p208, %p209
      %s212 = sadd.s32 %s211, 1
      %p215 = scmp.eq.s32.totalorder %s30, 1
      %p216 = scmp.ne.s32.totalorder %s211, %s213
      %p217 = scmp.eq.s32.totalorder %s30, 0
      %p218 = por %p216, %p217
      %p219 = scmp.ne.s32.totalorder %s211, %s213
      %p220 = scmp.eq.s32.totalorder %s35, 1
      %p221 = por %p219, %p220
      %p222 = scmp.ne.s32.totalorder %s213, %s214
      %p223 = scmp.eq.s32.totalorder %s35, 0
      %p224 = por %p222, %p223
      %p225 = scmp.ne.s32.totalorder %s213, %s214
      %p226 = scmp.eq.s32.totalorder %s36, 1
      %p227 = por %p225, %p226
      %p229 = scmp.ne.s32.totalorder %s214, %s228
      %p230 = scmp.eq.s32.totalorder %s36, 0
      %p231 = por %p229, %p230
      %s233 = sadd.s32 %s232, 1
      %p236 = scmp.eq.s32.totalorder %s30, 1
      %p237 = scmp.ne.s32.totalorder %s232, %s234
      %p238 = scmp.eq.s32.totalorder %s30, 0
      %p239 = por %p237, %p238
      %p240 = scmp.ne.s32.totalorder %s232, %s234
      %p241 = scmp.eq.s32.totalorder %s35, 1
      %p242 = por %p240, %p241
      %p243 = scmp.ne.s32.totalorder %s234, %s235
      %p244 = scmp.eq.s32.totalorder %s35, 0
      %p245 = por %p243, %p244
      %p246 = scmp.ne.s32.totalorder %s234, %s235
      %p247 = scmp.eq.s32.totalorder %s36, 1
      %p248 = por %p246, %p247
      %p250 = scmp.ne.s32.totalorder %s235, %s249
      %p251 = scmp.eq.s32.totalorder %s36, 0
      %p252 = por %p250, %p251
      %s254 = sadd.s32 %s253, 1
      %p257 = scmp.eq.s32.totalorder %s30, 1
      %p258 = scmp.ne.s32.totalorder %s253, %s255
      %p259 = scmp.eq.s32.totalorder %s30, 0
      %p260 = por %p258, %p259
      %p261 = scmp.ne.s32.totalorder %s253, %s255
      %p262 = scmp.eq.s32.totalorder %s35, 1
      %p263 = por %p261, %p262
      %p264 = scmp.ne.s32.totalorder %s255, %s256
      %p265 = scmp.eq.s32.totalorder %s35, 0
      %p266 = por %p264, %p265
      %p267 = scmp.ne.s32.totalorder %s255, %s256
      %p268 = scmp.eq.s32.totalorder %s36, 1
      %p269 = por %p267, %p268
      %p271 = scmp.ne.s32.totalorder %s256, %s270
      %p272 = scmp.eq.s32.totalorder %s36, 0
      %p273 = por %p271, %p272
      %s275 = sadd.s32 %s274, 1
      %p278 = scmp.eq.s32.totalorder %s30, 1
      %p279 = scmp.ne.s32.totalorder %s274, %s276
      %p280 = scmp.eq.s32.totalorder %s30, 0
      %p281 = por %p279, %p280
      %p282 = scmp.ne.s32.totalorder %s274, %s276
      %p283 = scmp.eq.s32.totalorder %s35, 1
      %p284 = por %p282, %p283
      %p285 = scmp.ne.s32.totalorder %s276, %s277
      %p286 = scmp.eq.s32.totalorder %s35, 0
      %p287 = por %p285, %p286
      %p288 = scmp.ne.s32.totalorder %s276, %s277
      %p289 = scmp.eq.s32.totalorder %s36, 1
      %p290 = por %p288, %p289
      %p292 = scmp.ne.s32.totalorder %s277, %s291
      %p293 = scmp.eq.s32.totalorder %s36, 0
      %p294 = por %p292, %p293
      %s296 = sadd.s32 %s295, 1
      %p299 = scmp.eq.s32.totalorder %s30, 1
      %p300 = scmp.ne.s32.totalorder %s295, %s297
      %p301 = scmp.eq.s32.totalorder %s30, 0
      %p302 = por %p300, %p301
      %p303 = scmp.ne.s32.totalorder %s295, %s297
      %p304 = scmp.eq.s32.totalorder %s35, 1
      %p305 = por %p303, %p304
      %p306 = scmp.ne.s32.totalorder %s297, %s298
      %p307 = scmp.eq.s32.totalorder %s35, 0
      %p308 = por %p306, %p307
      %p309 = scmp.ne.s32.totalorder %s297, %s298
      %p310 = scmp.eq.s32.totalorder %s36, 1
      %p311 = por %p309, %p310
      %p313 = scmp.ne.s32.totalorder %s298, %s312
      %p314 = scmp.eq.s32.totalorder %s36, 0
      %p315 = por %p313, %p314
      %s317 = sadd.s32 %s316, 1
      %p320 = scmp.eq.s32.totalorder %s30, 1
      %p321 = scmp.ne.s32.totalorder %s316, %s318
      %p322 = scmp.eq.s32.totalorder %s30, 0
      %p323 = por %p321, %p322
      %p324 = scmp.ne.s32.totalorder %s316, %s318
      %p325 = scmp.eq.s32.totalorder %s35, 1
      %p326 = por %p324, %p325
      %p327 = scmp.ne.s32.totalorder %s318, %s319
      %p328 = scmp.eq.s32.totalorder %s35, 0
      %p329 = por %p327, %p328
      %p330 = scmp.ne.s32.totalorder %s318, %s319
      %p331 = scmp.eq.s32.totalorder %s36, 1
      %p332 = por %p330, %p331
      %p334 = scmp.ne.s32.totalorder %s319, %s333
      %p335 = scmp.eq.s32.totalorder %s36, 0
      %p336 = por %p334, %p335
      %s338 = sadd.s32 %s337, 1
      %p341 = scmp.eq.s32.totalorder %s30, 1
      %p342 = scmp.ne.s32.totalorder %s337, %s339
      %p343 = scmp.eq.s32.totalorder %s30, 0
      %p344 = por %p342, %p343
      %p345 = scmp.ne.s32.totalorder %s337, %s339
      %p346 = scmp.eq.s32.totalorder %s35, 1
      %p347 = por %p345, %p346
      %p348 = scmp.ne.s32.totalorder %s339, %s340
      %p349 = scmp.eq.s32.totalorder %s35, 0
      %p350 = por %p348, %p349
      %p351 = scmp.ne.s32.totalorder %s339, %s340
      %p352 = scmp.eq.s32.totalorder %s36, 1
      %p353 = por %p351, %p352
      %p355 = scmp.ne.s32.totalorder %s340, %s354
      %p356 = scmp.eq.s32.totalorder %s36, 0
      %p357 = por %p355, %p356
      %s359 = sadd.s32 %s358, 1
      %p362 = scmp.eq.s32.totalorder %s30, 1
      %p363 = scmp.ne.s32.totalorder %s358, %s360
      %p364 = scmp.eq.s32.totalorder %s30, 0
      %p365 = por %p363, %p364
      %p366 = scmp.ne.s32.totalorder %s358, %s360
      %p367 = scmp.eq.s32.totalorder %s35, 1
      %p368 = por %p366, %p367
      %p369 = scmp.ne.s32.totalorder %s360, %s361
      %p370 = scmp.eq.s32.totalorder %s35, 0
      %p371 = por %p369, %p370
      %p372 = scmp.ne.s32.totalorder %s360, %s361
      %p373 = scmp.eq.s32.totalorder %s36, 1
      %p374 = por %p372, %p373
      %p376 = scmp.ne.s32.totalorder %s361, %s375
      %p377 = scmp.eq.s32.totalorder %s36, 0
      %p378 = por %p376, %p377
      %s379 = ssub.s32 %s30, %s37
      %p380 = scmp.eq.s32.totalorder %s379, 0
      %s382 = sadd.s32 %s381, 1
      %s383 = scalar_select %p380, %s381, %s382
      %p386 = pneg %p380
      %p387 = scmp.eq.s32.totalorder %s30, 1
      %p388 = por %p386, %p387
      %p389 = scmp.ne.s32.totalorder %s381, %s384
      %p390 = scmp.eq.s32.totalorder %s30, 0
      %p391 = por %p389, %p390
      %p392 = scmp.ne.s32.totalorder %s381, %s384
      %p393 = scmp.eq.s32.totalorder %s35, 1
      %p394 = por %p392, %p393
      %p395 = scmp.ne.s32.totalorder %s384, %s385
      %p396 = scmp.eq.s32.totalorder %s35, 0
      %p397 = por %p395, %p396
      %p398 = scmp.ne.s32.totalorder %s384, %s385
      %p399 = scmp.eq.s32.totalorder %s36, 1
      %p400 = por %p398, %p399
      %p402 = scmp.ne.s32.totalorder %s385, %s401
      %p403 = scmp.eq.s32.totalorder %s36, 0
      %p404 = por %p402, %p403
      %p405 = scmp.le.s32.totalorder 1, %s30
      %p406 = scmp.lt.s32.totalorder %s30, 3
      %p407 = pnand %p405, %p406
      %p408 = pneg %p407
      // Predicated region
      $region9: #{cqa_clip_forward.2} parent=5 // pred_check
        _
      $region10: #{cqa_clip_forward.2} parent=5 // pred_check_branch
        %410 = sbr.rel (%p407) target = $region12
      $region11: #{cqa_clip_forward.2} parent=5 // pred_region
        %s411 = ssub.s32 %s30, 1
        // Predicated region
        $region13: #{cqa_clip_forward.2} parent=11 // pred_check
          %p412 = pneg %p77
        $region14: #{cqa_clip_forward.2} parent=11 // pred_check_branch
          %414 = sbr.rel (%p412) target = $region16
        $region15: #{cqa_clip_forward.2} parent=11 // pred_region
          %s416 = ssub.s32 64, 64
          %417 = vsyncadd [#allocation3], %s416
          %s419 = sshll.u32 [#allocation2], 4
          %s420 = int_to_ptr.vmem [resolvable:$true] %s419
          %422 = dma.hbm_to_vmem [thread:$0]  %s1, 64, %s420, [#allocation3]
        $region16: #{cqa_clip_forward.2} parent=11 // pred_fallthru
          _
        // Predicated region
        $region17: #{cqa_clip_forward.2} parent=11 // pred_check
          %p423 = pneg %p98
        $region18: #{cqa_clip_forward.2} parent=11 // pred_check_branch
          %425 = sbr.rel (%p423) target = $region20
        $region19: #{cqa_clip_forward.2} parent=11 // pred_region
          %s427 = ssub.s32 16, 16
          %428 = vsyncadd [#allocation5], %s427
          %s430 = sshll.u32 [#allocation4], 4
          %s431 = int_to_ptr.vmem [resolvable:$true] %s430
          %433 = dma.hbm_to_vmem [thread:$0]  %s2, 16, %s431, [#allocation5]
        $region20: #{cqa_clip_forward.2} parent=11 // pred_fallthru
          _
        // Predicated region
        $region21: #{cqa_clip_forward.2} parent=11 // pred_check
          %p434 = pneg %p119
        $region22: #{cqa_clip_forward.2} parent=11 // pred_check_branch
          %436 = sbr.rel (%p434) target = $region24
        $region23: #{cqa_clip_forward.2} parent=11 // pred_region
          %s438 = ssub.s32 128, 128
          %439 = vsyncadd [#allocation5], %s438
          %s441 = sshll.u32 [#allocation6], 4
          %s442 = int_to_ptr.vmem [resolvable:$true] %s441
          %444 = dma.hbm_to_vmem [thread:$0]  %s3, 128, %s442, [#allocation5]
        $region24: #{cqa_clip_forward.2} parent=11 // pred_fallthru
          _
        // Predicated region
        $region25: #{cqa_clip_forward.2} parent=11 // pred_check
          %p445 = pneg %p140
        $region26: #{cqa_clip_forward.2} parent=11 // pred_check_branch
          %447 = sbr.rel (%p445) target = $region28
        $region27: #{cqa_clip_forward.2} parent=11 // pred_region
          %s449 = ssub.s32 16, 16
          %450 = vsyncadd [#allocation8], %s449
          %s452 = sshll.u32 [#allocation7], 4
          %s453 = int_to_ptr.vmem [resolvable:$true] %s452
          %455 = dma.hbm_to_vmem [thread:$0]  %s4, 16, %s453, [#allocation8]
        $region28: #{cqa_clip_forward.2} parent=11 // pred_fallthru
          _
        // Predicated region
        $region29: #{cqa_clip_forward.2} parent=11 // pred_check
          %p456 = pneg %p161
        $region30: #{cqa_clip_forward.2} parent=11 // pred_check_branch
          %458 = sbr.rel (%p456) target = $region32
        $region31: #{cqa_clip_forward.2} parent=11 // pred_region
          %s460 = ssub.s32 256, 256
          %461 = vsyncadd [#allocation8], %s460
          %s462 = sshll.u32 [#allocation9], 4
          %s463 = int_to_ptr.vmem [resolvable:$true] %s462
          %468 = dma.hbm_to_vmem [thread:$0]  %s5, 256, %s463, [#allocation8], 128, 128, 8
        $region32: #{cqa_clip_forward.2} parent=11 // pred_fallthru
          _
        // Predicated region
        $region33: #{cqa_clip_forward.2} parent=11 // pred_check
          %p469 = pneg %p182
        $region34: #{cqa_clip_forward.2} parent=11 // pred_check_branch
          %471 = sbr.rel (%p469) target = $region36
        $region35: #{cqa_clip_forward.2} parent=11 // pred_region
          %s473 = ssub.s32 16, 16
          %474 = vsyncadd [#allocation11], %s473
          %s476 = sshll.u32 [#allocation10], 4
          %s477 = int_to_ptr.vmem [resolvable:$true] %s476
          %479 = dma.hbm_to_vmem [thread:$0]  %s6, 16, %s477, [#allocation11]
        $region36: #{cqa_clip_forward.2} parent=11 // pred_fallthru
          _
        // Predicated region
        $region37: #{cqa_clip_forward.2} parent=11 // pred_check
          %p480 = pneg %p203
        $region38: #{cqa_clip_forward.2} parent=11 // pred_check_branch
          %482 = sbr.rel (%p480) target = $region40
        $region39: #{cqa_clip_forward.2} parent=11 // pred_region
          %s484 = ssub.s32 512, 512
          %485 = vsyncadd [#allocation11], %s484
          %s486 = sshll.u32 [#allocation12], 4
          %s487 = int_to_ptr.vmem [resolvable:$true] %s486
          %492 = dma.hbm_to_vmem [thread:$0]  %s7, 512, %s487, [#allocation11], 128, 128, 8
        $region40: #{cqa_clip_forward.2} parent=11 // pred_fallthru
          _
        // Predicated region
        $region41: #{cqa_clip_forward.2} parent=11 // pred_check
          %p493 = pneg %p224
        $region42: #{cqa_clip_forward.2} parent=11 // pred_check_branch
          %495 = sbr.rel (%p493) target = $region44
        $region43: #{cqa_clip_forward.2} parent=11 // pred_region
          %s497 = ssub.s32 16, 16
          %498 = vsyncadd [#allocation14], %s497
          %s500 = sshll.u32 [#allocation13], 4
          %s501 = int_to_ptr.vmem [resolvable:$true] %s500
          %503 = dma.hbm_to_vmem [thread:$0]  %s8, 16, %s501, [#allocation14]
        $region44: #{cqa_clip_forward.2} parent=11 // pred_fallthru
          _
        // Predicated region
        $region45: #{cqa_clip_forward.2} parent=11 // pred_check
          %p504 = pneg %p245
        $region46: #{cqa_clip_forward.2} parent=11 // pred_check_branch
          %506 = sbr.rel (%p504) target = $region48
        $region47: #{cqa_clip_forward.2} parent=11 // pred_region
          %s508 = ssub.s32 1024, 1024
          %509 = vsyncadd [#allocation14], %s508
          %s510 = sshll.u32 [#allocation15], 4
          %s511 = int_to_ptr.vmem [resolvable:$true] %s510
          %516 = dma.hbm_to_vmem [thread:$0]  %s9, 1024, %s511, [#allocation14], 128, 128, 8
        $region48: #{cqa_clip_forward.2} parent=11 // pred_fallthru
          _
        // Predicated region
        $region49: #{cqa_clip_forward.2} parent=11 // pred_check
          %p517 = pneg %p266
        $region50: #{cqa_clip_forward.2} parent=11 // pred_check_branch
          %519 = sbr.rel (%p517) target = $region52
        $region51: #{cqa_clip_forward.2} parent=11 // pred_region
          %s521 = ssub.s32 16, 16
          %522 = vsyncadd [#allocation17], %s521
          %s524 = sshll.u32 [#allocation16], 4
          %s525 = int_to_ptr.vmem [resolvable:$true] %s524
          %527 = dma.hbm_to_vmem [thread:$0]  %s10, 16, %s525, [#allocation17]
        $region52: #{cqa_clip_forward.2} parent=11 // pred_fallthru
          _
        // Predicated region
        $region53: #{cqa_clip_forward.2} parent=11 // pred_check
          %p528 = pneg %p287
        $region54: #{cqa_clip_forward.2} parent=11 // pred_check_branch
          %530 = sbr.rel (%p528) target = $region56
        $region55: #{cqa_clip_forward.2} parent=11 // pred_region
          %s532 = ssub.s32 32768, 32768
          %533 = vsyncadd [#allocation17], %s532
          %s534 = sshll.u32 [#allocation18], 4
          %s535 = int_to_ptr.vmem [resolvable:$true] %s534
          %540 = dma.hbm_to_vmem [thread:$0]  %s11, 32768, %s535, [#allocation17], 1024, 1024, 64
        $region56: #{cqa_clip_forward.2} parent=11 // pred_fallthru
          _
        // Predicated region
        $region57: #{cqa_clip_forward.2} parent=11 // pred_check
          %p541 = pneg %p308
        $region58: #{cqa_clip_forward.2} parent=11 // pred_check_branch
          %543 = sbr.rel (%p541) target = $region60
        $region59: #{cqa_clip_forward.2} parent=11 // pred_region
          %s545 = ssub.s32 512, 512
          %546 = vsyncadd [#allocation20], %s545
          %s547 = sshll.u32 [#allocation19], 4
          %s548 = int_to_ptr.vmem [resolvable:$true] %s547
          %553 = dma.hbm_to_vmem [thread:$0]  %s12, 512, %s548, [#allocation20], 256, 256, 16
        $region60: #{cqa_clip_forward.2} parent=11 // pred_fallthru
          _
        // Predicated region
        $region61: #{cqa_clip_forward.2} parent=11 // pred_check
          %p554 = pneg %p329
        $region62: #{cqa_clip_forward.2} parent=11 // pred_check_branch
          %556 = sbr.rel (%p554) target = $region64
        $region63: #{cqa_clip_forward.2} parent=11 // pred_region
          %s558 = ssub.s32 2048, 2048
          %559 = vsyncadd [#allocation20], %s558
          %s560 = sshll.u32 [#allocation21], 4
          %s561 = int_to_ptr.vmem [resolvable:$true] %s560
          %566 = dma.hbm_to_vmem [thread:$0]  %s13, 2048, %s561, [#allocation20], 256, 256, 16
        $region64: #{cqa_clip_forward.2} parent=11 // pred_fallthru
          _
        // Predicated region
        $region65: #{cqa_clip_forward.2} parent=11 // pred_check
          %p567 = pneg %p350
        $region66: #{cqa_clip_forward.2} parent=11 // pred_check_branch
          %569 = sbr.rel (%p567) target = $region68
        $region67: #{cqa_clip_forward.2} parent=11 // pred_region
          %s571 = ssub.s32 256, 256
          %572 = vsyncadd [#allocation23], %s571
          %s573 = sshll.u32 [#allocation22], 4
          %s574 = int_to_ptr.vmem [resolvable:$true] %s573
          %579 = dma.hbm_to_vmem [thread:$0]  %s14, 256, %s574, [#allocation23], 128, 128, 8
        $region68: #{cqa_clip_forward.2} parent=11 // pred_fallthru
          _
        // Predicated region
        $region69: #{cqa_clip_forward.2} parent=11 // pred_check
          %p580 = pneg %p371
        $region70: #{cqa_clip_forward.2} parent=11 // pred_check_branch
          %582 = sbr.rel (%p580) target = $region72
        $region71: #{cqa_clip_forward.2} parent=11 // pred_region
          %s584 = ssub.s32 2048, 2048
          %585 = vsyncadd [#allocation23], %s584
          %s586 = sshll.u32 [#allocation24], 4
          %s587 = int_to_ptr.vmem [resolvable:$true] %s586
          %592 = dma.hbm_to_vmem [thread:$0]  %s15, 2048, %s587, [#allocation23], 128, 128, 8
        $region72: #{cqa_clip_forward.2} parent=11 // pred_fallthru
          _
      $region12: #{cqa_clip_forward.2} parent=5 // pred_fallthru
        _
      %p593 = scmp.lt.s32.totalorder %s30, 2
      // Predicated region
      $region73: #{cqa_clip_forward.2} parent=5 // pred_check
        %p594 = pneg %p593
      $region74: #{cqa_clip_forward.2} parent=5 // pred_check_branch
        %596 = sbr.rel (%p594) target = $region76
      $region75: #{cqa_clip_forward.2} parent=5 // pred_region
        // Predicated region
        $region77: #{cqa_clip_forward.2} parent=75 // pred_check
          %p597 = pneg %p50
        $region78: #{cqa_clip_forward.2} parent=75 // pred_check_branch
          %599 = sbr.rel (%p597) target = $region80
        $region79: #{cqa_clip_forward.2} parent=75 // pred_region
          %p600 = scmp.lt.s32.totalorder %s30, 1
          %s601 = scalar_select %p600, %s30, 1
          %s602 = smul.addr %s601, 128
          %s603 = smul.addr %s602, 8
          %s604 = scalar_lea.vmem %s0, %s603
        $region80: #{cqa_clip_forward.2} parent=75 // pred_fallthru
          _
      $region76: #{cqa_clip_forward.2} parent=5 // pred_fallthru
        _
      %p605 = scmp.le.s32.totalorder 1, %s30
      %p606 = scmp.lt.s32.totalorder %s30, 3
      %p607 = pnand %p605, %p606
      %p608 = pneg %p607
      // Predicated region
      $region81: #{cqa_clip_forward.2} parent=5 // pred_check
        _
      $region82: #{cqa_clip_forward.2} parent=5 // pred_check_branch
        %610 = sbr.rel (%p607) target = $region84
      $region83: #{cqa_clip_forward.2} parent=5 // pred_region
        %s611 = ssub.s32 %s30, 1
        // Predicated region
        $region85: #{cqa_clip_forward.2} parent=83 // pred_check
          %p612 = pneg %p77
        $region86: #{cqa_clip_forward.2} parent=83 // pred_check_branch
          %614 = sbr.rel (%p612) target = $region88
        $region87: #{cqa_clip_forward.2} parent=83 // pred_region
          %615 = dma.done [#allocation3], 64
        $region88: #{cqa_clip_forward.2} parent=83 // pred_fallthru
          _
        // Predicated region
        $region89: #{cqa_clip_forward.2} parent=83 // pred_check
          %p616 = pneg %p98
        $region90: #{cqa_clip_forward.2} parent=83 // pred_check_branch
          %618 = sbr.rel (%p616) target = $region92
        $region91: #{cqa_clip_forward.2} parent=83 // pred_region
          %619 = dma.done [#allocation5], 16
        $region92: #{cqa_clip_forward.2} parent=83 // pred_fallthru
          _
        // Predicated region
        $region93: #{cqa_clip_forward.2} parent=83 // pred_check
          %p620 = pneg %p119
        $region94: #{cqa_clip_forward.2} parent=83 // pred_check_branch
          %622 = sbr.rel (%p620) target = $region96
        $region95: #{cqa_clip_forward.2} parent=83 // pred_region
          %623 = dma.done [#allocation5], 128
        $region96: #{cqa_clip_forward.2} parent=83 // pred_fallthru
          _
        // Predicated region
        $region97: #{cqa_clip_forward.2} parent=83 // pred_check
          %p624 = pneg %p140
        $region98: #{cqa_clip_forward.2} parent=83 // pred_check_branch
          %626 = sbr.rel (%p624) target = $region100
        $region99: #{cqa_clip_forward.2} parent=83 // pred_region
          %627 = dma.done [#allocation8], 16
        $region100: #{cqa_clip_forward.2} parent=83 // pred_fallthru
          _
        // Predicated region
        $region101: #{cqa_clip_forward.2} parent=83 // pred_check
          %p628 = pneg %p161
        $region102: #{cqa_clip_forward.2} parent=83 // pred_check_branch
          %630 = sbr.rel (%p628) target = $region104
        $region103: #{cqa_clip_forward.2} parent=83 // pred_region
          %631 = dma.done [#allocation8], 256
        $region104: #{cqa_clip_forward.2} parent=83 // pred_fallthru
          _
        // Predicated region
        $region105: #{cqa_clip_forward.2} parent=83 // pred_check
          %p632 = pneg %p182
        $region106: #{cqa_clip_forward.2} parent=83 // pred_check_branch
          %634 = sbr.rel (%p632) target = $region108
        $region107: #{cqa_clip_forward.2} parent=83 // pred_region
          %635 = dma.done [#allocation11], 16
        $region108: #{cqa_clip_forward.2} parent=83 // pred_fallthru
          _
        // Predicated region
        $region109: #{cqa_clip_forward.2} parent=83 // pred_check
          %p636 = pneg %p203
        $region110: #{cqa_clip_forward.2} parent=83 // pred_check_branch
          %638 = sbr.rel (%p636) target = $region112
        $region111: #{cqa_clip_forward.2} parent=83 // pred_region
          %639 = dma.done [#allocation11], 512
        $region112: #{cqa_clip_forward.2} parent=83 // pred_fallthru
          _
        // Predicated region
        $region113: #{cqa_clip_forward.2} parent=83 // pred_check
          %p640 = pneg %p224
        $region114: #{cqa_clip_forward.2} parent=83 // pred_check_branch
          %642 = sbr.rel (%p640) target = $region116
        $region115: #{cqa_clip_forward.2} parent=83 // pred_region
          %643 = dma.done [#allocation14], 16
        $region116: #{cqa_clip_forward.2} parent=83 // pred_fallthru
          _
        // Predicated region
        $region117: #{cqa_clip_forward.2} parent=83 // pred_check
          %p644 = pneg %p245
        $region118: #{cqa_clip_forward.2} parent=83 // pred_check_branch
          %646 = sbr.rel (%p644) target = $region120
        $region119: #{cqa_clip_forward.2} parent=83 // pred_region
          %647 = dma.done [#allocation14], 1024
        $region120: #{cqa_clip_forward.2} parent=83 // pred_fallthru
          _
        // Predicated region
        $region121: #{cqa_clip_forward.2} parent=83 // pred_check
          %p648 = pneg %p266
        $region122: #{cqa_clip_forward.2} parent=83 // pred_check_branch
          %650 = sbr.rel (%p648) target = $region124
        $region123: #{cqa_clip_forward.2} parent=83 // pred_region
          %651 = dma.done [#allocation17], 16
        $region124: #{cqa_clip_forward.2} parent=83 // pred_fallthru
          _
        // Predicated region
        $region125: #{cqa_clip_forward.2} parent=83 // pred_check
          %p652 = pneg %p287
        $region126: #{cqa_clip_forward.2} parent=83 // pred_check_branch
          %654 = sbr.rel (%p652) target = $region128
        $region127: #{cqa_clip_forward.2} parent=83 // pred_region
          %655 = dma.done [#allocation17], 32768
        $region128: #{cqa_clip_forward.2} parent=83 // pred_fallthru
          _
        // Predicated region
        $region129: #{cqa_clip_forward.2} parent=83 // pred_check
          %p656 = pneg %p308
        $region130: #{cqa_clip_forward.2} parent=83 // pred_check_branch
          %658 = sbr.rel (%p656) target = $region132
        $region131: #{cqa_clip_forward.2} parent=83 // pred_region
          %659 = dma.done [#allocation20], 512
        $region132: #{cqa_clip_forward.2} parent=83 // pred_fallthru
          _
        // Predicated region
        $region133: #{cqa_clip_forward.2} parent=83 // pred_check
          %p660 = pneg %p329
        $region134: #{cqa_clip_forward.2} parent=83 // pred_check_branch
          %662 = sbr.rel (%p660) target = $region136
        $region135: #{cqa_clip_forward.2} parent=83 // pred_region
          %663 = dma.done [#allocation20], 2048
        $region136: #{cqa_clip_forward.2} parent=83 // pred_fallthru
          _
        // Predicated region
        $region137: #{cqa_clip_forward.2} parent=83 // pred_check
          %p664 = pneg %p350
        $region138: #{cqa_clip_forward.2} parent=83 // pred_check_branch
          %666 = sbr.rel (%p664) target = $region140
        $region139: #{cqa_clip_forward.2} parent=83 // pred_region
          %667 = dma.done [#allocation23], 256
        $region140: #{cqa_clip_forward.2} parent=83 // pred_fallthru
          _
        // Predicated region
        $region141: #{cqa_clip_forward.2} parent=83 // pred_check
          %p668 = pneg %p371
        $region142: #{cqa_clip_forward.2} parent=83 // pred_check_branch
          %670 = sbr.rel (%p668) target = $region144
        $region143: #{cqa_clip_forward.2} parent=83 // pred_region
          %671 = dma.done [#allocation23], 2048
        $region144: #{cqa_clip_forward.2} parent=83 // pred_fallthru
          _
        %p672 = scmp.lt.s32.totalorder %s35, 1
        %s673 = scalar_select %p672, %s35, 1
        %s674 = smul.addr %s673, 128
        %s675 = smul.addr %s674, 8
        %s676 = scalar_lea.vmem %s0, %s675
        %p677 = pneg %p56
        %p678 = pneg %p53
        %p679 = pneg %p77
        %p680 = pneg %p74
        %p681 = pneg %p98
        %p682 = pneg %p95
        %p683 = pneg %p119
        %p684 = pneg %p116
        %p685 = pneg %p140
        %p686 = pneg %p137
        %p687 = pneg %p161
        %p688 = pneg %p158
        %p689 = pneg %p182
        %p690 = pneg %p179
        %p691 = pneg %p203
        %p692 = pneg %p200
        %p693 = pneg %p224
        %p694 = pneg %p221
        %p695 = pneg %p245
        %p696 = pneg %p242
        %p697 = pneg %p266
        %p698 = pneg %p263
        %p699 = pneg %p287
        %p700 = pneg %p284
        %p701 = pneg %p308
        %p702 = pneg %p305
        %p703 = pneg %p329
        %p704 = pneg %p326
        %p705 = pneg %p350
        %p706 = pneg %p347
        %p707 = pneg %p371
        %p708 = pneg %p368
        %p709 = pneg %p397
        %p710 = pneg %p394
        %p711 = scmp.lt.s32.totalorder %s35, 1
        %s712 = scalar_select %p711, %s35, 1
        %s713 = smul.addr %s712, 4
        %s714 = smul.addr %s713, 8
        %s715 = scalar_lea.vmem %s16, %s714
        %p716 = scmp.lt.s32.totalorder %s35, 1
        %s717 = scalar_select %p716, %s35, 1
        %s718 = smul.addr %s717, 128
        %s719 = smul.addr %s718, 8
        %s720 = scalar_lea.vmem %s0, %s719
        %p721 = scmp.lt.s32.totalorder %s35, 1
        %s722 = scalar_select %p721, %s35, 1
        %s723 = smul.addr %s722, 4
        %s724 = smul.addr %s723, 8
        %s725 = scalar_lea.vmem %s16, %s724
        %v726 = vld [vmem:[%s720] sm:$0xff]
        %v727 = vld [vmem:[%s720 + $0x8] sm:$0xff]
        %v728 = vld [vmem:[%s720 + $0x10] sm:$0xff]
        %v729 = vld [vmem:[%s720 + $0x18] sm:$0xff]
        %v730 = vld [vmem:[%s720 + $0x20] sm:$0xff]
        %v731 = vld [vmem:[%s720 + $0x28] sm:$0xff]
        %v732 = vld [vmem:[%s720 + $0x30] sm:$0xff]
        %v733 = vld [vmem:[%s720 + $0x38] sm:$0xff]
        %v734 = vld [vmem:[%s720 + $0x40] sm:$0xff]
        %v735 = vld [vmem:[%s720 + $0x48] sm:$0xff]
        %v736 = vld [vmem:[%s720 + $0x50] sm:$0xff]
        %v737 = vld [vmem:[%s720 + $0x58] sm:$0xff]
        %v738 = vld [vmem:[%s720 + $0x60] sm:$0xff]
        %v739 = vld [vmem:[%s720 + $0x68] sm:$0xff]
        %v740 = vld [vmem:[%s720 + $0x70] sm:$0xff]
        %v741 = vld [vmem:[%s720 + $0x78] sm:$0xff]
        %v742 = vld [vmem:[%s720 + $0x80] sm:$0xff]
        %v743 = vld [vmem:[%s720 + $0x88] sm:$0xff]
        %v744 = vld [vmem:[%s720 + $0x90] sm:$0xff]
        %v745 = vld [vmem:[%s720 + $0x98] sm:$0xff]
        %v746 = vld [vmem:[%s720 + $0xa0] sm:$0xff]
        %v747 = vld [vmem:[%s720 + $0xa8] sm:$0xff]
        %v748 = vld [vmem:[%s720 + $0xb0] sm:$0xff]
        %v749 = vld [vmem:[%s720 + $0xb8] sm:$0xff]
        %v750 = vld [vmem:[%s720 + $0xc0] sm:$0xff]
        %v751 = vld [vmem:[%s720 + $0xc8] sm:$0xff]
        %v752 = vld [vmem:[%s720 + $0xd0] sm:$0xff]
        %v753 = vld [vmem:[%s720 + $0xd8] sm:$0xff]
        %v754 = vld [vmem:[%s720 + $0xe0] sm:$0xff]
        %v755 = vld [vmem:[%s720 + $0xe8] sm:$0xff]
        %v756 = vld [vmem:[%s720 + $0xf0] sm:$0xff]
        %v757 = vld [vmem:[%s720 + $0xf8] sm:$0xff]
        %v758 = vld [vmem:[%s720 + $0x100] sm:$0xff]
        %v759 = vld [vmem:[%s720 + $0x108] sm:$0xff]
        %v760 = vld [vmem:[%s720 + $0x110] sm:$0xff]
        %v761 = vld [vmem:[%s720 + $0x118] sm:$0xff]
        %v762 = vld [vmem:[%s720 + $0x120] sm:$0xff]
        %v763 = vld [vmem:[%s720 + $0x128] sm:$0xff]
        %v764 = vld [vmem:[%s720 + $0x130] sm:$0xff]
        %v765 = vld [vmem:[%s720 + $0x138] sm:$0xff]
        %v766 = vld [vmem:[%s720 + $0x140] sm:$0xff]
        %v767 = vld [vmem:[%s720 + $0x148] sm:$0xff]
        %v768 = vld [vmem:[%s720 + $0x150] sm:$0xff]
        %v769 = vld [vmem:[%s720 + $0x158] sm:$0xff]
        %v770 = vld [vmem:[%s720 + $0x160] sm:$0xff]
        %v771 = vld [vmem:[%s720 + $0x168] sm:$0xff]
        %v772 = vld [vmem:[%s720 + $0x170] sm:$0xff]
        %v773 = vld [vmem:[%s720 + $0x178] sm:$0xff]
        %v774 = vld [vmem:[%s720 + $0x180] sm:$0xff]
        %v775 = vld [vmem:[%s720 + $0x188] sm:$0xff]
        %v776 = vld [vmem:[%s720 + $0x190] sm:$0xff]
        %v777 = vld [vmem:[%s720 + $0x198] sm:$0xff]
        %v778 = vld [vmem:[%s720 + $0x1a0] sm:$0xff]
        %v779 = vld [vmem:[%s720 + $0x1a8] sm:$0xff]
        %v780 = vld [vmem:[%s720 + $0x1b0] sm:$0xff]
        %v781 = vld [vmem:[%s720 + $0x1b8] sm:$0xff]
        %v782 = vld [vmem:[%s720 + $0x1c0] sm:$0xff]
        %v783 = vld [vmem:[%s720 + $0x1c8] sm:$0xff]
        %v784 = vld [vmem:[%s720 + $0x1d0] sm:$0xff]
        %v785 = vld [vmem:[%s720 + $0x1d8] sm:$0xff]
        %v786 = vld [vmem:[%s720 + $0x1e0] sm:$0xff]
        %v787 = vld [vmem:[%s720 + $0x1e8] sm:$0xff]
        %v788 = vld [vmem:[%s720 + $0x1f0] sm:$0xff]
        %v789 = vld [vmem:[%s720 + $0x1f8] sm:$0xff]
        %v790 = vld [vmem:[%s720 + $0x200] sm:$0xff]
        %v791 = vld [vmem:[%s720 + $0x208] sm:$0xff]
        %v792 = vld [vmem:[%s720 + $0x210] sm:$0xff]
        %v793 = vld [vmem:[%s720 + $0x218] sm:$0xff]
        %v794 = vld [vmem:[%s720 + $0x220] sm:$0xff]
        %v795 = vld [vmem:[%s720 + $0x228] sm:$0xff]
        %v796 = vld [vmem:[%s720 + $0x230] sm:$0xff]
        %v797 = vld [vmem:[%s720 + $0x238] sm:$0xff]
        %v798 = vld [vmem:[%s720 + $0x240] sm:$0xff]
        %v799 = vld [vmem:[%s720 + $0x248] sm:$0xff]
        %v800 = vld [vmem:[%s720 + $0x250] sm:$0xff]
        %v801 = vld [vmem:[%s720 + $0x258] sm:$0xff]
        %v802 = vld [vmem:[%s720 + $0x260] sm:$0xff]
        %v803 = vld [vmem:[%s720 + $0x268] sm:$0xff]
        %v804 = vld [vmem:[%s720 + $0x270] sm:$0xff]
        %v805 = vld [vmem:[%s720 + $0x278] sm:$0xff]
        %v806 = vld [vmem:[%s720 + $0x280] sm:$0xff]
        %v807 = vld [vmem:[%s720 + $0x288] sm:$0xff]
        %v808 = vld [vmem:[%s720 + $0x290] sm:$0xff]
        %v809 = vld [vmem:[%s720 + $0x298] sm:$0xff]
        %v810 = vld [vmem:[%s720 + $0x2a0] sm:$0xff]
        %v811 = vld [vmem:[%s720 + $0x2a8] sm:$0xff]
        %v812 = vld [vmem:[%s720 + $0x2b0] sm:$0xff]
        %v813 = vld [vmem:[%s720 + $0x2b8] sm:$0xff]
        %v814 = vld [vmem:[%s720 + $0x2c0] sm:$0xff]
        %v815 = vld [vmem:[%s720 + $0x2c8] sm:$0xff]
        %v816 = vld [vmem:[%s720 + $0x2d0] sm:$0xff]
        %v817 = vld [vmem:[%s720 + $0x2d8] sm:$0xff]
        %v818 = vld [vmem:[%s720 + $0x2e0] sm:$0xff]
        %v819 = vld [vmem:[%s720 + $0x2e8] sm:$0xff]
        %v820 = vld [vmem:[%s720 + $0x2f0] sm:$0xff]
        %v821 = vld [vmem:[%s720 + $0x2f8] sm:$0xff]
        %v822 = vld [vmem:[%s720 + $0x300] sm:$0xff]
        %v823 = vld [vmem:[%s720 + $0x308] sm:$0xff]
        %v824 = vld [vmem:[%s720 + $0x310] sm:$0xff]
        %v825 = vld [vmem:[%s720 + $0x318] sm:$0xff]
        %v826 = vld [vmem:[%s720 + $0x320] sm:$0xff]
        %v827 = vld [vmem:[%s720 + $0x328] sm:$0xff]
        %v828 = vld [vmem:[%s720 + $0x330] sm:$0xff]
        %v829 = vld [vmem:[%s720 + $0x338] sm:$0xff]
        %v830 = vld [vmem:[%s720 + $0x340] sm:$0xff]
        %v831 = vld [vmem:[%s720 + $0x348] sm:$0xff]
        %v832 = vld [vmem:[%s720 + $0x350] sm:$0xff]
        %v833 = vld [vmem:[%s720 + $0x358] sm:$0xff]
        %v834 = vld [vmem:[%s720 + $0x360] sm:$0xff]
        %v835 = vld [vmem:[%s720 + $0x368] sm:$0xff]
        %v836 = vld [vmem:[%s720 + $0x370] sm:$0xff]
        %v837 = vld [vmem:[%s720 + $0x378] sm:$0xff]
        %v838 = vld [vmem:[%s720 + $0x380] sm:$0xff]
        %v839 = vld [vmem:[%s720 + $0x388] sm:$0xff]
        %v840 = vld [vmem:[%s720 + $0x390] sm:$0xff]
        %v841 = vld [vmem:[%s720 + $0x398] sm:$0xff]
        %v842 = vld [vmem:[%s720 + $0x3a0] sm:$0xff]
        %v843 = vld [vmem:[%s720 + $0x3a8] sm:$0xff]
        %v844 = vld [vmem:[%s720 + $0x3b0] sm:$0xff]
        %v845 = vld [vmem:[%s720 + $0x3b8] sm:$0xff]
        %v846 = vld [vmem:[%s720 + $0x3c0] sm:$0xff]
        %v847 = vld [vmem:[%s720 + $0x3c8] sm:$0xff]
        %v848 = vld [vmem:[%s720 + $0x3d0] sm:$0xff]
        %v849 = vld [vmem:[%s720 + $0x3d8] sm:$0xff]
        %v850 = vld [vmem:[%s720 + $0x3e0] sm:$0xff]
        %v851 = vld [vmem:[%s720 + $0x3e8] sm:$0xff]
        %v852 = vld [vmem:[%s720 + $0x3f0] sm:$0xff]
        %v853 = vld [vmem:[%s720 + $0x3f8] sm:$0xff]
        %v854 = vld [vmem:[#allocation2] sm:$0x7]
        %856 = vset.pattern.permute.xlu0 0
        %857 = vperm.xlu0 %856, %v726
        %v858 = vpop.permute.xlu0 %857
        %861 = vset.pattern.permute.xlu0 0
        %862 = vperm.xlu0 %861, %v727
        %v863 = vpop.permute.xlu0 %862
        %866 = vset.pattern.permute.xlu0 0
        %867 = vperm.xlu0 %866, %v728
        %v868 = vpop.permute.xlu0 %867
        %871 = vset.pattern.permute.xlu0 0
        %872 = vperm.xlu0 %871, %v729
        %v873 = vpop.permute.xlu0 %872
        %876 = vset.pattern.permute.xlu0 0
        %877 = vperm.xlu0 %876, %v730
        %v878 = vpop.permute.xlu0 %877
        %881 = vset.pattern.permute.xlu0 0
        %882 = vperm.xlu0 %881, %v731
        %v883 = vpop.permute.xlu0 %882
        %886 = vset.pattern.permute.xlu0 0
        %887 = vperm.xlu0 %886, %v732
        %v888 = vpop.permute.xlu0 %887
        %891 = vset.pattern.permute.xlu0 0
        %892 = vperm.xlu0 %891, %v733
        %v893 = vpop.permute.xlu0 %892
        %896 = vset.pattern.permute.xlu0 0
        %897 = vperm.xlu0 %896, %v734
        %v898 = vpop.permute.xlu0 %897
        %901 = vset.pattern.permute.xlu0 0
        %902 = vperm.xlu0 %901, %v735
        %v903 = vpop.permute.xlu0 %902
        %906 = vset.pattern.permute.xlu0 0
        %907 = vperm.xlu0 %906, %v736
        %v908 = vpop.permute.xlu0 %907
        %911 = vset.pattern.permute.xlu0 0
        %912 = vperm.xlu0 %911, %v737
        %v913 = vpop.permute.xlu0 %912
        %916 = vset.pattern.permute.xlu0 0
        %917 = vperm.xlu0 %916, %v738
        %v918 = vpop.permute.xlu0 %917
        %921 = vset.pattern.permute.xlu0 0
        %922 = vperm.xlu0 %921, %v739
        %v923 = vpop.permute.xlu0 %922
        %926 = vset.pattern.permute.xlu0 0
        %927 = vperm.xlu0 %926, %v740
        %v928 = vpop.permute.xlu0 %927
        %931 = vset.pattern.permute.xlu0 0
        %932 = vperm.xlu0 %931, %v741
        %v933 = vpop.permute.xlu0 %932
        %936 = vset.pattern.permute.xlu0 0
        %937 = vperm.xlu0 %936, %v742
        %v938 = vpop.permute.xlu0 %937
        %941 = vset.pattern.permute.xlu0 0
        %942 = vperm.xlu0 %941, %v743
        %v943 = vpop.permute.xlu0 %942
        %946 = vset.pattern.permute.xlu0 0
        %947 = vperm.xlu0 %946, %v744
        %v948 = vpop.permute.xlu0 %947
        %951 = vset.pattern.permute.xlu0 0
        %952 = vperm.xlu0 %951, %v745
        %v953 = vpop.permute.xlu0 %952
        %956 = vset.pattern.permute.xlu0 0
        %957 = vperm.xlu0 %956, %v746
        %v958 = vpop.permute.xlu0 %957
        %961 = vset.pattern.permute.xlu0 0
        %962 = vperm.xlu0 %961, %v747
        %v963 = vpop.permute.xlu0 %962
        %966 = vset.pattern.permute.xlu0 0
        %967 = vperm.xlu0 %966, %v748
        %v968 = vpop.permute.xlu0 %967
        %971 = vset.pattern.permute.xlu0 0
        %972 = vperm.xlu0 %971, %v749
        %v973 = vpop.permute.xlu0 %972
        %976 = vset.pattern.permute.xlu0 0
        %977 = vperm.xlu0 %976, %v750
        %v978 = vpop.permute.xlu0 %977
        %981 = vset.pattern.permute.xlu0 0
        %982 = vperm.xlu0 %981, %v751
        %v983 = vpop.permute.xlu0 %982
        %986 = vset.pattern.permute.xlu0 0
        %987 = vperm.xlu0 %986, %v752
        %v988 = vpop.permute.xlu0 %987
        %991 = vset.pattern.permute.xlu0 0
        %992 = vperm.xlu0 %991, %v753
        %v993 = vpop.permute.xlu0 %992
        %996 = vset.pattern.permute.xlu0 0
        %997 = vperm.xlu0 %996, %v754
        %v998 = vpop.permute.xlu0 %997
        %1001 = vset.pattern.permute.xlu0 0
        %1002 = vperm.xlu0 %1001, %v755
        %v1003 = vpop.permute.xlu0 %1002
        %1006 = vset.pattern.permute.xlu0 0
        %1007 = vperm.xlu0 %1006, %v756
        %v1008 = vpop.permute.xlu0 %1007
        %1011 = vset.pattern.permute.xlu0 0
        %1012 = vperm.xlu0 %1011, %v757
        %v1013 = vpop.permute.xlu0 %1012
        %1016 = vset.pattern.permute.xlu0 0
        %1017 = vperm.xlu0 %1016, %v758
        %v1018 = vpop.permute.xlu0 %1017
        %1021 = vset.pattern.permute.xlu0 0
        %1022 = vperm.xlu0 %1021, %v759
        %v1023 = vpop.permute.xlu0 %1022
        %1026 = vset.pattern.permute.xlu0 0
        %1027 = vperm.xlu0 %1026, %v760
        %v1028 = vpop.permute.xlu0 %1027
        %1031 = vset.pattern.permute.xlu0 0
        %1032 = vperm.xlu0 %1031, %v761
        %v1033 = vpop.permute.xlu0 %1032
        %1036 = vset.pattern.permute.xlu0 0
        %1037 = vperm.xlu0 %1036, %v762
        %v1038 = vpop.permute.xlu0 %1037
        %1041 = vset.pattern.permute.xlu0 0
        %1042 = vperm.xlu0 %1041, %v763
        %v1043 = vpop.permute.xlu0 %1042
        %1046 = vset.pattern.permute.xlu0 0
        %1047 = vperm.xlu0 %1046, %v764
        %v1048 = vpop.permute.xlu0 %1047
        %1051 = vset.pattern.permute.xlu0 0
        %1052 = vperm.xlu0 %1051, %v765
        %v1053 = vpop.permute.xlu0 %1052
        %1056 = vset.pattern.permute.xlu0 0
        %1057 = vperm.xlu0 %1056, %v766
        %v1058 = vpop.permute.xlu0 %1057
        %1061 = vset.pattern.permute.xlu0 0
        %1062 = vperm.xlu0 %1061, %v767
        %v1063 = vpop.permute.xlu0 %1062
        %1066 = vset.pattern.permute.xlu0 0
        %1067 = vperm.xlu0 %1066, %v768
        %v1068 = vpop.permute.xlu0 %1067
        %1071 = vset.pattern.permute.xlu0 0
        %1072 = vperm.xlu0 %1071, %v769
        %v1073 = vpop.permute.xlu0 %1072
        %1076 = vset.pattern.permute.xlu0 0
        %1077 = vperm.xlu0 %1076, %v770
        %v1078 = vpop.permute.xlu0 %1077
        %1081 = vset.pattern.permute.xlu0 0
        %1082 = vperm.xlu0 %1081, %v771
        %v1083 = vpop.permute.xlu0 %1082
        %1086 = vset.pattern.permute.xlu0 0
        %1087 = vperm.xlu0 %1086, %v772
        %v1088 = vpop.permute.xlu0 %1087
        %1091 = vset.pattern.permute.xlu0 0
        %1092 = vperm.xlu0 %1091, %v773
        %v1093 = vpop.permute.xlu0 %1092
        %1096 = vset.pattern.permute.xlu0 0
        %1097 = vperm.xlu0 %1096, %v774
        %v1098 = vpop.permute.xlu0 %1097
        %1101 = vset.pattern.permute.xlu0 0
        %1102 = vperm.xlu0 %1101, %v775
        %v1103 = vpop.permute.xlu0 %1102
        %1106 = vset.pattern.permute.xlu0 0
        %1107 = vperm.xlu0 %1106, %v776
        %v1108 = vpop.permute.xlu0 %1107
        %1111 = vset.pattern.permute.xlu0 0
        %1112 = vperm.xlu0 %1111, %v777
        %v1113 = vpop.permute.xlu0 %1112
        %1116 = vset.pattern.permute.xlu0 0
        %1117 = vperm.xlu0 %1116, %v778
        %v1118 = vpop.permute.xlu0 %1117
        %1121 = vset.pattern.permute.xlu0 0
        %1122 = vperm.xlu0 %1121, %v779
        %v1123 = vpop.permute.xlu0 %1122
        %1126 = vset.pattern.permute.xlu0 0
        %1127 = vperm.xlu0 %1126, %v780
        %v1128 = vpop.permute.xlu0 %1127
        %1131 = vset.pattern.permute.xlu0 0
        %1132 = vperm.xlu0 %1131, %v781
        %v1133 = vpop.permute.xlu0 %1132
        %1136 = vset.pattern.permute.xlu0 0
        %1137 = vperm.xlu0 %1136, %v782
        %v1138 = vpop.permute.xlu0 %1137
        %1141 = vset.pattern.permute.xlu0 0
        %1142 = vperm.xlu0 %1141, %v783
        %v1143 = vpop.permute.xlu0 %1142
        %1146 = vset.pattern.permute.xlu0 0
        %1147 = vperm.xlu0 %1146, %v784
        %v1148 = vpop.permute.xlu0 %1147
        %1151 = vset.pattern.permute.xlu0 0
        %1152 = vperm.xlu0 %1151, %v785
        %v1153 = vpop.permute.xlu0 %1152
        %1156 = vset.pattern.permute.xlu0 0
        %1157 = vperm.xlu0 %1156, %v786
        %v1158 = vpop.permute.xlu0 %1157
        %1161 = vset.pattern.permute.xlu0 0
        %1162 = vperm.xlu0 %1161, %v787
        %v1163 = vpop.permute.xlu0 %1162
        %1166 = vset.pattern.permute.xlu0 0
        %1167 = vperm.xlu0 %1166, %v788
        %v1168 = vpop.permute.xlu0 %1167
        %1171 = vset.pattern.permute.xlu0 0
        %1172 = vperm.xlu0 %1171, %v789
        %v1173 = vpop.permute.xlu0 %1172
        %1176 = vset.pattern.permute.xlu0 0
        %1177 = vperm.xlu0 %1176, %v790
        %v1178 = vpop.permute.xlu0 %1177
        %1181 = vset.pattern.permute.xlu0 0
        %1182 = vperm.xlu0 %1181, %v791
        %v1183 = vpop.permute.xlu0 %1182
        %1186 = vset.pattern.permute.xlu0 0
        %1187 = vperm.xlu0 %1186, %v792
        %v1188 = vpop.permute.xlu0 %1187
        %1191 = vset.pattern.permute.xlu0 0
        %1192 = vperm.xlu0 %1191, %v793
        %v1193 = vpop.permute.xlu0 %1192
        %1196 = vset.pattern.permute.xlu0 0
        %1197 = vperm.xlu0 %1196, %v794
        %v1198 = vpop.permute.xlu0 %1197
        %1201 = vset.pattern.permute.xlu0 0
        %1202 = vperm.xlu0 %1201, %v795
        %v1203 = vpop.permute.xlu0 %1202
        %1206 = vset.pattern.permute.xlu0 0
        %1207 = vperm.xlu0 %1206, %v796
        %v1208 = vpop.permute.xlu0 %1207
        %1211 = vset.pattern.permute.xlu0 0
        %1212 = vperm.xlu0 %1211, %v797
        %v1213 = vpop.permute.xlu0 %1212
        %1216 = vset.pattern.permute.xlu0 0
        %1217 = vperm.xlu0 %1216, %v798
        %v1218 = vpop.permute.xlu0 %1217
        %1221 = vset.pattern.permute.xlu0 0
        %1222 = vperm.xlu0 %1221, %v799
        %v1223 = vpop.permute.xlu0 %1222
        %1226 = vset.pattern.permute.xlu0 0
        %1227 = vperm.xlu0 %1226, %v800
        %v1228 = vpop.permute.xlu0 %1227
        %1231 = vset.pattern.permute.xlu0 0
        %1232 = vperm.xlu0 %1231, %v801
        %v1233 = vpop.permute.xlu0 %1232
        %1236 = vset.pattern.permute.xlu0 0
        %1237 = vperm.xlu0 %1236, %v802
        %v1238 = vpop.permute.xlu0 %1237
        %1241 = vset.pattern.permute.xlu0 0
        %1242 = vperm.xlu0 %1241, %v803
        %v1243 = vpop.permute.xlu0 %1242
        %1246 = vset.pattern.permute.xlu0 0
        %1247 = vperm.xlu0 %1246, %v804
        %v1248 = vpop.permute.xlu0 %1247
        %1251 = vset.pattern.permute.xlu0 0
        %1252 = vperm.xlu0 %1251, %v805
        %v1253 = vpop.permute.xlu0 %1252
        %1256 = vset.pattern.permute.xlu0 0
        %1257 = vperm.xlu0 %1256, %v806
        %v1258 = vpop.permute.xlu0 %1257
        %1261 = vset.pattern.permute.xlu0 0
        %1262 = vperm.xlu0 %1261, %v807
        %v1263 = vpop.permute.xlu0 %1262
        %1266 = vset.pattern.permute.xlu0 0
        %1267 = vperm.xlu0 %1266, %v808
        %v1268 = vpop.permute.xlu0 %1267
        %1271 = vset.pattern.permute.xlu0 0
        %1272 = vperm.xlu0 %1271, %v809
        %v1273 = vpop.permute.xlu0 %1272
        %1276 = vset.pattern.permute.xlu0 0
        %1277 = vperm.xlu0 %1276, %v810
        %v1278 = vpop.permute.xlu0 %1277
        %1281 = vset.pattern.permute.xlu0 0
        %1282 = vperm.xlu0 %1281, %v811
        %v1283 = vpop.permute.xlu0 %1282
        %1286 = vset.pattern.permute.xlu0 0
        %1287 = vperm.xlu0 %1286, %v812
        %v1288 = vpop.permute.xlu0 %1287
        %1291 = vset.pattern.permute.xlu0 0
        %1292 = vperm.xlu0 %1291, %v813
        %v1293 = vpop.permute.xlu0 %1292
        %1296 = vset.pattern.permute.xlu0 0
        %1297 = vperm.xlu0 %1296, %v814
        %v1298 = vpop.permute.xlu0 %1297
        %1301 = vset.pattern.permute.xlu0 0
        %1302 = vperm.xlu0 %1301, %v815
        %v1303 = vpop.permute.xlu0 %1302
        %1306 = vset.pattern.permute.xlu0 0
        %1307 = vperm.xlu0 %1306, %v816
        %v1308 = vpop.permute.xlu0 %1307
        %1311 = vset.pattern.permute.xlu0 0
        %1312 = vperm.xlu0 %1311, %v817
        %v1313 = vpop.permute.xlu0 %1312
        %1316 = vset.pattern.permute.xlu0 0
        %1317 = vperm.xlu0 %1316, %v818
        %v1318 = vpop.permute.xlu0 %1317
        %1321 = vset.pattern.permute.xlu0 0
        %1322 = vperm.xlu0 %1321, %v819
        %v1323 = vpop.permute.xlu0 %1322
        %1326 = vset.pattern.permute.xlu0 0
        %1327 = vperm.xlu0 %1326, %v820
        %v1328 = vpop.permute.xlu0 %1327
        %1331 = vset.pattern.permute.xlu0 0
        %1332 = vperm.xlu0 %1331, %v821
        %v1333 = vpop.permute.xlu0 %1332
        %1336 = vset.pattern.permute.xlu0 0
        %1337 = vperm.xlu0 %1336, %v822
        %v1338 = vpop.permute.xlu0 %1337
        %1341 = vset.pattern.permute.xlu0 0
        %1342 = vperm.xlu0 %1341, %v823
        %v1343 = vpop.permute.xlu0 %1342
        %1346 = vset.pattern.permute.xlu0 0
        %1347 = vperm.xlu0 %1346, %v824
        %v1348 = vpop.permute.xlu0 %1347
        %1351 = vset.pattern.permute.xlu0 0
        %1352 = vperm.xlu0 %1351, %v825
        %v1353 = vpop.permute.xlu0 %1352
        %1356 = vset.pattern.permute.xlu0 0
        %1357 = vperm.xlu0 %1356, %v826
        %v1358 = vpop.permute.xlu0 %1357
        %1361 = vset.pattern.permute.xlu0 0
        %1362 = vperm.xlu0 %1361, %v827
        %v1363 = vpop.permute.xlu0 %1362
        %1366 = vset.pattern.permute.xlu0 0
        %1367 = vperm.xlu0 %1366, %v828
        %v1368 = vpop.permute.xlu0 %1367
        %1371 = vset.pattern.permute.xlu0 0
        %1372 = vperm.xlu0 %1371, %v829
        %v1373 = vpop.permute.xlu0 %1372
        %1376 = vset.pattern.permute.xlu0 0
        %1377 = vperm.xlu0 %1376, %v830
        %v1378 = vpop.permute.xlu0 %1377
        %1381 = vset.pattern.permute.xlu0 0
        %1382 = vperm.xlu0 %1381, %v831
        %v1383 = vpop.permute.xlu0 %1382
        %1386 = vset.pattern.permute.xlu0 0
        %1387 = vperm.xlu0 %1386, %v832
        %v1388 = vpop.permute.xlu0 %1387
        %1391 = vset.pattern.permute.xlu0 0
        %1392 = vperm.xlu0 %1391, %v833
        %v1393 = vpop.permute.xlu0 %1392
        %1396 = vset.pattern.permute.xlu0 0
        %1397 = vperm.xlu0 %1396, %v834
        %v1398 = vpop.permute.xlu0 %1397
        %1401 = vset.pattern.permute.xlu0 0
        %1402 = vperm.xlu0 %1401, %v835
        %v1403 = vpop.permute.xlu0 %1402
        %1406 = vset.pattern.permute.xlu0 0
        %1407 = vperm.xlu0 %1406, %v836
        %v1408 = vpop.permute.xlu0 %1407
        %1411 = vset.pattern.permute.xlu0 0
        %1412 = vperm.xlu0 %1411, %v837
        %v1413 = vpop.permute.xlu0 %1412
        %1416 = vset.pattern.permute.xlu0 0
        %1417 = vperm.xlu0 %1416, %v838
        %v1418 = vpop.permute.xlu0 %1417
        %1421 = vset.pattern.permute.xlu0 0
        %1422 = vperm.xlu0 %1421, %v839
        %v1423 = vpop.permute.xlu0 %1422
        %1426 = vset.pattern.permute.xlu0 0
        %1427 = vperm.xlu0 %1426, %v840
        %v1428 = vpop.permute.xlu0 %1427
        %1431 = vset.pattern.permute.xlu0 0
        %1432 = vperm.xlu0 %1431, %v841
        %v1433 = vpop.permute.xlu0 %1432
        %1436 = vset.pattern.permute.xlu0 0
        %1437 = vperm.xlu0 %1436, %v842
        %v1438 = vpop.permute.xlu0 %1437
        %1441 = vset.pattern.permute.xlu0 0
        %1442 = vperm.xlu0 %1441, %v843
        %v1443 = vpop.permute.xlu0 %1442
        %1446 = vset.pattern.permute.xlu0 0
        %1447 = vperm.xlu0 %1446, %v844
        %v1448 = vpop.permute.xlu0 %1447
        %1451 = vset.pattern.permute.xlu0 0
        %1452 = vperm.xlu0 %1451, %v845
        %v1453 = vpop.permute.xlu0 %1452
        %1456 = vset.pattern.permute.xlu0 0
        %1457 = vperm.xlu0 %1456, %v846
        %v1458 = vpop.permute.xlu0 %1457
        %1461 = vset.pattern.permute.xlu0 0
        %1462 = vperm.xlu0 %1461, %v847
        %v1463 = vpop.permute.xlu0 %1462
        %1466 = vset.pattern.permute.xlu0 0
        %1467 = vperm.xlu0 %1466, %v848
        %v1468 = vpop.permute.xlu0 %1467
        %1471 = vset.pattern.permute.xlu0 0
        %1472 = vperm.xlu0 %1471, %v849
        %v1473 = vpop.permute.xlu0 %1472
        %1476 = vset.pattern.permute.xlu0 0
        %1477 = vperm.xlu0 %1476, %v850
        %v1478 = vpop.permute.xlu0 %1477
        %1481 = vset.pattern.permute.xlu0 0
        %1482 = vperm.xlu0 %1481, %v851
        %v1483 = vpop.permute.xlu0 %1482
        %1486 = vset.pattern.permute.xlu0 0
        %1487 = vperm.xlu0 %1486, %v852
        %v1488 = vpop.permute.xlu0 %1487
        %1491 = vset.pattern.permute.xlu0 0
        %1492 = vperm.xlu0 %1491, %v853
        %v1493 = vpop.permute.xlu0 %1492
        %v1495 = vlaneseq
        %v1496 = vshrl.u32 %v1495, 7
        %v1497 = vsub.s32 0, %v1496
        %v1498 = vrot.slane %v854, %v1497
        %v1499 = vmul.f32 %v858, %v1498
        %v1500 = vmul.f32 %v863, %v1498
        %v1501 = vmul.f32 %v868, %v1498
        %v1502 = vmul.f32 %v873, %v1498
        %v1503 = vmul.f32 %v878, %v1498
        %v1504 = vmul.f32 %v883, %v1498
        %v1505 = vmul.f32 %v888, %v1498
        %v1506 = vmul.f32 %v893, %v1498
        %v1507 = vmul.f32 %v898, %v1498
        %v1508 = vmul.f32 %v903, %v1498
        %v1509 = vmul.f32 %v908, %v1498
        %v1510 = vmul.f32 %v913, %v1498
        %v1511 = vmul.f32 %v918, %v1498
        %v1512 = vmul.f32 %v923, %v1498
        %v1513 = vmul.f32 %v928, %v1498
        %v1514 = vmul.f32 %v933, %v1498
        %v1515 = vmul.f32 %v938, %v1498
        %v1516 = vmul.f32 %v943, %v1498
        %v1517 = vmul.f32 %v948, %v1498
        %v1518 = vmul.f32 %v953, %v1498
        %v1519 = vmul.f32 %v958, %v1498
        %v1520 = vmul.f32 %v963, %v1498
        %v1521 = vmul.f32 %v968, %v1498
        %v1522 = vmul.f32 %v973, %v1498
        %v1523 = vmul.f32 %v978, %v1498
        %v1524 = vmul.f32 %v983, %v1498
        %v1525 = vmul.f32 %v988, %v1498
        %v1526 = vmul.f32 %v993, %v1498
        %v1527 = vmul.f32 %v998, %v1498
        %v1528 = vmul.f32 %v1003, %v1498
        %v1529 = vmul.f32 %v1008, %v1498
        %v1530 = vmul.f32 %v1013, %v1498
        %v1531 = vmul.f32 %v1018, %v1498
        %v1532 = vmul.f32 %v1023, %v1498
        %v1533 = vmul.f32 %v1028, %v1498
        %v1534 = vmul.f32 %v1033, %v1498
        %v1535 = vmul.f32 %v1038, %v1498
        %v1536 = vmul.f32 %v1043, %v1498
        %v1537 = vmul.f32 %v1048, %v1498
        %v1538 = vmul.f32 %v1053, %v1498
        %v1539 = vmul.f32 %v1058, %v1498
        %v1540 = vmul.f32 %v1063, %v1498
        %v1541 = vmul.f32 %v1068, %v1498
        %v1542 = vmul.f32 %v1073, %v1498
        %v1543 = vmul.f32 %v1078, %v1498
        %v1544 = vmul.f32 %v1083, %v1498
        %v1545 = vmul.f32 %v1088, %v1498
        %v1546 = vmul.f32 %v1093, %v1498
        %v1547 = vmul.f32 %v1098, %v1498
        %v1548 = vmul.f32 %v1103, %v1498
        %v1549 = vmul.f32 %v1108, %v1498
        %v1550 = vmul.f32 %v1113, %v1498
        %v1551 = vmul.f32 %v1118, %v1498
        %v1552 = vmul.f32 %v1123, %v1498
        %v1553 = vmul.f32 %v1128, %v1498
        %v1554 = vmul.f32 %v1133, %v1498
        %v1555 = vmul.f32 %v1138, %v1498
        %v1556 = vmul.f32 %v1143, %v1498
        %v1557 = vmul.f32 %v1148, %v1498
        %v1558 = vmul.f32 %v1153, %v1498
        %v1559 = vmul.f32 %v1158, %v1498
        %v1560 = vmul.f32 %v1163, %v1498
        %v1561 = vmul.f32 %v1168, %v1498
        %v1562 = vmul.f32 %v1173, %v1498
        %v1563 = vmul.f32 %v1178, %v1498
        %v1564 = vmul.f32 %v1183, %v1498
        %v1565 = vmul.f32 %v1188, %v1498
        %v1566 = vmul.f32 %v1193, %v1498
        %v1567 = vmul.f32 %v1198, %v1498
        %v1568 = vmul.f32 %v1203, %v1498
        %v1569 = vmul.f32 %v1208, %v1498
        %v1570 = vmul.f32 %v1213, %v1498
        %v1571 = vmul.f32 %v1218, %v1498
        %v1572 = vmul.f32 %v1223, %v1498
        %v1573 = vmul.f32 %v1228, %v1498
        %v1574 = vmul.f32 %v1233, %v1498
        %v1575 = vmul.f32 %v1238, %v1498
        %v1576 = vmul.f32 %v1243, %v1498
        %v1577 = vmul.f32 %v1248, %v1498
        %v1578 = vmul.f32 %v1253, %v1498
        %v1579 = vmul.f32 %v1258, %v1498
        %v1580 = vmul.f32 %v1263, %v1498
        %v1581 = vmul.f32 %v1268, %v1498
        %v1582 = vmul.f32 %v1273, %v1498
        %v1583 = vmul.f32 %v1278, %v1498
        %v1584 = vmul.f32 %v1283, %v1498
        %v1585 = vmul.f32 %v1288, %v1498
        %v1586 = vmul.f32 %v1293, %v1498
        %v1587 = vmul.f32 %v1298, %v1498
        %v1588 = vmul.f32 %v1303, %v1498
        %v1589 = vmul.f32 %v1308, %v1498
        %v1590 = vmul.f32 %v1313, %v1498
        %v1591 = vmul.f32 %v1318, %v1498
        %v1592 = vmul.f32 %v1323, %v1498
        %v1593 = vmul.f32 %v1328, %v1498
        %v1594 = vmul.f32 %v1333, %v1498
        %v1595 = vmul.f32 %v1338, %v1498
        %v1596 = vmul.f32 %v1343, %v1498
        %v1597 = vmul.f32 %v1348, %v1498
        %v1598 = vmul.f32 %v1353, %v1498
        %v1599 = vmul.f32 %v1358, %v1498
        %v1600 = vmul.f32 %v1363, %v1498
        %v1601 = vmul.f32 %v1368, %v1498
        %v1602 = vmul.f32 %v1373, %v1498
        %v1603 = vmul.f32 %v1378, %v1498
        %v1604 = vmul.f32 %v1383, %v1498
        %v1605 = vmul.f32 %v1388, %v1498
        %v1606 = vmul.f32 %v1393, %v1498
        %v1607 = vmul.f32 %v1398, %v1498
        %v1608 = vmul.f32 %v1403, %v1498
        %v1609 = vmul.f32 %v1408, %v1498
        %v1610 = vmul.f32 %v1413, %v1498
        %v1611 = vmul.f32 %v1418, %v1498
        %v1612 = vmul.f32 %v1423, %v1498
        %v1613 = vmul.f32 %v1428, %v1498
        %v1614 = vmul.f32 %v1433, %v1498
        %v1615 = vmul.f32 %v1438, %v1498
        %v1616 = vmul.f32 %v1443, %v1498
        %v1617 = vmul.f32 %v1448, %v1498
        %v1618 = vmul.f32 %v1453, %v1498
        %v1619 = vmul.f32 %v1458, %v1498
        %v1620 = vmul.f32 %v1463, %v1498
        %v1621 = vmul.f32 %v1468, %v1498
        %v1622 = vmul.f32 %v1473, %v1498
        %v1623 = vmul.f32 %v1478, %v1498
        %v1624 = vmul.f32 %v1483, %v1498
        %v1625 = vmul.f32 %v1488, %v1498
        %v1626 = vmul.f32 %v1493, %v1498
        %1627 = vset.pattern.permute.xlu0 1
        %1628 = vperm.xlu0 %1627, %v726
        %v1629 = vpop.permute.xlu0 %1628
        %1631 = vset.pattern.permute.xlu0 1
        %1632 = vperm.xlu0 %1631, %v727
        %v1633 = vpop.permute.xlu0 %1632
        %1635 = vset.pattern.permute.xlu0 1
        %1636 = vperm.xlu0 %1635, %v728
        %v1637 = vpop.permute.xlu0 %1636
        %1639 = vset.pattern.permute.xlu0 1
        %1640 = vperm.xlu0 %1639, %v729
        %v1641 = vpop.permute.xlu0 %1640
        %1643 = vset.pattern.permute.xlu0 1
        %1644 = vperm.xlu0 %1643, %v730
        %v1645 = vpop.permute.xlu0 %1644
        %1647 = vset.pattern.permute.xlu0 1
        %1648 = vperm.xlu0 %1647, %v731
        %v1649 = vpop.permute.xlu0 %1648
        %1651 = vset.pattern.permute.xlu0 1
        %1652 = vperm.xlu0 %1651, %v732
        %v1653 = vpop.permute.xlu0 %1652
        %1655 = vset.pattern.permute.xlu0 1
        %1656 = vperm.xlu0 %1655, %v733
        %v1657 = vpop.permute.xlu0 %1656
        %1659 = vset.pattern.permute.xlu0 1
        %1660 = vperm.xlu0 %1659, %v734
        %v1661 = vpop.permute.xlu0 %1660
        %1663 = vset.pattern.permute.xlu0 1
        %1664 = vperm.xlu0 %1663, %v735
        %v1665 = vpop.permute.xlu0 %1664
        %1667 = vset.pattern.permute.xlu0 1
        %1668 = vperm.xlu0 %1667, %v736
        %v1669 = vpop.permute.xlu0 %1668
        %1671 = vset.pattern.permute.xlu0 1
        %1672 = vperm.xlu0 %1671, %v737
        %v1673 = vpop.permute.xlu0 %1672
        %1675 = vset.pattern.permute.xlu0 1
        %1676 = vperm.xlu0 %1675, %v738
        %v1677 = vpop.permute.xlu0 %1676
        %1679 = vset.pattern.permute.xlu0 1
        %1680 = vperm.xlu0 %1679, %v739
        %v1681 = vpop.permute.xlu0 %1680
        %1683 = vset.pattern.permute.xlu0 1
        %1684 = vperm.xlu0 %1683, %v740
        %v1685 = vpop.permute.xlu0 %1684
        %1687 = vset.pattern.permute.xlu0 1
        %1688 = vperm.xlu0 %1687, %v741
        %v1689 = vpop.permute.xlu0 %1688
        %1691 = vset.pattern.permute.xlu0 1
        %1692 = vperm.xlu0 %1691, %v742
        %v1693 = vpop.permute.xlu0 %1692
        %1695 = vset.pattern.permute.xlu0 1
        %1696 = vperm.xlu0 %1695, %v743
        %v1697 = vpop.permute.xlu0 %1696
        %1699 = vset.pattern.permute.xlu0 1
        %1700 = vperm.xlu0 %1699, %v744
        %v1701 = vpop.permute.xlu0 %1700
        %1703 = vset.pattern.permute.xlu0 1
        %1704 = vperm.xlu0 %1703, %v745
        %v1705 = vpop.permute.xlu0 %1704
        %1707 = vset.pattern.permute.xlu0 1
        %1708 = vperm.xlu0 %1707, %v746
        %v1709 = vpop.permute.xlu0 %1708
        %1711 = vset.pattern.permute.xlu0 1
        %1712 = vperm.xlu0 %1711, %v747
        %v1713 = vpop.permute.xlu0 %1712
        %1715 = vset.pattern.permute.xlu0 1
        %1716 = vperm.xlu0 %1715, %v748
        %v1717 = vpop.permute.xlu0 %1716
        %1719 = vset.pattern.permute.xlu0 1
        %1720 = vperm.xlu0 %1719, %v749
        %v1721 = vpop.permute.xlu0 %1720
        %1723 = vset.pattern.permute.xlu0 1
        %1724 = vperm.xlu0 %1723, %v750
        %v1725 = vpop.permute.xlu0 %1724
        %1727 = vset.pattern.permute.xlu0 1
        %1728 = vperm.xlu0 %1727, %v751
        %v1729 = vpop.permute.xlu0 %1728
        %1731 = vset.pattern.permute.xlu0 1
        %1732 = vperm.xlu0 %1731, %v752
        %v1733 = vpop.permute.xlu0 %1732
        %1735 = vset.pattern.permute.xlu0 1
        %1736 = vperm.xlu0 %1735, %v753
        %v1737 = vpop.permute.xlu0 %1736
        %1739 = vset.pattern.permute.xlu0 1
        %1740 = vperm.xlu0 %1739, %v754
        %v1741 = vpop.permute.xlu0 %1740
        %1743 = vset.pattern.permute.xlu0 1
        %1744 = vperm.xlu0 %1743, %v755
        %v1745 = vpop.permute.xlu0 %1744
        %1747 = vset.pattern.permute.xlu0 1
        %1748 = vperm.xlu0 %1747, %v756
        %v1749 = vpop.permute.xlu0 %1748
        %1751 = vset.pattern.permute.xlu0 1
        %1752 = vperm.xlu0 %1751, %v757
        %v1753 = vpop.permute.xlu0 %1752
        %1755 = vset.pattern.permute.xlu0 1
        %1756 = vperm.xlu0 %1755, %v758
        %v1757 = vpop.permute.xlu0 %1756
        %1759 = vset.pattern.permute.xlu0 1
        %1760 = vperm.xlu0 %1759, %v759
        %v1761 = vpop.permute.xlu0 %1760
        %1763 = vset.pattern.permute.xlu0 1
        %1764 = vperm.xlu0 %1763, %v760
        %v1765 = vpop.permute.xlu0 %1764
        %1767 = vset.pattern.permute.xlu0 1
        %1768 = vperm.xlu0 %1767, %v761
        %v1769 = vpop.permute.xlu0 %1768
        %1771 = vset.pattern.permute.xlu0 1
        %1772 = vperm.xlu0 %1771, %v762
        %v1773 = vpop.permute.xlu0 %1772
        %1775 = vset.pattern.permute.xlu0 1
        %1776 = vperm.xlu0 %1775, %v763
        %v1777 = vpop.permute.xlu0 %1776
        %1779 = vset.pattern.permute.xlu0 1
        %1780 = vperm.xlu0 %1779, %v764
        %v1781 = vpop.permute.xlu0 %1780
        %1783 = vset.pattern.permute.xlu0 1
        %1784 = vperm.xlu0 %1783, %v765
        %v1785 = vpop.permute.xlu0 %1784
        %1787 = vset.pattern.permute.xlu0 1
        %1788 = vperm.xlu0 %1787, %v766
        %v1789 = vpop.permute.xlu0 %1788
        %1791 = vset.pattern.permute.xlu0 1
        %1792 = vperm.xlu0 %1791, %v767
        %v1793 = vpop.permute.xlu0 %1792
        %1795 = vset.pattern.permute.xlu0 1
        %1796 = vperm.xlu0 %1795, %v768
        %v1797 = vpop.permute.xlu0 %1796
        %1799 = vset.pattern.permute.xlu0 1
        %1800 = vperm.xlu0 %1799, %v769
        %v1801 = vpop.permute.xlu0 %1800
        %1803 = vset.pattern.permute.xlu0 1
        %1804 = vperm.xlu0 %1803, %v770
        %v1805 = vpop.permute.xlu0 %1804
        %1807 = vset.pattern.permute.xlu0 1
        %1808 = vperm.xlu0 %1807, %v771
        %v1809 = vpop.permute.xlu0 %1808
        %1811 = vset.pattern.permute.xlu0 1
        %1812 = vperm.xlu0 %1811, %v772
        %v1813 = vpop.permute.xlu0 %1812
        %1815 = vset.pattern.permute.xlu0 1
        %1816 = vperm.xlu0 %1815, %v773
        %v1817 = vpop.permute.xlu0 %1816
        %1819 = vset.pattern.permute.xlu0 1
        %1820 = vperm.xlu0 %1819, %v774
        %v1821 = vpop.permute.xlu0 %1820
        %1823 = vset.pattern.permute.xlu0 1
        %1824 = vperm.xlu0 %1823, %v775
        %v1825 = vpop.permute.xlu0 %1824
        %1827 = vset.pattern.permute.xlu0 1
        %1828 = vperm.xlu0 %1827, %v776
        %v1829 = vpop.permute.xlu0 %1828
        %1831 = vset.pattern.permute.xlu0 1
        %1832 = vperm.xlu0 %1831, %v777
        %v1833 = vpop.permute.xlu0 %1832
        %1835 = vset.pattern.permute.xlu0 1
        %1836 = vperm.xlu0 %1835, %v778
        %v1837 = vpop.permute.xlu0 %1836
        %1839 = vset.pattern.permute.xlu0 1
        %1840 = vperm.xlu0 %1839, %v779
        %v1841 = vpop.permute.xlu0 %1840
        %1843 = vset.pattern.permute.xlu0 1
        %1844 = vperm.xlu0 %1843, %v780
        %v1845 = vpop.permute.xlu0 %1844
        %1847 = vset.pattern.permute.xlu0 1
        %1848 = vperm.xlu0 %1847, %v781
        %v1849 = vpop.permute.xlu0 %1848
        %1851 = vset.pattern.permute.xlu0 1
        %1852 = vperm.xlu0 %1851, %v782
        %v1853 = vpop.permute.xlu0 %1852
        %1855 = vset.pattern.permute.xlu0 1
        %1856 = vperm.xlu0 %1855, %v783
        %v1857 = vpop.permute.xlu0 %1856
        %1859 = vset.pattern.permute.xlu0 1
        %1860 = vperm.xlu0 %1859, %v784
        %v1861 = vpop.permute.xlu0 %1860
        %1863 = vset.pattern.permute.xlu0 1
        %1864 = vperm.xlu0 %1863, %v785
        %v1865 = vpop.permute.xlu0 %1864
        %1867 = vset.pattern.permute.xlu0 1
        %1868 = vperm.xlu0 %1867, %v786
        %v1869 = vpop.permute.xlu0 %1868
        %1871 = vset.pattern.permute.xlu0 1
        %1872 = vperm.xlu0 %1871, %v787
        %v1873 = vpop.permute.xlu0 %1872
        %1875 = vset.pattern.permute.xlu0 1
        %1876 = vperm.xlu0 %1875, %v788
        %v1877 = vpop.permute.xlu0 %1876
        %1879 = vset.pattern.permute.xlu0 1
        %1880 = vperm.xlu0 %1879, %v789
        %v1881 = vpop.permute.xlu0 %1880
        %1883 = vset.pattern.permute.xlu0 1
        %1884 = vperm.xlu0 %1883, %v790
        %v1885 = vpop.permute.xlu0 %1884
        %1887 = vset.pattern.permute.xlu0 1
        %1888 = vperm.xlu0 %1887, %v791
        %v1889 = vpop.permute.xlu0 %1888
        %1891 = vset.pattern.permute.xlu0 1
        %1892 = vperm.xlu0 %1891, %v792
        %v1893 = vpop.permute.xlu0 %1892
        %1895 = vset.pattern.permute.xlu0 1
        %1896 = vperm.xlu0 %1895, %v793
        %v1897 = vpop.permute.xlu0 %1896
        %1899 = vset.pattern.permute.xlu0 1
        %1900 = vperm.xlu0 %1899, %v794
        %v1901 = vpop.permute.xlu0 %1900
        %1903 = vset.pattern.permute.xlu0 1
        %1904 = vperm.xlu0 %1903, %v795
        %v1905 = vpop.permute.xlu0 %1904
        %1907 = vset.pattern.permute.xlu0 1
        %1908 = vperm.xlu0 %1907, %v796
        %v1909 = vpop.permute.xlu0 %1908
        %1911 = vset.pattern.permute.xlu0 1
        %1912 = vperm.xlu0 %1911, %v797
        %v1913 = vpop.permute.xlu0 %1912
        %1915 = vset.pattern.permute.xlu0 1
        %1916 = vperm.xlu0 %1915, %v798
        %v1917 = vpop.permute.xlu0 %1916
        %1919 = vset.pattern.permute.xlu0 1
        %1920 = vperm.xlu0 %1919, %v799
        %v1921 = vpop.permute.xlu0 %1920
        %1923 = vset.pattern.permute.xlu0 1
        %1924 = vperm.xlu0 %1923, %v800
        %v1925 = vpop.permute.xlu0 %1924
        %1927 = vset.pattern.permute.xlu0 1
        %1928 = vperm.xlu0 %1927, %v801
        %v1929 = vpop.permute.xlu0 %1928
        %1931 = vset.pattern.permute.xlu0 1
        %1932 = vperm.xlu0 %1931, %v802
        %v1933 = vpop.permute.xlu0 %1932
        %1935 = vset.pattern.permute.xlu0 1
        %1936 = vperm.xlu0 %1935, %v803
        %v1937 = vpop.permute.xlu0 %1936
        %1939 = vset.pattern.permute.xlu0 1
        %1940 = vperm.xlu0 %1939, %v804
        %v1941 = vpop.permute.xlu0 %1940
        %1943 = vset.pattern.permute.xlu0 1
        %1944 = vperm.xlu0 %1943, %v805
        %v1945 = vpop.permute.xlu0 %1944
        %1947 = vset.pattern.permute.xlu0 1
        %1948 = vperm.xlu0 %1947, %v806
        %v1949 = vpop.permute.xlu0 %1948
        %1951 = vset.pattern.permute.xlu0 1
        %1952 = vperm.xlu0 %1951, %v807
        %v1953 = vpop.permute.xlu0 %1952
        %1955 = vset.pattern.permute.xlu0 1
        %1956 = vperm.xlu0 %1955, %v808
        %v1957 = vpop.permute.xlu0 %1956
        %1959 = vset.pattern.permute.xlu0 1
        %1960 = vperm.xlu0 %1959, %v809
        %v1961 = vpop.permute.xlu0 %1960
        %1963 = vset.pattern.permute.xlu0 1
        %1964 = vperm.xlu0 %1963, %v810
        %v1965 = vpop.permute.xlu0 %1964
        %1967 = vset.pattern.permute.xlu0 1
        %1968 = vperm.xlu0 %1967, %v811
        %v1969 = vpop.permute.xlu0 %1968
        %1971 = vset.pattern.permute.xlu0 1
        %1972 = vperm.xlu0 %1971, %v812
        %v1973 = vpop.permute.xlu0 %1972
        %1975 = vset.pattern.permute.xlu0 1
        %1976 = vperm.xlu0 %1975, %v813
        %v1977 = vpop.permute.xlu0 %1976
        %1979 = vset.pattern.permute.xlu0 1
        %1980 = vperm.xlu0 %1979, %v814
        %v1981 = vpop.permute.xlu0 %1980
        %1983 = vset.pattern.permute.xlu0 1
        %1984 = vperm.xlu0 %1983, %v815
        %v1985 = vpop.permute.xlu0 %1984
        %1987 = vset.pattern.permute.xlu0 1
        %1988 = vperm.xlu0 %1987, %v816
        %v1989 = vpop.permute.xlu0 %1988
        %1991 = vset.pattern.permute.xlu0 1
        %1992 = vperm.xlu0 %1991, %v817
        %v1993 = vpop.permute.xlu0 %1992
        %1995 = vset.pattern.permute.xlu0 1
        %1996 = vperm.xlu0 %1995, %v818
        %v1997 = vpop.permute.xlu0 %1996
        %1999 = vset.pattern.permute.xlu0 1
        %2000 = vperm.xlu0 %1999, %v819
        %v2001 = vpop.permute.xlu0 %2000
        %2003 = vset.pattern.permute.xlu0 1
        %2004 = vperm.xlu0 %2003, %v820
        %v2005 = vpop.permute.xlu0 %2004
        %2007 = vset.pattern.permute.xlu0 1
        %2008 = vperm.xlu0 %2007, %v821
        %v2009 = vpop.permute.xlu0 %2008
        %2011 = vset.pattern.permute.xlu0 1
        %2012 = vperm.xlu0 %2011, %v822
        %v2013 = vpop.permute.xlu0 %2012
        %2015 = vset.pattern.permute.xlu0 1
        %2016 = vperm.xlu0 %2015, %v823
        %v2017 = vpop.permute.xlu0 %2016
        %2019 = vset.pattern.permute.xlu0 1
        %2020 = vperm.xlu0 %2019, %v824
        %v2021 = vpop.permute.xlu0 %2020
        %2023 = vset.pattern.permute.xlu0 1
        %2024 = vperm.xlu0 %2023, %v825
        %v2025 = vpop.permute.xlu0 %2024
        %2027 = vset.pattern.permute.xlu0 1
        %2028 = vperm.xlu0 %2027, %v826
        %v2029 = vpop.permute.xlu0 %2028
        %2031 = vset.pattern.permute.xlu0 1
        %2032 = vperm.xlu0 %2031, %v827
        %v2033 = vpop.permute.xlu0 %2032
        %2035 = vset.pattern.permute.xlu0 1
        %2036 = vperm.xlu0 %2035, %v828
        %v2037 = vpop.permute.xlu0 %2036
        %2039 = vset.pattern.permute.xlu0 1
        %2040 = vperm.xlu0 %2039, %v829
        %v2041 = vpop.permute.xlu0 %2040
        %2043 = vset.pattern.permute.xlu0 1
        %2044 = vperm.xlu0 %2043, %v830
        %v2045 = vpop.permute.xlu0 %2044
        %2047 = vset.pattern.permute.xlu0 1
        %2048 = vperm.xlu0 %2047, %v831
        %v2049 = vpop.permute.xlu0 %2048
        %2051 = vset.pattern.permute.xlu0 1
        %2052 = vperm.xlu0 %2051, %v832
        %v2053 = vpop.permute.xlu0 %2052
        %2055 = vset.pattern.permute.xlu0 1
        %2056 = vperm.xlu0 %2055, %v833
        %v2057 = vpop.permute.xlu0 %2056
        %2059 = vset.pattern.permute.xlu0 1
        %2060 = vperm.xlu0 %2059, %v834
        %v2061 = vpop.permute.xlu0 %2060
        %2063 = vset.pattern.permute.xlu0 1
        %2064 = vperm.xlu0 %2063, %v835
        %v2065 = vpop.permute.xlu0 %2064
        %2067 = vset.pattern.permute.xlu0 1
        %2068 = vperm.xlu0 %2067, %v836
        %v2069 = vpop.permute.xlu0 %2068
        %2071 = vset.pattern.permute.xlu0 1
        %2072 = vperm.xlu0 %2071, %v837
        %v2073 = vpop.permute.xlu0 %2072
        %2075 = vset.pattern.permute.xlu0 1
        %2076 = vperm.xlu0 %2075, %v838
        %v2077 = vpop.permute.xlu0 %2076
        %2079 = vset.pattern.permute.xlu0 1
        %2080 = vperm.xlu0 %2079, %v839
        %v2081 = vpop.permute.xlu0 %2080
        %2083 = vset.pattern.permute.xlu0 1
        %2084 = vperm.xlu0 %2083, %v840
        %v2085 = vpop.permute.xlu0 %2084
        %2087 = vset.pattern.permute.xlu0 1
        %2088 = vperm.xlu0 %2087, %v841
        %v2089 = vpop.permute.xlu0 %2088
        %2091 = vset.pattern.permute.xlu0 1
        %2092 = vperm.xlu0 %2091, %v842
        %v2093 = vpop.permute.xlu0 %2092
        %2095 = vset.pattern.permute.xlu0 1
        %2096 = vperm.xlu0 %2095, %v843
        %v2097 = vpop.permute.xlu0 %2096
        %2099 = vset.pattern.permute.xlu0 1
        %2100 = vperm.xlu0 %2099, %v844
        %v2101 = vpop.permute.xlu0 %2100
        %2103 = vset.pattern.permute.xlu0 1
        %2104 = vperm.xlu0 %2103, %v845
        %v2105 = vpop.permute.xlu0 %2104
        %2107 = vset.pattern.permute.xlu0 1
        %2108 = vperm.xlu0 %2107, %v846
        %v2109 = vpop.permute.xlu0 %2108
        %2111 = vset.pattern.permute.xlu0 1
        %2112 = vperm.xlu0 %2111, %v847
        %v2113 = vpop.permute.xlu0 %2112
        %2115 = vset.pattern.permute.xlu0 1
        %2116 = vperm.xlu0 %2115, %v848
        %v2117 = vpop.permute.xlu0 %2116
        %2119 = vset.pattern.permute.xlu0 1
        %2120 = vperm.xlu0 %2119, %v849
        %v2121 = vpop.permute.xlu0 %2120
        %2123 = vset.pattern.permute.xlu0 1
        %2124 = vperm.xlu0 %2123, %v850
        %v2125 = vpop.permute.xlu0 %2124
        %2127 = vset.pattern.permute.xlu0 1
        %2128 = vperm.xlu0 %2127, %v851
        %v2129 = vpop.permute.xlu0 %2128
        %2131 = vset.pattern.permute.xlu0 1
        %2132 = vperm.xlu0 %2131, %v852
        %v2133 = vpop.permute.xlu0 %2132
        %2135 = vset.pattern.permute.xlu0 1
        %2136 = vperm.xlu0 %2135, %v853
        %v2137 = vpop.permute.xlu0 %2136
        %v2139 = vlaneseq
        %v2140 = vshrl.u32 %v2139, 7
        %v2141 = vsub.s32 1, %v2140
        %v2142 = vrot.slane %v854, %v2141
        %v2143 = vmul.f32 %v1629, %v2142
        %v2144 = vmul.f32 %v1633, %v2142
        %v2145 = vmul.f32 %v1637, %v2142
        %v2146 = vmul.f32 %v1641, %v2142
        %v2147 = vmul.f32 %v1645, %v2142
        %v2148 = vmul.f32 %v1649, %v2142
        %v2149 = vmul.f32 %v1653, %v2142
        %v2150 = vmul.f32 %v1657, %v2142
        %v2151 = vmul.f32 %v1661, %v2142
        %v2152 = vmul.f32 %v1665, %v2142
        %v2153 = vmul.f32 %v1669, %v2142
        %v2154 = vmul.f32 %v1673, %v2142
        %v2155 = vmul.f32 %v1677, %v2142
        %v2156 = vmul.f32 %v1681, %v2142
        %v2157 = vmul.f32 %v1685, %v2142
        %v2158 = vmul.f32 %v1689, %v2142
        %v2159 = vmul.f32 %v1693, %v2142
        %v2160 = vmul.f32 %v1697, %v2142
        %v2161 = vmul.f32 %v1701, %v2142
        %v2162 = vmul.f32 %v1705, %v2142
        %v2163 = vmul.f32 %v1709, %v2142
        %v2164 = vmul.f32 %v1713, %v2142
        %v2165 = vmul.f32 %v1717, %v2142
        %v2166 = vmul.f32 %v1721, %v2142
        %v2167 = vmul.f32 %v1725, %v2142
        %v2168 = vmul.f32 %v1729, %v2142
        %v2169 = vmul.f32 %v1733, %v2142
        %v2170 = vmul.f32 %v1737, %v2142
        %v2171 = vmul.f32 %v1741, %v2142
        %v2172 = vmul.f32 %v1745, %v2142
        %v2173 = vmul.f32 %v1749, %v2142
        %v2174 = vmul.f32 %v1753, %v2142
        %v2175 = vmul.f32 %v1757, %v2142
        %v2176 = vmul.f32 %v1761, %v2142
        %v2177 = vmul.f32 %v1765, %v2142
        %v2178 = vmul.f32 %v1769, %v2142
        %v2179 = vmul.f32 %v1773, %v2142
        %v2180 = vmul.f32 %v1777, %v2142
        %v2181 = vmul.f32 %v1781, %v2142
        %v2182 = vmul.f32 %v1785, %v2142
        %v2183 = vmul.f32 %v1789, %v2142
        %v2184 = vmul.f32 %v1793, %v2142
        %v2185 = vmul.f32 %v1797, %v2142
        %v2186 = vmul.f32 %v1801, %v2142
        %v2187 = vmul.f32 %v1805, %v2142
        %v2188 = vmul.f32 %v1809, %v2142
        %v2189 = vmul.f32 %v1813, %v2142
        %v2190 = vmul.f32 %v1817, %v2142
        %v2191 = vmul.f32 %v1821, %v2142
        %v2192 = vmul.f32 %v1825, %v2142
        %v2193 = vmul.f32 %v1829, %v2142
        %v2194 = vmul.f32 %v1833, %v2142
        %v2195 = vmul.f32 %v1837, %v2142
        %v2196 = vmul.f32 %v1841, %v2142
        %v2197 = vmul.f32 %v1845, %v2142
        %v2198 = vmul.f32 %v1849, %v2142
        %v2199 = vmul.f32 %v1853, %v2142
        %v2200 = vmul.f32 %v1857, %v2142
        %v2201 = vmul.f32 %v1861, %v2142
        %v2202 = vmul.f32 %v1865, %v2142
        %v2203 = vmul.f32 %v1869, %v2142
        %v2204 = vmul.f32 %v1873, %v2142
        %v2205 = vmul.f32 %v1877, %v2142
        %v2206 = vmul.f32 %v1881, %v2142
        %v2207 = vmul.f32 %v1885, %v2142
        %v2208 = vmul.f32 %v1889, %v2142
        %v2209 = vmul.f32 %v1893, %v2142
        %v2210 = vmul.f32 %v1897, %v2142
        %v2211 = vmul.f32 %v1901, %v2142
        %v2212 = vmul.f32 %v1905, %v2142
        %v2213 = vmul.f32 %v1909, %v2142
        %v2214 = vmul.f32 %v1913, %v2142
        %v2215 = vmul.f32 %v1917, %v2142
        %v2216 = vmul.f32 %v1921, %v2142
        %v2217 = vmul.f32 %v1925, %v2142
        %v2218 = vmul.f32 %v1929, %v2142
        %v2219 = vmul.f32 %v1933, %v2142
        %v2220 = vmul.f32 %v1937, %v2142
        %v2221 = vmul.f32 %v1941, %v2142
        %v2222 = vmul.f32 %v1945, %v2142
        %v2223 = vmul.f32 %v1949, %v2142
        %v2224 = vmul.f32 %v1953, %v2142
        %v2225 = vmul.f32 %v1957, %v2142
        %v2226 = vmul.f32 %v1961, %v2142
        %v2227 = vmul.f32 %v1965, %v2142
        %v2228 = vmul.f32 %v1969, %v2142
        %v2229 = vmul.f32 %v1973, %v2142
        %v2230 = vmul.f32 %v1977, %v2142
        %v2231 = vmul.f32 %v1981, %v2142
        %v2232 = vmul.f32 %v1985, %v2142
        %v2233 = vmul.f32 %v1989, %v2142
        %v2234 = vmul.f32 %v1993, %v2142
        %v2235 = vmul.f32 %v1997, %v2142
        %v2236 = vmul.f32 %v2001, %v2142
        %v2237 = vmul.f32 %v2005, %v2142
        %v2238 = vmul.f32 %v2009, %v2142
        %v2239 = vmul.f32 %v2013, %v2142
        %v2240 = vmul.f32 %v2017, %v2142
        %v2241 = vmul.f32 %v2021, %v2142
        %v2242 = vmul.f32 %v2025, %v2142
        %v2243 = vmul.f32 %v2029, %v2142
        %v2244 = vmul.f32 %v2033, %v2142
        %v2245 = vmul.f32 %v2037, %v2142
        %v2246 = vmul.f32 %v2041, %v2142
        %v2247 = vmul.f32 %v2045, %v2142
        %v2248 = vmul.f32 %v2049, %v2142
        %v2249 = vmul.f32 %v2053, %v2142
        %v2250 = vmul.f32 %v2057, %v2142
        %v2251 = vmul.f32 %v2061, %v2142
        %v2252 = vmul.f32 %v2065, %v2142
        %v2253 = vmul.f32 %v2069, %v2142
        %v2254 = vmul.f32 %v2073, %v2142
        %v2255 = vmul.f32 %v2077, %v2142
        %v2256 = vmul.f32 %v2081, %v2142
        %v2257 = vmul.f32 %v2085, %v2142
        %v2258 = vmul.f32 %v2089, %v2142
        %v2259 = vmul.f32 %v2093, %v2142
        %v2260 = vmul.f32 %v2097, %v2142
        %v2261 = vmul.f32 %v2101, %v2142
        %v2262 = vmul.f32 %v2105, %v2142
        %v2263 = vmul.f32 %v2109, %v2142
        %v2264 = vmul.f32 %v2113, %v2142
        %v2265 = vmul.f32 %v2117, %v2142
        %v2266 = vmul.f32 %v2121, %v2142
        %v2267 = vmul.f32 %v2125, %v2142
        %v2268 = vmul.f32 %v2129, %v2142
        %v2269 = vmul.f32 %v2133, %v2142
        %v2270 = vmul.f32 %v2137, %v2142
        %v2271 = vadd.f32 %v1499, %v2143
        %v2272 = vadd.f32 %v1500, %v2144
        %v2273 = vadd.f32 %v1501, %v2145
        %v2274 = vadd.f32 %v1502, %v2146
        %v2275 = vadd.f32 %v1503, %v2147
        %v2276 = vadd.f32 %v1504, %v2148
        %v2277 = vadd.f32 %v1505, %v2149
        %v2278 = vadd.f32 %v1506, %v2150
        %v2279 = vadd.f32 %v1507, %v2151
        %v2280 = vadd.f32 %v1508, %v2152
        %v2281 = vadd.f32 %v1509, %v2153
        %v2282 = vadd.f32 %v1510, %v2154
        %v2283 = vadd.f32 %v1511, %v2155
        %v2284 = vadd.f32 %v1512, %v2156
        %v2285 = vadd.f32 %v1513, %v2157
        %v2286 = vadd.f32 %v1514, %v2158
        %v2287 = vadd.f32 %v1515, %v2159
        %v2288 = vadd.f32 %v1516, %v2160
        %v2289 = vadd.f32 %v1517, %v2161
        %v2290 = vadd.f32 %v1518, %v2162
        %v2291 = vadd.f32 %v1519, %v2163
        %v2292 = vadd.f32 %v1520, %v2164
        %v2293 = vadd.f32 %v1521, %v2165
        %v2294 = vadd.f32 %v1522, %v2166
        %v2295 = vadd.f32 %v1523, %v2167
        %v2296 = vadd.f32 %v1524, %v2168
        %v2297 = vadd.f32 %v1525, %v2169
        %v2298 = vadd.f32 %v1526, %v2170
        %v2299 = vadd.f32 %v1527, %v2171
        %v2300 = vadd.f32 %v1528, %v2172
        %v2301 = vadd.f32 %v1529, %v2173
        %v2302 = vadd.f32 %v1530, %v2174
        %v2303 = vadd.f32 %v1531, %v2175
        %v2304 = vadd.f32 %v1532, %v2176
        %v2305 = vadd.f32 %v1533, %v2177
        %v2306 = vadd.f32 %v1534, %v2178
        %v2307 = vadd.f32 %v1535, %v2179
        %v2308 = vadd.f32 %v1536, %v2180
        %v2309 = vadd.f32 %v1537, %v2181
        %v2310 = vadd.f32 %v1538, %v2182
        %v2311 = vadd.f32 %v1539, %v2183
        %v2312 = vadd.f32 %v1540, %v2184
        %v2313 = vadd.f32 %v1541, %v2185
        %v2314 = vadd.f32 %v1542, %v2186
        %v2315 = vadd.f32 %v1543, %v2187
        %v2316 = vadd.f32 %v1544, %v2188
        %v2317 = vadd.f32 %v1545, %v2189
        %v2318 = vadd.f32 %v1546, %v2190
        %v2319 = vadd.f32 %v1547, %v2191
        %v2320 = vadd.f32 %v1548, %v2192
        %v2321 = vadd.f32 %v1549, %v2193
        %v2322 = vadd.f32 %v1550, %v2194
        %v2323 = vadd.f32 %v1551, %v2195
        %v2324 = vadd.f32 %v1552, %v2196
        %v2325 = vadd.f32 %v1553, %v2197
        %v2326 = vadd.f32 %v1554, %v2198
        %v2327 = vadd.f32 %v1555, %v2199
        %v2328 = vadd.f32 %v1556, %v2200
        %v2329 = vadd.f32 %v1557, %v2201
        %v2330 = vadd.f32 %v1558, %v2202
        %v2331 = vadd.f32 %v1559, %v2203
        %v2332 = vadd.f32 %v1560, %v2204
        %v2333 = vadd.f32 %v1561, %v2205
        %v2334 = vadd.f32 %v1562, %v2206
        %v2335 = vadd.f32 %v1563, %v2207
        %v2336 = vadd.f32 %v1564, %v2208
        %v2337 = vadd.f32 %v1565, %v2209
        %v2338 = vadd.f32 %v1566, %v2210
        %v2339 = vadd.f32 %v1567, %v2211
        %v2340 = vadd.f32 %v1568, %v2212
        %v2341 = vadd.f32 %v1569, %v2213
        %v2342 = vadd.f32 %v1570, %v2214
        %v2343 = vadd.f32 %v1571, %v2215
        %v2344 = vadd.f32 %v1572, %v2216
        %v2345 = vadd.f32 %v1573, %v2217
        %v2346 = vadd.f32 %v1574, %v2218
        %v2347 = vadd.f32 %v1575, %v2219
        %v2348 = vadd.f32 %v1576, %v2220
        %v2349 = vadd.f32 %v1577, %v2221
        %v2350 = vadd.f32 %v1578, %v2222
        %v2351 = vadd.f32 %v1579, %v2223
        %v2352 = vadd.f32 %v1580, %v2224
        %v2353 = vadd.f32 %v1581, %v2225
        %v2354 = vadd.f32 %v1582, %v2226
        %v2355 = vadd.f32 %v1583, %v2227
        %v2356 = vadd.f32 %v1584, %v2228
        %v2357 = vadd.f32 %v1585, %v2229
        %v2358 = vadd.f32 %v1586, %v2230
        %v2359 = vadd.f32 %v1587, %v2231
        %v2360 = vadd.f32 %v1588, %v2232
        %v2361 = vadd.f32 %v1589, %v2233
        %v2362 = vadd.f32 %v1590, %v2234
        %v2363 = vadd.f32 %v1591, %v2235
        %v2364 = vadd.f32 %v1592, %v2236
        %v2365 = vadd.f32 %v1593, %v2237
        %v2366 = vadd.f32 %v1594, %v2238
        %v2367 = vadd.f32 %v1595, %v2239
        %v2368 = vadd.f32 %v1596, %v2240
        %v2369 = vadd.f32 %v1597, %v2241
        %v2370 = vadd.f32 %v1598, %v2242
        %v2371 = vadd.f32 %v1599, %v2243
        %v2372 = vadd.f32 %v1600, %v2244
        %v2373 = vadd.f32 %v1601, %v2245
        %v2374 = vadd.f32 %v1602, %v2246
        %v2375 = vadd.f32 %v1603, %v2247
        %v2376 = vadd.f32 %v1604, %v2248
        %v2377 = vadd.f32 %v1605, %v2249
        %v2378 = vadd.f32 %v1606, %v2250
        %v2379 = vadd.f32 %v1607, %v2251
        %v2380 = vadd.f32 %v1608, %v2252
        %v2381 = vadd.f32 %v1609, %v2253
        %v2382 = vadd.f32 %v1610, %v2254
        %v2383 = vadd.f32 %v1611, %v2255
        %v2384 = vadd.f32 %v1612, %v2256
        %v2385 = vadd.f32 %v1613, %v2257
        %v2386 = vadd.f32 %v1614, %v2258
        %v2387 = vadd.f32 %v1615, %v2259
        %v2388 = vadd.f32 %v1616, %v2260
        %v2389 = vadd.f32 %v1617, %v2261
        %v2390 = vadd.f32 %v1618, %v2262
        %v2391 = vadd.f32 %v1619, %v2263
        %v2392 = vadd.f32 %v1620, %v2264
        %v2393 = vadd.f32 %v1621, %v2265
        %v2394 = vadd.f32 %v1622, %v2266
        %v2395 = vadd.f32 %v1623, %v2267
        %v2396 = vadd.f32 %v1624, %v2268
        %v2397 = vadd.f32 %v1625, %v2269
        %v2398 = vadd.f32 %v1626, %v2270
        %2399 = vset.pattern.permute.xlu0 2
        %2400 = vperm.xlu0 %2399, %v726
        %v2401 = vpop.permute.xlu0 %2400
        %2403 = vset.pattern.permute.xlu0 2
        %2404 = vperm.xlu0 %2403, %v727
        %v2405 = vpop.permute.xlu0 %2404
        %2407 = vset.pattern.permute.xlu0 2
        %2408 = vperm.xlu0 %2407, %v728
        %v2409 = vpop.permute.xlu0 %2408
        %2411 = vset.pattern.permute.xlu0 2
        %2412 = vperm.xlu0 %2411, %v729
        %v2413 = vpop.permute.xlu0 %2412
        %2415 = vset.pattern.permute.xlu0 2
        %2416 = vperm.xlu0 %2415, %v730
        %v2417 = vpop.permute.xlu0 %2416
        %2419 = vset.pattern.permute.xlu0 2
        %2420 = vperm.xlu0 %2419, %v731
        %v2421 = vpop.permute.xlu0 %2420
        %2423 = vset.pattern.permute.xlu0 2
        %2424 = vperm.xlu0 %2423, %v732
        %v2425 = vpop.permute.xlu0 %2424
        %2427 = vset.pattern.permute.xlu0 2
        %2428 = vperm.xlu0 %2427, %v733
        %v2429 = vpop.permute.xlu0 %2428
        %2431 = vset.pattern.permute.xlu0 2
        %2432 = vperm.xlu0 %2431, %v734
        %v2433 = vpop.permute.xlu0 %2432
        %2435 = vset.pattern.permute.xlu0 2
        %2436 = vperm.xlu0 %2435, %v735
        %v2437 = vpop.permute.xlu0 %2436
        %2439 = vset.pattern.permute.xlu0 2
        %2440 = vperm.xlu0 %2439, %v736
        %v2441 = vpop.permute.xlu0 %2440
        %2443 = vset.pattern.permute.xlu0 2
        %2444 = vperm.xlu0 %2443, %v737
        %v2445 = vpop.permute.xlu0 %2444
        %2447 = vset.pattern.permute.xlu0 2
        %2448 = vperm.xlu0 %2447, %v738
        %v2449 = vpop.permute.xlu0 %2448
        %2451 = vset.pattern.permute.xlu0 2
        %2452 = vperm.xlu0 %2451, %v739
        %v2453 = vpop.permute.xlu0 %2452
        %2455 = vset.pattern.permute.xlu0 2
        %2456 = vperm.xlu0 %2455, %v740
        %v2457 = vpop.permute.xlu0 %2456
        %2459 = vset.pattern.permute.xlu0 2
        %2460 = vperm.xlu0 %2459, %v741
        %v2461 = vpop.permute.xlu0 %2460
        %2463 = vset.pattern.permute.xlu0 2
        %2464 = vperm.xlu0 %2463, %v742
        %v2465 = vpop.permute.xlu0 %2464
        %2467 = vset.pattern.permute.xlu0 2
        %2468 = vperm.xlu0 %2467, %v743
        %v2469 = vpop.permute.xlu0 %2468
        %2471 = vset.pattern.permute.xlu0 2
        %2472 = vperm.xlu0 %2471, %v744
        %v2473 = vpop.permute.xlu0 %2472
        %2475 = vset.pattern.permute.xlu0 2
        %2476 = vperm.xlu0 %2475, %v745
        %v2477 = vpop.permute.xlu0 %2476
        %2479 = vset.pattern.permute.xlu0 2
        %2480 = vperm.xlu0 %2479, %v746
        %v2481 = vpop.permute.xlu0 %2480
        %2483 = vset.pattern.permute.xlu0 2
        %2484 = vperm.xlu0 %2483, %v747
        %v2485 = vpop.permute.xlu0 %2484
        %2487 = vset.pattern.permute.xlu0 2
        %2488 = vperm.xlu0 %2487, %v748
        %v2489 = vpop.permute.xlu0 %2488
        %2491 = vset.pattern.permute.xlu0 2
        %2492 = vperm.xlu0 %2491, %v749
        %v2493 = vpop.permute.xlu0 %2492
        %2495 = vset.pattern.permute.xlu0 2
        %2496 = vperm.xlu0 %2495, %v750
        %v2497 = vpop.permute.xlu0 %2496
        %2499 = vset.pattern.permute.xlu0 2
        %2500 = vperm.xlu0 %2499, %v751
        %v2501 = vpop.permute.xlu0 %2500
        %2503 = vset.pattern.permute.xlu0 2
        %2504 = vperm.xlu0 %2503, %v752
        %v2505 = vpop.permute.xlu0 %2504
        %2507 = vset.pattern.permute.xlu0 2
        %2508 = vperm.xlu0 %2507, %v753
        %v2509 = vpop.permute.xlu0 %2508
        %2511 = vset.pattern.permute.xlu0 2
        %2512 = vperm.xlu0 %2511, %v754
        %v2513 = vpop.permute.xlu0 %2512
        %2515 = vset.pattern.permute.xlu0 2
        %2516 = vperm.xlu0 %2515, %v755
        %v2517 = vpop.permute.xlu0 %2516
        %2519 = vset.pattern.permute.xlu0 2
        %2520 = vperm.xlu0 %2519, %v756
        %v2521 = vpop.permute.xlu0 %2520
        %2523 = vset.pattern.permute.xlu0 2
        %2524 = vperm.xlu0 %2523, %v757
        %v2525 = vpop.permute.xlu0 %2524
        %2527 = vset.pattern.permute.xlu0 2
        %2528 = vperm.xlu0 %2527, %v758
        %v2529 = vpop.permute.xlu0 %2528
        %2531 = vset.pattern.permute.xlu0 2
        %2532 = vperm.xlu0 %2531, %v759
        %v2533 = vpop.permute.xlu0 %2532
        %2535 = vset.pattern.permute.xlu0 2
        %2536 = vperm.xlu0 %2535, %v760
        %v2537 = vpop.permute.xlu0 %2536
        %2539 = vset.pattern.permute.xlu0 2
        %2540 = vperm.xlu0 %2539, %v761
        %v2541 = vpop.permute.xlu0 %2540
        %2543 = vset.pattern.permute.xlu0 2
        %2544 = vperm.xlu0 %2543, %v762
        %v2545 = vpop.permute.xlu0 %2544
        %2547 = vset.pattern.permute.xlu0 2
        %2548 = vperm.xlu0 %2547, %v763
        %v2549 = vpop.permute.xlu0 %2548
        %2551 = vset.pattern.permute.xlu0 2
        %2552 = vperm.xlu0 %2551, %v764
        %v2553 = vpop.permute.xlu0 %2552
        %2555 = vset.pattern.permute.xlu0 2
        %2556 = vperm.xlu0 %2555, %v765
        %v2557 = vpop.permute.xlu0 %2556
        %2559 = vset.pattern.permute.xlu0 2
        %2560 = vperm.xlu0 %2559, %v766
        %v2561 = vpop.permute.xlu0 %2560
        %2563 = vset.pattern.permute.xlu0 2
        %2564 = vperm.xlu0 %2563, %v767
        %v2565 = vpop.permute.xlu0 %2564
        %2567 = vset.pattern.permute.xlu0 2
        %2568 = vperm.xlu0 %2567, %v768
        %v2569 = vpop.permute.xlu0 %2568
        %2571 = vset.pattern.permute.xlu0 2
        %2572 = vperm.xlu0 %2571, %v769
        %v2573 = vpop.permute.xlu0 %2572
        %2575 = vset.pattern.permute.xlu0 2
        %2576 = vperm.xlu0 %2575, %v770
        %v2577 = vpop.permute.xlu0 %2576
        %2579 = vset.pattern.permute.xlu0 2
        %2580 = vperm.xlu0 %2579, %v771
        %v2581 = vpop.permute.xlu0 %2580
        %2583 = vset.pattern.permute.xlu0 2
        %2584 = vperm.xlu0 %2583, %v772
        %v2585 = vpop.permute.xlu0 %2584
        %2587 = vset.pattern.permute.xlu0 2
        %2588 = vperm.xlu0 %2587, %v773
        %v2589 = vpop.permute.xlu0 %2588
        %2591 = vset.pattern.permute.xlu0 2
        %2592 = vperm.xlu0 %2591, %v774
        %v2593 = vpop.permute.xlu0 %2592
        %2595 = vset.pattern.permute.xlu0 2
        %2596 = vperm.xlu0 %2595, %v775
        %v2597 = vpop.permute.xlu0 %2596
        %2599 = vset.pattern.permute.xlu0 2
        %2600 = vperm.xlu0 %2599, %v776
        %v2601 = vpop.permute.xlu0 %2600
        %2603 = vset.pattern.permute.xlu0 2
        %2604 = vperm.xlu0 %2603, %v777
        %v2605 = vpop.permute.xlu0 %2604
        %2607 = vset.pattern.permute.xlu0 2
        %2608 = vperm.xlu0 %2607, %v778
        %v2609 = vpop.permute.xlu0 %2608
        %2611 = vset.pattern.permute.xlu0 2
        %2612 = vperm.xlu0 %2611, %v779
        %v2613 = vpop.permute.xlu0 %2612
        %2615 = vset.pattern.permute.xlu0 2
        %2616 = vperm.xlu0 %2615, %v780
        %v2617 = vpop.permute.xlu0 %2616
        %2619 = vset.pattern.permute.xlu0 2
        %2620 = vperm.xlu0 %2619, %v781
        %v2621 = vpop.permute.xlu0 %2620
        %2623 = vset.pattern.permute.xlu0 2
        %2624 = vperm.xlu0 %2623, %v782
        %v2625 = vpop.permute.xlu0 %2624
        %2627 = vset.pattern.permute.xlu0 2
        %2628 = vperm.xlu0 %2627, %v783
        %v2629 = vpop.permute.xlu0 %2628
        %2631 = vset.pattern.permute.xlu0 2
        %2632 = vperm.xlu0 %2631, %v784
        %v2633 = vpop.permute.xlu0 %2632
        %2635 = vset.pattern.permute.xlu0 2
        %2636 = vperm.xlu0 %2635, %v785
        %v2637 = vpop.permute.xlu0 %2636
        %2639 = vset.pattern.permute.xlu0 2
        %2640 = vperm.xlu0 %2639, %v786
        %v2641 = vpop.permute.xlu0 %2640
        %2643 = vset.pattern.permute.xlu0 2
        %2644 = vperm.xlu0 %2643, %v787
        %v2645 = vpop.permute.xlu0 %2644
        %2647 = vset.pattern.permute.xlu0 2
        %2648 = vperm.xlu0 %2647, %v788
        %v2649 = vpop.permute.xlu0 %2648
        %2651 = vset.pattern.permute.xlu0 2
        %2652 = vperm.xlu0 %2651, %v789
        %v2653 = vpop.permute.xlu0 %2652
        %2655 = vset.pattern.permute.xlu0 2
        %2656 = vperm.xlu0 %2655, %v790
        %v2657 = vpop.permute.xlu0 %2656
        %2659 = vset.pattern.permute.xlu0 2
        %2660 = vperm.xlu0 %2659, %v791
        %v2661 = vpop.permute.xlu0 %2660
        %2663 = vset.pattern.permute.xlu0 2
        %2664 = vperm.xlu0 %2663, %v792
        %v2665 = vpop.permute.xlu0 %2664
        %2667 = vset.pattern.permute.xlu0 2
        %2668 = vperm.xlu0 %2667, %v793
        %v2669 = vpop.permute.xlu0 %2668
        %2671 = vset.pattern.permute.xlu0 2
        %2672 = vperm.xlu0 %2671, %v794
        %v2673 = vpop.permute.xlu0 %2672
        %2675 = vset.pattern.permute.xlu0 2
        %2676 = vperm.xlu0 %2675, %v795
        %v2677 = vpop.permute.xlu0 %2676
        %2679 = vset.pattern.permute.xlu0 2
        %2680 = vperm.xlu0 %2679, %v796
        %v2681 = vpop.permute.xlu0 %2680
        %2683 = vset.pattern.permute.xlu0 2
        %2684 = vperm.xlu0 %2683, %v797
        %v2685 = vpop.permute.xlu0 %2684
        %2687 = vset.pattern.permute.xlu0 2
        %2688 = vperm.xlu0 %2687, %v798
        %v2689 = vpop.permute.xlu0 %2688
        %2691 = vset.pattern.permute.xlu0 2
        %2692 = vperm.xlu0 %2691, %v799
        %v2693 = vpop.permute.xlu0 %2692
        %2695 = vset.pattern.permute.xlu0 2
        %2696 = vperm.xlu0 %2695, %v800
        %v2697 = vpop.permute.xlu0 %2696
        %2699 = vset.pattern.permute.xlu0 2
        %2700 = vperm.xlu0 %2699, %v801
        %v2701 = vpop.permute.xlu0 %2700
        %2703 = vset.pattern.permute.xlu0 2
        %2704 = vperm.xlu0 %2703, %v802
        %v2705 = vpop.permute.xlu0 %2704
        %2707 = vset.pattern.permute.xlu0 2
        %2708 = vperm.xlu0 %2707, %v803
        %v2709 = vpop.permute.xlu0 %2708
        %2711 = vset.pattern.permute.xlu0 2
        %2712 = vperm.xlu0 %2711, %v804
        %v2713 = vpop.permute.xlu0 %2712
        %2715 = vset.pattern.permute.xlu0 2
        %2716 = vperm.xlu0 %2715, %v805
        %v2717 = vpop.permute.xlu0 %2716
        %2719 = vset.pattern.permute.xlu0 2
        %2720 = vperm.xlu0 %2719, %v806
        %v2721 = vpop.permute.xlu0 %2720
        %2723 = vset.pattern.permute.xlu0 2
        %2724 = vperm.xlu0 %2723, %v807
        %v2725 = vpop.permute.xlu0 %2724
        %2727 = vset.pattern.permute.xlu0 2
        %2728 = vperm.xlu0 %2727, %v808
        %v2729 = vpop.permute.xlu0 %2728
        %2731 = vset.pattern.permute.xlu0 2
        %2732 = vperm.xlu0 %2731, %v809
        %v2733 = vpop.permute.xlu0 %2732
        %2735 = vset.pattern.permute.xlu0 2
        %2736 = vperm.xlu0 %2735, %v810
        %v2737 = vpop.permute.xlu0 %2736
        %2739 = vset.pattern.permute.xlu0 2
        %2740 = vperm.xlu0 %2739, %v811
        %v2741 = vpop.permute.xlu0 %2740
        %2743 = vset.pattern.permute.xlu0 2
        %2744 = vperm.xlu0 %2743, %v812
        %v2745 = vpop.permute.xlu0 %2744
        %2747 = vset.pattern.permute.xlu0 2
        %2748 = vperm.xlu0 %2747, %v813
        %v2749 = vpop.permute.xlu0 %2748
        %2751 = vset.pattern.permute.xlu0 2
        %2752 = vperm.xlu0 %2751, %v814
        %v2753 = vpop.permute.xlu0 %2752
        %2755 = vset.pattern.permute.xlu0 2
        %2756 = vperm.xlu0 %2755, %v815
        %v2757 = vpop.permute.xlu0 %2756
        %2759 = vset.pattern.permute.xlu0 2
        %2760 = vperm.xlu0 %2759, %v816
        %v2761 = vpop.permute.xlu0 %2760
        %2763 = vset.pattern.permute.xlu0 2
        %2764 = vperm.xlu0 %2763, %v817
        %v2765 = vpop.permute.xlu0 %2764
        %2767 = vset.pattern.permute.xlu0 2
        %2768 = vperm.xlu0 %2767, %v818
        %v2769 = vpop.permute.xlu0 %2768
        %2771 = vset.pattern.permute.xlu0 2
        %2772 = vperm.xlu0 %2771, %v819
        %v2773 = vpop.permute.xlu0 %2772
        %2775 = vset.pattern.permute.xlu0 2
        %2776 = vperm.xlu0 %2775, %v820
        %v2777 = vpop.permute.xlu0 %2776
        %2779 = vset.pattern.permute.xlu0 2
        %2780 = vperm.xlu0 %2779, %v821
        %v2781 = vpop.permute.xlu0 %2780
        %2783 = vset.pattern.permute.xlu0 2
        %2784 = vperm.xlu0 %2783, %v822
        %v2785 = vpop.permute.xlu0 %2784
        %2787 = vset.pattern.permute.xlu0 2
        %2788 = vperm.xlu0 %2787, %v823
        %v2789 = vpop.permute.xlu0 %2788
        %2791 = vset.pattern.permute.xlu0 2
        %2792 = vperm.xlu0 %2791, %v824
        %v2793 = vpop.permute.xlu0 %2792
        %2795 = vset.pattern.permute.xlu0 2
        %2796 = vperm.xlu0 %2795, %v825
        %v2797 = vpop.permute.xlu0 %2796
        %2799 = vset.pattern.permute.xlu0 2
        %2800 = vperm.xlu0 %2799, %v826
        %v2801 = vpop.permute.xlu0 %2800
        %2803 = vset.pattern.permute.xlu0 2
        %2804 = vperm.xlu0 %2803, %v827
        %v2805 = vpop.permute.xlu0 %2804
        %2807 = vset.pattern.permute.xlu0 2
        %2808 = vperm.xlu0 %2807, %v828
        %v2809 = vpop.permute.xlu0 %2808
        %2811 = vset.pattern.permute.xlu0 2
        %2812 = vperm.xlu0 %2811, %v829
        %v2813 = vpop.permute.xlu0 %2812
        %2815 = vset.pattern.permute.xlu0 2
        %2816 = vperm.xlu0 %2815, %v830
        %v2817 = vpop.permute.xlu0 %2816
        %2819 = vset.pattern.permute.xlu0 2
        %2820 = vperm.xlu0 %2819, %v831
        %v2821 = vpop.permute.xlu0 %2820
        %2823 = vset.pattern.permute.xlu0 2
        %2824 = vperm.xlu0 %2823, %v832
        %v2825 = vpop.permute.xlu0 %2824
        %2827 = vset.pattern.permute.xlu0 2
        %2828 = vperm.xlu0 %2827, %v833
        %v2829 = vpop.permute.xlu0 %2828
        %2831 = vset.pattern.permute.xlu0 2
        %2832 = vperm.xlu0 %2831, %v834
        %v2833 = vpop.permute.xlu0 %2832
        %2835 = vset.pattern.permute.xlu0 2
        %2836 = vperm.xlu0 %2835, %v835
        %v2837 = vpop.permute.xlu0 %2836
        %2839 = vset.pattern.permute.xlu0 2
        %2840 = vperm.xlu0 %2839, %v836
        %v2841 = vpop.permute.xlu0 %2840
        %2843 = vset.pattern.permute.xlu0 2
        %2844 = vperm.xlu0 %2843, %v837
        %v2845 = vpop.permute.xlu0 %2844
        %2847 = vset.pattern.permute.xlu0 2
        %2848 = vperm.xlu0 %2847, %v838
        %v2849 = vpop.permute.xlu0 %2848
        %2851 = vset.pattern.permute.xlu0 2
        %2852 = vperm.xlu0 %2851, %v839
        %v2853 = vpop.permute.xlu0 %2852
        %2855 = vset.pattern.permute.xlu0 2
        %2856 = vperm.xlu0 %2855, %v840
        %v2857 = vpop.permute.xlu0 %2856
        %2859 = vset.pattern.permute.xlu0 2
        %2860 = vperm.xlu0 %2859, %v841
        %v2861 = vpop.permute.xlu0 %2860
        %2863 = vset.pattern.permute.xlu0 2
        %2864 = vperm.xlu0 %2863, %v842
        %v2865 = vpop.permute.xlu0 %2864
        %2867 = vset.pattern.permute.xlu0 2
        %2868 = vperm.xlu0 %2867, %v843
        %v2869 = vpop.permute.xlu0 %2868
        %2871 = vset.pattern.permute.xlu0 2
        %2872 = vperm.xlu0 %2871, %v844
        %v2873 = vpop.permute.xlu0 %2872
        %2875 = vset.pattern.permute.xlu0 2
        %2876 = vperm.xlu0 %2875, %v845
        %v2877 = vpop.permute.xlu0 %2876
        %2879 = vset.pattern.permute.xlu0 2
        %2880 = vperm.xlu0 %2879, %v846
        %v2881 = vpop.permute.xlu0 %2880
        %2883 = vset.pattern.permute.xlu0 2
        %2884 = vperm.xlu0 %2883, %v847
        %v2885 = vpop.permute.xlu0 %2884
        %2887 = vset.pattern.permute.xlu0 2
        %2888 = vperm.xlu0 %2887, %v848
        %v2889 = vpop.permute.xlu0 %2888
        %2891 = vset.pattern.permute.xlu0 2
        %2892 = vperm.xlu0 %2891, %v849
        %v2893 = vpop.permute.xlu0 %2892
        %2895 = vset.pattern.permute.xlu0 2
        %2896 = vperm.xlu0 %2895, %v850
        %v2897 = vpop.permute.xlu0 %2896
        %2899 = vset.pattern.permute.xlu0 2
        %2900 = vperm.xlu0 %2899, %v851
        %v2901 = vpop.permute.xlu0 %2900
        %2903 = vset.pattern.permute.xlu0 2
        %2904 = vperm.xlu0 %2903, %v852
        %v2905 = vpop.permute.xlu0 %2904
        %2907 = vset.pattern.permute.xlu0 2
        %2908 = vperm.xlu0 %2907, %v853
        %v2909 = vpop.permute.xlu0 %2908
        %v2911 = vlaneseq
        %v2912 = vshrl.u32 %v2911, 7
        %v2913 = vsub.s32 2, %v2912
        %v2914 = vrot.slane %v854, %v2913
        %v2915 = vmul.f32 %v2401, %v2914
        %v2916 = vmul.f32 %v2405, %v2914
        %v2917 = vmul.f32 %v2409, %v2914
        %v2918 = vmul.f32 %v2413, %v2914
        %v2919 = vmul.f32 %v2417, %v2914
        %v2920 = vmul.f32 %v2421, %v2914
        %v2921 = vmul.f32 %v2425, %v2914
        %v2922 = vmul.f32 %v2429, %v2914
        %v2923 = vmul.f32 %v2433, %v2914
        %v2924 = vmul.f32 %v2437, %v2914
        %v2925 = vmul.f32 %v2441, %v2914
        %v2926 = vmul.f32 %v2445, %v2914
        %v2927 = vmul.f32 %v2449, %v2914
        %v2928 = vmul.f32 %v2453, %v2914
        %v2929 = vmul.f32 %v2457, %v2914
        %v2930 = vmul.f32 %v2461, %v2914
        %v2931 = vmul.f32 %v2465, %v2914
        %v2932 = vmul.f32 %v2469, %v2914
        %v2933 = vmul.f32 %v2473, %v2914
        %v2934 = vmul.f32 %v2477, %v2914
        %v2935 = vmul.f32 %v2481, %v2914
        %v2936 = vmul.f32 %v2485, %v2914
        %v2937 = vmul.f32 %v2489, %v2914
        %v2938 = vmul.f32 %v2493, %v2914
        %v2939 = vmul.f32 %v2497, %v2914
        %v2940 = vmul.f32 %v2501, %v2914
        %v2941 = vmul.f32 %v2505, %v2914
        %v2942 = vmul.f32 %v2509, %v2914
        %v2943 = vmul.f32 %v2513, %v2914
        %v2944 = vmul.f32 %v2517, %v2914
        %v2945 = vmul.f32 %v2521, %v2914
        %v2946 = vmul.f32 %v2525, %v2914
        %v2947 = vmul.f32 %v2529, %v2914
        %v2948 = vmul.f32 %v2533, %v2914
        %v2949 = vmul.f32 %v2537, %v2914
        %v2950 = vmul.f32 %v2541, %v2914
        %v2951 = vmul.f32 %v2545, %v2914
        %v2952 = vmul.f32 %v2549, %v2914
        %v2953 = vmul.f32 %v2553, %v2914
        %v2954 = vmul.f32 %v2557, %v2914
        %v2955 = vmul.f32 %v2561, %v2914
        %v2956 = vmul.f32 %v2565, %v2914
        %v2957 = vmul.f32 %v2569, %v2914
        %v2958 = vmul.f32 %v2573, %v2914
        %v2959 = vmul.f32 %v2577, %v2914
        %v2960 = vmul.f32 %v2581, %v2914
        %v2961 = vmul.f32 %v2585, %v2914
        %v2962 = vmul.f32 %v2589, %v2914
        %v2963 = vmul.f32 %v2593, %v2914
        %v2964 = vmul.f32 %v2597, %v2914
        %v2965 = vmul.f32 %v2601, %v2914
        %v2966 = vmul.f32 %v2605, %v2914
        %v2967 = vmul.f32 %v2609, %v2914
        %v2968 = vmul.f32 %v2613, %v2914
        %v2969 = vmul.f32 %v2617, %v2914
        %v2970 = vmul.f32 %v2621, %v2914
        %v2971 = vmul.f32 %v2625, %v2914
        %v2972 = vmul.f32 %v2629, %v2914
        %v2973 = vmul.f32 %v2633, %v2914
        %v2974 = vmul.f32 %v2637, %v2914
        %v2975 = vmul.f32 %v2641, %v2914
        %v2976 = vmul.f32 %v2645, %v2914
        %v2977 = vmul.f32 %v2649, %v2914
        %v2978 = vmul.f32 %v2653, %v2914
        %v2979 = vmul.f32 %v2657, %v2914
        %v2980 = vmul.f32 %v2661, %v2914
        %v2981 = vmul.f32 %v2665, %v2914
        %v2982 = vmul.f32 %v2669, %v2914
        %v2983 = vmul.f32 %v2673, %v2914
        %v2984 = vmul.f32 %v2677, %v2914
        %v2985 = vmul.f32 %v2681, %v2914
        %v2986 = vmul.f32 %v2685, %v2914
        %v2987 = vmul.f32 %v2689, %v2914
        %v2988 = vmul.f32 %v2693, %v2914
        %v2989 = vmul.f32 %v2697, %v2914
        %v2990 = vmul.f32 %v2701, %v2914
        %v2991 = vmul.f32 %v2705, %v2914
        %v2992 = vmul.f32 %v2709, %v2914
        %v2993 = vmul.f32 %v2713, %v2914
        %v2994 = vmul.f32 %v2717, %v2914
        %v2995 = vmul.f32 %v2721, %v2914
        %v2996 = vmul.f32 %v2725, %v2914
        %v2997 = vmul.f32 %v2729, %v2914
        %v2998 = vmul.f32 %v2733, %v2914
        %v2999 = vmul.f32 %v2737, %v2914
        %v3000 = vmul.f32 %v2741, %v2914
        %v3001 = vmul.f32 %v2745, %v2914
        %v3002 = vmul.f32 %v2749, %v2914
        %v3003 = vmul.f32 %v2753, %v2914
        %v3004 = vmul.f32 %v2757, %v2914
        %v3005 = vmul.f32 %v2761, %v2914
        %v3006 = vmul.f32 %v2765, %v2914
        %v3007 = vmul.f32 %v2769, %v2914
        %v3008 = vmul.f32 %v2773, %v2914
        %v3009 = vmul.f32 %v2777, %v2914
        %v3010 = vmul.f32 %v2781, %v2914
        %v3011 = vmul.f32 %v2785, %v2914
        %v3012 = vmul.f32 %v2789, %v2914
        %v3013 = vmul.f32 %v2793, %v2914
        %v3014 = vmul.f32 %v2797, %v2914
        %v3015 = vmul.f32 %v2801, %v2914
        %v3016 = vmul.f32 %v2805, %v2914
        %v3017 = vmul.f32 %v2809, %v2914
        %v3018 = vmul.f32 %v2813, %v2914
        %v3019 = vmul.f32 %v2817, %v2914
        %v3020 = vmul.f32 %v2821, %v2914
        %v3021 = vmul.f32 %v2825, %v2914
        %v3022 = vmul.f32 %v2829, %v2914
        %v3023 = vmul.f32 %v2833, %v2914
        %v3024 = vmul.f32 %v2837, %v2914
        %v3025 = vmul.f32 %v2841, %v2914
        %v3026 = vmul.f32 %v2845, %v2914
        %v3027 = vmul.f32 %v2849, %v2914
        %v3028 = vmul.f32 %v2853, %v2914
        %v3029 = vmul.f32 %v2857, %v2914
        %v3030 = vmul.f32 %v2861, %v2914
        %v3031 = vmul.f32 %v2865, %v2914
        %v3032 = vmul.f32 %v2869, %v2914
        %v3033 = vmul.f32 %v2873, %v2914
        %v3034 = vmul.f32 %v2877, %v2914
        %v3035 = vmul.f32 %v2881, %v2914
        %v3036 = vmul.f32 %v2885, %v2914
        %v3037 = vmul.f32 %v2889, %v2914
        %v3038 = vmul.f32 %v2893, %v2914
        %v3039 = vmul.f32 %v2897, %v2914
        %v3040 = vmul.f32 %v2901, %v2914
        %v3041 = vmul.f32 %v2905, %v2914
        %v3042 = vmul.f32 %v2909, %v2914
        %v3043 = vadd.f32 %v2271, %v2915
        %v3044 = vadd.f32 %v2272, %v2916
        %v3045 = vadd.f32 %v2273, %v2917
        %v3046 = vadd.f32 %v2274, %v2918
        %v3047 = vadd.f32 %v2275, %v2919
        %v3048 = vadd.f32 %v2276, %v2920
        %v3049 = vadd.f32 %v2277, %v2921
        %v3050 = vadd.f32 %v2278, %v2922
        %v3051 = vadd.f32 %v2279, %v2923
        %v3052 = vadd.f32 %v2280, %v2924
        %v3053 = vadd.f32 %v2281, %v2925
        %v3054 = vadd.f32 %v2282, %v2926
        %v3055 = vadd.f32 %v2283, %v2927
        %v3056 = vadd.f32 %v2284, %v2928
        %v3057 = vadd.f32 %v2285, %v2929
        %v3058 = vadd.f32 %v2286, %v2930
        %v3059 = vadd.f32 %v2287, %v2931
        %v3060 = vadd.f32 %v2288, %v2932
        %v3061 = vadd.f32 %v2289, %v2933
        %v3062 = vadd.f32 %v2290, %v2934
        %v3063 = vadd.f32 %v2291, %v2935
        %v3064 = vadd.f32 %v2292, %v2936
        %v3065 = vadd.f32 %v2293, %v2937
        %v3066 = vadd.f32 %v2294, %v2938
        %v3067 = vadd.f32 %v2295, %v2939
        %v3068 = vadd.f32 %v2296, %v2940
        %v3069 = vadd.f32 %v2297, %v2941
        %v3070 = vadd.f32 %v2298, %v2942
        %v3071 = vadd.f32 %v2299, %v2943
        %v3072 = vadd.f32 %v2300, %v2944
        %v3073 = vadd.f32 %v2301, %v2945
        %v3074 = vadd.f32 %v2302, %v2946
        %v3075 = vadd.f32 %v2303, %v2947
        %v3076 = vadd.f32 %v2304, %v2948
        %v3077 = vadd.f32 %v2305, %v2949
        %v3078 = vadd.f32 %v2306, %v2950
        %v3079 = vadd.f32 %v2307, %v2951
        %v3080 = vadd.f32 %v2308, %v2952
        %v3081 = vadd.f32 %v2309, %v2953
        %v3082 = vadd.f32 %v2310, %v2954
        %v3083 = vadd.f32 %v2311, %v2955
        %v3084 = vadd.f32 %v2312, %v2956
        %v3085 = vadd.f32 %v2313, %v2957
        %v3086 = vadd.f32 %v2314, %v2958
        %v3087 = vadd.f32 %v2315, %v2959
        %v3088 = vadd.f32 %v2316, %v2960
        %v3089 = vadd.f32 %v2317, %v2961
        %v3090 = vadd.f32 %v2318, %v2962
        %v3091 = vadd.f32 %v2319, %v2963
        %v3092 = vadd.f32 %v2320, %v2964
        %v3093 = vadd.f32 %v2321, %v2965
        %v3094 = vadd.f32 %v2322, %v2966
        %v3095 = vadd.f32 %v2323, %v2967
        %v3096 = vadd.f32 %v2324, %v2968
        %v3097 = vadd.f32 %v2325, %v2969
        %v3098 = vadd.f32 %v2326, %v2970
        %v3099 = vadd.f32 %v2327, %v2971
        %v3100 = vadd.f32 %v2328, %v2972
        %v3101 = vadd.f32 %v2329, %v2973
        %v3102 = vadd.f32 %v2330, %v2974
        %v3103 = vadd.f32 %v2331, %v2975
        %v3104 = vadd.f32 %v2332, %v2976
        %v3105 = vadd.f32 %v2333, %v2977
        %v3106 = vadd.f32 %v2334, %v2978
        %v3107 = vadd.f32 %v2335, %v2979
        %v3108 = vadd.f32 %v2336, %v2980
        %v3109 = vadd.f32 %v2337, %v2981
        %v3110 = vadd.f32 %v2338, %v2982
        %v3111 = vadd.f32 %v2339, %v2983
        %v3112 = vadd.f32 %v2340, %v2984
        %v3113 = vadd.f32 %v2341, %v2985
        %v3114 = vadd.f32 %v2342, %v2986
        %v3115 = vadd.f32 %v2343, %v2987
        %v3116 = vadd.f32 %v2344, %v2988
        %v3117 = vadd.f32 %v2345, %v2989
        %v3118 = vadd.f32 %v2346, %v2990
        %v3119 = vadd.f32 %v2347, %v2991
        %v3120 = vadd.f32 %v2348, %v2992
        %v3121 = vadd.f32 %v2349, %v2993
        %v3122 = vadd.f32 %v2350, %v2994
        %v3123 = vadd.f32 %v2351, %v2995
        %v3124 = vadd.f32 %v2352, %v2996
        %v3125 = vadd.f32 %v2353, %v2997
        %v3126 = vadd.f32 %v2354, %v2998
        %v3127 = vadd.f32 %v2355, %v2999
        %v3128 = vadd.f32 %v2356, %v3000
        %v3129 = vadd.f32 %v2357, %v3001
        %v3130 = vadd.f32 %v2358, %v3002
        %v3131 = vadd.f32 %v2359, %v3003
        %v3132 = vadd.f32 %v2360, %v3004
        %v3133 = vadd.f32 %v2361, %v3005
        %v3134 = vadd.f32 %v2362, %v3006
        %v3135 = vadd.f32 %v2363, %v3007
        %v3136 = vadd.f32 %v2364, %v3008
        %v3137 = vadd.f32 %v2365, %v3009
        %v3138 = vadd.f32 %v2366, %v3010
        %v3139 = vadd.f32 %v2367, %v3011
        %v3140 = vadd.f32 %v2368, %v3012
        %v3141 = vadd.f32 %v2369, %v3013
        %v3142 = vadd.f32 %v2370, %v3014
        %v3143 = vadd.f32 %v2371, %v3015
        %v3144 = vadd.f32 %v2372, %v3016
        %v3145 = vadd.f32 %v2373, %v3017
        %v3146 = vadd.f32 %v2374, %v3018
        %v3147 = vadd.f32 %v2375, %v3019
        %v3148 = vadd.f32 %v2376, %v3020
        %v3149 = vadd.f32 %v2377, %v3021
        %v3150 = vadd.f32 %v2378, %v3022
        %v3151 = vadd.f32 %v2379, %v3023
        %v3152 = vadd.f32 %v2380, %v3024
        %v3153 = vadd.f32 %v2381, %v3025
        %v3154 = vadd.f32 %v2382, %v3026
        %v3155 = vadd.f32 %v2383, %v3027
        %v3156 = vadd.f32 %v2384, %v3028
        %v3157 = vadd.f32 %v2385, %v3029
        %v3158 = vadd.f32 %v2386, %v3030
        %v3159 = vadd.f32 %v2387, %v3031
        %v3160 = vadd.f32 %v2388, %v3032
        %v3161 = vadd.f32 %v2389, %v3033
        %v3162 = vadd.f32 %v2390, %v3034
        %v3163 = vadd.f32 %v2391, %v3035
        %v3164 = vadd.f32 %v2392, %v3036
        %v3165 = vadd.f32 %v2393, %v3037
        %v3166 = vadd.f32 %v2394, %v3038
        %v3167 = vadd.f32 %v2395, %v3039
        %v3168 = vadd.f32 %v2396, %v3040
        %v3169 = vadd.f32 %v2397, %v3041
        %v3170 = vadd.f32 %v2398, %v3042
        %v3171 = vld [vmem:[#allocation4] sm:$0x1]
        %v3173 = vlaneseq
        %v3174 = vshrl.u32 %v3173, 7
        %v3175 = vsub.s32 0, %v3174
        %v3176 = vrot.slane %v3171, %v3175
        %v3178 = vadd.f32 %v3043, %v3176
        %v3179 = vadd.f32 %v3044, %v3176
        %v3180 = vadd.f32 %v3045, %v3176
        %v3181 = vadd.f32 %v3046, %v3176
        %v3182 = vadd.f32 %v3047, %v3176
        %v3183 = vadd.f32 %v3048, %v3176
        %v3184 = vadd.f32 %v3049, %v3176
        %v3185 = vadd.f32 %v3050, %v3176
        %v3186 = vadd.f32 %v3051, %v3176
        %v3187 = vadd.f32 %v3052, %v3176
        %v3188 = vadd.f32 %v3053, %v3176
        %v3189 = vadd.f32 %v3054, %v3176
        %v3190 = vadd.f32 %v3055, %v3176
        %v3191 = vadd.f32 %v3056, %v3176
        %v3192 = vadd.f32 %v3057, %v3176
        %v3193 = vadd.f32 %v3058, %v3176
        %v3194 = vadd.f32 %v3059, %v3176
        %v3195 = vadd.f32 %v3060, %v3176
        %v3196 = vadd.f32 %v3061, %v3176
        %v3197 = vadd.f32 %v3062, %v3176
        %v3198 = vadd.f32 %v3063, %v3176
        %v3199 = vadd.f32 %v3064, %v3176
        %v3200 = vadd.f32 %v3065, %v3176
        %v3201 = vadd.f32 %v3066, %v3176
        %v3202 = vadd.f32 %v3067, %v3176
        %v3203 = vadd.f32 %v3068, %v3176
        %v3204 = vadd.f32 %v3069, %v3176
        %v3205 = vadd.f32 %v3070, %v3176
        %v3206 = vadd.f32 %v3071, %v3176
        %v3207 = vadd.f32 %v3072, %v3176
        %v3208 = vadd.f32 %v3073, %v3176
        %v3209 = vadd.f32 %v3074, %v3176
        %v3210 = vadd.f32 %v3075, %v3176
        %v3211 = vadd.f32 %v3076, %v3176
        %v3212 = vadd.f32 %v3077, %v3176
        %v3213 = vadd.f32 %v3078, %v3176
        %v3214 = vadd.f32 %v3079, %v3176
        %v3215 = vadd.f32 %v3080, %v3176
        %v3216 = vadd.f32 %v3081, %v3176
        %v3217 = vadd.f32 %v3082, %v3176
        %v3218 = vadd.f32 %v3083, %v3176
        %v3219 = vadd.f32 %v3084, %v3176
        %v3220 = vadd.f32 %v3085, %v3176
        %v3221 = vadd.f32 %v3086, %v3176
        %v3222 = vadd.f32 %v3087, %v3176
        %v3223 = vadd.f32 %v3088, %v3176
        %v3224 = vadd.f32 %v3089, %v3176
        %v3225 = vadd.f32 %v3090, %v3176
        %v3226 = vadd.f32 %v3091, %v3176
        %v3227 = vadd.f32 %v3092, %v3176
        %v3228 = vadd.f32 %v3093, %v3176
        %v3229 = vadd.f32 %v3094, %v3176
        %v3230 = vadd.f32 %v3095, %v3176
        %v3231 = vadd.f32 %v3096, %v3176
        %v3232 = vadd.f32 %v3097, %v3176
        %v3233 = vadd.f32 %v3098, %v3176
        %v3234 = vadd.f32 %v3099, %v3176
        %v3235 = vadd.f32 %v3100, %v3176
        %v3236 = vadd.f32 %v3101, %v3176
        %v3237 = vadd.f32 %v3102, %v3176
        %v3238 = vadd.f32 %v3103, %v3176
        %v3239 = vadd.f32 %v3104, %v3176
        %v3240 = vadd.f32 %v3105, %v3176
        %v3241 = vadd.f32 %v3106, %v3176
        %v3242 = vadd.f32 %v3107, %v3176
        %v3243 = vadd.f32 %v3108, %v3176
        %v3244 = vadd.f32 %v3109, %v3176
        %v3245 = vadd.f32 %v3110, %v3176
        %v3246 = vadd.f32 %v3111, %v3176
        %v3247 = vadd.f32 %v3112, %v3176
        %v3248 = vadd.f32 %v3113, %v3176
        %v3249 = vadd.f32 %v3114, %v3176
        %v3250 = vadd.f32 %v3115, %v3176
        %v3251 = vadd.f32 %v3116, %v3176
        %v3252 = vadd.f32 %v3117, %v3176
        %v3253 = vadd.f32 %v3118, %v3176
        %v3254 = vadd.f32 %v3119, %v3176
        %v3255 = vadd.f32 %v3120, %v3176
        %v3256 = vadd.f32 %v3121, %v3176
        %v3257 = vadd.f32 %v3122, %v3176
        %v3258 = vadd.f32 %v3123, %v3176
        %v3259 = vadd.f32 %v3124, %v3176
        %v3260 = vadd.f32 %v3125, %v3176
        %v3261 = vadd.f32 %v3126, %v3176
        %v3262 = vadd.f32 %v3127, %v3176
        %v3263 = vadd.f32 %v3128, %v3176
        %v3264 = vadd.f32 %v3129, %v3176
        %v3265 = vadd.f32 %v3130, %v3176
        %v3266 = vadd.f32 %v3131, %v3176
        %v3267 = vadd.f32 %v3132, %v3176
        %v3268 = vadd.f32 %v3133, %v3176
        %v3269 = vadd.f32 %v3134, %v3176
        %v3270 = vadd.f32 %v3135, %v3176
        %v3271 = vadd.f32 %v3136, %v3176
        %v3272 = vadd.f32 %v3137, %v3176
        %v3273 = vadd.f32 %v3138, %v3176
        %v3274 = vadd.f32 %v3139, %v3176
        %v3275 = vadd.f32 %v3140, %v3176
        %v3276 = vadd.f32 %v3141, %v3176
        %v3277 = vadd.f32 %v3142, %v3176
        %v3278 = vadd.f32 %v3143, %v3176
        %v3279 = vadd.f32 %v3144, %v3176
        %v3280 = vadd.f32 %v3145, %v3176
        %v3281 = vadd.f32 %v3146, %v3176
        %v3282 = vadd.f32 %v3147, %v3176
        %v3283 = vadd.f32 %v3148, %v3176
        %v3284 = vadd.f32 %v3149, %v3176
        %v3285 = vadd.f32 %v3150, %v3176
        %v3286 = vadd.f32 %v3151, %v3176
        %v3287 = vadd.f32 %v3152, %v3176
        %v3288 = vadd.f32 %v3153, %v3176
        %v3289 = vadd.f32 %v3154, %v3176
        %v3290 = vadd.f32 %v3155, %v3176
        %v3291 = vadd.f32 %v3156, %v3176
        %v3292 = vadd.f32 %v3157, %v3176
        %v3293 = vadd.f32 %v3158, %v3176
        %v3294 = vadd.f32 %v3159, %v3176
        %v3295 = vadd.f32 %v3160, %v3176
        %v3296 = vadd.f32 %v3161, %v3176
        %v3297 = vadd.f32 %v3162, %v3176
        %v3298 = vadd.f32 %v3163, %v3176
        %v3299 = vadd.f32 %v3164, %v3176
        %v3300 = vadd.f32 %v3165, %v3176
        %v3301 = vadd.f32 %v3166, %v3176
        %v3302 = vadd.f32 %v3167, %v3176
        %v3303 = vadd.f32 %v3168, %v3176
        %v3304 = vadd.f32 %v3169, %v3176
        %v3305 = vadd.f32 %v3170, %v3176
        %v3306 = vmax.f32 %v3178, 0.0
        %v3307 = vmax.f32 %v3179, 0.0
        %v3308 = vmax.f32 %v3180, 0.0
        %v3309 = vmax.f32 %v3181, 0.0
        %v3310 = vmax.f32 %v3182, 0.0
        %v3311 = vmax.f32 %v3183, 0.0
        %v3312 = vmax.f32 %v3184, 0.0
        %v3313 = vmax.f32 %v3185, 0.0
        %v3314 = vmax.f32 %v3186, 0.0
        %v3315 = vmax.f32 %v3187, 0.0
        %v3316 = vmax.f32 %v3188, 0.0
        %v3317 = vmax.f32 %v3189, 0.0
        %v3318 = vmax.f32 %v3190, 0.0
        %v3319 = vmax.f32 %v3191, 0.0
        %v3320 = vmax.f32 %v3192, 0.0
        %v3321 = vmax.f32 %v3193, 0.0
        %v3322 = vmax.f32 %v3194, 0.0
        %v3323 = vmax.f32 %v3195, 0.0
        %v3324 = vmax.f32 %v3196, 0.0
        %v3325 = vmax.f32 %v3197, 0.0
        %v3326 = vmax.f32 %v3198, 0.0
        %v3327 = vmax.f32 %v3199, 0.0
        %v3328 = vmax.f32 %v3200, 0.0
        %v3329 = vmax.f32 %v3201, 0.0
        %v3330 = vmax.f32 %v3202, 0.0
        %v3331 = vmax.f32 %v3203, 0.0
        %v3332 = vmax.f32 %v3204, 0.0
        %v3333 = vmax.f32 %v3205, 0.0
        %v3334 = vmax.f32 %v3206, 0.0
        %v3335 = vmax.f32 %v3207, 0.0
        %v3336 = vmax.f32 %v3208, 0.0
        %v3337 = vmax.f32 %v3209, 0.0
        %v3338 = vmax.f32 %v3210, 0.0
        %v3339 = vmax.f32 %v3211, 0.0
        %v3340 = vmax.f32 %v3212, 0.0
        %v3341 = vmax.f32 %v3213, 0.0
        %v3342 = vmax.f32 %v3214, 0.0
        %v3343 = vmax.f32 %v3215, 0.0
        %v3344 = vmax.f32 %v3216, 0.0
        %v3345 = vmax.f32 %v3217, 0.0
        %v3346 = vmax.f32 %v3218, 0.0
        %v3347 = vmax.f32 %v3219, 0.0
        %v3348 = vmax.f32 %v3220, 0.0
        %v3349 = vmax.f32 %v3221, 0.0
        %v3350 = vmax.f32 %v3222, 0.0
        %v3351 = vmax.f32 %v3223, 0.0
        %v3352 = vmax.f32 %v3224, 0.0
        %v3353 = vmax.f32 %v3225, 0.0
        %v3354 = vmax.f32 %v3226, 0.0
        %v3355 = vmax.f32 %v3227, 0.0
        %v3356 = vmax.f32 %v3228, 0.0
        %v3357 = vmax.f32 %v3229, 0.0
        %v3358 = vmax.f32 %v3230, 0.0
        %v3359 = vmax.f32 %v3231, 0.0
        %v3360 = vmax.f32 %v3232, 0.0
        %v3361 = vmax.f32 %v3233, 0.0
        %v3362 = vmax.f32 %v3234, 0.0
        %v3363 = vmax.f32 %v3235, 0.0
        %v3364 = vmax.f32 %v3236, 0.0
        %v3365 = vmax.f32 %v3237, 0.0
        %v3366 = vmax.f32 %v3238, 0.0
        %v3367 = vmax.f32 %v3239, 0.0
        %v3368 = vmax.f32 %v3240, 0.0
        %v3369 = vmax.f32 %v3241, 0.0
        %v3370 = vmax.f32 %v3242, 0.0
        %v3371 = vmax.f32 %v3243, 0.0
        %v3372 = vmax.f32 %v3244, 0.0
        %v3373 = vmax.f32 %v3245, 0.0
        %v3374 = vmax.f32 %v3246, 0.0
        %v3375 = vmax.f32 %v3247, 0.0
        %v3376 = vmax.f32 %v3248, 0.0
        %v3377 = vmax.f32 %v3249, 0.0
        %v3378 = vmax.f32 %v3250, 0.0
        %v3379 = vmax.f32 %v3251, 0.0
        %v3380 = vmax.f32 %v3252, 0.0
        %v3381 = vmax.f32 %v3253, 0.0
        %v3382 = vmax.f32 %v3254, 0.0
        %v3383 = vmax.f32 %v3255, 0.0
        %v3384 = vmax.f32 %v3256, 0.0
        %v3385 = vmax.f32 %v3257, 0.0
        %v3386 = vmax.f32 %v3258, 0.0
        %v3387 = vmax.f32 %v3259, 0.0
        %v3388 = vmax.f32 %v3260, 0.0
        %v3389 = vmax.f32 %v3261, 0.0
        %v3390 = vmax.f32 %v3262, 0.0
        %v3391 = vmax.f32 %v3263, 0.0
        %v3392 = vmax.f32 %v3264, 0.0
        %v3393 = vmax.f32 %v3265, 0.0
        %v3394 = vmax.f32 %v3266, 0.0
        %v3395 = vmax.f32 %v3267, 0.0
        %v3396 = vmax.f32 %v3268, 0.0
        %v3397 = vmax.f32 %v3269, 0.0
        %v3398 = vmax.f32 %v3270, 0.0
        %v3399 = vmax.f32 %v3271, 0.0
        %v3400 = vmax.f32 %v3272, 0.0
        %v3401 = vmax.f32 %v3273, 0.0
        %v3402 = vmax.f32 %v3274, 0.0
        %v3403 = vmax.f32 %v3275, 0.0
        %v3404 = vmax.f32 %v3276, 0.0
        %v3405 = vmax.f32 %v3277, 0.0
        %v3406 = vmax.f32 %v3278, 0.0
        %v3407 = vmax.f32 %v3279, 0.0
        %v3408 = vmax.f32 %v3280, 0.0
        %v3409 = vmax.f32 %v3281, 0.0
        %v3410 = vmax.f32 %v3282, 0.0
        %v3411 = vmax.f32 %v3283, 0.0
        %v3412 = vmax.f32 %v3284, 0.0
        %v3413 = vmax.f32 %v3285, 0.0
        %v3414 = vmax.f32 %v3286, 0.0
        %v3415 = vmax.f32 %v3287, 0.0
        %v3416 = vmax.f32 %v3288, 0.0
        %v3417 = vmax.f32 %v3289, 0.0
        %v3418 = vmax.f32 %v3290, 0.0
        %v3419 = vmax.f32 %v3291, 0.0
        %v3420 = vmax.f32 %v3292, 0.0
        %v3421 = vmax.f32 %v3293, 0.0
        %v3422 = vmax.f32 %v3294, 0.0
        %v3423 = vmax.f32 %v3295, 0.0
        %v3424 = vmax.f32 %v3296, 0.0
        %v3425 = vmax.f32 %v3297, 0.0
        %v3426 = vmax.f32 %v3298, 0.0
        %v3427 = vmax.f32 %v3299, 0.0
        %v3428 = vmax.f32 %v3300, 0.0
        %v3429 = vmax.f32 %v3301, 0.0
        %v3430 = vmax.f32 %v3302, 0.0
        %v3431 = vmax.f32 %v3303, 0.0
        %v3432 = vmax.f32 %v3304, 0.0
        %v3433 = vmax.f32 %v3305, 0.0
        %v3434 = vld [vmem:[#allocation18] sm:$0xff]
        %v3435 = vld [vmem:[#allocation18 + $0x8] sm:$0xff]
        %v3436 = vld [vmem:[#allocation18 + $0x10] sm:$0xff]
        %v3437 = vld [vmem:[#allocation18 + $0x18] sm:$0xff]
        %v3438 = vld [vmem:[#allocation18 + $0x20] sm:$0xff]
        %v3439 = vld [vmem:[#allocation18 + $0x28] sm:$0xff]
        %v3440 = vld [vmem:[#allocation18 + $0x30] sm:$0xff]
        %v3441 = vld [vmem:[#allocation18 + $0x38] sm:$0xff]
        %v3442 = vld [vmem:[#allocation18 + $0x40] sm:$0xff]
        %v3443 = vld [vmem:[#allocation18 + $0x48] sm:$0xff]
        %v3444 = vld [vmem:[#allocation18 + $0x50] sm:$0xff]
        %v3445 = vld [vmem:[#allocation18 + $0x58] sm:$0xff]
        %v3446 = vld [vmem:[#allocation18 + $0x60] sm:$0xff]
        %v3447 = vld [vmem:[#allocation18 + $0x68] sm:$0xff]
        %v3448 = vld [vmem:[#allocation18 + $0x70] sm:$0xff]
        %v3449 = vld [vmem:[#allocation18 + $0x78] sm:$0xff]
        %v3450 = vld [vmem:[#allocation18 + $0x80] sm:$0xff]
        %v3451 = vld [vmem:[#allocation18 + $0x88] sm:$0xff]
        %v3452 = vld [vmem:[#allocation18 + $0x90] sm:$0xff]
        %v3453 = vld [vmem:[#allocation18 + $0x98] sm:$0xff]
        %v3454 = vld [vmem:[#allocation18 + $0xa0] sm:$0xff]
        %v3455 = vld [vmem:[#allocation18 + $0xa8] sm:$0xff]
        %v3456 = vld [vmem:[#allocation18 + $0xb0] sm:$0xff]
        %v3457 = vld [vmem:[#allocation18 + $0xb8] sm:$0xff]
        %v3458 = vld [vmem:[#allocation18 + $0xc0] sm:$0xff]
        %v3459 = vld [vmem:[#allocation18 + $0xc8] sm:$0xff]
        %v3460 = vld [vmem:[#allocation18 + $0xd0] sm:$0xff]
        %v3461 = vld [vmem:[#allocation18 + $0xd8] sm:$0xff]
        %v3462 = vld [vmem:[#allocation18 + $0xe0] sm:$0xff]
        %v3463 = vld [vmem:[#allocation18 + $0xe8] sm:$0xff]
        %v3464 = vld [vmem:[#allocation18 + $0xf0] sm:$0xff]
        %v3465 = vld [vmem:[#allocation18 + $0xf8] sm:$0xff]
        %v3466 = vld [vmem:[#allocation18 + $0x100] sm:$0xff]
        %v3467 = vld [vmem:[#allocation18 + $0x108] sm:$0xff]
        %v3468 = vld [vmem:[#allocation18 + $0x110] sm:$0xff]
        %v3469 = vld [vmem:[#allocation18 + $0x118] sm:$0xff]
        %v3470 = vld [vmem:[#allocation18 + $0x120] sm:$0xff]
        %v3471 = vld [vmem:[#allocation18 + $0x128] sm:$0xff]
        %v3472 = vld [vmem:[#allocation18 + $0x130] sm:$0xff]
        %v3473 = vld [vmem:[#allocation18 + $0x138] sm:$0xff]
        %v3474 = vld [vmem:[#allocation18 + $0x140] sm:$0xff]
        %v3475 = vld [vmem:[#allocation18 + $0x148] sm:$0xff]
        %v3476 = vld [vmem:[#allocation18 + $0x150] sm:$0xff]
        %v3477 = vld [vmem:[#allocation18 + $0x158] sm:$0xff]
        %v3478 = vld [vmem:[#allocation18 + $0x160] sm:$0xff]
        %v3479 = vld [vmem:[#allocation18 + $0x168] sm:$0xff]
        %v3480 = vld [vmem:[#allocation18 + $0x170] sm:$0xff]
        %v3481 = vld [vmem:[#allocation18 + $0x178] sm:$0xff]
        %v3482 = vld [vmem:[#allocation18 + $0x180] sm:$0xff]
        %v3483 = vld [vmem:[#allocation18 + $0x188] sm:$0xff]
        %v3484 = vld [vmem:[#allocation18 + $0x190] sm:$0xff]
        %v3485 = vld [vmem:[#allocation18 + $0x198] sm:$0xff]
        %v3486 = vld [vmem:[#allocation18 + $0x1a0] sm:$0xff]
        %v3487 = vld [vmem:[#allocation18 + $0x1a8] sm:$0xff]
        %v3488 = vld [vmem:[#allocation18 + $0x1b0] sm:$0xff]
        %v3489 = vld [vmem:[#allocation18 + $0x1b8] sm:$0xff]
        %v3490 = vld [vmem:[#allocation18 + $0x1c0] sm:$0xff]
        %v3491 = vld [vmem:[#allocation18 + $0x1c8] sm:$0xff]
        %v3492 = vld [vmem:[#allocation18 + $0x1d0] sm:$0xff]
        %v3493 = vld [vmem:[#allocation18 + $0x1d8] sm:$0xff]
        %v3494 = vld [vmem:[#allocation18 + $0x1e0] sm:$0xff]
        %v3495 = vld [vmem:[#allocation18 + $0x1e8] sm:$0xff]
        %v3496 = vld [vmem:[#allocation18 + $0x1f0] sm:$0xff]
        %v3497 = vld [vmem:[#allocation18 + $0x1f8] sm:$0xff]
        %v3498 = vld [vmem:[#allocation18 + $0x200] sm:$0xff]
        %v3499 = vld [vmem:[#allocation18 + $0x208] sm:$0xff]
        %v3500 = vld [vmem:[#allocation18 + $0x210] sm:$0xff]
        %v3501 = vld [vmem:[#allocation18 + $0x218] sm:$0xff]
        %v3502 = vld [vmem:[#allocation18 + $0x220] sm:$0xff]
        %v3503 = vld [vmem:[#allocation18 + $0x228] sm:$0xff]
        %v3504 = vld [vmem:[#allocation18 + $0x230] sm:$0xff]
        %v3505 = vld [vmem:[#allocation18 + $0x238] sm:$0xff]
        %v3506 = vld [vmem:[#allocation18 + $0x240] sm:$0xff]
        %v3507 = vld [vmem:[#allocation18 + $0x248] sm:$0xff]
        %v3508 = vld [vmem:[#allocation18 + $0x250] sm:$0xff]
        %v3509 = vld [vmem:[#allocation18 + $0x258] sm:$0xff]
        %v3510 = vld [vmem:[#allocation18 + $0x260] sm:$0xff]
        %v3511 = vld [vmem:[#allocation18 + $0x268] sm:$0xff]
        %v3512 = vld [vmem:[#allocation18 + $0x270] sm:$0xff]
        %v3513 = vld [vmem:[#allocation18 + $0x278] sm:$0xff]
        %v3514 = vld [vmem:[#allocation18 + $0x280] sm:$0xff]
        %v3515 = vld [vmem:[#allocation18 + $0x288] sm:$0xff]
        %v3516 = vld [vmem:[#allocation18 + $0x290] sm:$0xff]
        %v3517 = vld [vmem:[#allocation18 + $0x298] sm:$0xff]
        %v3518 = vld [vmem:[#allocation18 + $0x2a0] sm:$0xff]
        %v3519 = vld [vmem:[#allocation18 + $0x2a8] sm:$0xff]
        %v3520 = vld [vmem:[#allocation18 + $0x2b0] sm:$0xff]
        %v3521 = vld [vmem:[#allocation18 + $0x2b8] sm:$0xff]
        %v3522 = vld [vmem:[#allocation18 + $0x2c0] sm:$0xff]
        %v3523 = vld [vmem:[#allocation18 + $0x2c8] sm:$0xff]
        %v3524 = vld [vmem:[#allocation18 + $0x2d0] sm:$0xff]
        %v3525 = vld [vmem:[#allocation18 + $0x2d8] sm:$0xff]
        %v3526 = vld [vmem:[#allocation18 + $0x2e0] sm:$0xff]
        %v3527 = vld [vmem:[#allocation18 + $0x2e8] sm:$0xff]
        %v3528 = vld [vmem:[#allocation18 + $0x2f0] sm:$0xff]
        %v3529 = vld [vmem:[#allocation18 + $0x2f8] sm:$0xff]
        %v3530 = vld [vmem:[#allocation18 + $0x300] sm:$0xff]
        %v3531 = vld [vmem:[#allocation18 + $0x308] sm:$0xff]
        %v3532 = vld [vmem:[#allocation18 + $0x310] sm:$0xff]
        %v3533 = vld [vmem:[#allocation18 + $0x318] sm:$0xff]
        %v3534 = vld [vmem:[#allocation18 + $0x320] sm:$0xff]
        %v3535 = vld [vmem:[#allocation18 + $0x328] sm:$0xff]
        %v3536 = vld [vmem:[#allocation18 + $0x330] sm:$0xff]
        %v3537 = vld [vmem:[#allocation18 + $0x338] sm:$0xff]
        %v3538 = vld [vmem:[#allocation18 + $0x340] sm:$0xff]
        %v3539 = vld [vmem:[#allocation18 + $0x348] sm:$0xff]
        %v3540 = vld [vmem:[#allocation18 + $0x350] sm:$0xff]
        %v3541 = vld [vmem:[#allocation18 + $0x358] sm:$0xff]
        %v3542 = vld [vmem:[#allocation18 + $0x360] sm:$0xff]
        %v3543 = vld [vmem:[#allocation18 + $0x368] sm:$0xff]
        %v3544 = vld [vmem:[#allocation18 + $0x370] sm:$0xff]
        %v3545 = vld [vmem:[#allocation18 + $0x378] sm:$0xff]
        %v3546 = vld [vmem:[#allocation18 + $0x380] sm:$0xff]
        %v3547 = vld [vmem:[#allocation18 + $0x388] sm:$0xff]
        %v3548 = vld [vmem:[#allocation18 + $0x390] sm:$0xff]
        %v3549 = vld [vmem:[#allocation18 + $0x398] sm:$0xff]
        %v3550 = vld [vmem:[#allocation18 + $0x3a0] sm:$0xff]
        %v3551 = vld [vmem:[#allocation18 + $0x3a8] sm:$0xff]
        %v3552 = vld [vmem:[#allocation18 + $0x3b0] sm:$0xff]
        %v3553 = vld [vmem:[#allocation18 + $0x3b8] sm:$0xff]
        %v3554 = vld [vmem:[#allocation18 + $0x3c0] sm:$0xff]
        %v3555 = vld [vmem:[#allocation18 + $0x3c8] sm:$0xff]
        %v3556 = vld [vmem:[#allocation18 + $0x3d0] sm:$0xff]
        %v3557 = vld [vmem:[#allocation18 + $0x3d8] sm:$0xff]
        %v3558 = vld [vmem:[#allocation18 + $0x3e0] sm:$0xff]
        %v3559 = vld [vmem:[#allocation18 + $0x3e8] sm:$0xff]
        %v3560 = vld [vmem:[#allocation18 + $0x3f0] sm:$0xff]
        %v3561 = vld [vmem:[#allocation18 + $0x3f8] sm:$0xff]
        %v3562 = vld [vmem:[#allocation18 + $0x400] sm:$0xff]
        %v3563 = vld [vmem:[#allocation18 + $0x408] sm:$0xff]
        %v3564 = vld [vmem:[#allocation18 + $0x410] sm:$0xff]
        %v3565 = vld [vmem:[#allocation18 + $0x418] sm:$0xff]
        %v3566 = vld [vmem:[#allocation18 + $0x420] sm:$0xff]
        %v3567 = vld [vmem:[#allocation18 + $0x428] sm:$0xff]
        %v3568 = vld [vmem:[#allocation18 + $0x430] sm:$0xff]
        %v3569 = vld [vmem:[#allocation18 + $0x438] sm:$0xff]
        %v3570 = vld [vmem:[#allocation18 + $0x440] sm:$0xff]
        %v3571 = vld [vmem:[#allocation18 + $0x448] sm:$0xff]
        %v3572 = vld [vmem:[#allocation18 + $0x450] sm:$0xff]
        %v3573 = vld [vmem:[#allocation18 + $0x458] sm:$0xff]
        %v3574 = vld [vmem:[#allocation18 + $0x460] sm:$0xff]
        %v3575 = vld [vmem:[#allocation18 + $0x468] sm:$0xff]
        %v3576 = vld [vmem:[#allocation18 + $0x470] sm:$0xff]
        %v3577 = vld [vmem:[#allocation18 + $0x478] sm:$0xff]
        %v3578 = vld [vmem:[#allocation18 + $0x480] sm:$0xff]
        %v3579 = vld [vmem:[#allocation18 + $0x488] sm:$0xff]
        %v3580 = vld [vmem:[#allocation18 + $0x490] sm:$0xff]
        %v3581 = vld [vmem:[#allocation18 + $0x498] sm:$0xff]
        %v3582 = vld [vmem:[#allocation18 + $0x4a0] sm:$0xff]
        %v3583 = vld [vmem:[#allocation18 + $0x4a8] sm:$0xff]
        %v3584 = vld [vmem:[#allocation18 + $0x4b0] sm:$0xff]
        %v3585 = vld [vmem:[#allocation18 + $0x4b8] sm:$0xff]
        %v3586 = vld [vmem:[#allocation18 + $0x4c0] sm:$0xff]
        %v3587 = vld [vmem:[#allocation18 + $0x4c8] sm:$0xff]
        %v3588 = vld [vmem:[#allocation18 + $0x4d0] sm:$0xff]
        %v3589 = vld [vmem:[#allocation18 + $0x4d8] sm:$0xff]
        %v3590 = vld [vmem:[#allocation18 + $0x4e0] sm:$0xff]
        %v3591 = vld [vmem:[#allocation18 + $0x4e8] sm:$0xff]
        %v3592 = vld [vmem:[#allocation18 + $0x4f0] sm:$0xff]
        %v3593 = vld [vmem:[#allocation18 + $0x4f8] sm:$0xff]
        %v3594 = vld [vmem:[#allocation18 + $0x500] sm:$0xff]
        %v3595 = vld [vmem:[#allocation18 + $0x508] sm:$0xff]
        %v3596 = vld [vmem:[#allocation18 + $0x510] sm:$0xff]
        %v3597 = vld [vmem:[#allocation18 + $0x518] sm:$0xff]
        %v3598 = vld [vmem:[#allocation18 + $0x520] sm:$0xff]
        %v3599 = vld [vmem:[#allocation18 + $0x528] sm:$0xff]
        %v3600 = vld [vmem:[#allocation18 + $0x530] sm:$0xff]
        %v3601 = vld [vmem:[#allocation18 + $0x538] sm:$0xff]
        %v3602 = vld [vmem:[#allocation18 + $0x540] sm:$0xff]
        %v3603 = vld [vmem:[#allocation18 + $0x548] sm:$0xff]
        %v3604 = vld [vmem:[#allocation18 + $0x550] sm:$0xff]
        %v3605 = vld [vmem:[#allocation18 + $0x558] sm:$0xff]
        %v3606 = vld [vmem:[#allocation18 + $0x560] sm:$0xff]
        %v3607 = vld [vmem:[#allocation18 + $0x568] sm:$0xff]
        %v3608 = vld [vmem:[#allocation18 + $0x570] sm:$0xff]
        %v3609 = vld [vmem:[#allocation18 + $0x578] sm:$0xff]
        %v3610 = vld [vmem:[#allocation18 + $0x580] sm:$0xff]
        %v3611 = vld [vmem:[#allocation18 + $0x588] sm:$0xff]
        %v3612 = vld [vmem:[#allocation18 + $0x590] sm:$0xff]
        %v3613 = vld [vmem:[#allocation18 + $0x598] sm:$0xff]
        %v3614 = vld [vmem:[#allocation18 + $0x5a0] sm:$0xff]
        %v3615 = vld [vmem:[#allocation18 + $0x5a8] sm:$0xff]
        %v3616 = vld [vmem:[#allocation18 + $0x5b0] sm:$0xff]
        %v3617 = vld [vmem:[#allocation18 + $0x5b8] sm:$0xff]
        %v3618 = vld [vmem:[#allocation18 + $0x5c0] sm:$0xff]
        %v3619 = vld [vmem:[#allocation18 + $0x5c8] sm:$0xff]
        %v3620 = vld [vmem:[#allocation18 + $0x5d0] sm:$0xff]
        %v3621 = vld [vmem:[#allocation18 + $0x5d8] sm:$0xff]
        %v3622 = vld [vmem:[#allocation18 + $0x5e0] sm:$0xff]
        %v3623 = vld [vmem:[#allocation18 + $0x5e8] sm:$0xff]
        %v3624 = vld [vmem:[#allocation18 + $0x5f0] sm:$0xff]
        %v3625 = vld [vmem:[#allocation18 + $0x5f8] sm:$0xff]
        %v3626 = vld [vmem:[#allocation18 + $0x600] sm:$0xff]
        %v3627 = vld [vmem:[#allocation18 + $0x608] sm:$0xff]
        %v3628 = vld [vmem:[#allocation18 + $0x610] sm:$0xff]
        %v3629 = vld [vmem:[#allocation18 + $0x618] sm:$0xff]
        %v3630 = vld [vmem:[#allocation18 + $0x620] sm:$0xff]
        %v3631 = vld [vmem:[#allocation18 + $0x628] sm:$0xff]
        %v3632 = vld [vmem:[#allocation18 + $0x630] sm:$0xff]
        %v3633 = vld [vmem:[#allocation18 + $0x638] sm:$0xff]
        %v3634 = vld [vmem:[#allocation18 + $0x640] sm:$0xff]
        %v3635 = vld [vmem:[#allocation18 + $0x648] sm:$0xff]
        %v3636 = vld [vmem:[#allocation18 + $0x650] sm:$0xff]
        %v3637 = vld [vmem:[#allocation18 + $0x658] sm:$0xff]
        %v3638 = vld [vmem:[#allocation18 + $0x660] sm:$0xff]
        %v3639 = vld [vmem:[#allocation18 + $0x668] sm:$0xff]
        %v3640 = vld [vmem:[#allocation18 + $0x670] sm:$0xff]
        %v3641 = vld [vmem:[#allocation18 + $0x678] sm:$0xff]
        %v3642 = vld [vmem:[#allocation18 + $0x680] sm:$0xff]
        %v3643 = vld [vmem:[#allocation18 + $0x688] sm:$0xff]
        %v3644 = vld [vmem:[#allocation18 + $0x690] sm:$0xff]
        %v3645 = vld [vmem:[#allocation18 + $0x698] sm:$0xff]
        %v3646 = vld [vmem:[#allocation18 + $0x6a0] sm:$0xff]
        %v3647 = vld [vmem:[#allocation18 + $0x6a8] sm:$0xff]
        %v3648 = vld [vmem:[#allocation18 + $0x6b0] sm:$0xff]
        %v3649 = vld [vmem:[#allocation18 + $0x6b8] sm:$0xff]
        %v3650 = vld [vmem:[#allocation18 + $0x6c0] sm:$0xff]
        %v3651 = vld [vmem:[#allocation18 + $0x6c8] sm:$0xff]
        %v3652 = vld [vmem:[#allocation18 + $0x6d0] sm:$0xff]
        %v3653 = vld [vmem:[#allocation18 + $0x6d8] sm:$0xff]
        %v3654 = vld [vmem:[#allocation18 + $0x6e0] sm:$0xff]
        %v3655 = vld [vmem:[#allocation18 + $0x6e8] sm:$0xff]
        %v3656 = vld [vmem:[#allocation18 + $0x6f0] sm:$0xff]
        %v3657 = vld [vmem:[#allocation18 + $0x6f8] sm:$0xff]
        %v3658 = vld [vmem:[#allocation18 + $0x700] sm:$0xff]
        %v3659 = vld [vmem:[#allocation18 + $0x708] sm:$0xff]
        %v3660 = vld [vmem:[#allocation18 + $0x710] sm:$0xff]
        %v3661 = vld [vmem:[#allocation18 + $0x718] sm:$0xff]
        %v3662 = vld [vmem:[#allocation18 + $0x720] sm:$0xff]
        %v3663 = vld [vmem:[#allocation18 + $0x728] sm:$0xff]
        %v3664 = vld [vmem:[#allocation18 + $0x730] sm:$0xff]
        %v3665 = vld [vmem:[#allocation18 + $0x738] sm:$0xff]
        %v3666 = vld [vmem:[#allocation18 + $0x740] sm:$0xff]
        %v3667 = vld [vmem:[#allocation18 + $0x748] sm:$0xff]
        %v3668 = vld [vmem:[#allocation18 + $0x750] sm:$0xff]
        %v3669 = vld [vmem:[#allocation18 + $0x758] sm:$0xff]
        %v3670 = vld [vmem:[#allocation18 + $0x760] sm:$0xff]
        %v3671 = vld [vmem:[#allocation18 + $0x768] sm:$0xff]
        %v3672 = vld [vmem:[#allocation18 + $0x770] sm:$0xff]
        %v3673 = vld [vmem:[#allocation18 + $0x778] sm:$0xff]
        %v3674 = vld [vmem:[#allocation18 + $0x780] sm:$0xff]
        %v3675 = vld [vmem:[#allocation18 + $0x788] sm:$0xff]
        %v3676 = vld [vmem:[#allocation18 + $0x790] sm:$0xff]
        %v3677 = vld [vmem:[#allocation18 + $0x798] sm:$0xff]
        %v3678 = vld [vmem:[#allocation18 + $0x7a0] sm:$0xff]
        %v3679 = vld [vmem:[#allocation18 + $0x7a8] sm:$0xff]
        %v3680 = vld [vmem:[#allocation18 + $0x7b0] sm:$0xff]
        %v3681 = vld [vmem:[#allocation18 + $0x7b8] sm:$0xff]
        %v3682 = vld [vmem:[#allocation18 + $0x7c0] sm:$0xff]
        %v3683 = vld [vmem:[#allocation18 + $0x7c8] sm:$0xff]
        %v3684 = vld [vmem:[#allocation18 + $0x7d0] sm:$0xff]
        %v3685 = vld [vmem:[#allocation18 + $0x7d8] sm:$0xff]
        %v3686 = vld [vmem:[#allocation18 + $0x7e0] sm:$0xff]
        %v3687 = vld [vmem:[#allocation18 + $0x7e8] sm:$0xff]
        %v3688 = vld [vmem:[#allocation18 + $0x7f0] sm:$0xff]
        %v3689 = vld [vmem:[#allocation18 + $0x7f8] sm:$0xff]
        %3690 = vmatprep.subr.mxu0 0.0
        %3691 = vmatpush1.msra.mxu0 %v3306
        %3692 = vmatprep.subr.mxu0 0.0
        %3693 = vmatpush1.msra.mxu0 %v3307
        %3694 = vmatprep.subr.mxu0 0.0
        %3695 = vmatpush1.msra.mxu0 %v3308
        %3696 = vmatprep.subr.mxu0 0.0
        %3697 = vmatpush1.msra.mxu0 %v3309
        %3698 = vmatprep.subr.mxu0 0.0
        %3699 = vmatpush1.msra.mxu0 %v3310
        %3700 = vmatprep.subr.mxu0 0.0
        %3701 = vmatpush1.msra.mxu0 %v3311
        %3702 = vmatprep.subr.mxu0 0.0
        %3703 = vmatpush1.msra.mxu0 %v3312
        %3704 = vmatprep.subr.mxu0 0.0
        %3705 = vmatpush1.msra.mxu0 %v3313
        %3706 = vmatprep.subr.mxu0 0.0
        %3707 = vmatpush1.msra.mxu0 %v3314
        %3708 = vmatprep.subr.mxu0 0.0
        %3709 = vmatpush1.msra.mxu0 %v3315
        %3710 = vmatprep.subr.mxu0 0.0
        %3711 = vmatpush1.msra.mxu0 %v3316
        %3712 = vmatprep.subr.mxu0 0.0
        %3713 = vmatpush1.msra.mxu0 %v3317
        %3714 = vmatprep.subr.mxu0 0.0
        %3715 = vmatpush1.msra.mxu0 %v3318
        %3716 = vmatprep.subr.mxu0 0.0
        %3717 = vmatpush1.msra.mxu0 %v3319
        %3718 = vmatprep.subr.mxu0 0.0
        %3719 = vmatpush1.msra.mxu0 %v3320
        %3720 = vmatprep.subr.mxu0 0.0
        %3721 = vmatpush1.msra.mxu0 %v3321
        %3722 = vmatprep.subr.mxu0 0.0
        %3723 = vmatpush1.msra.mxu0 %v3322
        %3724 = vmatprep.subr.mxu0 0.0
        %3725 = vmatpush1.msra.mxu0 %v3323
        %3726 = vmatprep.subr.mxu0 0.0
        %3727 = vmatpush1.msra.mxu0 %v3324
        %3728 = vmatprep.subr.mxu0 0.0
        %3729 = vmatpush1.msra.mxu0 %v3325
        %3730 = vmatprep.subr.mxu0 0.0
        %3731 = vmatpush1.msra.mxu0 %v3326
        %3732 = vmatprep.subr.mxu0 0.0
        %3733 = vmatpush1.msra.mxu0 %v3327
        %3734 = vmatprep.subr.mxu0 0.0
        %3735 = vmatpush1.msra.mxu0 %v3328
        %3736 = vmatprep.subr.mxu0 0.0
        %3737 = vmatpush1.msra.mxu0 %v3329
        %3738 = vmatprep.subr.mxu0 0.0
        %3739 = vmatpush1.msra.mxu0 %v3330
        %3740 = vmatprep.subr.mxu0 0.0
        %3741 = vmatpush1.msra.mxu0 %v3331
        %3742 = vmatprep.subr.mxu0 0.0
        %3743 = vmatpush1.msra.mxu0 %v3332
        %3744 = vmatprep.subr.mxu0 0.0
        %3745 = vmatpush1.msra.mxu0 %v3333
        %3746 = vmatprep.subr.mxu0 0.0
        %3747 = vmatpush1.msra.mxu0 %v3334
        %3748 = vmatprep.subr.mxu0 0.0
        %3749 = vmatpush1.msra.mxu0 %v3335
        %3750 = vmatprep.subr.mxu0 0.0
        %3751 = vmatpush1.msra.mxu0 %v3336
        %3752 = vmatprep.subr.mxu0 0.0
        %3753 = vmatpush1.msra.mxu0 %v3337
        %3754 = vmatprep.mubr.f32.mxu0 %v3435
        %3755 = vmatmul.mubr.f32.gmra.mrb[0].mxu0 %v3434
        %v3756 = vpop.f32.mrb[0].mxu0
        %v3757 = vadd.f32 0.0, %v3756
        %v3758 = vpop.f32.mrb[0].mxu0
        %3759 = vmatprep.mubr.f32.mxu0 %v3443
        %3760 = vmatmul.mubr.f32.gmra.mrb[0].mxu0 %v3442
        %v3761 = vpop.f32.mrb[0].mxu0
        %v3762 = vadd.f32 0.0, %v3761
        %v3763 = vpop.f32.mrb[0].mxu0
        %3764 = vmatprep.mubr.f32.mxu0 %v3451
        %3765 = vmatmul.mubr.f32.gmra.mrb[0].mxu0 %v3450
        %v3766 = vpop.f32.mrb[0].mxu0
        %v3767 = vadd.f32 0.0, %v3766
        %v3768 = vpop.f32.mrb[0].mxu0
        %3769 = vmatprep.mubr.f32.mxu0 %v3459
        %3770 = vmatmul.mubr.f32.gmra.mrb[0].mxu0 %v3458
        %v3771 = vpop.f32.mrb[0].mxu0
        %v3772 = vadd.f32 0.0, %v3771
        %v3773 = vpop.f32.mrb[0].mxu0
        %3774 = vmatprep.mubr.f32.mxu0 %v3467
        %3775 = vmatmul.mubr.f32.gmra.mrb[0].mxu0 %v3466
        %v3776 = vpop.f32.mrb[0].mxu0
        %v3777 = vadd.f32 0.0, %v3776
        %v3778 = vpop.f32.mrb[0].mxu0
        %3779 = vmatprep.mubr.f32.mxu0 %v3475
        %3780 = vmatmul.mubr.f32.gmra.mrb[0].mxu0 %v3474
        %v3781 = vpop.f32.mrb[0].mxu0
        %v3782 = vadd.f32 0.0, %v3781
        %v3783 = vpop.f32.mrb[0].mxu0
        %3784 = vmatprep.mubr.f32.mxu0 %v3483
        %3785 = vmatmul.mubr.f32.gmra.mrb[0].mxu0 %v3482
        %v3786 = vpop.f32.mrb[0].mxu0
        %v3787 = vadd.f32 0.0, %v3786
        %v3788 = vpop.f32.mrb[0].mxu0
        %3789 = vmatprep.mubr.f32.mxu0 %v3491
        %3790 = vmatmul.mubr.f32.gmra.mrb[0].mxu0 %v3490
        %v3791 = vpop.f32.mrb[0].mxu0
        %v3792 = vadd.f32 0.0, %v3791
        %v3793 = vpop.f32.mrb[0].mxu0
        %3794 = vmatprep.mubr.f32.mxu0 %v3499
        %3795 = vmatmul.mubr.f32.gmra.mrb[0].mxu0 %v3498
        %v3796 = vpop.f32.mrb[0].mxu0
        %v3797 = vadd.f32 0.0, %v3796
        %v3798 = vpop.f32.mrb[0].mxu0
        %3799 = vmatprep.mubr.f32.mxu0 %v3507
        %3800 = vmatmul.mubr.f32.gmra.mrb[0].mxu0 %v3506
        %v3801 = vpop.f32.mrb[0].mxu0
        %v3802 = vadd.f32 0.0, %v3801
        %v3803 = vpop.f32.mrb[0].mxu0
        %3804 = vmatprep.mubr.f32.mxu0 %v3515
        %3805 = vmatmul.mubr.f32.gmra.mrb[0].mxu0 %v3514
        %v3806 = vpop.f32.mrb[0].mxu0
        %v3807 = vadd.f32 0.0, %v3806
        %v3808 = vpop.f32.mrb[0].mxu0
        %3809 = vmatprep.mubr.f32.mxu0 %v3523
        %3810 = vmatmul.mubr.f32.gmra.mrb[0].mxu0 %v3522
        %v3811 = vpop.f32.mrb[0].mxu0
        %v3812 = vadd.f32 0.0, %v3811
        %v3813 = vpop.f32.mrb[0].mxu0
        %3814 = vmatprep.mubr.f32.mxu0 %v3531
        %3815 = vmatmul.mubr.f32.gmra.mrb[0].mxu0 %v3530
        %v3816 = vpop.f32.mrb[0].mxu0
        %v3817 = vadd.f32 0.0, %v3816
        %v3818 = vpop.f32.mrb[0].mxu0
        %3819 = vmatprep.mubr.f32.mxu0 %v3539
        %3820 = vmatmul.mubr.f32.gmra.mrb[0].mxu0 %v3538
        %v3821 = vpop.f32.mrb[0].mxu0
        %v3822 = vadd.f32 0.0, %v3821
        %v3823 = vpop.f32.mrb[0].mxu0
        %3824 = vmatprep.mubr.f32.mxu0 %v3547
        %3825 = vmatmul.mubr.f32.gmra.mrb[0].mxu0 %v3546
        %v3826 = vpop.f32.mrb[0].mxu0
        %v3827 = vadd.f32 0.0, %v3826
        %v3828 = vpop.f32.mrb[0].mxu0
        %3829 = vmatprep.mubr.f32.mxu0 %v3555
        %3830 = vmatmul.mubr.f32.gmra.mrb[0].mxu0 %v3554
        %v3831 = vpop.f32.mrb[0].mxu0
        %v3832 = vadd.f32 0.0, %v3831
        %v3833 = vpop.f32.mrb[0].mxu0
        %3834 = vmatprep.mubr.f32.mxu0 %v3563
        %3835 = vmatmul.mubr.f32.gmra.mrb[0].mxu0 %v3562
        %v3836 = vpop.f32.mrb[0].mxu0
        %v3837 = vadd.f32 0.0, %v3836
        %v3838 = vpop.f32.mrb[0].mxu0
        %3839 = vmatprep.mubr.f32.mxu0 %v3571
        %3840 = vmatmul.mubr.f32.gmra.mrb[0].mxu0 %v3570
        %v3841 = vpop.f32.mrb[0].mxu0
        %v3842 = vadd.f32 0.0, %v3841
        %v3843 = vpop.f32.mrb[0].mxu0
        %3844 = vmatprep.mubr.f32.mxu0 %v3579
        %3845 = vmatmul.mubr.f32.gmra.mrb[0].mxu0 %v3578
        %v3846 = vpop.f32.mrb[0].mxu0
        %v3847 = vadd.f32 0.0, %v3846
        %v3848 = vpop.f32.mrb[0].mxu0
        %3849 = vmatprep.mubr.f32.mxu0 %v3587
        %3850 = vmatmul.mubr.f32.gmra.mrb[0].mxu0 %v3586
        %v3851 = vpop.f32.mrb[0].mxu0
        %v3852 = vadd.f32 0.0, %v3851
        %v3853 = vpop.f32.mrb[0].mxu0
        %3854 = vmatprep.mubr.f32.mxu0 %v3595
        %3855 = vmatmul.mubr.f32.gmra.mrb[0].mxu0 %v3594
        %v3856 = vpop.f32.mrb[0].mxu0
        %v3857 = vadd.f32 0.0, %v3856
        %v3858 = vpop.f32.mrb[0].mxu0
        %3859 = vmatprep.mubr.f32.mxu0 %v3603
        %3860 = vmatmul.mubr.f32.gmra.mrb[0].mxu0 %v3602
        %v3861 = vpop.f32.mrb[0].mxu0
        %v3862 = vadd.f32 0.0, %v3861
        %v3863 = vpop.f32.mrb[0].mxu0
        %3864 = vmatprep.mubr.f32.mxu0 %v3611
        %3865 = vmatmul.mubr.f32.gmra.mrb[0].mxu0 %v3610
        %v3866 = vpop.f32.mrb[0].mxu0
        %v3867 = vadd.f32 0.0, %v3866
        %v3868 = vpop.f32.mrb[0].mxu0
        %3869 = vmatprep.mubr.f32.mxu0 %v3619
        %3870 = vmatmul.mubr.f32.gmra.mrb[0].mxu0 %v3618
        %v3871 = vpop.f32.mrb[0].mxu0
        %v3872 = vadd.f32 0.0, %v3871
        %v3873 = vpop.f32.mrb[0].mxu0
        %3874 = vmatprep.mubr.f32.mxu0 %v3627
        %3875 = vmatmul.mubr.f32.gmra.mrb[0].mxu0 %v3626
        %v3876 = vpop.f32.mrb[0].mxu0
        %v3877 = vadd.f32 0.0, %v3876
        %v3878 = vpop.f32.mrb[0].mxu0
        %3879 = vmatprep.mubr.f32.mxu0 %v3635
        %3880 = vmatmul.mubr.f32.gmra.mrb[0].mxu0 %v3634
        %v3881 = vpop.f32.mrb[0].mxu0
        %v3882 = vadd.f32 0.0, %v3881
        %v3883 = vpop.f32.mrb[0].mxu0
        %3884 = vmatprep.mubr.f32.mxu0 %v3643
        %3885 = vmatmul.mubr.f32.gmra.mrb[0].mxu0 %v3642
        %v3886 = vpop.f32.mrb[0].mxu0
        %v3887 = vadd.f32 0.0, %v3886
        %v3888 = vpop.f32.mrb[0].mxu0
        %3889 = vmatprep.mubr.f32.mxu0 %v3651
        %3890 = vmatmul.mubr.f32.gmra.mrb[0].mxu0 %v3650
        %v3891 = vpop.f32.mrb[0].mxu0
        %v3892 = vadd.f32 0.0, %v3891
        %v3893 = vpop.f32.mrb[0].mxu0
        %3894 = vmatprep.mubr.f32.mxu0 %v3659
        %3895 = vmatmul.mubr.f32.gmra.mrb[0].mxu0 %v3658
        %v3896 = vpop.f32.mrb[0].mxu0
        %v3897 = vadd.f32 0.0, %v3896
        %v3898 = vpop.f32.mrb[0].mxu0
        %3899 = vmatprep.mubr.f32.mxu0 %v3667
        %3900 = vmatmul.mubr.f32.gmra.mrb[0].mxu0 %v3666
        %v3901 = vpop.f32.mrb[0].mxu0
        %v3902 = vadd.f32 0.0, %v3901
        %v3903 = vpop.f32.mrb[0].mxu0
        %3904 = vmatprep.mubr.f32.mxu0 %v3675
        %3905 = vmatmul.mubr.f32.gmra.mrb[0].mxu0 %v3674
        %v3906 = vpop.f32.mrb[0].mxu0
        %v3907 = vadd.f32 0.0, %v3906
        %v3908 = vpop.f32.mrb[0].mxu0
        %3909 = vmatprep.mubr.f32.mxu0 %v3683
        %3910 = vmatmul.mubr.f32.gmra.mrb[0].mxu0 %v3682
        %v3911 = vpop.f32.mrb[0].mxu0
        %v3912 = vadd.f32 0.0, %v3911
        %v3913 = vpop.f32.mrb[0].mxu0
        %3914 = vdwg.mxu0
        %3915 = vmatprep.subr.mxu0 0.0
        %3916 = vmatpush1.msra.mxu0 %v3338
        %3917 = vmatprep.subr.mxu0 0.0
        %3918 = vmatpush1.msra.mxu0 %v3339
        %3919 = vmatprep.subr.mxu0 0.0
        %3920 = vmatpush1.msra.mxu0 %v3340
        %3921 = vmatprep.subr.mxu0 0.0
        %3922 = vmatpush1.msra.mxu0 %v3341
        %3923 = vmatprep.subr.mxu0 0.0
        %3924 = vmatpush1.msra.mxu0 %v3342
        %3925 = vmatprep.subr.mxu0 0.0
        %3926 = vmatpush1.msra.mxu0 %v3343
        %3927 = vmatprep.subr.mxu0 0.0
        %3928 = vmatpush1.msra.mxu0 %v3344
        %3929 = vmatprep.subr.mxu0 0.0
        %3930 = vmatpush1.msra.mxu0 %v3345
        %3931 = vmatprep.subr.mxu0 0.0
        %3932 = vmatpush1.msra.mxu0 %v3346
        %3933 = vmatprep.subr.mxu0 0.0
        %3934 = vmatpush1.msra.mxu0 %v3347
        %3935 = vmatprep.subr.mxu0 0.0
        %3936 = vmatpush1.msra.mxu0 %v3348
        %3937 = vmatprep.subr.mxu0 0.0
        %3938 = vmatpush1.msra.mxu0 %v3349
        %3939 = vmatprep.subr.mxu0 0.0
        %3940 = vmatpush1.msra.mxu0 %v3350
        %3941 = vmatprep.subr.mxu0 0.0
        %3942 = vmatpush1.msra.mxu0 %v3351
        %3943 = vmatprep.subr.mxu0 0.0
        %3944 = vmatpush1.msra.mxu0 %v3352
        %3945 = vmatprep.subr.mxu0 0.0
        %3946 = vmatpush1.msra.mxu0 %v3353
        %3947 = vmatprep.subr.mxu0 0.0
        %3948 = vmatpush1.msra.mxu0 %v3354
        %3949 = vmatprep.subr.mxu0 0.0
        %3950 = vmatpush1.msra.mxu0 %v3355
        %3951 = vmatprep.subr.mxu0 0.0
        %3952 = vmatpush1.msra.mxu0 %v3356
        %3953 = vmatprep.subr.mxu0 0.0
        %3954 = vmatpush1.msra.mxu0 %v3357
        %3955 = vmatprep.subr.mxu0 0.0
        %3956 = vmatpush1.msra.mxu0 %v3358
        %3957 = vmatprep.subr.mxu0 0.0
        %3958 = vmatpush1.msra.mxu0 %v3359
        %3959 = vmatprep.subr.mxu0 0.0
        %3960 = vmatpush1.msra.mxu0 %v3360
        %3961 = vmatprep.subr.mxu0 0.0
        %3962 = vmatpush1.msra.mxu0 %v3361
        %3963 = vmatprep.subr.mxu0 0.0
        %3964 = vmatpush1.msra.mxu0 %v3362
        %3965 = vmatprep.subr.mxu0 0.0
        %3966 = vmatpush1.msra.mxu0 %v3363
        %3967 = vmatprep.subr.mxu0 0.0
        %3968 = vmatpush1.msra.mxu0 %v3364
        %3969 = vmatprep.subr.mxu0 0.0
        %3970 = vmatpush1.msra.mxu0 %v3365
        %3971 = vmatprep.subr.mxu0 0.0
        %3972 = vmatpush1.msra.mxu0 %v3366
        %3973 = vmatprep.subr.mxu0 0.0
        %3974 = vmatpush1.msra.mxu0 %v3367
        %3975 = vmatprep.subr.mxu0 0.0
        %3976 = vmatpush1.msra.mxu0 %v3368
        %3977 = vmatprep.subr.mxu0 0.0
        %3978 = vmatpush1.msra.mxu0 %v3369
        %3979 = vmatprep.mubr.f32.mxu0 %v3437
        %3980 = vmatmul.mubr.f32.gmra.mrb[0].mxu0 %v3436
        %v3981 = vpop.f32.mrb[0].mxu0
        %v3982 = vadd.f32 %v3757, %v3981
        %v3983 = vpop.f32.mrb[0].mxu0
        %3984 = vmatprep.mubr.f32.mxu0 %v3445
        %3985 = vmatmul.mubr.f32.gmra.mrb[0].mxu0 %v3444
        %v3986 = vpop.f32.mrb[0].mxu0
        %v3987 = vadd.f32 %v3762, %v3986
        %v3988 = vpop.f32.mrb[0].mxu0
        %3989 = vmatprep.mubr.f32.mxu0 %v3453
        %3990 = vmatmul.mubr.f32.gmra.mrb[0].mxu0 %v3452
        %v3991 = vpop.f32.mrb[0].mxu0
        %v3992 = vadd.f32 %v3767, %v3991
        %v3993 = vpop.f32.mrb[0].mxu0
        %3994 = vmatprep.mubr.f32.mxu0 %v3461
        %3995 = vmatmul.mubr.f32.gmra.mrb[0].mxu0 %v3460
        %v3996 = vpop.f32.mrb[0].mxu0
        %v3997 = vadd.f32 %v3772, %v3996
        %v3998 = vpop.f32.mrb[0].mxu0
        %3999 = vmatprep.mubr.f32.mxu0 %v3469
        %4000 = vmatmul.mubr.f32.gmra.mrb[0].mxu0 %v3468
        %v4001 = vpop.f32.mrb[0].mxu0
        %v4002 = vadd.f32 %v3777, %v4001
        %v4003 = vpop.f32.mrb[0].mxu0
        %4004 = vmatprep.mubr.f32.mxu0 %v3477
        %4005 = vmatmul.mubr.f32.gmra.mrb[0].mxu0 %v3476
        %v4006 = vpop.f32.mrb[0].mxu0
        %v4007 = vadd.f32 %v3782, %v4006
        %v4008 = vpop.f32.mrb[0].mxu0
        %4009 = vmatprep.mubr.f32.mxu0 %v3485
        %4010 = vmatmul.mubr.f32.gmra.mrb[0].mxu0 %v3484
        %v4011 = vpop.f32.mrb[0].mxu0
        %v4012 = vadd.f32 %v3787, %v4011
        %v4013 = vpop.f32.mrb[0].mxu0
        %4014 = vmatprep.mubr.f32.mxu0 %v3493
        %4015 = vmatmul.mubr.f32.gmra.mrb[0].mxu0 %v3492
        %v4016 = vpop.f32.mrb[0].mxu0
        %v4017 = vadd.f32 %v3792, %v4016
        %v4018 = vpop.f32.mrb[0].mxu0
        %4019 = vmatprep.mubr.f32.mxu0 %v3501
        %4020 = vmatmul.mubr.f32.gmra.mrb[0].mxu0 %v3500
        %v4021 = vpop.f32.mrb[0].mxu0
        %v4022 = vadd.f32 %v3797, %v4021
        %v4023 = vpop.f32.mrb[0].mxu0
        %4024 = vmatprep.mubr.f32.mxu0 %v3509
        %4025 = vmatmul.mubr.f32.gmra.mrb[0].mxu0 %v3508
        %v4026 = vpop.f32.mrb[0].mxu0
        %v4027 = vadd.f32 %v3802, %v4026
        %v4028 = vpop.f32.mrb[0].mxu0
        %4029 = vmatprep.mubr.f32.mxu0 %v3517
        %4030 = vmatmul.mubr.f32.gmra.mrb[0].mxu0 %v3516
        %v4031 = vpop.f32.mrb[0].mxu0
        %v4032 = vadd.f32 %v3807, %v4031
        %v4033 = vpop.f32.mrb[0].mxu0
        %4034 = vmatprep.mubr.f32.mxu0 %v3525
        %4035 = vmatmul.mubr.f32.gmra.mrb[0].mxu0 %v3524
        %v4036 = vpop.f32.mrb[0].mxu0
        %v4037 = vadd.f32 %v3812, %v4036
        %v4038 = vpop.f32.mrb[0].mxu0
        %4039 = vmatprep.mubr.f32.mxu0 %v3533
        %4040 = vmatmul.mubr.f32.gmra.mrb[0].mxu0 %v3532
        %v4041 = vpop.f32.mrb[0].mxu0
        %v4042 = vadd.f32 %v3817, %v4041
        %v4043 = vpop.f32.mrb[0].mxu0
        %4044 = vmatprep.mubr.f32.mxu0 %v3541
        %4045 = vmatmul.mubr.f32.gmra.mrb[0].mxu0 %v3540
        %v4046 = vpop.f32.mrb[0].mxu0
        %v4047 = vadd.f32 %v3822, %v4046
        %v4048 = vpop.f32.mrb[0].mxu0
        %4049 = vmatprep.mubr.f32.mxu0 %v3549
        %4050 = vmatmul.mubr.f32.gmra.mrb[0].mxu0 %v3548
        %v4051 = vpop.f32.mrb[0].mxu0
        %v4052 = vadd.f32 %v3827, %v4051
        %v4053 = vpop.f32.mrb[0].mxu0
        %4054 = vmatprep.mubr.f32.mxu0 %v3557
        %4055 = vmatmul.mubr.f32.gmra.mrb[0].mxu0 %v3556
        %v4056 = vpop.f32.mrb[0].mxu0
        %v4057 = vadd.f32 %v3832, %v4056
        %v4058 = vpop.f32.mrb[0].mxu0
        %4059 = vmatprep.mubr.f32.mxu0 %v3565
        %4060 = vmatmul.mubr.f32.gmra.mrb[0].mxu0 %v3564
        %v4061 = vpop.f32.mrb[0].mxu0
        %v4062 = vadd.f32 %v3837, %v4061
        %v4063 = vpop.f32.mrb[0].mxu0
        %4064 = vmatprep.mubr.f32.mxu0 %v3573
        %4065 = vmatmul.mubr.f32.gmra.mrb[0].mxu0 %v3572
        %v4066 = vpop.f32.mrb[0].mxu0
        %v4067 = vadd.f32 %v3842, %v4066
        %v4068 = vpop.f32.mrb[0].mxu0
        %4069 = vmatprep.mubr.f32.mxu0 %v3581
        %4070 = vmatmul.mubr.f32.gmra.mrb[0].mxu0 %v3580
        %v4071 = vpop.f32.mrb[0].mxu0
        %v4072 = vadd.f32 %v3847, %v4071
        %v4073 = vpop.f32.mrb[0].mxu0
        %4074 = vmatprep.mubr.f32.mxu0 %v3589
        %4075 = vmatmul.mubr.f32.gmra.mrb[0].mxu0 %v3588
        %v4076 = vpop.f32.mrb[0].mxu0
        %v4077 = vadd.f32 %v3852, %v4076
        %v4078 = vpop.f32.mrb[0].mxu0
        %4079 = vmatprep.mubr.f32.mxu0 %v3597
        %4080 = vmatmul.mubr.f32.gmra.mrb[0].mxu0 %v3596
        %v4081 = vpop.f32.mrb[0].mxu0
        %v4082 = vadd.f32 %v3857, %v4081
        %v4083 = vpop.f32.mrb[0].mxu0
        %4084 = vmatprep.mubr.f32.mxu0 %v3605
        %4085 = vmatmul.mubr.f32.gmra.mrb[0].mxu0 %v3604
        %v4086 = vpop.f32.mrb[0].mxu0
        %v4087 = vadd.f32 %v3862, %v4086
        %v4088 = vpop.f32.mrb[0].mxu0
        %4089 = vmatprep.mubr.f32.mxu0 %v3613
        %4090 = vmatmul.mubr.f32.gmra.mrb[0].mxu0 %v3612
        %v4091 = vpop.f32.mrb[0].mxu0
        %v4092 = vadd.f32 %v3867, %v4091
        %v4093 = vpop.f32.mrb[0].mxu0
        %4094 = vmatprep.mubr.f32.mxu0 %v3621
        %4095 = vmatmul.mubr.f32.gmra.mrb[0].mxu0 %v3620
        %v4096 = vpop.f32.mrb[0].mxu0
        %v4097 = vadd.f32 %v3872, %v4096
        %v4098 = vpop.f32.mrb[0].mxu0
        %4099 = vmatprep.mubr.f32.mxu0 %v3629
        %4100 = vmatmul.mubr.f32.gmra.mrb[0].mxu0 %v3628
        %v4101 = vpop.f32.mrb[0].mxu0
        %v4102 = vadd.f32 %v3877, %v4101
        %v4103 = vpop.f32.mrb[0].mxu0
        %4104 = vmatprep.mubr.f32.mxu0 %v3637
        %4105 = vmatmul.mubr.f32.gmra.mrb[0].mxu0 %v3636
        %v4106 = vpop.f32.mrb[0].mxu0
        %v4107 = vadd.f32 %v3882, %v4106
        %v4108 = vpop.f32.mrb[0].mxu0
        %4109 = vmatprep.mubr.f32.mxu0 %v3645
        %4110 = vmatmul.mubr.f32.gmra.mrb[0].mxu0 %v3644
        %v4111 = vpop.f32.mrb[0].mxu0
        %v4112 = vadd.f32 %v3887, %v4111
        %v4113 = vpop.f32.mrb[0].mxu0
        %4114 = vmatprep.mubr.f32.mxu0 %v3653
        %4115 = vmatmul.mubr.f32.gmra.mrb[0].mxu0 %v3652
        %v4116 = vpop.f32.mrb[0].mxu0
        %v4117 = vadd.f32 %v3892, %v4116
        %v4118 = vpop.f32.mrb[0].mxu0
        %4119 = vmatprep.mubr.f32.mxu0 %v3661
        %4120 = vmatmul.mubr.f32.gmra.mrb[0].mxu0 %v3660
        %v4121 = vpop.f32.mrb[0].mxu0
        %v4122 = vadd.f32 %v3897, %v4121
        %v4123 = vpop.f32.mrb[0].mxu0
        %4124 = vmatprep.mubr.f32.mxu0 %v3669
        %4125 = vmatmul.mubr.f32.gmra.mrb[0].mxu0 %v3668
        %v4126 = vpop.f32.mrb[0].mxu0
        %v4127 = vadd.f32 %v3902, %v4126
        %v4128 = vpop.f32.mrb[0].mxu0
        %4129 = vmatprep.mubr.f32.mxu0 %v3677
        %4130 = vmatmul.mubr.f32.gmra.mrb[0].mxu0 %v3676
        %v4131 = vpop.f32.mrb[0].mxu0
        %v4132 = vadd.f32 %v3907, %v4131
        %v4133 = vpop.f32.mrb[0].mxu0
        %4134 = vmatprep.mubr.f32.mxu0 %v3685
        %4135 = vmatmul.mubr.f32.gmra.mrb[0].mxu0 %v3684
        %v4136 = vpop.f32.mrb[0].mxu0
        %v4137 = vadd.f32 %v3912, %v4136
        %v4138 = vpop.f32.mrb[0].mxu0
        %4139 = vdwg.mxu0
        %4140 = vmatprep.subr.mxu0 0.0
        %4141 = vmatpush1.msra.mxu0 %v3370
        %4142 = vmatprep.subr.mxu0 0.0
        %4143 = vmatpush1.msra.mxu0 %v3371
        %4144 = vmatprep.subr.mxu0 0.0
        %4145 = vmatpush1.msra.mxu0 %v3372
        %4146 = vmatprep.subr.mxu0 0.0
        %4147 = vmatpush1.msra.mxu0 %v3373
        %4148 = vmatprep.subr.mxu0 0.0
        %4149 = vmatpush1.msra.mxu0 %v3374
        %4150 = vmatprep.subr.mxu0 0.0
        %4151 = vmatpush1.msra.mxu0 %v3375
        %4152 = vmatprep.subr.mxu0 0.0
        %4153 = vmatpush1.msra.mxu0 %v3376
        %4154 = vmatprep.subr.mxu0 0.0
        %4155 = vmatpush1.msra.mxu0 %v3377
        %4156 = vmatprep.subr.mxu0 0.0
        %4157 = vmatpush1.msra.mxu0 %v3378
        %4158 = vmatprep.subr.mxu0 0.0
        %4159 = vmatpush1.msra.mxu0 %v3379
        %4160 = vmatprep.subr.mxu0 0.0
        %4161 = vmatpush1.msra.mxu0 %v3380
        %4162 = vmatprep.subr.mxu0 0.0
        %4163 = vmatpush1.msra.mxu0 %v3381
        %4164 = vmatprep.subr.mxu0 0.0
        %4165 = vmatpush1.msra.mxu0 %v3382
        %4166 = vmatprep.subr.mxu0 0.0
        %4167 = vmatpush1.msra.mxu0 %v3383
        %4168 = vmatprep.subr.mxu0 0.0
        %4169 = vmatpush1.msra.mxu0 %v3384
        %4170 = vmatprep.subr.mxu0 0.0
        %4171 = vmatpush1.msra.mxu0 %v3385
        %4172 = vmatprep.subr.mxu0 0.0
        %4173 = vmatpush1.msra.mxu0 %v3386
        %4174 = vmatprep.subr.mxu0 0.0
        %4175 = vmatpush1.msra.mxu0 %v3387
        %4176 = vmatprep.subr.mxu0 0.0
        %4177 = vmatpush1.msra.mxu0 %v3388
        %4178 = vmatprep.subr.mxu0 0.0
        %4179 = vmatpush1.msra.mxu0 %v3389
        %4180 = vmatprep.subr.mxu0 0.0
        %4181 = vmatpush1.msra.mxu0 %v3390
        %4182 = vmatprep.subr.mxu0 0.0
        %4183 = vmatpush1.msra.mxu0 %v3391
        %4184 = vmatprep.subr.mxu0 0.0
        %4185 = vmatpush1.msra.mxu0 %v3392
        %4186 = vmatprep.subr.mxu0 0.0
        %4187 = vmatpush1.msra.mxu0 %v3393
        %4188 = vmatprep.subr.mxu0 0.0
        %4189 = vmatpush1.msra.mxu0 %v3394
        %4190 = vmatprep.subr.mxu0 0.0
        %4191 = vmatpush1.msra.mxu0 %v3395
        %4192 = vmatprep.subr.mxu0 0.0
        %4193 = vmatpush1.msra.mxu0 %v3396
        %4194 = vmatprep.subr.mxu0 0.0
        %4195 = vmatpush1.msra.mxu0 %v3397
        %4196 = vmatprep.subr.mxu0 0.0
        %4197 = vmatpush1.msra.mxu0 %v3398
        %4198 = vmatprep.subr.mxu0 0.0
        %4199 = vmatpush1.msra.mxu0 %v3399
        %4200 = vmatprep.subr.mxu0 0.0
        %4201 = vmatpush1.msra.mxu0 %v3400
        %4202 = vmatprep.subr.mxu0 0.0
        %4203 = vmatpush1.msra.mxu0 %v3401
        %4204 = vmatprep.mubr.f32.mxu0 %v3439
        %4205 = vmatmul.mubr.f32.gmra.mrb[0].mxu0 %v3438
        %v4206 = vpop.f32.mrb[0].mxu0
        %v4207 = vadd.f32 %v3982, %v4206
        %v4208 = vpop.f32.mrb[0].mxu0
        %4209 = vmatprep.mubr.f32.mxu0 %v3447
        %4210 = vmatmul.mubr.f32.gmra.mrb[0].mxu0 %v3446
        %v4211 = vpop.f32.mrb[0].mxu0
        %v4212 = vadd.f32 %v3987, %v4211
        %v4213 = vpop.f32.mrb[0].mxu0
        %4214 = vmatprep.mubr.f32.mxu0 %v3455
        %4215 = vmatmul.mubr.f32.gmra.mrb[0].mxu0 %v3454
        %v4216 = vpop.f32.mrb[0].mxu0
        %v4217 = vadd.f32 %v3992, %v4216
        %v4218 = vpop.f32.mrb[0].mxu0
        %4219 = vmatprep.mubr.f32.mxu0 %v3463
        %4220 = vmatmul.mubr.f32.gmra.mrb[0].mxu0 %v3462
        %v4221 = vpop.f32.mrb[0].mxu0
        %v4222 = vadd.f32 %v3997, %v4221
        %v4223 = vpop.f32.mrb[0].mxu0
        %4224 = vmatprep.mubr.f32.mxu0 %v3471
        %4225 = vmatmul.mubr.f32.gmra.mrb[0].mxu0 %v3470
        %v4226 = vpop.f32.mrb[0].mxu0
        %v4227 = vadd.f32 %v4002, %v4226
        %v4228 = vpop.f32.mrb[0].mxu0
        %4229 = vmatprep.mubr.f32.mxu0 %v3479
        %4230 = vmatmul.mubr.f32.gmra.mrb[0].mxu0 %v3478
        %v4231 = vpop.f32.mrb[0].mxu0
        %v4232 = vadd.f32 %v4007, %v4231
        %v4233 = vpop.f32.mrb[0].mxu0
        %4234 = vmatprep.mubr.f32.mxu0 %v3487
        %4235 = vmatmul.mubr.f32.gmra.mrb[0].mxu0 %v3486
        %v4236 = vpop.f32.mrb[0].mxu0
        %v4237 = vadd.f32 %v4012, %v4236
        %v4238 = vpop.f32.mrb[0].mxu0
        %4239 = vmatprep.mubr.f32.mxu0 %v3495
        %4240 = vmatmul.mubr.f32.gmra.mrb[0].mxu0 %v3494
        %v4241 = vpop.f32.mrb[0].mxu0
        %v4242 = vadd.f32 %v4017, %v4241
        %v4243 = vpop.f32.mrb[0].mxu0
        %4244 = vmatprep.mubr.f32.mxu0 %v3503
        %4245 = vmatmul.mubr.f32.gmra.mrb[0].mxu0 %v3502
        %v4246 = vpop.f32.mrb[0].mxu0
        %v4247 = vadd.f32 %v4022, %v4246
        %v4248 = vpop.f32.mrb[0].mxu0
        %4249 = vmatprep.mubr.f32.mxu0 %v3511
        %4250 = vmatmul.mubr.f32.gmra.mrb[0].mxu0 %v3510
        %v4251 = vpop.f32.mrb[0].mxu0
        %v4252 = vadd.f32 %v4027, %v4251
        %v4253 = vpop.f32.mrb[0].mxu0
        %4254 = vmatprep.mubr.f32.mxu0 %v3519
        %4255 = vmatmul.mubr.f32.gmra.mrb[0].mxu0 %v3518
        %v4256 = vpop.f32.mrb[0].mxu0
        %v4257 = vadd.f32 %v4032, %v4256
        %v4258 = vpop.f32.mrb[0].mxu0
        %4259 = vmatprep.mubr.f32.mxu0 %v3527
        %4260 = vmatmul.mubr.f32.gmra.mrb[0].mxu0 %v3526
        %v4261 = vpop.f32.mrb[0].mxu0
        %v4262 = vadd.f32 %v4037, %v4261
        %v4263 = vpop.f32.mrb[0].mxu0
        %4264 = vmatprep.mubr.f32.mxu0 %v3535
        %4265 = vmatmul.mubr.f32.gmra.mrb[0].mxu0 %v3534
        %v4266 = vpop.f32.mrb[0].mxu0
        %v4267 = vadd.f32 %v4042, %v4266
        %v4268 = vpop.f32.mrb[0].mxu0
        %4269 = vmatprep.mubr.f32.mxu0 %v3543
        %4270 = vmatmul.mubr.f32.gmra.mrb[0].mxu0 %v3542
        %v4271 = vpop.f32.mrb[0].mxu0
        %v4272 = vadd.f32 %v4047, %v4271
        %v4273 = vpop.f32.mrb[0].mxu0
        %4274 = vmatprep.mubr.f32.mxu0 %v3551
        %4275 = vmatmul.mubr.f32.gmra.mrb[0].mxu0 %v3550
        %v4276 = vpop.f32.mrb[0].mxu0
        %v4277 = vadd.f32 %v4052, %v4276
        %v4278 = vpop.f32.mrb[0].mxu0
        %4279 = vmatprep.mubr.f32.mxu0 %v3559
        %4280 = vmatmul.mubr.f32.gmra.mrb[0].mxu0 %v3558
        %v4281 = vpop.f32.mrb[0].mxu0
        %v4282 = vadd.f32 %v4057, %v4281
        %v4283 = vpop.f32.mrb[0].mxu0
        %4284 = vmatprep.mubr.f32.mxu0 %v3567
        %4285 = vmatmul.mubr.f32.gmra.mrb[0].mxu0 %v3566
        %v4286 = vpop.f32.mrb[0].mxu0
        %v4287 = vadd.f32 %v4062, %v4286
        %v4288 = vpop.f32.mrb[0].mxu0
        %4289 = vmatprep.mubr.f32.mxu0 %v3575
        %4290 = vmatmul.mubr.f32.gmra.mrb[0].mxu0 %v3574
        %v4291 = vpop.f32.mrb[0].mxu0
        %v4292 = vadd.f32 %v4067, %v4291
        %v4293 = vpop.f32.mrb[0].mxu0
        %4294 = vmatprep.mubr.f32.mxu0 %v3583
        %4295 = vmatmul.mubr.f32.gmra.mrb[0].mxu0 %v3582
        %v4296 = vpop.f32.mrb[0].mxu0
        %v4297 = vadd.f32 %v4072, %v4296
        %v4298 = vpop.f32.mrb[0].mxu0
        %4299 = vmatprep.mubr.f32.mxu0 %v3591
        %4300 = vmatmul.mubr.f32.gmra.mrb[0].mxu0 %v3590
        %v4301 = vpop.f32.mrb[0].mxu0
        %v4302 = vadd.f32 %v4077, %v4301
        %v4303 = vpop.f32.mrb[0].mxu0
        %4304 = vmatprep.mubr.f32.mxu0 %v3599
        %4305 = vmatmul.mubr.f32.gmra.mrb[0].mxu0 %v3598
        %v4306 = vpop.f32.mrb[0].mxu0
        %v4307 = vadd.f32 %v4082, %v4306
        %v4308 = vpop.f32.mrb[0].mxu0
        %4309 = vmatprep.mubr.f32.mxu0 %v3607
        %4310 = vmatmul.mubr.f32.gmra.mrb[0].mxu0 %v3606
        %v4311 = vpop.f32.mrb[0].mxu0
        %v4312 = vadd.f32 %v4087, %v4311
        %v4313 = vpop.f32.mrb[0].mxu0
        %4314 = vmatprep.mubr.f32.mxu0 %v3615
        %4315 = vmatmul.mubr.f32.gmra.mrb[0].mxu0 %v3614
        %v4316 = vpop.f32.mrb[0].mxu0
        %v4317 = vadd.f32 %v4092, %v4316
        %v4318 = vpop.f32.mrb[0].mxu0
        %4319 = vmatprep.mubr.f32.mxu0 %v3623
        %4320 = vmatmul.mubr.f32.gmra.mrb[0].mxu0 %v3622
        %v4321 = vpop.f32.mrb[0].mxu0
        %v4322 = vadd.f32 %v4097, %v4321
        %v4323 = vpop.f32.mrb[0].mxu0
        %4324 = vmatprep.mubr.f32.mxu0 %v3631
        %4325 = vmatmul.mubr.f32.gmra.mrb[0].mxu0 %v3630
        %v4326 = vpop.f32.mrb[0].mxu0
        %v4327 = vadd.f32 %v4102, %v4326
        %v4328 = vpop.f32.mrb[0].mxu0
        %4329 = vmatprep.mubr.f32.mxu0 %v3639
        %4330 = vmatmul.mubr.f32.gmra.mrb[0].mxu0 %v3638
        %v4331 = vpop.f32.mrb[0].mxu0
        %v4332 = vadd.f32 %v4107, %v4331
        %v4333 = vpop.f32.mrb[0].mxu0
        %4334 = vmatprep.mubr.f32.mxu0 %v3647
        %4335 = vmatmul.mubr.f32.gmra.mrb[0].mxu0 %v3646
        %v4336 = vpop.f32.mrb[0].mxu0
        %v4337 = vadd.f32 %v4112, %v4336
        %v4338 = vpop.f32.mrb[0].mxu0
        %4339 = vmatprep.mubr.f32.mxu0 %v3655
        %4340 = vmatmul.mubr.f32.gmra.mrb[0].mxu0 %v3654
        %v4341 = vpop.f32.mrb[0].mxu0
        %v4342 = vadd.f32 %v4117, %v4341
        %v4343 = vpop.f32.mrb[0].mxu0
        %4344 = vmatprep.mubr.f32.mxu0 %v3663
        %4345 = vmatmul.mubr.f32.gmra.mrb[0].mxu0 %v3662
        %v4346 = vpop.f32.mrb[0].mxu0
        %v4347 = vadd.f32 %v4122, %v4346
        %v4348 = vpop.f32.mrb[0].mxu0
        %4349 = vmatprep.mubr.f32.mxu0 %v3671
        %4350 = vmatmul.mubr.f32.gmra.mrb[0].mxu0 %v3670
        %v4351 = vpop.f32.mrb[0].mxu0
        %v4352 = vadd.f32 %v4127, %v4351
        %v4353 = vpop.f32.mrb[0].mxu0
        %4354 = vmatprep.mubr.f32.mxu0 %v3679
        %4355 = vmatmul.mubr.f32.gmra.mrb[0].mxu0 %v3678
        %v4356 = vpop.f32.mrb[0].mxu0
        %v4357 = vadd.f32 %v4132, %v4356
        %v4358 = vpop.f32.mrb[0].mxu0
        %4359 = vmatprep.mubr.f32.mxu0 %v3687
        %4360 = vmatmul.mubr.f32.gmra.mrb[0].mxu0 %v3686
        %v4361 = vpop.f32.mrb[0].mxu0
        %v4362 = vadd.f32 %v4137, %v4361
        %v4363 = vpop.f32.mrb[0].mxu0
        %4364 = vdwg.mxu0
        %4365 = vmatprep.subr.mxu0 0.0
        %4366 = vmatpush1.msra.mxu0 %v3402
        %4367 = vmatprep.subr.mxu0 0.0
        %4368 = vmatpush1.msra.mxu0 %v3403
        %4369 = vmatprep.subr.mxu0 0.0
        %4370 = vmatpush1.msra.mxu0 %v3404
        %4371 = vmatprep.subr.mxu0 0.0
        %4372 = vmatpush1.msra.mxu0 %v3405
        %4373 = vmatprep.subr.mxu0 0.0
        %4374 = vmatpush1.msra.mxu0 %v3406
        %4375 = vmatprep.subr.mxu0 0.0
        %4376 = vmatpush1.msra.mxu0 %v3407
        %4377 = vmatprep.subr.mxu0 0.0
        %4378 = vmatpush1.msra.mxu0 %v3408
        %4379 = vmatprep.subr.mxu0 0.0
        %4380 = vmatpush1.msra.mxu0 %v3409
        %4381 = vmatprep.subr.mxu0 0.0
        %4382 = vmatpush1.msra.mxu0 %v3410
        %4383 = vmatprep.subr.mxu0 0.0
        %4384 = vmatpush1.msra.mxu0 %v3411
        %4385 = vmatprep.subr.mxu0 0.0
        %4386 = vmatpush1.msra.mxu0 %v3412
        %4387 = vmatprep.subr.mxu0 0.0
        %4388 = vmatpush1.msra.mxu0 %v3413
        %4389 = vmatprep.subr.mxu0 0.0
        %4390 = vmatpush1.msra.mxu0 %v3414
        %4391 = vmatprep.subr.mxu0 0.0
        %4392 = vmatpush1.msra.mxu0 %v3415
        %4393 = vmatprep.subr.mxu0 0.0
        %4394 = vmatpush1.msra.mxu0 %v3416
        %4395 = vmatprep.subr.mxu0 0.0
        %4396 = vmatpush1.msra.mxu0 %v3417
        %4397 = vmatprep.subr.mxu0 0.0
        %4398 = vmatpush1.msra.mxu0 %v3418
        %4399 = vmatprep.subr.mxu0 0.0
        %4400 = vmatpush1.msra.mxu0 %v3419
        %4401 = vmatprep.subr.mxu0 0.0
        %4402 = vmatpush1.msra.mxu0 %v3420
        %4403 = vmatprep.subr.mxu0 0.0
        %4404 = vmatpush1.msra.mxu0 %v3421
        %4405 = vmatprep.subr.mxu0 0.0
        %4406 = vmatpush1.msra.mxu0 %v3422
        %4407 = vmatprep.subr.mxu0 0.0
        %4408 = vmatpush1.msra.mxu0 %v3423
        %4409 = vmatprep.subr.mxu0 0.0
        %4410 = vmatpush1.msra.mxu0 %v3424
        %4411 = vmatprep.subr.mxu0 0.0
        %4412 = vmatpush1.msra.mxu0 %v3425
        %4413 = vmatprep.subr.mxu0 0.0
        %4414 = vmatpush1.msra.mxu0 %v3426
        %4415 = vmatprep.subr.mxu0 0.0
        %4416 = vmatpush1.msra.mxu0 %v3427
        %4417 = vmatprep.subr.mxu0 0.0
        %4418 = vmatpush1.msra.mxu0 %v3428
        %4419 = vmatprep.subr.mxu0 0.0
        %4420 = vmatpush1.msra.mxu0 %v3429
        %4421 = vmatprep.subr.mxu0 0.0
        %4422 = vmatpush1.msra.mxu0 %v3430
        %4423 = vmatprep.subr.mxu0 0.0
        %4424 = vmatpush1.msra.mxu0 %v3431
        %4425 = vmatprep.subr.mxu0 0.0
        %4426 = vmatpush1.msra.mxu0 %v3432
        %4427 = vmatprep.subr.mxu0 0.0
        %4428 = vmatpush1.msra.mxu0 %v3433
        %4429 = vmatprep.mubr.f32.mxu0 %v3441
        %4430 = vmatmul.mubr.f32.gmra.mrb[0].mxu0 %v3440
        %v4431 = vpop.f32.mrb[0].mxu0
        %v4432 = vadd.f32 %v4207, %v4431
        %v4433 = vpop.f32.mrb[0].mxu0
        %4434 = vmatprep.mubr.f32.mxu0 %v3449
        %4435 = vmatmul.mubr.f32.gmra.mrb[0].mxu0 %v3448
        %v4436 = vpop.f32.mrb[0].mxu0
        %v4437 = vadd.f32 %v4212, %v4436
        %v4438 = vpop.f32.mrb[0].mxu0
        %4439 = vmatprep.mubr.f32.mxu0 %v3457
        %4440 = vmatmul.mubr.f32.gmra.mrb[0].mxu0 %v3456
        %v4441 = vpop.f32.mrb[0].mxu0
        %v4442 = vadd.f32 %v4217, %v4441
        %v4443 = vpop.f32.mrb[0].mxu0
        %4444 = vmatprep.mubr.f32.mxu0 %v3465
        %4445 = vmatmul.mubr.f32.gmra.mrb[0].mxu0 %v3464
        %v4446 = vpop.f32.mrb[0].mxu0
        %v4447 = vadd.f32 %v4222, %v4446
        %v4448 = vpop.f32.mrb[0].mxu0
        %4449 = vmatprep.mubr.f32.mxu0 %v3473
        %4450 = vmatmul.mubr.f32.gmra.mrb[0].mxu0 %v3472
        %v4451 = vpop.f32.mrb[0].mxu0
        %v4452 = vadd.f32 %v4227, %v4451
        %v4453 = vpop.f32.mrb[0].mxu0
        %4454 = vmatprep.mubr.f32.mxu0 %v3481
        %4455 = vmatmul.mubr.f32.gmra.mrb[0].mxu0 %v3480
        %v4456 = vpop.f32.mrb[0].mxu0
        %v4457 = vadd.f32 %v4232, %v4456
        %v4458 = vpop.f32.mrb[0].mxu0
        %4459 = vmatprep.mubr.f32.mxu0 %v3489
        %4460 = vmatmul.mubr.f32.gmra.mrb[0].mxu0 %v3488
        %v4461 = vpop.f32.mrb[0].mxu0
        %v4462 = vadd.f32 %v4237, %v4461
        %v4463 = vpop.f32.mrb[0].mxu0
        %4464 = vmatprep.mubr.f32.mxu0 %v3497
        %4465 = vmatmul.mubr.f32.gmra.mrb[0].mxu0 %v3496
        %v4466 = vpop.f32.mrb[0].mxu0
        %v4467 = vadd.f32 %v4242, %v4466
        %v4468 = vpop.f32.mrb[0].mxu0
        %4469 = vmatprep.mubr.f32.mxu0 %v3505
        %4470 = vmatmul.mubr.f32.gmra.mrb[0].mxu0 %v3504
        %v4471 = vpop.f32.mrb[0].mxu0
        %v4472 = vadd.f32 %v4247, %v4471
        %v4473 = vpop.f32.mrb[0].mxu0
        %4474 = vmatprep.mubr.f32.mxu0 %v3513
        %4475 = vmatmul.mubr.f32.gmra.mrb[0].mxu0 %v3512
        %v4476 = vpop.f32.mrb[0].mxu0
        %v4477 = vadd.f32 %v4252, %v4476
        %v4478 = vpop.f32.mrb[0].mxu0
        %4479 = vmatprep.mubr.f32.mxu0 %v3521
        %4480 = vmatmul.mubr.f32.gmra.mrb[0].mxu0 %v3520
        %v4481 = vpop.f32.mrb[0].mxu0
        %v4482 = vadd.f32 %v4257, %v4481
        %v4483 = vpop.f32.mrb[0].mxu0
        %4484 = vmatprep.mubr.f32.mxu0 %v3529
        %4485 = vmatmul.mubr.f32.gmra.mrb[0].mxu0 %v3528
        %v4486 = vpop.f32.mrb[0].mxu0
        %v4487 = vadd.f32 %v4262, %v4486
        %v4488 = vpop.f32.mrb[0].mxu0
        %4489 = vmatprep.mubr.f32.mxu0 %v3537
        %4490 = vmatmul.mubr.f32.gmra.mrb[0].mxu0 %v3536
        %v4491 = vpop.f32.mrb[0].mxu0
        %v4492 = vadd.f32 %v4267, %v4491
        %v4493 = vpop.f32.mrb[0].mxu0
        %4494 = vmatprep.mubr.f32.mxu0 %v3545
        %4495 = vmatmul.mubr.f32.gmra.mrb[0].mxu0 %v3544
        %v4496 = vpop.f32.mrb[0].mxu0
        %v4497 = vadd.f32 %v4272, %v4496
        %v4498 = vpop.f32.mrb[0].mxu0
        %4499 = vmatprep.mubr.f32.mxu0 %v3553
        %4500 = vmatmul.mubr.f32.gmra.mrb[0].mxu0 %v3552
        %v4501 = vpop.f32.mrb[0].mxu0
        %v4502 = vadd.f32 %v4277, %v4501
        %v4503 = vpop.f32.mrb[0].mxu0
        %4504 = vmatprep.mubr.f32.mxu0 %v3561
        %4505 = vmatmul.mubr.f32.gmra.mrb[0].mxu0 %v3560
        %v4506 = vpop.f32.mrb[0].mxu0
        %v4507 = vadd.f32 %v4282, %v4506
        %v4508 = vpop.f32.mrb[0].mxu0
        %4509 = vmatprep.mubr.f32.mxu0 %v3569
        %4510 = vmatmul.mubr.f32.gmra.mrb[0].mxu0 %v3568
        %v4511 = vpop.f32.mrb[0].mxu0
        %v4512 = vadd.f32 %v4287, %v4511
        %v4513 = vpop.f32.mrb[0].mxu0
        %4514 = vmatprep.mubr.f32.mxu0 %v3577
        %4515 = vmatmul.mubr.f32.gmra.mrb[0].mxu0 %v3576
        %v4516 = vpop.f32.mrb[0].mxu0
        %v4517 = vadd.f32 %v4292, %v4516
        %v4518 = vpop.f32.mrb[0].mxu0
        %4519 = vmatprep.mubr.f32.mxu0 %v3585
        %4520 = vmatmul.mubr.f32.gmra.mrb[0].mxu0 %v3584
        %v4521 = vpop.f32.mrb[0].mxu0
        %v4522 = vadd.f32 %v4297, %v4521
        %v4523 = vpop.f32.mrb[0].mxu0
        %4524 = vmatprep.mubr.f32.mxu0 %v3593
        %4525 = vmatmul.mubr.f32.gmra.mrb[0].mxu0 %v3592
        %v4526 = vpop.f32.mrb[0].mxu0
        %v4527 = vadd.f32 %v4302, %v4526
        %v4528 = vpop.f32.mrb[0].mxu0
        %4529 = vmatprep.mubr.f32.mxu0 %v3601
        %4530 = vmatmul.mubr.f32.gmra.mrb[0].mxu0 %v3600
        %v4531 = vpop.f32.mrb[0].mxu0
        %v4532 = vadd.f32 %v4307, %v4531
        %v4533 = vpop.f32.mrb[0].mxu0
        %4534 = vmatprep.mubr.f32.mxu0 %v3609
        %4535 = vmatmul.mubr.f32.gmra.mrb[0].mxu0 %v3608
        %v4536 = vpop.f32.mrb[0].mxu0
        %v4537 = vadd.f32 %v4312, %v4536
        %v4538 = vpop.f32.mrb[0].mxu0
        %4539 = vmatprep.mubr.f32.mxu0 %v3617
        %4540 = vmatmul.mubr.f32.gmra.mrb[0].mxu0 %v3616
        %v4541 = vpop.f32.mrb[0].mxu0
        %v4542 = vadd.f32 %v4317, %v4541
        %v4543 = vpop.f32.mrb[0].mxu0
        %4544 = vmatprep.mubr.f32.mxu0 %v3625
        %4545 = vmatmul.mubr.f32.gmra.mrb[0].mxu0 %v3624
        %v4546 = vpop.f32.mrb[0].mxu0
        %v4547 = vadd.f32 %v4322, %v4546
        %v4548 = vpop.f32.mrb[0].mxu0
        %4549 = vmatprep.mubr.f32.mxu0 %v3633
        %4550 = vmatmul.mubr.f32.gmra.mrb[0].mxu0 %v3632
        %v4551 = vpop.f32.mrb[0].mxu0
        %v4552 = vadd.f32 %v4327, %v4551
        %v4553 = vpop.f32.mrb[0].mxu0
        %4554 = vmatprep.mubr.f32.mxu0 %v3641
        %4555 = vmatmul.mubr.f32.gmra.mrb[0].mxu0 %v3640
        %v4556 = vpop.f32.mrb[0].mxu0
        %v4557 = vadd.f32 %v4332, %v4556
        %v4558 = vpop.f32.mrb[0].mxu0
        %4559 = vmatprep.mubr.f32.mxu0 %v3649
        %4560 = vmatmul.mubr.f32.gmra.mrb[0].mxu0 %v3648
        %v4561 = vpop.f32.mrb[0].mxu0
        %v4562 = vadd.f32 %v4337, %v4561
        %v4563 = vpop.f32.mrb[0].mxu0
        %4564 = vmatprep.mubr.f32.mxu0 %v3657
        %4565 = vmatmul.mubr.f32.gmra.mrb[0].mxu0 %v3656
        %v4566 = vpop.f32.mrb[0].mxu0
        %v4567 = vadd.f32 %v4342, %v4566
        %v4568 = vpop.f32.mrb[0].mxu0
        %4569 = vmatprep.mubr.f32.mxu0 %v3665
        %4570 = vmatmul.mubr.f32.gmra.mrb[0].mxu0 %v3664
        %v4571 = vpop.f32.mrb[0].mxu0
        %v4572 = vadd.f32 %v4347, %v4571
        %v4573 = vpop.f32.mrb[0].mxu0
        %4574 = vmatprep.mubr.f32.mxu0 %v3673
        %4575 = vmatmul.mubr.f32.gmra.mrb[0].mxu0 %v3672
        %v4576 = vpop.f32.mrb[0].mxu0
        %v4577 = vadd.f32 %v4352, %v4576
        %v4578 = vpop.f32.mrb[0].mxu0
        %4579 = vmatprep.mubr.f32.mxu0 %v3681
        %4580 = vmatmul.mubr.f32.gmra.mrb[0].mxu0 %v3680
        %v4581 = vpop.f32.mrb[0].mxu0
        %v4582 = vadd.f32 %v4357, %v4581
        %v4583 = vpop.f32.mrb[0].mxu0
        %4584 = vmatprep.mubr.f32.mxu0 %v3689
        %4585 = vmatmul.mubr.f32.gmra.mrb[0].mxu0 %v3688
        %v4586 = vpop.f32.mrb[0].mxu0
        %v4587 = vadd.f32 %v4362, %v4586
        %v4588 = vpop.f32.mrb[0].mxu0
        %4589 = vdwg.mxu0
        %v4590 = vld [vmem:[#allocation6] sm:$0xff]
        %v4591 = vld [vmem:[#allocation7] sm:$0x1]
        %v4593 = vlaneseq
        %v4594 = vshrl.u32 %v4593, 7
        %v4595 = vsub.s32 0, %v4594
        %v4596 = vrot.slane %v4591, %v4595
        %vm4598 = vcmask 64512
        %v4600 = vsel %vm4598, %v4432, 0
        %v4603 = vsel %vm4598, %v4437, 0
        %v4606 = vsel %vm4598, %v4442, 0
        %v4609 = vsel %vm4598, %v4447, 0
        %v4612 = vsel %vm4598, %v4452, 0
        %v4615 = vsel %vm4598, %v4457, 0
        %v4618 = vsel %vm4598, %v4462, 0
        %v4621 = vsel %vm4598, %v4467, 0
        %v4624 = vsel %vm4598, %v4472, 0
        %v4627 = vsel %vm4598, %v4477, 0
        %v4630 = vsel %vm4598, %v4482, 0
        %v4633 = vsel %vm4598, %v4487, 0
        %v4636 = vsel %vm4598, %v4492, 0
        %v4639 = vsel %vm4598, %v4497, 0
        %v4642 = vsel %vm4598, %v4502, 0
        %v4645 = vsel %vm4598, %v4507, 0
        %v4648 = vsel %vm4598, %v4512, 0
        %v4651 = vsel %vm4598, %v4517, 0
        %v4654 = vsel %vm4598, %v4522, 0
        %v4657 = vsel %vm4598, %v4527, 0
        %v4660 = vsel %vm4598, %v4532, 0
        %v4663 = vsel %vm4598, %v4537, 0
        %v4666 = vsel %vm4598, %v4542, 0
        %v4669 = vsel %vm4598, %v4547, 0
        %v4672 = vsel %vm4598, %v4552, 0
        %v4675 = vsel %vm4598, %v4557, 0
        %v4678 = vsel %vm4598, %v4562, 0
        %v4681 = vsel %vm4598, %v4567, 0
        %v4684 = vsel %vm4598, %v4572, 0
        %v4687 = vsel %vm4598, %v4577, 0
        %v4690 = vsel %vm4598, %v4582, 0
        %v4693 = vsel %vm4598, %v4587, 0
        %4695 = vmatprep.subr.mxu0 0.0
        %4696 = vmatpush1.msra.mxu0 %v4590
        %4697 = vmatprep.subr.mxu0 0.0
        %4698 = vmatpush1.msra.mxu0 0.0
        %4699 = vmatprep.subr.mxu0 0.0
        %4700 = vmatpush1.msra.mxu0 0.0
        %4701 = vmatprep.subr.mxu0 0.0
        %4702 = vmatpush1.msra.mxu0 0.0
        %4703 = vmatprep.subr.mxu0 0.0
        %4704 = vmatpush1.msra.mxu0 0.0
        %4705 = vmatprep.subr.mxu0 0.0
        %4706 = vmatpush1.msra.mxu0 0.0
        %4707 = vmatprep.subr.mxu0 0.0
        %4708 = vmatpush1.msra.mxu0 0.0
        %4709 = vmatprep.subr.mxu0 0.0
        %4710 = vmatpush1.msra.mxu0 0.0
        %4711 = vmatprep.subr.mxu0 0.0
        %4712 = vmatpush1.msra.mxu0 0.0
        %4713 = vmatprep.subr.mxu0 0.0
        %4714 = vmatpush1.msra.mxu0 0.0
        %4715 = vmatprep.subr.mxu0 0.0
        %4716 = vmatpush1.msra.mxu0 0.0
        %4717 = vmatprep.subr.mxu0 0.0
        %4718 = vmatpush1.msra.mxu0 0.0
        %4719 = vmatprep.subr.mxu0 0.0
        %4720 = vmatpush1.msra.mxu0 0.0
        %4721 = vmatprep.subr.mxu0 0.0
        %4722 = vmatpush1.msra.mxu0 0.0
        %4723 = vmatprep.subr.mxu0 0.0
        %4724 = vmatpush1.msra.mxu0 0.0
        %4725 = vmatprep.subr.mxu0 0.0
        %4726 = vmatpush1.msra.mxu0 0.0
        %4727 = vmatprep.subr.mxu0 0.0
        %4728 = vmatpush1.msra.mxu0 0.0
        %4729 = vmatprep.subr.mxu0 0.0
        %4730 = vmatpush1.msra.mxu0 0.0
        %4731 = vmatprep.subr.mxu0 0.0
        %4732 = vmatpush1.msra.mxu0 0.0
        %4733 = vmatprep.subr.mxu0 0.0
        %4734 = vmatpush1.msra.mxu0 0.0
        %4735 = vmatprep.subr.mxu0 0.0
        %4736 = vmatpush1.msra.mxu0 0.0
        %4737 = vmatprep.subr.mxu0 0.0
        %4738 = vmatpush1.msra.mxu0 0.0
        %4739 = vmatprep.subr.mxu0 0.0
        %4740 = vmatpush1.msra.mxu0 0.0
        %4741 = vmatprep.subr.mxu0 0.0
        %4742 = vmatpush1.msra.mxu0 0.0
        %4743 = vmatprep.subr.mxu0 0.0
        %4744 = vmatpush1.msra.mxu0 0.0
        %4745 = vmatprep.subr.mxu0 0.0
        %4746 = vmatpush1.msra.mxu0 0.0
        %4747 = vmatprep.subr.mxu0 0.0
        %4748 = vmatpush1.msra.mxu0 0.0
        %4749 = vmatprep.subr.mxu0 0.0
        %4750 = vmatpush1.msra.mxu0 0.0
        %4751 = vmatprep.subr.mxu0 0.0
        %4752 = vmatpush1.msra.mxu0 0.0
        %4753 = vmatprep.subr.mxu0 0.0
        %4754 = vmatpush1.msra.mxu0 0.0
        %4755 = vmatprep.subr.mxu0 0.0
        %4756 = vmatpush1.msra.mxu0 0.0
        %4757 = vmatprep.subr.mxu0 0.0
        %4758 = vmatpush1.msra.mxu0 0.0
        %4759 = vmatprep.mubr.f32.mxu0 0.0
        %4760 = vmatmul.mubr.f32.gmra.mrb[0].mxu0 %v4600
        %v4761 = vpop.f32.mrb[0].mxu0
        %v4762 = vadd.f32 %v4596, %v4761
        %v4763 = vpop.f32.mrb[0].mxu0
        %4764 = vmatprep.mubr.f32.mxu0 0.0
        %4765 = vmatmul.mubr.f32.gmra.mrb[0].mxu0 %v4603
        %v4766 = vpop.f32.mrb[0].mxu0
        %v4767 = vadd.f32 %v4596, %v4766
        %v4768 = vpop.f32.mrb[0].mxu0
        %4769 = vmatprep.mubr.f32.mxu0 0.0
        %4770 = vmatmul.mubr.f32.gmra.mrb[0].mxu0 %v4606
        %v4771 = vpop.f32.mrb[0].mxu0
        %v4772 = vadd.f32 %v4596, %v4771
        %v4773 = vpop.f32.mrb[0].mxu0
        %4774 = vmatprep.mubr.f32.mxu0 0.0
        %4775 = vmatmul.mubr.f32.gmra.mrb[0].mxu0 %v4609
        %v4776 = vpop.f32.mrb[0].mxu0
        %v4777 = vadd.f32 %v4596, %v4776
        %v4778 = vpop.f32.mrb[0].mxu0
        %4779 = vmatprep.mubr.f32.mxu0 0.0
        %4780 = vmatmul.mubr.f32.gmra.mrb[0].mxu0 %v4612
        %v4781 = vpop.f32.mrb[0].mxu0
        %v4782 = vadd.f32 %v4596, %v4781
        %v4783 = vpop.f32.mrb[0].mxu0
        %4784 = vmatprep.mubr.f32.mxu0 0.0
        %4785 = vmatmul.mubr.f32.gmra.mrb[0].mxu0 %v4615
        %v4786 = vpop.f32.mrb[0].mxu0
        %v4787 = vadd.f32 %v4596, %v4786
        %v4788 = vpop.f32.mrb[0].mxu0
        %4789 = vmatprep.mubr.f32.mxu0 0.0
        %4790 = vmatmul.mubr.f32.gmra.mrb[0].mxu0 %v4618
        %v4791 = vpop.f32.mrb[0].mxu0
        %v4792 = vadd.f32 %v4596, %v4791
        %v4793 = vpop.f32.mrb[0].mxu0
        %4794 = vmatprep.mubr.f32.mxu0 0.0
        %4795 = vmatmul.mubr.f32.gmra.mrb[0].mxu0 %v4621
        %v4796 = vpop.f32.mrb[0].mxu0
        %v4797 = vadd.f32 %v4596, %v4796
        %v4798 = vpop.f32.mrb[0].mxu0
        %4799 = vmatprep.mubr.f32.mxu0 0.0
        %4800 = vmatmul.mubr.f32.gmra.mrb[0].mxu0 %v4624
        %v4801 = vpop.f32.mrb[0].mxu0
        %v4802 = vadd.f32 %v4596, %v4801
        %v4803 = vpop.f32.mrb[0].mxu0
        %4804 = vmatprep.mubr.f32.mxu0 0.0
        %4805 = vmatmul.mubr.f32.gmra.mrb[0].mxu0 %v4627
        %v4806 = vpop.f32.mrb[0].mxu0
        %v4807 = vadd.f32 %v4596, %v4806
        %v4808 = vpop.f32.mrb[0].mxu0
        %4809 = vmatprep.mubr.f32.mxu0 0.0
        %4810 = vmatmul.mubr.f32.gmra.mrb[0].mxu0 %v4630
        %v4811 = vpop.f32.mrb[0].mxu0
        %v4812 = vadd.f32 %v4596, %v4811
        %v4813 = vpop.f32.mrb[0].mxu0
        %4814 = vmatprep.mubr.f32.mxu0 0.0
        %4815 = vmatmul.mubr.f32.gmra.mrb[0].mxu0 %v4633
        %v4816 = vpop.f32.mrb[0].mxu0
        %v4817 = vadd.f32 %v4596, %v4816
        %v4818 = vpop.f32.mrb[0].mxu0
        %4819 = vmatprep.mubr.f32.mxu0 0.0
        %4820 = vmatmul.mubr.f32.gmra.mrb[0].mxu0 %v4636
        %v4821 = vpop.f32.mrb[0].mxu0
        %v4822 = vadd.f32 %v4596, %v4821
        %v4823 = vpop.f32.mrb[0].mxu0
        %4824 = vmatprep.mubr.f32.mxu0 0.0
        %4825 = vmatmul.mubr.f32.gmra.mrb[0].mxu0 %v4639
        %v4826 = vpop.f32.mrb[0].mxu0
        %v4827 = vadd.f32 %v4596, %v4826
        %v4828 = vpop.f32.mrb[0].mxu0
        %4829 = vmatprep.mubr.f32.mxu0 0.0
        %4830 = vmatmul.mubr.f32.gmra.mrb[0].mxu0 %v4642
        %v4831 = vpop.f32.mrb[0].mxu0
        %v4832 = vadd.f32 %v4596, %v4831
        %v4833 = vpop.f32.mrb[0].mxu0
        %4834 = vmatprep.mubr.f32.mxu0 0.0
        %4835 = vmatmul.mubr.f32.gmra.mrb[0].mxu0 %v4645
        %v4836 = vpop.f32.mrb[0].mxu0
        %v4837 = vadd.f32 %v4596, %v4836
        %v4838 = vpop.f32.mrb[0].mxu0
        %4839 = vmatprep.mubr.f32.mxu0 0.0
        %4840 = vmatmul.mubr.f32.gmra.mrb[0].mxu0 %v4648
        %v4841 = vpop.f32.mrb[0].mxu0
        %v4842 = vadd.f32 %v4596, %v4841
        %v4843 = vpop.f32.mrb[0].mxu0
        %4844 = vmatprep.mubr.f32.mxu0 0.0
        %4845 = vmatmul.mubr.f32.gmra.mrb[0].mxu0 %v4651
        %v4846 = vpop.f32.mrb[0].mxu0
        %v4847 = vadd.f32 %v4596, %v4846
        %v4848 = vpop.f32.mrb[0].mxu0
        %4849 = vmatprep.mubr.f32.mxu0 0.0
        %4850 = vmatmul.mubr.f32.gmra.mrb[0].mxu0 %v4654
        %v4851 = vpop.f32.mrb[0].mxu0
        %v4852 = vadd.f32 %v4596, %v4851
        %v4853 = vpop.f32.mrb[0].mxu0
        %4854 = vmatprep.mubr.f32.mxu0 0.0
        %4855 = vmatmul.mubr.f32.gmra.mrb[0].mxu0 %v4657
        %v4856 = vpop.f32.mrb[0].mxu0
        %v4857 = vadd.f32 %v4596, %v4856
        %v4858 = vpop.f32.mrb[0].mxu0
        %4859 = vmatprep.mubr.f32.mxu0 0.0
        %4860 = vmatmul.mubr.f32.gmra.mrb[0].mxu0 %v4660
        %v4861 = vpop.f32.mrb[0].mxu0
        %v4862 = vadd.f32 %v4596, %v4861
        %v4863 = vpop.f32.mrb[0].mxu0
        %4864 = vmatprep.mubr.f32.mxu0 0.0
        %4865 = vmatmul.mubr.f32.gmra.mrb[0].mxu0 %v4663
        %v4866 = vpop.f32.mrb[0].mxu0
        %v4867 = vadd.f32 %v4596, %v4866
        %v4868 = vpop.f32.mrb[0].mxu0
        %4869 = vmatprep.mubr.f32.mxu0 0.0
        %4870 = vmatmul.mubr.f32.gmra.mrb[0].mxu0 %v4666
        %v4871 = vpop.f32.mrb[0].mxu0
        %v4872 = vadd.f32 %v4596, %v4871
        %v4873 = vpop.f32.mrb[0].mxu0
        %4874 = vmatprep.mubr.f32.mxu0 0.0
        %4875 = vmatmul.mubr.f32.gmra.mrb[0].mxu0 %v4669
        %v4876 = vpop.f32.mrb[0].mxu0
        %v4877 = vadd.f32 %v4596, %v4876
        %v4878 = vpop.f32.mrb[0].mxu0
        %4879 = vmatprep.mubr.f32.mxu0 0.0
        %4880 = vmatmul.mubr.f32.gmra.mrb[0].mxu0 %v4672
        %v4881 = vpop.f32.mrb[0].mxu0
        %v4882 = vadd.f32 %v4596, %v4881
        %v4883 = vpop.f32.mrb[0].mxu0
        %4884 = vmatprep.mubr.f32.mxu0 0.0
        %4885 = vmatmul.mubr.f32.gmra.mrb[0].mxu0 %v4675
        %v4886 = vpop.f32.mrb[0].mxu0
        %v4887 = vadd.f32 %v4596, %v4886
        %v4888 = vpop.f32.mrb[0].mxu0
        %4889 = vmatprep.mubr.f32.mxu0 0.0
        %4890 = vmatmul.mubr.f32.gmra.mrb[0].mxu0 %v4678
        %v4891 = vpop.f32.mrb[0].mxu0
        %v4892 = vadd.f32 %v4596, %v4891
        %v4893 = vpop.f32.mrb[0].mxu0
        %4894 = vmatprep.mubr.f32.mxu0 0.0
        %4895 = vmatmul.mubr.f32.gmra.mrb[0].mxu0 %v4681
        %v4896 = vpop.f32.mrb[0].mxu0
        %v4897 = vadd.f32 %v4596, %v4896
        %v4898 = vpop.f32.mrb[0].mxu0
        %4899 = vmatprep.mubr.f32.mxu0 0.0
        %4900 = vmatmul.mubr.f32.gmra.mrb[0].mxu0 %v4684
        %v4901 = vpop.f32.mrb[0].mxu0
        %v4902 = vadd.f32 %v4596, %v4901
        %v4903 = vpop.f32.mrb[0].mxu0
        %4904 = vmatprep.mubr.f32.mxu0 0.0
        %4905 = vmatmul.mubr.f32.gmra.mrb[0].mxu0 %v4687
        %v4906 = vpop.f32.mrb[0].mxu0
        %v4907 = vadd.f32 %v4596, %v4906
        %v4908 = vpop.f32.mrb[0].mxu0
        %4909 = vmatprep.mubr.f32.mxu0 0.0
        %4910 = vmatmul.mubr.f32.gmra.mrb[0].mxu0 %v4690
        %v4911 = vpop.f32.mrb[0].mxu0
        %v4912 = vadd.f32 %v4596, %v4911
        %v4913 = vpop.f32.mrb[0].mxu0
        %4914 = vmatprep.mubr.f32.mxu0 0.0
        %4915 = vmatmul.mubr.f32.gmra.mrb[0].mxu0 %v4693
        %v4916 = vpop.f32.mrb[0].mxu0
        %v4917 = vadd.f32 %v4596, %v4916
        %v4918 = vpop.f32.mrb[0].mxu0
        %4919 = vdwg.mxu0
        %v4920 = vmax.f32 %v4762, 0.0
        %v4921 = vmax.f32 %v4767, 0.0
        %v4922 = vmax.f32 %v4772, 0.0
        %v4923 = vmax.f32 %v4777, 0.0
        %v4924 = vmax.f32 %v4782, 0.0
        %v4925 = vmax.f32 %v4787, 0.0
        %v4926 = vmax.f32 %v4792, 0.0
        %v4927 = vmax.f32 %v4797, 0.0
        %v4928 = vmax.f32 %v4802, 0.0
        %v4929 = vmax.f32 %v4807, 0.0
        %v4930 = vmax.f32 %v4812, 0.0
        %v4931 = vmax.f32 %v4817, 0.0
        %v4932 = vmax.f32 %v4822, 0.0
        %v4933 = vmax.f32 %v4827, 0.0
        %v4934 = vmax.f32 %v4832, 0.0
        %v4935 = vmax.f32 %v4837, 0.0
        %v4936 = vmax.f32 %v4842, 0.0
        %v4937 = vmax.f32 %v4847, 0.0
        %v4938 = vmax.f32 %v4852, 0.0
        %v4939 = vmax.f32 %v4857, 0.0
        %v4940 = vmax.f32 %v4862, 0.0
        %v4941 = vmax.f32 %v4867, 0.0
        %v4942 = vmax.f32 %v4872, 0.0
        %v4943 = vmax.f32 %v4877, 0.0
        %v4944 = vmax.f32 %v4882, 0.0
        %v4945 = vmax.f32 %v4887, 0.0
        %v4946 = vmax.f32 %v4892, 0.0
        %v4947 = vmax.f32 %v4897, 0.0
        %v4948 = vmax.f32 %v4902, 0.0
        %v4949 = vmax.f32 %v4907, 0.0
        %v4950 = vmax.f32 %v4912, 0.0
        %v4951 = vmax.f32 %v4917, 0.0
        %v4952 = vld [vmem:[#allocation9] sm:$0xff]
        %v4953 = vld [vmem:[#allocation9 + $0x8] sm:$0xff]
        %v4954 = vld [vmem:[#allocation10] sm:$0x1]
        %v4956 = vlaneseq
        %v4957 = vshrl.u32 %v4956, 7
        %v4958 = vsub.s32 0, %v4957
        %v4959 = vrot.slane %v4954, %v4958
        %vm4961 = vcmask 130048
        %v4963 = vsel %vm4961, %v4920, 0
        %v4966 = vsel %vm4961, %v4921, 0
        %v4969 = vsel %vm4961, %v4922, 0
        %v4972 = vsel %vm4961, %v4923, 0
        %v4975 = vsel %vm4961, %v4924, 0
        %v4978 = vsel %vm4961, %v4925, 0
        %v4981 = vsel %vm4961, %v4926, 0
        %v4984 = vsel %vm4961, %v4927, 0
        %v4987 = vsel %vm4961, %v4928, 0
        %v4990 = vsel %vm4961, %v4929, 0
        %v4993 = vsel %vm4961, %v4930, 0
        %v4996 = vsel %vm4961, %v4931, 0
        %v4999 = vsel %vm4961, %v4932, 0
        %v5002 = vsel %vm4961, %v4933, 0
        %v5005 = vsel %vm4961, %v4934, 0
        %v5008 = vsel %vm4961, %v4935, 0
        %v5011 = vsel %vm4961, %v4936, 0
        %v5014 = vsel %vm4961, %v4937, 0
        %v5017 = vsel %vm4961, %v4938, 0
        %v5020 = vsel %vm4961, %v4939, 0
        %v5023 = vsel %vm4961, %v4940, 0
        %v5026 = vsel %vm4961, %v4941, 0
        %v5029 = vsel %vm4961, %v4942, 0
        %v5032 = vsel %vm4961, %v4943, 0
        %v5035 = vsel %vm4961, %v4944, 0
        %v5038 = vsel %vm4961, %v4945, 0
        %v5041 = vsel %vm4961, %v4946, 0
        %v5044 = vsel %vm4961, %v4947, 0
        %v5047 = vsel %vm4961, %v4948, 0
        %v5050 = vsel %vm4961, %v4949, 0
        %v5053 = vsel %vm4961, %v4950, 0
        %v5056 = vsel %vm4961, %v4951, 0
        %5058 = vmatprep.subr.mxu0 0.0
        %5059 = vmatpush1.msra.mxu0 %v4952
        %5060 = vmatprep.subr.mxu0 0.0
        %5061 = vmatpush1.msra.mxu0 %v4953
        %5062 = vmatprep.subr.mxu0 0.0
        %5063 = vmatpush1.msra.mxu0 0.0
        %5064 = vmatprep.subr.mxu0 0.0
        %5065 = vmatpush1.msra.mxu0 0.0
        %5066 = vmatprep.subr.mxu0 0.0
        %5067 = vmatpush1.msra.mxu0 0.0
        %5068 = vmatprep.subr.mxu0 0.0
        %5069 = vmatpush1.msra.mxu0 0.0
        %5070 = vmatprep.subr.mxu0 0.0
        %5071 = vmatpush1.msra.mxu0 0.0
        %5072 = vmatprep.subr.mxu0 0.0
        %5073 = vmatpush1.msra.mxu0 0.0
        %5074 = vmatprep.subr.mxu0 0.0
        %5075 = vmatpush1.msra.mxu0 0.0
        %5076 = vmatprep.subr.mxu0 0.0
        %5077 = vmatpush1.msra.mxu0 0.0
        %5078 = vmatprep.subr.mxu0 0.0
        %5079 = vmatpush1.msra.mxu0 0.0
        %5080 = vmatprep.subr.mxu0 0.0
        %5081 = vmatpush1.msra.mxu0 0.0
        %5082 = vmatprep.subr.mxu0 0.0
        %5083 = vmatpush1.msra.mxu0 0.0
        %5084 = vmatprep.subr.mxu0 0.0
        %5085 = vmatpush1.msra.mxu0 0.0
        %5086 = vmatprep.subr.mxu0 0.0
        %5087 = vmatpush1.msra.mxu0 0.0
        %5088 = vmatprep.subr.mxu0 0.0
        %5089 = vmatpush1.msra.mxu0 0.0
        %5090 = vmatprep.subr.mxu0 0.0
        %5091 = vmatpush1.msra.mxu0 0.0
        %5092 = vmatprep.subr.mxu0 0.0
        %5093 = vmatpush1.msra.mxu0 0.0
        %5094 = vmatprep.subr.mxu0 0.0
        %5095 = vmatpush1.msra.mxu0 0.0
        %5096 = vmatprep.subr.mxu0 0.0
        %5097 = vmatpush1.msra.mxu0 0.0
        %5098 = vmatprep.subr.mxu0 0.0
        %5099 = vmatpush1.msra.mxu0 0.0
        %5100 = vmatprep.subr.mxu0 0.0
        %5101 = vmatpush1.msra.mxu0 0.0
        %5102 = vmatprep.subr.mxu0 0.0
        %5103 = vmatpush1.msra.mxu0 0.0
        %5104 = vmatprep.subr.mxu0 0.0
        %5105 = vmatpush1.msra.mxu0 0.0
        %5106 = vmatprep.subr.mxu0 0.0
        %5107 = vmatpush1.msra.mxu0 0.0
        %5108 = vmatprep.subr.mxu0 0.0
        %5109 = vmatpush1.msra.mxu0 0.0
        %5110 = vmatprep.subr.mxu0 0.0
        %5111 = vmatpush1.msra.mxu0 0.0
        %5112 = vmatprep.subr.mxu0 0.0
        %5113 = vmatpush1.msra.mxu0 0.0
        %5114 = vmatprep.subr.mxu0 0.0
        %5115 = vmatpush1.msra.mxu0 0.0
        %5116 = vmatprep.subr.mxu0 0.0
        %5117 = vmatpush1.msra.mxu0 0.0
        %5118 = vmatprep.subr.mxu0 0.0
        %5119 = vmatpush1.msra.mxu0 0.0
        %5120 = vmatprep.subr.mxu0 0.0
        %5121 = vmatpush1.msra.mxu0 0.0
        %5122 = vmatprep.mubr.f32.mxu0 0.0
        %5123 = vmatmul.mubr.f32.gmra.mrb[0].mxu0 %v4963
        %v5124 = vpop.f32.mrb[0].mxu0
        %v5125 = vadd.f32 %v4959, %v5124
        %v5126 = vpop.f32.mrb[0].mxu0
        %5127 = vmatprep.mubr.f32.mxu0 0.0
        %5128 = vmatmul.mubr.f32.gmra.mrb[0].mxu0 %v4966
        %v5129 = vpop.f32.mrb[0].mxu0
        %v5130 = vadd.f32 %v4959, %v5129
        %v5131 = vpop.f32.mrb[0].mxu0
        %5132 = vmatprep.mubr.f32.mxu0 0.0
        %5133 = vmatmul.mubr.f32.gmra.mrb[0].mxu0 %v4969
        %v5134 = vpop.f32.mrb[0].mxu0
        %v5135 = vadd.f32 %v4959, %v5134
        %v5136 = vpop.f32.mrb[0].mxu0
        %5137 = vmatprep.mubr.f32.mxu0 0.0
        %5138 = vmatmul.mubr.f32.gmra.mrb[0].mxu0 %v4972
        %v5139 = vpop.f32.mrb[0].mxu0
        %v5140 = vadd.f32 %v4959, %v5139
        %v5141 = vpop.f32.mrb[0].mxu0
        %5142 = vmatprep.mubr.f32.mxu0 0.0
        %5143 = vmatmul.mubr.f32.gmra.mrb[0].mxu0 %v4975
        %v5144 = vpop.f32.mrb[0].mxu0
        %v5145 = vadd.f32 %v4959, %v5144
        %v5146 = vpop.f32.mrb[0].mxu0
        %5147 = vmatprep.mubr.f32.mxu0 0.0
        %5148 = vmatmul.mubr.f32.gmra.mrb[0].mxu0 %v4978
        %v5149 = vpop.f32.mrb[0].mxu0
        %v5150 = vadd.f32 %v4959, %v5149
        %v5151 = vpop.f32.mrb[0].mxu0
        %5152 = vmatprep.mubr.f32.mxu0 0.0
        %5153 = vmatmul.mubr.f32.gmra.mrb[0].mxu0 %v4981
        %v5154 = vpop.f32.mrb[0].mxu0
        %v5155 = vadd.f32 %v4959, %v5154
        %v5156 = vpop.f32.mrb[0].mxu0
        %5157 = vmatprep.mubr.f32.mxu0 0.0
        %5158 = vmatmul.mubr.f32.gmra.mrb[0].mxu0 %v4984
        %v5159 = vpop.f32.mrb[0].mxu0
        %v5160 = vadd.f32 %v4959, %v5159
        %v5161 = vpop.f32.mrb[0].mxu0
        %5162 = vmatprep.mubr.f32.mxu0 0.0
        %5163 = vmatmul.mubr.f32.gmra.mrb[0].mxu0 %v4987
        %v5164 = vpop.f32.mrb[0].mxu0
        %v5165 = vadd.f32 %v4959, %v5164
        %v5166 = vpop.f32.mrb[0].mxu0
        %5167 = vmatprep.mubr.f32.mxu0 0.0
        %5168 = vmatmul.mubr.f32.gmra.mrb[0].mxu0 %v4990
        %v5169 = vpop.f32.mrb[0].mxu0
        %v5170 = vadd.f32 %v4959, %v5169
        %v5171 = vpop.f32.mrb[0].mxu0
        %5172 = vmatprep.mubr.f32.mxu0 0.0
        %5173 = vmatmul.mubr.f32.gmra.mrb[0].mxu0 %v4993
        %v5174 = vpop.f32.mrb[0].mxu0
        %v5175 = vadd.f32 %v4959, %v5174
        %v5176 = vpop.f32.mrb[0].mxu0
        %5177 = vmatprep.mubr.f32.mxu0 0.0
        %5178 = vmatmul.mubr.f32.gmra.mrb[0].mxu0 %v4996
        %v5179 = vpop.f32.mrb[0].mxu0
        %v5180 = vadd.f32 %v4959, %v5179
        %v5181 = vpop.f32.mrb[0].mxu0
        %5182 = vmatprep.mubr.f32.mxu0 0.0
        %5183 = vmatmul.mubr.f32.gmra.mrb[0].mxu0 %v4999
        %v5184 = vpop.f32.mrb[0].mxu0
        %v5185 = vadd.f32 %v4959, %v5184
        %v5186 = vpop.f32.mrb[0].mxu0
        %5187 = vmatprep.mubr.f32.mxu0 0.0
        %5188 = vmatmul.mubr.f32.gmra.mrb[0].mxu0 %v5002
        %v5189 = vpop.f32.mrb[0].mxu0
        %v5190 = vadd.f32 %v4959, %v5189
        %v5191 = vpop.f32.mrb[0].mxu0
        %5192 = vmatprep.mubr.f32.mxu0 0.0
        %5193 = vmatmul.mubr.f32.gmra.mrb[0].mxu0 %v5005
        %v5194 = vpop.f32.mrb[0].mxu0
        %v5195 = vadd.f32 %v4959, %v5194
        %v5196 = vpop.f32.mrb[0].mxu0
        %5197 = vmatprep.mubr.f32.mxu0 0.0
        %5198 = vmatmul.mubr.f32.gmra.mrb[0].mxu0 %v5008
        %v5199 = vpop.f32.mrb[0].mxu0
        %v5200 = vadd.f32 %v4959, %v5199
        %v5201 = vpop.f32.mrb[0].mxu0
        %5202 = vmatprep.mubr.f32.mxu0 0.0
        %5203 = vmatmul.mubr.f32.gmra.mrb[0].mxu0 %v5011
        %v5204 = vpop.f32.mrb[0].mxu0
        %v5205 = vadd.f32 %v4959, %v5204
        %v5206 = vpop.f32.mrb[0].mxu0
        %5207 = vmatprep.mubr.f32.mxu0 0.0
        %5208 = vmatmul.mubr.f32.gmra.mrb[0].mxu0 %v5014
        %v5209 = vpop.f32.mrb[0].mxu0
        %v5210 = vadd.f32 %v4959, %v5209
        %v5211 = vpop.f32.mrb[0].mxu0
        %5212 = vmatprep.mubr.f32.mxu0 0.0
        %5213 = vmatmul.mubr.f32.gmra.mrb[0].mxu0 %v5017
        %v5214 = vpop.f32.mrb[0].mxu0
        %v5215 = vadd.f32 %v4959, %v5214
        %v5216 = vpop.f32.mrb[0].mxu0
        %5217 = vmatprep.mubr.f32.mxu0 0.0
        %5218 = vmatmul.mubr.f32.gmra.mrb[0].mxu0 %v5020
        %v5219 = vpop.f32.mrb[0].mxu0
        %v5220 = vadd.f32 %v4959, %v5219
        %v5221 = vpop.f32.mrb[0].mxu0
        %5222 = vmatprep.mubr.f32.mxu0 0.0
        %5223 = vmatmul.mubr.f32.gmra.mrb[0].mxu0 %v5023
        %v5224 = vpop.f32.mrb[0].mxu0
        %v5225 = vadd.f32 %v4959, %v5224
        %v5226 = vpop.f32.mrb[0].mxu0
        %5227 = vmatprep.mubr.f32.mxu0 0.0
        %5228 = vmatmul.mubr.f32.gmra.mrb[0].mxu0 %v5026
        %v5229 = vpop.f32.mrb[0].mxu0
        %v5230 = vadd.f32 %v4959, %v5229
        %v5231 = vpop.f32.mrb[0].mxu0
        %5232 = vmatprep.mubr.f32.mxu0 0.0
        %5233 = vmatmul.mubr.f32.gmra.mrb[0].mxu0 %v5029
        %v5234 = vpop.f32.mrb[0].mxu0
        %v5235 = vadd.f32 %v4959, %v5234
        %v5236 = vpop.f32.mrb[0].mxu0
        %5237 = vmatprep.mubr.f32.mxu0 0.0
        %5238 = vmatmul.mubr.f32.gmra.mrb[0].mxu0 %v5032
        %v5239 = vpop.f32.mrb[0].mxu0
        %v5240 = vadd.f32 %v4959, %v5239
        %v5241 = vpop.f32.mrb[0].mxu0
        %5242 = vmatprep.mubr.f32.mxu0 0.0
        %5243 = vmatmul.mubr.f32.gmra.mrb[0].mxu0 %v5035
        %v5244 = vpop.f32.mrb[0].mxu0
        %v5245 = vadd.f32 %v4959, %v5244
        %v5246 = vpop.f32.mrb[0].mxu0
        %5247 = vmatprep.mubr.f32.mxu0 0.0
        %5248 = vmatmul.mubr.f32.gmra.mrb[0].mxu0 %v5038
        %v5249 = vpop.f32.mrb[0].mxu0
        %v5250 = vadd.f32 %v4959, %v5249
        %v5251 = vpop.f32.mrb[0].mxu0
        %5252 = vmatprep.mubr.f32.mxu0 0.0
        %5253 = vmatmul.mubr.f32.gmra.mrb[0].mxu0 %v5041
        %v5254 = vpop.f32.mrb[0].mxu0
        %v5255 = vadd.f32 %v4959, %v5254
        %v5256 = vpop.f32.mrb[0].mxu0
        %5257 = vmatprep.mubr.f32.mxu0 0.0
        %5258 = vmatmul.mubr.f32.gmra.mrb[0].mxu0 %v5044
        %v5259 = vpop.f32.mrb[0].mxu0
        %v5260 = vadd.f32 %v4959, %v5259
        %v5261 = vpop.f32.mrb[0].mxu0
        %5262 = vmatprep.mubr.f32.mxu0 0.0
        %5263 = vmatmul.mubr.f32.gmra.mrb[0].mxu0 %v5047
        %v5264 = vpop.f32.mrb[0].mxu0
        %v5265 = vadd.f32 %v4959, %v5264
        %v5266 = vpop.f32.mrb[0].mxu0
        %5267 = vmatprep.mubr.f32.mxu0 0.0
        %5268 = vmatmul.mubr.f32.gmra.mrb[0].mxu0 %v5050
        %v5269 = vpop.f32.mrb[0].mxu0
        %v5270 = vadd.f32 %v4959, %v5269
        %v5271 = vpop.f32.mrb[0].mxu0
        %5272 = vmatprep.mubr.f32.mxu0 0.0
        %5273 = vmatmul.mubr.f32.gmra.mrb[0].mxu0 %v5053
        %v5274 = vpop.f32.mrb[0].mxu0
        %v5275 = vadd.f32 %v4959, %v5274
        %v5276 = vpop.f32.mrb[0].mxu0
        %5277 = vmatprep.mubr.f32.mxu0 0.0
        %5278 = vmatmul.mubr.f32.gmra.mrb[0].mxu0 %v5056
        %v5279 = vpop.f32.mrb[0].mxu0
        %v5280 = vadd.f32 %v4959, %v5279
        %v5281 = vpop.f32.mrb[0].mxu0
        %5282 = vdwg.mxu0
        %v5283 = vmax.f32 %v5125, 0.0
        %v5284 = vmax.f32 %v5130, 0.0
        %v5285 = vmax.f32 %v5135, 0.0
        %v5286 = vmax.f32 %v5140, 0.0
        %v5287 = vmax.f32 %v5145, 0.0
        %v5288 = vmax.f32 %v5150, 0.0
        %v5289 = vmax.f32 %v5155, 0.0
        %v5290 = vmax.f32 %v5160, 0.0
        %v5291 = vmax.f32 %v5165, 0.0
        %v5292 = vmax.f32 %v5170, 0.0
        %v5293 = vmax.f32 %v5175, 0.0
        %v5294 = vmax.f32 %v5180, 0.0
        %v5295 = vmax.f32 %v5185, 0.0
        %v5296 = vmax.f32 %v5190, 0.0
        %v5297 = vmax.f32 %v5195, 0.0
        %v5298 = vmax.f32 %v5200, 0.0
        %v5299 = vmax.f32 %v5205, 0.0
        %v5300 = vmax.f32 %v5210, 0.0
        %v5301 = vmax.f32 %v5215, 0.0
        %v5302 = vmax.f32 %v5220, 0.0
        %v5303 = vmax.f32 %v5225, 0.0
        %v5304 = vmax.f32 %v5230, 0.0
        %v5305 = vmax.f32 %v5235, 0.0
        %v5306 = vmax.f32 %v5240, 0.0
        %v5307 = vmax.f32 %v5245, 0.0
        %v5308 = vmax.f32 %v5250, 0.0
        %v5309 = vmax.f32 %v5255, 0.0
        %v5310 = vmax.f32 %v5260, 0.0
        %v5311 = vmax.f32 %v5265, 0.0
        %v5312 = vmax.f32 %v5270, 0.0
        %v5313 = vmax.f32 %v5275, 0.0
        %v5314 = vmax.f32 %v5280, 0.0
        %v5315 = vld [vmem:[#allocation21] sm:$0xff]
        %v5316 = vld [vmem:[#allocation21 + $0x8] sm:$0xff]
        %v5317 = vld [vmem:[#allocation21 + $0x10] sm:$0xff]
        %v5318 = vld [vmem:[#allocation21 + $0x18] sm:$0xff]
        %v5319 = vld [vmem:[#allocation21 + $0x20] sm:$0xff]
        %v5320 = vld [vmem:[#allocation21 + $0x28] sm:$0xff]
        %v5321 = vld [vmem:[#allocation21 + $0x30] sm:$0xff]
        %v5322 = vld [vmem:[#allocation21 + $0x38] sm:$0xff]
        %v5323 = vld [vmem:[#allocation21 + $0x40] sm:$0xff]
        %v5324 = vld [vmem:[#allocation21 + $0x48] sm:$0xff]
        %v5325 = vld [vmem:[#allocation21 + $0x50] sm:$0xff]
        %v5326 = vld [vmem:[#allocation21 + $0x58] sm:$0xff]
        %v5327 = vld [vmem:[#allocation21 + $0x60] sm:$0xff]
        %v5328 = vld [vmem:[#allocation21 + $0x68] sm:$0xff]
        %v5329 = vld [vmem:[#allocation21 + $0x70] sm:$0xff]
        %v5330 = vld [vmem:[#allocation21 + $0x78] sm:$0xff]
        %5331 = vmatprep.subr.mxu0 0.0
        %5332 = vmatpush1.msra.mxu0 %v5283
        %5333 = vmatprep.subr.mxu0 0.0
        %5334 = vmatpush1.msra.mxu0 %v5284
        %5335 = vmatprep.subr.mxu0 0.0
        %5336 = vmatpush1.msra.mxu0 %v5285
        %5337 = vmatprep.subr.mxu0 0.0
        %5338 = vmatpush1.msra.mxu0 %v5286
        %5339 = vmatprep.subr.mxu0 0.0
        %5340 = vmatpush1.msra.mxu0 %v5287
        %5341 = vmatprep.subr.mxu0 0.0
        %5342 = vmatpush1.msra.mxu0 %v5288
        %5343 = vmatprep.subr.mxu0 0.0
        %5344 = vmatpush1.msra.mxu0 %v5289
        %5345 = vmatprep.subr.mxu0 0.0
        %5346 = vmatpush1.msra.mxu0 %v5290
        %5347 = vmatprep.subr.mxu0 0.0
        %5348 = vmatpush1.msra.mxu0 %v5291
        %5349 = vmatprep.subr.mxu0 0.0
        %5350 = vmatpush1.msra.mxu0 %v5292
        %5351 = vmatprep.subr.mxu0 0.0
        %5352 = vmatpush1.msra.mxu0 %v5293
        %5353 = vmatprep.subr.mxu0 0.0
        %5354 = vmatpush1.msra.mxu0 %v5294
        %5355 = vmatprep.subr.mxu0 0.0
        %5356 = vmatpush1.msra.mxu0 %v5295
        %5357 = vmatprep.subr.mxu0 0.0
        %5358 = vmatpush1.msra.mxu0 %v5296
        %5359 = vmatprep.subr.mxu0 0.0
        %5360 = vmatpush1.msra.mxu0 %v5297
        %5361 = vmatprep.subr.mxu0 0.0
        %5362 = vmatpush1.msra.mxu0 %v5298
        %5363 = vmatprep.subr.mxu0 0.0
        %5364 = vmatpush1.msra.mxu0 %v5299
        %5365 = vmatprep.subr.mxu0 0.0
        %5366 = vmatpush1.msra.mxu0 %v5300
        %5367 = vmatprep.subr.mxu0 0.0
        %5368 = vmatpush1.msra.mxu0 %v5301
        %5369 = vmatprep.subr.mxu0 0.0
        %5370 = vmatpush1.msra.mxu0 %v5302
        %5371 = vmatprep.subr.mxu0 0.0
        %5372 = vmatpush1.msra.mxu0 %v5303
        %5373 = vmatprep.subr.mxu0 0.0
        %5374 = vmatpush1.msra.mxu0 %v5304
        %5375 = vmatprep.subr.mxu0 0.0
        %5376 = vmatpush1.msra.mxu0 %v5305
        %5377 = vmatprep.subr.mxu0 0.0
        %5378 = vmatpush1.msra.mxu0 %v5306
        %5379 = vmatprep.subr.mxu0 0.0
        %5380 = vmatpush1.msra.mxu0 %v5307
        %5381 = vmatprep.subr.mxu0 0.0
        %5382 = vmatpush1.msra.mxu0 %v5308
        %5383 = vmatprep.subr.mxu0 0.0
        %5384 = vmatpush1.msra.mxu0 %v5309
        %5385 = vmatprep.subr.mxu0 0.0
        %5386 = vmatpush1.msra.mxu0 %v5310
        %5387 = vmatprep.subr.mxu0 0.0
        %5388 = vmatpush1.msra.mxu0 %v5311
        %5389 = vmatprep.subr.mxu0 0.0
        %5390 = vmatpush1.msra.mxu0 %v5312
        %5391 = vmatprep.subr.mxu0 0.0
        %5392 = vmatpush1.msra.mxu0 %v5313
        %5393 = vmatprep.subr.mxu0 0.0
        %5394 = vmatpush1.msra.mxu0 %v5314
        %5395 = vmatprep.mubr.f32.mxu0 %v5316
        %5396 = vmatmul.mubr.f32.gmra.mrb[0].mxu0 %v5315
        %v5397 = vpop.f32.mrb[0].mxu0
        %v5398 = vadd.f32 0.0, %v5397
        %v5399 = vpop.f32.mrb[0].mxu0
        %5400 = vmatprep.mubr.f32.mxu0 %v5318
        %5401 = vmatmul.mubr.f32.gmra.mrb[0].mxu0 %v5317
        %v5402 = vpop.f32.mrb[0].mxu0
        %v5403 = vadd.f32 0.0, %v5402
        %v5404 = vpop.f32.mrb[0].mxu0
        %5405 = vmatprep.mubr.f32.mxu0 %v5320
        %5406 = vmatmul.mubr.f32.gmra.mrb[0].mxu0 %v5319
        %v5407 = vpop.f32.mrb[0].mxu0
        %v5408 = vadd.f32 0.0, %v5407
        %v5409 = vpop.f32.mrb[0].mxu0
        %5410 = vmatprep.mubr.f32.mxu0 %v5322
        %5411 = vmatmul.mubr.f32.gmra.mrb[0].mxu0 %v5321
        %v5412 = vpop.f32.mrb[0].mxu0
        %v5413 = vadd.f32 0.0, %v5412
        %v5414 = vpop.f32.mrb[0].mxu0
        %5415 = vmatprep.mubr.f32.mxu0 %v5324
        %5416 = vmatmul.mubr.f32.gmra.mrb[0].mxu0 %v5323
        %v5417 = vpop.f32.mrb[0].mxu0
        %v5418 = vadd.f32 0.0, %v5417
        %v5419 = vpop.f32.mrb[0].mxu0
        %5420 = vmatprep.mubr.f32.mxu0 %v5326
        %5421 = vmatmul.mubr.f32.gmra.mrb[0].mxu0 %v5325
        %v5422 = vpop.f32.mrb[0].mxu0
        %v5423 = vadd.f32 0.0, %v5422
        %v5424 = vpop.f32.mrb[0].mxu0
        %5425 = vmatprep.mubr.f32.mxu0 %v5328
        %5426 = vmatmul.mubr.f32.gmra.mrb[0].mxu0 %v5327
        %v5427 = vpop.f32.mrb[0].mxu0
        %v5428 = vadd.f32 0.0, %v5427
        %v5429 = vpop.f32.mrb[0].mxu0
        %5430 = vmatprep.mubr.f32.mxu0 %v5330
        %5431 = vmatmul.mubr.f32.gmra.mrb[0].mxu0 %v5329
        %v5432 = vpop.f32.mrb[0].mxu0
        %v5433 = vadd.f32 0.0, %v5432
        %v5434 = vpop.f32.mrb[0].mxu0
        %5435 = vdwg.mxu0
        %v5436 = vld [vmem:[#allocation12] sm:$0xff]
        %v5437 = vld [vmem:[#allocation12 + $0x8] sm:$0xff]
        %v5438 = vld [vmem:[#allocation12 + $0x10] sm:$0xff]
        %v5439 = vld [vmem:[#allocation12 + $0x18] sm:$0xff]
        %v5440 = vld [vmem:[#allocation13] sm:$0x1]
        %v5442 = vlaneseq
        %v5443 = vshrl.u32 %v5442, 7
        %v5444 = vsub.s32 0, %v5443
        %v5445 = vrot.slane %v5440, %v5444
        %vm5447 = vcmask 261120
        %v5449 = vsel %vm5447, %v5398, 0
        %v5452 = vsel %vm5447, %v5403, 0
        %v5455 = vsel %vm5447, %v5408, 0
        %v5458 = vsel %vm5447, %v5413, 0
        %v5461 = vsel %vm5447, %v5418, 0
        %v5464 = vsel %vm5447, %v5423, 0
        %v5467 = vsel %vm5447, %v5428, 0
        %v5470 = vsel %vm5447, %v5433, 0
        %5472 = vmatprep.subr.mxu0 0.0
        %5473 = vmatpush1.msra.mxu0 %v5436
        %5474 = vmatprep.subr.mxu0 0.0
        %5475 = vmatpush1.msra.mxu0 %v5437
        %5476 = vmatprep.subr.mxu0 0.0
        %5477 = vmatpush1.msra.mxu0 %v5438
        %5478 = vmatprep.subr.mxu0 0.0
        %5479 = vmatpush1.msra.mxu0 %v5439
        %5480 = vmatprep.subr.mxu0 0.0
        %5481 = vmatpush1.msra.mxu0 0.0
        %5482 = vmatprep.subr.mxu0 0.0
        %5483 = vmatpush1.msra.mxu0 0.0
        %5484 = vmatprep.subr.mxu0 0.0
        %5485 = vmatpush1.msra.mxu0 0.0
        %5486 = vmatprep.subr.mxu0 0.0
        %5487 = vmatpush1.msra.mxu0 0.0
        %5488 = vmatprep.subr.mxu0 0.0
        %5489 = vmatpush1.msra.mxu0 0.0
        %5490 = vmatprep.subr.mxu0 0.0
        %5491 = vmatpush1.msra.mxu0 0.0
        %5492 = vmatprep.subr.mxu0 0.0
        %5493 = vmatpush1.msra.mxu0 0.0
        %5494 = vmatprep.subr.mxu0 0.0
        %5495 = vmatpush1.msra.mxu0 0.0
        %5496 = vmatprep.subr.mxu0 0.0
        %5497 = vmatpush1.msra.mxu0 0.0
        %5498 = vmatprep.subr.mxu0 0.0
        %5499 = vmatpush1.msra.mxu0 0.0
        %5500 = vmatprep.subr.mxu0 0.0
        %5501 = vmatpush1.msra.mxu0 0.0
        %5502 = vmatprep.subr.mxu0 0.0
        %5503 = vmatpush1.msra.mxu0 0.0
        %5504 = vmatprep.subr.mxu0 0.0
        %5505 = vmatpush1.msra.mxu0 0.0
        %5506 = vmatprep.subr.mxu0 0.0
        %5507 = vmatpush1.msra.mxu0 0.0
        %5508 = vmatprep.subr.mxu0 0.0
        %5509 = vmatpush1.msra.mxu0 0.0
        %5510 = vmatprep.subr.mxu0 0.0
        %5511 = vmatpush1.msra.mxu0 0.0
        %5512 = vmatprep.subr.mxu0 0.0
        %5513 = vmatpush1.msra.mxu0 0.0
        %5514 = vmatprep.subr.mxu0 0.0
        %5515 = vmatpush1.msra.mxu0 0.0
        %5516 = vmatprep.subr.mxu0 0.0
        %5517 = vmatpush1.msra.mxu0 0.0
        %5518 = vmatprep.subr.mxu0 0.0
        %5519 = vmatpush1.msra.mxu0 0.0
        %5520 = vmatprep.subr.mxu0 0.0
        %5521 = vmatpush1.msra.mxu0 0.0
        %5522 = vmatprep.subr.mxu0 0.0
        %5523 = vmatpush1.msra.mxu0 0.0
        %5524 = vmatprep.subr.mxu0 0.0
        %5525 = vmatpush1.msra.mxu0 0.0
        %5526 = vmatprep.subr.mxu0 0.0
        %5527 = vmatpush1.msra.mxu0 0.0
        %5528 = vmatprep.subr.mxu0 0.0
        %5529 = vmatpush1.msra.mxu0 0.0
        %5530 = vmatprep.subr.mxu0 0.0
        %5531 = vmatpush1.msra.mxu0 0.0
        %5532 = vmatprep.subr.mxu0 0.0
        %5533 = vmatpush1.msra.mxu0 0.0
        %5534 = vmatprep.subr.mxu0 0.0
        %5535 = vmatpush1.msra.mxu0 0.0
        %5536 = vmatprep.mubr.f32.mxu0 0.0
        %5537 = vmatmul.mubr.f32.gmra.mrb[0].mxu0 %v5449
        %v5538 = vpop.f32.mrb[0].mxu0
        %v5539 = vadd.f32 %v5445, %v5538
        %v5540 = vpop.f32.mrb[0].mxu0
        %5541 = vmatprep.mubr.f32.mxu0 0.0
        %5542 = vmatmul.mubr.f32.gmra.mrb[0].mxu0 %v5452
        %v5543 = vpop.f32.mrb[0].mxu0
        %v5544 = vadd.f32 %v5445, %v5543
        %v5545 = vpop.f32.mrb[0].mxu0
        %5546 = vmatprep.mubr.f32.mxu0 0.0
        %5547 = vmatmul.mubr.f32.gmra.mrb[0].mxu0 %v5455
        %v5548 = vpop.f32.mrb[0].mxu0
        %v5549 = vadd.f32 %v5445, %v5548
        %v5550 = vpop.f32.mrb[0].mxu0
        %5551 = vmatprep.mubr.f32.mxu0 0.0
        %5552 = vmatmul.mubr.f32.gmra.mrb[0].mxu0 %v5458
        %v5553 = vpop.f32.mrb[0].mxu0
        %v5554 = vadd.f32 %v5445, %v5553
        %v5555 = vpop.f32.mrb[0].mxu0
        %5556 = vmatprep.mubr.f32.mxu0 0.0
        %5557 = vmatmul.mubr.f32.gmra.mrb[0].mxu0 %v5461
        %v5558 = vpop.f32.mrb[0].mxu0
        %v5559 = vadd.f32 %v5445, %v5558
        %v5560 = vpop.f32.mrb[0].mxu0
        %5561 = vmatprep.mubr.f32.mxu0 0.0
        %5562 = vmatmul.mubr.f32.gmra.mrb[0].mxu0 %v5464
        %v5563 = vpop.f32.mrb[0].mxu0
        %v5564 = vadd.f32 %v5445, %v5563
        %v5565 = vpop.f32.mrb[0].mxu0
        %5566 = vmatprep.mubr.f32.mxu0 0.0
        %5567 = vmatmul.mubr.f32.gmra.mrb[0].mxu0 %v5467
        %v5568 = vpop.f32.mrb[0].mxu0
        %v5569 = vadd.f32 %v5445, %v5568
        %v5570 = vpop.f32.mrb[0].mxu0
        %5571 = vmatprep.mubr.f32.mxu0 0.0
        %5572 = vmatmul.mubr.f32.gmra.mrb[0].mxu0 %v5470
        %v5573 = vpop.f32.mrb[0].mxu0
        %v5574 = vadd.f32 %v5445, %v5573
        %v5575 = vpop.f32.mrb[0].mxu0
        %5576 = vdwg.mxu0
        %v5577 = vmax.f32 %v5539, 0.0
        %v5578 = vmax.f32 %v5544, 0.0
        %v5579 = vmax.f32 %v5549, 0.0
        %v5580 = vmax.f32 %v5554, 0.0
        %v5581 = vmax.f32 %v5559, 0.0
        %v5582 = vmax.f32 %v5564, 0.0
        %v5583 = vmax.f32 %v5569, 0.0
        %v5584 = vmax.f32 %v5574, 0.0
        %v5585 = vld [vmem:[#allocation15] sm:$0xff]
        %v5586 = vld [vmem:[#allocation15 + $0x8] sm:$0xff]
        %v5587 = vld [vmem:[#allocation15 + $0x10] sm:$0xff]
        %v5588 = vld [vmem:[#allocation15 + $0x18] sm:$0xff]
        %v5589 = vld [vmem:[#allocation15 + $0x20] sm:$0xff]
        %v5590 = vld [vmem:[#allocation15 + $0x28] sm:$0xff]
        %v5591 = vld [vmem:[#allocation15 + $0x30] sm:$0xff]
        %v5592 = vld [vmem:[#allocation15 + $0x38] sm:$0xff]
        %v5593 = vld [vmem:[#allocation16] sm:$0x1]
        %v5595 = vlaneseq
        %v5596 = vshrl.u32 %v5595, 7
        %v5597 = vsub.s32 0, %v5596
        %v5598 = vrot.slane %v5593, %v5597
        %vm5600 = vcmask 523264
        %v5602 = vsel %vm5600, %v5577, 0
        %v5605 = vsel %vm5600, %v5578, 0
        %v5608 = vsel %vm5600, %v5579, 0
        %v5611 = vsel %vm5600, %v5580, 0
        %v5614 = vsel %vm5600, %v5581, 0
        %v5617 = vsel %vm5600, %v5582, 0
        %v5620 = vsel %vm5600, %v5583, 0
        %v5623 = vsel %vm5600, %v5584, 0
        %5625 = vmatprep.subr.mxu0 0.0
        %5626 = vmatpush1.msra.mxu0 %v5585
        %5627 = vmatprep.subr.mxu0 0.0
        %5628 = vmatpush1.msra.mxu0 %v5586
        %5629 = vmatprep.subr.mxu0 0.0
        %5630 = vmatpush1.msra.mxu0 %v5587
        %5631 = vmatprep.subr.mxu0 0.0
        %5632 = vmatpush1.msra.mxu0 %v5588
        %5633 = vmatprep.subr.mxu0 0.0
        %5634 = vmatpush1.msra.mxu0 %v5589
        %5635 = vmatprep.subr.mxu0 0.0
        %5636 = vmatpush1.msra.mxu0 %v5590
        %5637 = vmatprep.subr.mxu0 0.0
        %5638 = vmatpush1.msra.mxu0 %v5591
        %5639 = vmatprep.subr.mxu0 0.0
        %5640 = vmatpush1.msra.mxu0 %v5592
        %5641 = vmatprep.subr.mxu0 0.0
        %5642 = vmatpush1.msra.mxu0 0.0
        %5643 = vmatprep.subr.mxu0 0.0
        %5644 = vmatpush1.msra.mxu0 0.0
        %5645 = vmatprep.subr.mxu0 0.0
        %5646 = vmatpush1.msra.mxu0 0.0
        %5647 = vmatprep.subr.mxu0 0.0
        %5648 = vmatpush1.msra.mxu0 0.0
        %5649 = vmatprep.subr.mxu0 0.0
        %5650 = vmatpush1.msra.mxu0 0.0
        %5651 = vmatprep.subr.mxu0 0.0
        %5652 = vmatpush1.msra.mxu0 0.0
        %5653 = vmatprep.subr.mxu0 0.0
        %5654 = vmatpush1.msra.mxu0 0.0
        %5655 = vmatprep.subr.mxu0 0.0
        %5656 = vmatpush1.msra.mxu0 0.0
        %5657 = vmatprep.subr.mxu0 0.0
        %5658 = vmatpush1.msra.mxu0 0.0
        %5659 = vmatprep.subr.mxu0 0.0
        %5660 = vmatpush1.msra.mxu0 0.0
        %5661 = vmatprep.subr.mxu0 0.0
        %5662 = vmatpush1.msra.mxu0 0.0
        %5663 = vmatprep.subr.mxu0 0.0
        %5664 = vmatpush1.msra.mxu0 0.0
        %5665 = vmatprep.subr.mxu0 0.0
        %5666 = vmatpush1.msra.mxu0 0.0
        %5667 = vmatprep.subr.mxu0 0.0
        %5668 = vmatpush1.msra.mxu0 0.0
        %5669 = vmatprep.subr.mxu0 0.0
        %5670 = vmatpush1.msra.mxu0 0.0
        %5671 = vmatprep.subr.mxu0 0.0
        %5672 = vmatpush1.msra.mxu0 0.0
        %5673 = vmatprep.subr.mxu0 0.0
        %5674 = vmatpush1.msra.mxu0 0.0
        %5675 = vmatprep.subr.mxu0 0.0
        %5676 = vmatpush1.msra.mxu0 0.0
        %5677 = vmatprep.subr.mxu0 0.0
        %5678 = vmatpush1.msra.mxu0 0.0
        %5679 = vmatprep.subr.mxu0 0.0
        %5680 = vmatpush1.msra.mxu0 0.0
        %5681 = vmatprep.subr.mxu0 0.0
        %5682 = vmatpush1.msra.mxu0 0.0
        %5683 = vmatprep.subr.mxu0 0.0
        %5684 = vmatpush1.msra.mxu0 0.0
        %5685 = vmatprep.subr.mxu0 0.0
        %5686 = vmatpush1.msra.mxu0 0.0
        %5687 = vmatprep.subr.mxu0 0.0
        %5688 = vmatpush1.msra.mxu0 0.0
        %5689 = vmatprep.mubr.f32.mxu0 0.0
        %5690 = vmatmul.mubr.f32.gmra.mrb[0].mxu0 %v5602
        %v5691 = vpop.f32.mrb[0].mxu0
        %v5692 = vadd.f32 %v5598, %v5691
        %v5693 = vpop.f32.mrb[0].mxu0
        %5694 = vmatprep.mubr.f32.mxu0 0.0
        %5695 = vmatmul.mubr.f32.gmra.mrb[0].mxu0 %v5605
        %v5696 = vpop.f32.mrb[0].mxu0
        %v5697 = vadd.f32 %v5598, %v5696
        %v5698 = vpop.f32.mrb[0].mxu0
        %5699 = vmatprep.mubr.f32.mxu0 0.0
        %5700 = vmatmul.mubr.f32.gmra.mrb[0].mxu0 %v5608
        %v5701 = vpop.f32.mrb[0].mxu0
        %v5702 = vadd.f32 %v5598, %v5701
        %v5703 = vpop.f32.mrb[0].mxu0
        %5704 = vmatprep.mubr.f32.mxu0 0.0
        %5705 = vmatmul.mubr.f32.gmra.mrb[0].mxu0 %v5611
        %v5706 = vpop.f32.mrb[0].mxu0
        %v5707 = vadd.f32 %v5598, %v5706
        %v5708 = vpop.f32.mrb[0].mxu0
        %5709 = vmatprep.mubr.f32.mxu0 0.0
        %5710 = vmatmul.mubr.f32.gmra.mrb[0].mxu0 %v5614
        %v5711 = vpop.f32.mrb[0].mxu0
        %v5712 = vadd.f32 %v5598, %v5711
        %v5713 = vpop.f32.mrb[0].mxu0
        %5714 = vmatprep.mubr.f32.mxu0 0.0
        %5715 = vmatmul.mubr.f32.gmra.mrb[0].mxu0 %v5617
        %v5716 = vpop.f32.mrb[0].mxu0
        %v5717 = vadd.f32 %v5598, %v5716
        %v5718 = vpop.f32.mrb[0].mxu0
        %5719 = vmatprep.mubr.f32.mxu0 0.0
        %5720 = vmatmul.mubr.f32.gmra.mrb[0].mxu0 %v5620
        %v5721 = vpop.f32.mrb[0].mxu0
        %v5722 = vadd.f32 %v5598, %v5721
        %v5723 = vpop.f32.mrb[0].mxu0
        %5724 = vmatprep.mubr.f32.mxu0 0.0
        %5725 = vmatmul.mubr.f32.gmra.mrb[0].mxu0 %v5623
        %v5726 = vpop.f32.mrb[0].mxu0
        %v5727 = vadd.f32 %v5598, %v5726
        %v5728 = vpop.f32.mrb[0].mxu0
        %5729 = vdwg.mxu0
        %v5730 = vmax.f32 %v5692, 0.0
        %v5731 = vmax.f32 %v5697, 0.0
        %v5732 = vmax.f32 %v5702, 0.0
        %v5733 = vmax.f32 %v5707, 0.0
        %v5734 = vmax.f32 %v5712, 0.0
        %v5735 = vmax.f32 %v5717, 0.0
        %v5736 = vmax.f32 %v5722, 0.0
        %v5737 = vmax.f32 %v5727, 0.0
        %v5738 = vld [vmem:[#allocation22] sm:$0xff]
        %v5739 = vld [vmem:[#allocation22 + $0x8] sm:$0xff]
        %v5741 = vsel %vm5600, %v5738, 0
        %v5744 = vsel %vm5600, %v5739, 0
        %5746 = vmatprep.subr.mxu0 0.0
        %5747 = vmatpush1.msra.mxu0 %v5730
        %5748 = vmatprep.subr.mxu0 0.0
        %5749 = vmatpush1.msra.mxu0 %v5731
        %5750 = vmatprep.subr.mxu0 0.0
        %5751 = vmatpush1.msra.mxu0 %v5732
        %5752 = vmatprep.subr.mxu0 0.0
        %5753 = vmatpush1.msra.mxu0 %v5733
        %5754 = vmatprep.subr.mxu0 0.0
        %5755 = vmatpush1.msra.mxu0 %v5734
        %5756 = vmatprep.subr.mxu0 0.0
        %5757 = vmatpush1.msra.mxu0 %v5735
        %5758 = vmatprep.subr.mxu0 0.0
        %5759 = vmatpush1.msra.mxu0 %v5736
        %5760 = vmatprep.subr.mxu0 0.0
        %5761 = vmatpush1.msra.mxu0 %v5737
        %5762 = vmatprep.subr.mxu0 0.0
        %5763 = vmatpush1.msra.mxu0 0.0
        %5764 = vmatprep.subr.mxu0 0.0
        %5765 = vmatpush1.msra.mxu0 0.0
        %5766 = vmatprep.subr.mxu0 0.0
        %5767 = vmatpush1.msra.mxu0 0.0
        %5768 = vmatprep.subr.mxu0 0.0
        %5769 = vmatpush1.msra.mxu0 0.0
        %5770 = vmatprep.subr.mxu0 0.0
        %5771 = vmatpush1.msra.mxu0 0.0
        %5772 = vmatprep.subr.mxu0 0.0
        %5773 = vmatpush1.msra.mxu0 0.0
        %5774 = vmatprep.subr.mxu0 0.0
        %5775 = vmatpush1.msra.mxu0 0.0
        %5776 = vmatprep.subr.mxu0 0.0
        %5777 = vmatpush1.msra.mxu0 0.0
        %5778 = vmatprep.subr.mxu0 0.0
        %5779 = vmatpush1.msra.mxu0 0.0
        %5780 = vmatprep.subr.mxu0 0.0
        %5781 = vmatpush1.msra.mxu0 0.0
        %5782 = vmatprep.subr.mxu0 0.0
        %5783 = vmatpush1.msra.mxu0 0.0
        %5784 = vmatprep.subr.mxu0 0.0
        %5785 = vmatpush1.msra.mxu0 0.0
        %5786 = vmatprep.subr.mxu0 0.0
        %5787 = vmatpush1.msra.mxu0 0.0
        %5788 = vmatprep.subr.mxu0 0.0
        %5789 = vmatpush1.msra.mxu0 0.0
        %5790 = vmatprep.subr.mxu0 0.0
        %5791 = vmatpush1.msra.mxu0 0.0
        %5792 = vmatprep.subr.mxu0 0.0
        %5793 = vmatpush1.msra.mxu0 0.0
        %5794 = vmatprep.subr.mxu0 0.0
        %5795 = vmatpush1.msra.mxu0 0.0
        %5796 = vmatprep.subr.mxu0 0.0
        %5797 = vmatpush1.msra.mxu0 0.0
        %5798 = vmatprep.subr.mxu0 0.0
        %5799 = vmatpush1.msra.mxu0 0.0
        %5800 = vmatprep.subr.mxu0 0.0
        %5801 = vmatpush1.msra.mxu0 0.0
        %5802 = vmatprep.subr.mxu0 0.0
        %5803 = vmatpush1.msra.mxu0 0.0
        %5804 = vmatprep.subr.mxu0 0.0
        %5805 = vmatpush1.msra.mxu0 0.0
        %5806 = vmatprep.subr.mxu0 0.0
        %5807 = vmatpush1.msra.mxu0 0.0
        %5808 = vmatprep.subr.mxu0 0.0
        %5809 = vmatpush1.msra.mxu0 0.0
        %5810 = vmatprep.mubr.f32.mxu0 0.0
        %5811 = vmatmul.mubr.f32.gmra.mrb[0].mxu0 %v5741
        %v5812 = vpop.f32.mrb[0].mxu0
        %v5813 = vadd.f32 0.0, %v5812
        %v5814 = vpop.f32.mrb[0].mxu0
        %5815 = vmatprep.mubr.f32.mxu0 0.0
        %5816 = vmatmul.mubr.f32.gmra.mrb[0].mxu0 %v5744
        %v5817 = vpop.f32.mrb[0].mxu0
        %v5818 = vadd.f32 0.0, %v5817
        %v5819 = vpop.f32.mrb[0].mxu0
        %5820 = vdwg.mxu0
        %v5821 = vld [vmem:[#allocation19] sm:$0xff]
        %v5822 = vld [vmem:[#allocation19 + $0x8] sm:$0xff]
        %v5823 = vld [vmem:[#allocation19 + $0x10] sm:$0xff]
        %v5824 = vld [vmem:[#allocation19 + $0x18] sm:$0xff]
        %5825 = vmatprep.subr.mxu0 0.0
        %5826 = vmatpush1.msra.mxu0 %v4432
        %5827 = vmatprep.subr.mxu0 0.0
        %5828 = vmatpush1.msra.mxu0 %v4437
        %5829 = vmatprep.subr.mxu0 0.0
        %5830 = vmatpush1.msra.mxu0 %v4442
        %5831 = vmatprep.subr.mxu0 0.0
        %5832 = vmatpush1.msra.mxu0 %v4447
        %5833 = vmatprep.subr.mxu0 0.0
        %5834 = vmatpush1.msra.mxu0 %v4452
        %5835 = vmatprep.subr.mxu0 0.0
        %5836 = vmatpush1.msra.mxu0 %v4457
        %5837 = vmatprep.subr.mxu0 0.0
        %5838 = vmatpush1.msra.mxu0 %v4462
        %5839 = vmatprep.subr.mxu0 0.0
        %5840 = vmatpush1.msra.mxu0 %v4467
        %5841 = vmatprep.subr.mxu0 0.0
        %5842 = vmatpush1.msra.mxu0 %v4472
        %5843 = vmatprep.subr.mxu0 0.0
        %5844 = vmatpush1.msra.mxu0 %v4477
        %5845 = vmatprep.subr.mxu0 0.0
        %5846 = vmatpush1.msra.mxu0 %v4482
        %5847 = vmatprep.subr.mxu0 0.0
        %5848 = vmatpush1.msra.mxu0 %v4487
        %5849 = vmatprep.subr.mxu0 0.0
        %5850 = vmatpush1.msra.mxu0 %v4492
        %5851 = vmatprep.subr.mxu0 0.0
        %5852 = vmatpush1.msra.mxu0 %v4497
        %5853 = vmatprep.subr.mxu0 0.0
        %5854 = vmatpush1.msra.mxu0 %v4502
        %5855 = vmatprep.subr.mxu0 0.0
        %5856 = vmatpush1.msra.mxu0 %v4507
        %5857 = vmatprep.subr.mxu0 0.0
        %5858 = vmatpush1.msra.mxu0 %v4512
        %5859 = vmatprep.subr.mxu0 0.0
        %5860 = vmatpush1.msra.mxu0 %v4517
        %5861 = vmatprep.subr.mxu0 0.0
        %5862 = vmatpush1.msra.mxu0 %v4522
        %5863 = vmatprep.subr.mxu0 0.0
        %5864 = vmatpush1.msra.mxu0 %v4527
        %5865 = vmatprep.subr.mxu0 0.0
        %5866 = vmatpush1.msra.mxu0 %v4532
        %5867 = vmatprep.subr.mxu0 0.0
        %5868 = vmatpush1.msra.mxu0 %v4537
        %5869 = vmatprep.subr.mxu0 0.0
        %5870 = vmatpush1.msra.mxu0 %v4542
        %5871 = vmatprep.subr.mxu0 0.0
        %5872 = vmatpush1.msra.mxu0 %v4547
        %5873 = vmatprep.subr.mxu0 0.0
        %5874 = vmatpush1.msra.mxu0 %v4552
        %5875 = vmatprep.subr.mxu0 0.0
        %5876 = vmatpush1.msra.mxu0 %v4557
        %5877 = vmatprep.subr.mxu0 0.0
        %5878 = vmatpush1.msra.mxu0 %v4562
        %5879 = vmatprep.subr.mxu0 0.0
        %5880 = vmatpush1.msra.mxu0 %v4567
        %5881 = vmatprep.subr.mxu0 0.0
        %5882 = vmatpush1.msra.mxu0 %v4572
        %5883 = vmatprep.subr.mxu0 0.0
        %5884 = vmatpush1.msra.mxu0 %v4577
        %5885 = vmatprep.subr.mxu0 0.0
        %5886 = vmatpush1.msra.mxu0 %v4582
        %5887 = vmatprep.subr.mxu0 0.0
        %5888 = vmatpush1.msra.mxu0 %v4587
        %5889 = vmatprep.mubr.f32.mxu0 %v5822
        %5890 = vmatmul.mubr.f32.gmra.mrb[0].mxu0 %v5821
        %v5891 = vpop.f32.mrb[0].mxu0
        %v5892 = vadd.f32 0.0, %v5891
        %v5893 = vpop.f32.mrb[0].mxu0
        %5894 = vmatprep.mubr.f32.mxu0 %v5824
        %5895 = vmatmul.mubr.f32.gmra.mrb[0].mxu0 %v5823
        %v5896 = vpop.f32.mrb[0].mxu0
        %v5897 = vadd.f32 0.0, %v5896
        %v5898 = vpop.f32.mrb[0].mxu0
        %5899 = vdwg.mxu0
        %5900 = vmatprep.subr.mxu0 0.0
        %5901 = vmatpush1.msra.mxu0 %v4920
        %5902 = vmatprep.subr.mxu0 0.0
        %5903 = vmatpush1.msra.mxu0 %v4921
        %5904 = vmatprep.subr.mxu0 0.0
        %5905 = vmatpush1.msra.mxu0 %v4922
        %5906 = vmatprep.subr.mxu0 0.0
        %5907 = vmatpush1.msra.mxu0 %v4923
        %5908 = vmatprep.subr.mxu0 0.0
        %5909 = vmatpush1.msra.mxu0 %v4924
        %5910 = vmatprep.subr.mxu0 0.0
        %5911 = vmatpush1.msra.mxu0 %v4925
        %5912 = vmatprep.subr.mxu0 0.0
        %5913 = vmatpush1.msra.mxu0 %v4926
        %5914 = vmatprep.subr.mxu0 0.0
        %5915 = vmatpush1.msra.mxu0 %v4927
        %5916 = vmatprep.subr.mxu0 0.0
        %5917 = vmatpush1.msra.mxu0 %v4928
        %5918 = vmatprep.subr.mxu0 0.0
        %5919 = vmatpush1.msra.mxu0 %v4929
        %5920 = vmatprep.subr.mxu0 0.0
        %5921 = vmatpush1.msra.mxu0 %v4930
        %5922 = vmatprep.subr.mxu0 0.0
        %5923 = vmatpush1.msra.mxu0 %v4931
        %5924 = vmatprep.subr.mxu0 0.0
        %5925 = vmatpush1.msra.mxu0 %v4932
        %5926 = vmatprep.subr.mxu0 0.0
        %5927 = vmatpush1.msra.mxu0 %v4933
        %5928 = vmatprep.subr.mxu0 0.0
        %5929 = vmatpush1.msra.mxu0 %v4934
        %5930 = vmatprep.subr.mxu0 0.0
        %5931 = vmatpush1.msra.mxu0 %v4935
        %5932 = vmatprep.subr.mxu0 0.0
        %5933 = vmatpush1.msra.mxu0 %v4936
        %5934 = vmatprep.subr.mxu0 0.0
        %5935 = vmatpush1.msra.mxu0 %v4937
        %5936 = vmatprep.subr.mxu0 0.0
        %5937 = vmatpush1.msra.mxu0 %v4938
        %5938 = vmatprep.subr.mxu0 0.0
        %5939 = vmatpush1.msra.mxu0 %v4939
        %5940 = vmatprep.subr.mxu0 0.0
        %5941 = vmatpush1.msra.mxu0 %v4940
        %5942 = vmatprep.subr.mxu0 0.0
        %5943 = vmatpush1.msra.mxu0 %v4941
        %5944 = vmatprep.subr.mxu0 0.0
        %5945 = vmatpush1.msra.mxu0 %v4942
        %5946 = vmatprep.subr.mxu0 0.0
        %5947 = vmatpush1.msra.mxu0 %v4943
        %5948 = vmatprep.subr.mxu0 0.0
        %5949 = vmatpush1.msra.mxu0 %v4944
        %5950 = vmatprep.subr.mxu0 0.0
        %5951 = vmatpush1.msra.mxu0 %v4945
        %5952 = vmatprep.subr.mxu0 0.0
        %5953 = vmatpush1.msra.mxu0 %v4946
        %5954 = vmatprep.subr.mxu0 0.0
        %5955 = vmatpush1.msra.mxu0 %v4947
        %5956 = vmatprep.subr.mxu0 0.0
        %5957 = vmatpush1.msra.mxu0 %v4948
        %5958 = vmatprep.subr.mxu0 0.0
        %5959 = vmatpush1.msra.mxu0 %v4949
        %5960 = vmatprep.subr.mxu0 0.0
        %5961 = vmatpush1.msra.mxu0 %v4950
        %5962 = vmatprep.subr.mxu0 0.0
        %5963 = vmatpush1.msra.mxu0 %v4951
        %5964 = vmatprep.mubr.f32.mxu0 %v5822
        %5965 = vmatmul.mubr.f32.gmra.mrb[0].mxu0 %v5821
        %v5966 = vpop.f32.mrb[0].mxu0
        %v5967 = vadd.f32 0.0, %v5966
        %v5968 = vpop.f32.mrb[0].mxu0
        %5969 = vmatprep.mubr.f32.mxu0 %v5824
        %5970 = vmatmul.mubr.f32.gmra.mrb[0].mxu0 %v5823
        %v5971 = vpop.f32.mrb[0].mxu0
        %v5972 = vadd.f32 0.0, %v5971
        %v5973 = vpop.f32.mrb[0].mxu0
        %5974 = vdwg.mxu0
        %5975 = vmatprep.subr.mxu0 0.0
        %5976 = vmatpush1.msra.mxu0 %v5398
        %5977 = vmatprep.subr.mxu0 0.0
        %5978 = vmatpush1.msra.mxu0 %v5403
        %5979 = vmatprep.subr.mxu0 0.0
        %5980 = vmatpush1.msra.mxu0 %v5408
        %5981 = vmatprep.subr.mxu0 0.0
        %5982 = vmatpush1.msra.mxu0 %v5413
        %5983 = vmatprep.subr.mxu0 0.0
        %5984 = vmatpush1.msra.mxu0 %v5418
        %5985 = vmatprep.subr.mxu0 0.0
        %5986 = vmatpush1.msra.mxu0 %v5423
        %5987 = vmatprep.subr.mxu0 0.0
        %5988 = vmatpush1.msra.mxu0 %v5428
        %5989 = vmatprep.subr.mxu0 0.0
        %5990 = vmatpush1.msra.mxu0 %v5433
        %5991 = vmatprep.subr.mxu0 0.0
        %5992 = vmatpush1.msra.mxu0 0.0
        %5993 = vmatprep.subr.mxu0 0.0
        %5994 = vmatpush1.msra.mxu0 0.0
        %5995 = vmatprep.subr.mxu0 0.0
        %5996 = vmatpush1.msra.mxu0 0.0
        %5997 = vmatprep.subr.mxu0 0.0
        %5998 = vmatpush1.msra.mxu0 0.0
        %5999 = vmatprep.subr.mxu0 0.0
        %6000 = vmatpush1.msra.mxu0 0.0
        %6001 = vmatprep.subr.mxu0 0.0
        %6002 = vmatpush1.msra.mxu0 0.0
        %6003 = vmatprep.subr.mxu0 0.0
        %6004 = vmatpush1.msra.mxu0 0.0
        %6005 = vmatprep.subr.mxu0 0.0
        %6006 = vmatpush1.msra.mxu0 0.0
        %6007 = vmatprep.subr.mxu0 0.0
        %6008 = vmatpush1.msra.mxu0 0.0
        %6009 = vmatprep.subr.mxu0 0.0
        %6010 = vmatpush1.msra.mxu0 0.0
        %6011 = vmatprep.subr.mxu0 0.0
        %6012 = vmatpush1.msra.mxu0 0.0
        %6013 = vmatprep.subr.mxu0 0.0
        %6014 = vmatpush1.msra.mxu0 0.0
        %6015 = vmatprep.subr.mxu0 0.0
        %6016 = vmatpush1.msra.mxu0 0.0
        %6017 = vmatprep.subr.mxu0 0.0
        %6018 = vmatpush1.msra.mxu0 0.0
        %6019 = vmatprep.subr.mxu0 0.0
        %6020 = vmatpush1.msra.mxu0 0.0
        %6021 = vmatprep.subr.mxu0 0.0
        %6022 = vmatpush1.msra.mxu0 0.0
        %6023 = vmatprep.subr.mxu0 0.0
        %6024 = vmatpush1.msra.mxu0 0.0
        %6025 = vmatprep.subr.mxu0 0.0
        %6026 = vmatpush1.msra.mxu0 0.0
        %6027 = vmatprep.subr.mxu0 0.0
        %6028 = vmatpush1.msra.mxu0 0.0
        %6029 = vmatprep.subr.mxu0 0.0
        %6030 = vmatpush1.msra.mxu0 0.0
        %6031 = vmatprep.subr.mxu0 0.0
        %6032 = vmatpush1.msra.mxu0 0.0
        %6033 = vmatprep.subr.mxu0 0.0
        %6034 = vmatpush1.msra.mxu0 0.0
        %6035 = vmatprep.subr.mxu0 0.0
        %6036 = vmatpush1.msra.mxu0 0.0
        %6037 = vmatprep.subr.mxu0 0.0
        %6038 = vmatpush1.msra.mxu0 0.0
        %6039 = vmatprep.mubr.f32.mxu0 0.0
        %6040 = vmatmul.mubr.f32.gmra.mrb[0].mxu0 %v5741
        %v6041 = vpop.f32.mrb[0].mxu0
        %v6042 = vadd.f32 0.0, %v6041
        %v6043 = vpop.f32.mrb[0].mxu0
        %6044 = vmatprep.mubr.f32.mxu0 0.0
        %6045 = vmatmul.mubr.f32.gmra.mrb[0].mxu0 %v5744
        %v6046 = vpop.f32.mrb[0].mxu0
        %v6047 = vadd.f32 0.0, %v6046
        %v6048 = vpop.f32.mrb[0].mxu0
        %6049 = vdwg.mxu0
        %6050 = vmatprep.subr.mxu0 0.0
        %6051 = vmatpush1.msra.mxu0 %v5577
        %6052 = vmatprep.subr.mxu0 0.0
        %6053 = vmatpush1.msra.mxu0 %v5578
        %6054 = vmatprep.subr.mxu0 0.0
        %6055 = vmatpush1.msra.mxu0 %v5579
        %6056 = vmatprep.subr.mxu0 0.0
        %6057 = vmatpush1.msra.mxu0 %v5580
        %6058 = vmatprep.subr.mxu0 0.0
        %6059 = vmatpush1.msra.mxu0 %v5581
        %6060 = vmatprep.subr.mxu0 0.0
        %6061 = vmatpush1.msra.mxu0 %v5582
        %6062 = vmatprep.subr.mxu0 0.0
        %6063 = vmatpush1.msra.mxu0 %v5583
        %6064 = vmatprep.subr.mxu0 0.0
        %6065 = vmatpush1.msra.mxu0 %v5584
        %6066 = vmatprep.subr.mxu0 0.0
        %6067 = vmatpush1.msra.mxu0 0.0
        %6068 = vmatprep.subr.mxu0 0.0
        %6069 = vmatpush1.msra.mxu0 0.0
        %6070 = vmatprep.subr.mxu0 0.0
        %6071 = vmatpush1.msra.mxu0 0.0
        %6072 = vmatprep.subr.mxu0 0.0
        %6073 = vmatpush1.msra.mxu0 0.0
        %6074 = vmatprep.subr.mxu0 0.0
        %6075 = vmatpush1.msra.mxu0 0.0
        %6076 = vmatprep.subr.mxu0 0.0
        %6077 = vmatpush1.msra.mxu0 0.0
        %6078 = vmatprep.subr.mxu0 0.0
        %6079 = vmatpush1.msra.mxu0 0.0
        %6080 = vmatprep.subr.mxu0 0.0
        %6081 = vmatpush1.msra.mxu0 0.0
        %6082 = vmatprep.subr.mxu0 0.0
        %6083 = vmatpush1.msra.mxu0 0.0
        %6084 = vmatprep.subr.mxu0 0.0
        %6085 = vmatpush1.msra.mxu0 0.0
        %6086 = vmatprep.subr.mxu0 0.0
        %6087 = vmatpush1.msra.mxu0 0.0
        %6088 = vmatprep.subr.mxu0 0.0
        %6089 = vmatpush1.msra.mxu0 0.0
        %6090 = vmatprep.subr.mxu0 0.0
        %6091 = vmatpush1.msra.mxu0 0.0
        %6092 = vmatprep.subr.mxu0 0.0
        %6093 = vmatpush1.msra.mxu0 0.0
        %6094 = vmatprep.subr.mxu0 0.0
        %6095 = vmatpush1.msra.mxu0 0.0
        %6096 = vmatprep.subr.mxu0 0.0
        %6097 = vmatpush1.msra.mxu0 0.0
        %6098 = vmatprep.subr.mxu0 0.0
        %6099 = vmatpush1.msra.mxu0 0.0
        %6100 = vmatprep.subr.mxu0 0.0
        %6101 = vmatpush1.msra.mxu0 0.0
        %6102 = vmatprep.subr.mxu0 0.0
        %6103 = vmatpush1.msra.mxu0 0.0
        %6104 = vmatprep.subr.mxu0 0.0
        %6105 = vmatpush1.msra.mxu0 0.0
        %6106 = vmatprep.subr.mxu0 0.0
        %6107 = vmatpush1.msra.mxu0 0.0
        %6108 = vmatprep.subr.mxu0 0.0
        %6109 = vmatpush1.msra.mxu0 0.0
        %6110 = vmatprep.subr.mxu0 0.0
        %6111 = vmatpush1.msra.mxu0 0.0
        %6112 = vmatprep.subr.mxu0 0.0
        %6113 = vmatpush1.msra.mxu0 0.0
        %6114 = vmatprep.mubr.f32.mxu0 0.0
        %6115 = vmatmul.mubr.f32.gmra.mrb[0].mxu0 %v5741
        %v6116 = vpop.f32.mrb[0].mxu0
        %v6117 = vadd.f32 0.0, %v6116
        %v6118 = vpop.f32.mrb[0].mxu0
        %6119 = vmatprep.mubr.f32.mxu0 0.0
        %6120 = vmatmul.mubr.f32.gmra.mrb[0].mxu0 %v5744
        %v6121 = vpop.f32.mrb[0].mxu0
        %v6122 = vadd.f32 0.0, %v6121
        %v6123 = vpop.f32.mrb[0].mxu0
        %6124 = vdwg.mxu0
        %v6125 = vld [vmem:[#allocation24] sm:$0xff]
        %v6126 = vld [vmem:[#allocation24 + $0x8] sm:$0xff]
        %v6127 = vld [vmem:[#allocation24 + $0x10] sm:$0xff]
        %v6128 = vld [vmem:[#allocation24 + $0x18] sm:$0xff]
        %v6129 = vld [vmem:[#allocation24 + $0x20] sm:$0xff]
        %v6130 = vld [vmem:[#allocation24 + $0x28] sm:$0xff]
        %v6131 = vld [vmem:[#allocation24 + $0x30] sm:$0xff]
        %v6132 = vld [vmem:[#allocation24 + $0x38] sm:$0xff]
        %v6133 = vld [vmem:[#allocation24 + $0x40] sm:$0xff]
        %v6134 = vld [vmem:[#allocation24 + $0x48] sm:$0xff]
        %v6135 = vld [vmem:[#allocation24 + $0x50] sm:$0xff]
        %v6136 = vld [vmem:[#allocation24 + $0x58] sm:$0xff]
        %v6137 = vld [vmem:[#allocation24 + $0x60] sm:$0xff]
        %v6138 = vld [vmem:[#allocation24 + $0x68] sm:$0xff]
        %v6139 = vld [vmem:[#allocation24 + $0x70] sm:$0xff]
        %v6141 = vsel %vm5447, %v6042, 0
        %v6144 = vsel %vm5447, %v6047, 0
        %6146 = vmatprep.subr.mxu0 0.0
        %6147 = vmatpush1.msra.mxu0 %v6133
        %6148 = vmatprep.subr.mxu0 0.0
        %6149 = vmatpush1.msra.mxu0 %v6134
        %6150 = vmatprep.subr.mxu0 0.0
        %6151 = vmatpush1.msra.mxu0 %v6135
        %6152 = vmatprep.subr.mxu0 0.0
        %6153 = vmatpush1.msra.mxu0 %v6136
        %6154 = vmatprep.subr.mxu0 0.0
        %6155 = vmatpush1.msra.mxu0 0.0
        %6156 = vmatprep.subr.mxu0 0.0
        %6157 = vmatpush1.msra.mxu0 0.0
        %6158 = vmatprep.subr.mxu0 0.0
        %6159 = vmatpush1.msra.mxu0 0.0
        %6160 = vmatprep.subr.mxu0 0.0
        %6161 = vmatpush1.msra.mxu0 0.0
        %6162 = vmatprep.subr.mxu0 0.0
        %6163 = vmatpush1.msra.mxu0 0.0
        %6164 = vmatprep.subr.mxu0 0.0
        %6165 = vmatpush1.msra.mxu0 0.0
        %6166 = vmatprep.subr.mxu0 0.0
        %6167 = vmatpush1.msra.mxu0 0.0
        %6168 = vmatprep.subr.mxu0 0.0
        %6169 = vmatpush1.msra.mxu0 0.0
        %6170 = vmatprep.subr.mxu0 0.0
        %6171 = vmatpush1.msra.mxu0 0.0
        %6172 = vmatprep.subr.mxu0 0.0
        %6173 = vmatpush1.msra.mxu0 0.0
        %6174 = vmatprep.subr.mxu0 0.0
        %6175 = vmatpush1.msra.mxu0 0.0
        %6176 = vmatprep.subr.mxu0 0.0
        %6177 = vmatpush1.msra.mxu0 0.0
        %6178 = vmatprep.subr.mxu0 0.0
        %6179 = vmatpush1.msra.mxu0 0.0
        %6180 = vmatprep.subr.mxu0 0.0
        %6181 = vmatpush1.msra.mxu0 0.0
        %6182 = vmatprep.subr.mxu0 0.0
        %6183 = vmatpush1.msra.mxu0 0.0
        %6184 = vmatprep.subr.mxu0 0.0
        %6185 = vmatpush1.msra.mxu0 0.0
        %6186 = vmatprep.subr.mxu0 0.0
        %6187 = vmatpush1.msra.mxu0 0.0
        %6188 = vmatprep.subr.mxu0 0.0
        %6189 = vmatpush1.msra.mxu0 0.0
        %6190 = vmatprep.subr.mxu0 0.0
        %6191 = vmatpush1.msra.mxu0 0.0
        %6192 = vmatprep.subr.mxu0 0.0
        %6193 = vmatpush1.msra.mxu0 0.0
        %6194 = vmatprep.subr.mxu0 0.0
        %6195 = vmatpush1.msra.mxu0 0.0
        %6196 = vmatprep.subr.mxu0 0.0
        %6197 = vmatpush1.msra.mxu0 0.0
        %6198 = vmatprep.subr.mxu0 0.0
        %6199 = vmatpush1.msra.mxu0 0.0
        %6200 = vmatprep.subr.mxu0 0.0
        %6201 = vmatpush1.msra.mxu0 0.0
        %6202 = vmatprep.subr.mxu0 0.0
        %6203 = vmatpush1.msra.mxu0 0.0
        %6204 = vmatprep.subr.mxu0 0.0
        %6205 = vmatpush1.msra.mxu0 0.0
        %6206 = vmatprep.subr.mxu0 0.0
        %6207 = vmatpush1.msra.mxu0 0.0
        %6208 = vmatprep.subr.mxu0 0.0
        %6209 = vmatpush1.msra.mxu0 0.0
        %6210 = vmatprep.mubr.f32.mxu0 0.0
        %6211 = vmatmul.mubr.f32.gmra.mrb[0].mxu0 %v6141
        %v6212 = vpop.f32.mrb[0].mxu0
        %v6213 = vadd.f32 0.0, %v6212
        %v6214 = vpop.f32.mrb[0].mxu0
        %6215 = vmatprep.mubr.f32.mxu0 0.0
        %6216 = vmatmul.mubr.f32.gmra.mrb[0].mxu0 %v6144
        %v6217 = vpop.f32.mrb[0].mxu0
        %v6218 = vadd.f32 0.0, %v6217
        %v6219 = vpop.f32.mrb[0].mxu0
        %6220 = vdwg.mxu0
        %v6222 = vsel %vm5600, %v6117, 0
        %v6225 = vsel %vm5600, %v6122, 0
        %6227 = vmatprep.subr.mxu0 0.0
        %6228 = vmatpush1.msra.mxu0 %v6125
        %6229 = vmatprep.subr.mxu0 0.0
        %6230 = vmatpush1.msra.mxu0 %v6126
        %6231 = vmatprep.subr.mxu0 0.0
        %6232 = vmatpush1.msra.mxu0 %v6127
        %6233 = vmatprep.subr.mxu0 0.0
        %6234 = vmatpush1.msra.mxu0 %v6128
        %6235 = vmatprep.subr.mxu0 0.0
        %6236 = vmatpush1.msra.mxu0 %v6129
        %6237 = vmatprep.subr.mxu0 0.0
        %6238 = vmatpush1.msra.mxu0 %v6130
        %6239 = vmatprep.subr.mxu0 0.0
        %6240 = vmatpush1.msra.mxu0 %v6131
        %6241 = vmatprep.subr.mxu0 0.0
        %6242 = vmatpush1.msra.mxu0 %v6132
        %6243 = vmatprep.subr.mxu0 0.0
        %6244 = vmatpush1.msra.mxu0 0.0
        %6245 = vmatprep.subr.mxu0 0.0
        %6246 = vmatpush1.msra.mxu0 0.0
        %6247 = vmatprep.subr.mxu0 0.0
        %6248 = vmatpush1.msra.mxu0 0.0
        %6249 = vmatprep.subr.mxu0 0.0
        %6250 = vmatpush1.msra.mxu0 0.0
        %6251 = vmatprep.subr.mxu0 0.0
        %6252 = vmatpush1.msra.mxu0 0.0
        %6253 = vmatprep.subr.mxu0 0.0
        %6254 = vmatpush1.msra.mxu0 0.0
        %6255 = vmatprep.subr.mxu0 0.0
        %6256 = vmatpush1.msra.mxu0 0.0
        %6257 = vmatprep.subr.mxu0 0.0
        %6258 = vmatpush1.msra.mxu0 0.0
        %6259 = vmatprep.subr.mxu0 0.0
        %6260 = vmatpush1.msra.mxu0 0.0
        %6261 = vmatprep.subr.mxu0 0.0
        %6262 = vmatpush1.msra.mxu0 0.0
        %6263 = vmatprep.subr.mxu0 0.0
        %6264 = vmatpush1.msra.mxu0 0.0
        %6265 = vmatprep.subr.mxu0 0.0
        %6266 = vmatpush1.msra.mxu0 0.0
        %6267 = vmatprep.subr.mxu0 0.0
        %6268 = vmatpush1.msra.mxu0 0.0
        %6269 = vmatprep.subr.mxu0 0.0
        %6270 = vmatpush1.msra.mxu0 0.0
        %6271 = vmatprep.subr.mxu0 0.0
        %6272 = vmatpush1.msra.mxu0 0.0
        %6273 = vmatprep.subr.mxu0 0.0
        %6274 = vmatpush1.msra.mxu0 0.0
        %6275 = vmatprep.subr.mxu0 0.0
        %6276 = vmatpush1.msra.mxu0 0.0
        %6277 = vmatprep.subr.mxu0 0.0
        %6278 = vmatpush1.msra.mxu0 0.0
        %6279 = vmatprep.subr.mxu0 0.0
        %6280 = vmatpush1.msra.mxu0 0.0
        %6281 = vmatprep.subr.mxu0 0.0
        %6282 = vmatpush1.msra.mxu0 0.0
        %6283 = vmatprep.subr.mxu0 0.0
        %6284 = vmatpush1.msra.mxu0 0.0
        %6285 = vmatprep.subr.mxu0 0.0
        %6286 = vmatpush1.msra.mxu0 0.0
        %6287 = vmatprep.subr.mxu0 0.0
        %6288 = vmatpush1.msra.mxu0 0.0
        %6289 = vmatprep.subr.mxu0 0.0
        %6290 = vmatpush1.msra.mxu0 0.0
        %6291 = vmatprep.mubr.f32.mxu0 0.0
        %6292 = vmatmul.mubr.f32.gmra.mrb[0].mxu0 %v6222
        %v6293 = vpop.f32.mrb[0].mxu0
        %v6294 = vadd.f32 %v6213, %v6293
        %v6295 = vpop.f32.mrb[0].mxu0
        %6296 = vmatprep.mubr.f32.mxu0 0.0
        %6297 = vmatmul.mubr.f32.gmra.mrb[0].mxu0 %v6225
        %v6298 = vpop.f32.mrb[0].mxu0
        %v6299 = vadd.f32 %v6218, %v6298
        %v6300 = vpop.f32.mrb[0].mxu0
        %6301 = vdwg.mxu0
        %v6303 = vsel %vm4961, %v5967, 0
        %v6306 = vsel %vm4961, %v5972, 0
        %6308 = vmatprep.subr.mxu0 0.0
        %6309 = vmatpush1.msra.mxu0 %v6137
        %6310 = vmatprep.subr.mxu0 0.0
        %6311 = vmatpush1.msra.mxu0 %v6138
        %6312 = vmatprep.subr.mxu0 0.0
        %6313 = vmatpush1.msra.mxu0 0.0
        %6314 = vmatprep.subr.mxu0 0.0
        %6315 = vmatpush1.msra.mxu0 0.0
        %6316 = vmatprep.subr.mxu0 0.0
        %6317 = vmatpush1.msra.mxu0 0.0
        %6318 = vmatprep.subr.mxu0 0.0
        %6319 = vmatpush1.msra.mxu0 0.0
        %6320 = vmatprep.subr.mxu0 0.0
        %6321 = vmatpush1.msra.mxu0 0.0
        %6322 = vmatprep.subr.mxu0 0.0
        %6323 = vmatpush1.msra.mxu0 0.0
        %6324 = vmatprep.subr.mxu0 0.0
        %6325 = vmatpush1.msra.mxu0 0.0
        %6326 = vmatprep.subr.mxu0 0.0
        %6327 = vmatpush1.msra.mxu0 0.0
        %6328 = vmatprep.subr.mxu0 0.0
        %6329 = vmatpush1.msra.mxu0 0.0
        %6330 = vmatprep.subr.mxu0 0.0
        %6331 = vmatpush1.msra.mxu0 0.0
        %6332 = vmatprep.subr.mxu0 0.0
        %6333 = vmatpush1.msra.mxu0 0.0
        %6334 = vmatprep.subr.mxu0 0.0
        %6335 = vmatpush1.msra.mxu0 0.0
        %6336 = vmatprep.subr.mxu0 0.0
        %6337 = vmatpush1.msra.mxu0 0.0
        %6338 = vmatprep.subr.mxu0 0.0
        %6339 = vmatpush1.msra.mxu0 0.0
        %6340 = vmatprep.subr.mxu0 0.0
        %6341 = vmatpush1.msra.mxu0 0.0
        %6342 = vmatprep.subr.mxu0 0.0
        %6343 = vmatpush1.msra.mxu0 0.0
        %6344 = vmatprep.subr.mxu0 0.0
        %6345 = vmatpush1.msra.mxu0 0.0
        %6346 = vmatprep.subr.mxu0 0.0
        %6347 = vmatpush1.msra.mxu0 0.0
        %6348 = vmatprep.subr.mxu0 0.0
        %6349 = vmatpush1.msra.mxu0 0.0
        %6350 = vmatprep.subr.mxu0 0.0
        %6351 = vmatpush1.msra.mxu0 0.0
        %6352 = vmatprep.subr.mxu0 0.0
        %6353 = vmatpush1.msra.mxu0 0.0
        %6354 = vmatprep.subr.mxu0 0.0
        %6355 = vmatpush1.msra.mxu0 0.0
        %6356 = vmatprep.subr.mxu0 0.0
        %6357 = vmatpush1.msra.mxu0 0.0
        %6358 = vmatprep.subr.mxu0 0.0
        %6359 = vmatpush1.msra.mxu0 0.0
        %6360 = vmatprep.subr.mxu0 0.0
        %6361 = vmatpush1.msra.mxu0 0.0
        %6362 = vmatprep.subr.mxu0 0.0
        %6363 = vmatpush1.msra.mxu0 0.0
        %6364 = vmatprep.subr.mxu0 0.0
        %6365 = vmatpush1.msra.mxu0 0.0
        %6366 = vmatprep.subr.mxu0 0.0
        %6367 = vmatpush1.msra.mxu0 0.0
        %6368 = vmatprep.subr.mxu0 0.0
        %6369 = vmatpush1.msra.mxu0 0.0
        %6370 = vmatprep.subr.mxu0 0.0
        %6371 = vmatpush1.msra.mxu0 0.0
        %6372 = vmatprep.mubr.f32.mxu0 0.0
        %6373 = vmatmul.mubr.f32.gmra.mrb[0].mxu0 %v6303
        %v6374 = vpop.f32.mrb[0].mxu0
        %v6375 = vadd.f32 0.0, %v6374
        %v6376 = vpop.f32.mrb[0].mxu0
        %6377 = vmatprep.mubr.f32.mxu0 0.0
        %6378 = vmatmul.mubr.f32.gmra.mrb[0].mxu0 %v6306
        %v6379 = vpop.f32.mrb[0].mxu0
        %v6380 = vadd.f32 0.0, %v6379
        %v6381 = vpop.f32.mrb[0].mxu0
        %6382 = vdwg.mxu0
        %v6383 = vadd.f32 %v6294, %v6375
        %v6384 = vadd.f32 %v6299, %v6380
        %v6386 = vsel %vm4598, %v5892, 0
        %v6389 = vsel %vm4598, %v5897, 0
        %6391 = vmatprep.subr.mxu0 0.0
        %6392 = vmatpush1.msra.mxu0 %v6139
        %6393 = vmatprep.subr.mxu0 0.0
        %6394 = vmatpush1.msra.mxu0 0.0
        %6395 = vmatprep.subr.mxu0 0.0
        %6396 = vmatpush1.msra.mxu0 0.0
        %6397 = vmatprep.subr.mxu0 0.0
        %6398 = vmatpush1.msra.mxu0 0.0
        %6399 = vmatprep.subr.mxu0 0.0
        %6400 = vmatpush1.msra.mxu0 0.0
        %6401 = vmatprep.subr.mxu0 0.0
        %6402 = vmatpush1.msra.mxu0 0.0
        %6403 = vmatprep.subr.mxu0 0.0
        %6404 = vmatpush1.msra.mxu0 0.0
        %6405 = vmatprep.subr.mxu0 0.0
        %6406 = vmatpush1.msra.mxu0 0.0
        %6407 = vmatprep.subr.mxu0 0.0
        %6408 = vmatpush1.msra.mxu0 0.0
        %6409 = vmatprep.subr.mxu0 0.0
        %6410 = vmatpush1.msra.mxu0 0.0
        %6411 = vmatprep.subr.mxu0 0.0
        %6412 = vmatpush1.msra.mxu0 0.0
        %6413 = vmatprep.subr.mxu0 0.0
        %6414 = vmatpush1.msra.mxu0 0.0
        %6415 = vmatprep.subr.mxu0 0.0
        %6416 = vmatpush1.msra.mxu0 0.0
        %6417 = vmatprep.subr.mxu0 0.0
        %6418 = vmatpush1.msra.mxu0 0.0
        %6419 = vmatprep.subr.mxu0 0.0
        %6420 = vmatpush1.msra.mxu0 0.0
        %6421 = vmatprep.subr.mxu0 0.0
        %6422 = vmatpush1.msra.mxu0 0.0
        %6423 = vmatprep.subr.mxu0 0.0
        %6424 = vmatpush1.msra.mxu0 0.0
        %6425 = vmatprep.subr.mxu0 0.0
        %6426 = vmatpush1.msra.mxu0 0.0
        %6427 = vmatprep.subr.mxu0 0.0
        %6428 = vmatpush1.msra.mxu0 0.0
        %6429 = vmatprep.subr.mxu0 0.0
        %6430 = vmatpush1.msra.mxu0 0.0
        %6431 = vmatprep.subr.mxu0 0.0
        %6432 = vmatpush1.msra.mxu0 0.0
        %6433 = vmatprep.subr.mxu0 0.0
        %6434 = vmatpush1.msra.mxu0 0.0
        %6435 = vmatprep.subr.mxu0 0.0
        %6436 = vmatpush1.msra.mxu0 0.0
        %6437 = vmatprep.subr.mxu0 0.0
        %6438 = vmatpush1.msra.mxu0 0.0
        %6439 = vmatprep.subr.mxu0 0.0
        %6440 = vmatpush1.msra.mxu0 0.0
        %6441 = vmatprep.subr.mxu0 0.0
        %6442 = vmatpush1.msra.mxu0 0.0
        %6443 = vmatprep.subr.mxu0 0.0
        %6444 = vmatpush1.msra.mxu0 0.0
        %6445 = vmatprep.subr.mxu0 0.0
        %6446 = vmatpush1.msra.mxu0 0.0
        %6447 = vmatprep.subr.mxu0 0.0
        %6448 = vmatpush1.msra.mxu0 0.0
        %6449 = vmatprep.subr.mxu0 0.0
        %6450 = vmatpush1.msra.mxu0 0.0
        %6451 = vmatprep.subr.mxu0 0.0
        %6452 = vmatpush1.msra.mxu0 0.0
        %6453 = vmatprep.subr.mxu0 0.0
        %6454 = vmatpush1.msra.mxu0 0.0
        %6455 = vmatprep.mubr.f32.mxu0 0.0
        %6456 = vmatmul.mubr.f32.gmra.mrb[0].mxu0 %v6386
        %v6457 = vpop.f32.mrb[0].mxu0
        %v6458 = vadd.f32 0.0, %v6457
        %v6459 = vpop.f32.mrb[0].mxu0
        %6460 = vmatprep.mubr.f32.mxu0 0.0
        %6461 = vmatmul.mubr.f32.gmra.mrb[0].mxu0 %v6389
        %v6462 = vpop.f32.mrb[0].mxu0
        %v6463 = vadd.f32 0.0, %v6462
        %v6464 = vpop.f32.mrb[0].mxu0
        %6465 = vdwg.mxu0
        %v6466 = vadd.f32 %v6383, %v6458
        %v6467 = vadd.f32 %v6384, %v6463
        %6468 = vst [vmem:[%s725] sm:$0xff] %v5813
        %6469 = vst [vmem:[%s725 + $0x10] sm:$0xff] %v5818
        %6470 = vst [vmem:[%s725 + $0x8] sm:$0xff] %v6466
        %6471 = vst [vmem:[%s725 + $0x18] sm:$0xff] %v6467
        %p6472 = scmp.lt.s32.totalorder %s35, 1
        %s6473 = scalar_select %p6472, %s35, 1
        %s6474 = smul.addr %s6473, 4
        %s6475 = smul.addr %s6474, 8
        %s6476 = scalar_lea.vmem %s16, %s6475
        // Predicated region
        $region145: #{cqa_clip_forward.2} parent=83 // pred_check
          %p6477 = pneg %p394
        $region146: #{cqa_clip_forward.2} parent=83 // pred_check_branch
          %6479 = sbr.rel (%p6477) target = $region148
        $region147: #{cqa_clip_forward.2} parent=83 // pred_region
          _
        $region148: #{cqa_clip_forward.2} parent=83 // pred_fallthru
          _
      $region84: #{cqa_clip_forward.2} parent=5 // pred_fallthru
        _
      %p6480 = scmp.le.s32.totalorder 2, %s30
      // Predicated region
      $region149: #{cqa_clip_forward.2} parent=5 // pred_check
        %p6481 = pneg %p6480
      $region150: #{cqa_clip_forward.2} parent=5 // pred_check_branch
        %6483 = sbr.rel (%p6481) target = $region152
      $region151: #{cqa_clip_forward.2} parent=5 // pred_region
        %s6484 = ssub.s32 %s30, 2
        // Predicated region
        $region153: #{cqa_clip_forward.2} parent=151 // pred_check
          %p6485 = pneg %p400
        $region154: #{cqa_clip_forward.2} parent=151 // pred_check_branch
          %6487 = sbr.rel (%p6485) target = $region156
        $region155: #{cqa_clip_forward.2} parent=151 // pred_region
          %p6488 = scmp.lt.s32.totalorder %s36, 1
          %s6489 = scalar_select %p6488, %s36, 1
          %s6490 = smul.addr %s6489, 4
          %s6491 = smul.addr %s6490, 8
          %s6492 = scalar_lea.vmem %s16, %s6491
        $region156: #{cqa_clip_forward.2} parent=151 // pred_fallthru
          _
      $region152: #{cqa_clip_forward.2} parent=5 // pred_fallthru
        _
    $region6: #{cqa_clip_forward.2} parent=1 // loop_footer
      %s34 = sadd.s32 1, %s30
    $region7: #{cqa_clip_forward.2} parent=1 // loop_footer_branch
      %29 = sbr.rel target = $region3
    $region8: #{cqa_clip_forward.2} parent=1 // loop_exit
      _
    %6493 = vsyncpa [#allocation3], 1
    %s6494 = scalar_lea.sflag [#allocation3], 1
    %6495 = vsyncpa %s6494, 1
    %6496 = vsyncpa [#allocation5], 1
    %6497 = vsyncpa [#allocation8], 1
    %6498 = vsyncpa [#allocation11], 1
    %6499 = vsyncpa [#allocation14], 1
    %6500 = vsyncpa [#allocation17], 1
    %6501 = vsyncpa [#allocation20], 1
    %6502 = vsyncpa [#allocation23], 1

</llo_original>
